<compile_context>
chip_gen: v6e
topology: v6e:2x2x1
jax: 0.10.0
libtpu: 0.0.40
codegen_flags: <defaults>
</compile_context>

<pallas_src>
import functools
import math

import jax
import jax.numpy as jnp
from jax.experimental import pallas as pl
from jax.experimental.pallas import tpu as pltpu

VOCAB_SIZE = 14


def _net_decode_kernel(tok_ref, tokrev_ref,
                       wx_f_ref, wx_b_ref, bx_ref,
                       whh_ref,
                       wfc_f_ref, wfc_b_ref, bfc_ref,
                       start_ref, end_ref, trans_t_ref,
                       out_ref, *, S, B, H, T, V):
    f32 = jnp.float32
    BIG = jnp.int32(2 ** 30)
    H2 = 2 * H

    # ---- one-hot tokens (forward time order and time-reversed) -------------
    iota_v = jax.lax.broadcasted_iota(jnp.int32, (S * B, V), 1)
    oh_f = (tok_ref[...] == iota_v).astype(f32)            # (S*B, V)
    oh_b = (tokrev_ref[...] == iota_v).astype(f32)         # (S*B, V)

    # ---- fused input projection (embedding folded in, gate-interleaved) ----
    # row s*B+b -> gates for forward input x_s and backward input x_{S-1-s}
    xg = (jnp.dot(oh_f, wx_f_ref[...], preferred_element_type=f32)
          + jnp.dot(oh_b, wx_b_ref[...], preferred_element_type=f32)
          + bx_ref[...])                                   # (S*B, 8H)

    # ---- fused bidirectional LSTM: one recurrent matmul per step -----------
    whh = whh_ref[...]                                     # (2H, 8H), hoisted
    h = jnp.zeros((B, H2), f32)                            # [h_fwd | h_bwd]
    c = jnp.zeros((B, H2), f32)
    h_steps = []
    for s in range(S):
        g = xg[s * B:(s + 1) * B, :] + jnp.dot(h, whh, preferred_element_type=f32)
        i = jax.nn.sigmoid(g[:, 0:H2])                     # [i_f | i_b]
        f = jax.nn.sigmoid(g[:, H2:2 * H2])                # [f_f | f_b]
        gg = jnp.tanh(g[:, 2 * H2:3 * H2])                 # [g_f | g_b]
        o = jax.nn.sigmoid(g[:, 3 * H2:4 * H2])            # [o_f | o_b]
        c = f * c + i * gg
        h = o * jnp.tanh(c)
        h_steps.append(h)

    # ---- fc emissions: two stacked matmuls over all time steps -------------
    # fwd hidden at time t = h_steps[t][:, :H];
    # bwd hidden at time t = h_steps[S-1-t][:, H:2H]  (bwd step s ate x_{S-1-s})
    hf_all = jnp.concatenate([h_steps[t][:, 0:H] for t in range(S)], axis=0)
    hb_all = jnp.concatenate([h_steps[S - 1 - t][:, H:H2] for t in range(S)],
                             axis=0)                       # (S*B, H) each
    emis = (jnp.dot(hf_all, wfc_f_ref[...], preferred_element_type=f32)
            + jnp.dot(hb_all, wfc_b_ref[...], preferred_element_type=f32)
            + bfc_ref[...])                                # (S*B, T)

    # ---- CRF Viterbi decode (mask all-ones) ---------------------------------
    trans_t = trans_t_ref[...]                             # (T, T): [to, from]
    start = start_ref[...]                                 # (1, T)
    end = end_ref[...]                                     # (1, T)
    trans_b = jnp.broadcast_to(trans_t.reshape(1, T, T), (B, T, T))  # hoisted
    iota_from = jax.lax.broadcasted_iota(jnp.int32, (B, T, T), 2)
    idt = jax.lax.broadcasted_iota(jnp.int32, (B, T), 1)

    score = start + emis[0:B, :]                           # (B, T)
    hist = []
    for t in range(1, S):
        cand = score[:, None, :] + trans_b                 # (B, to, from)
        m = jnp.max(cand, axis=-1)                         # (B, T)
        arg = jnp.min(jnp.where(cand == m[:, :, None], iota_from, BIG),
                      axis=-1)                             # first-max argmax
        hist.append(arg)
        score = m + emis[t * B:(t + 1) * B, :]
    score = score + end

    # final argmax over tags (first occurrence), kept 2-D as (B, 1)
    mt = jnp.max(score, axis=1, keepdims=True)
    best = jnp.min(jnp.where(score == mt, idt, BIG), axis=1, keepdims=True)

    # backtrace into registers; single full store at the end
    cols = [None] * S
    cols[S - 1] = best
    for t in range(S - 2, -1, -1):
        sel = (idt == best)                                # (B, T) bool
        best = jnp.sum(jnp.where(sel, hist[t], 0), axis=1, keepdims=True)
        cols[t] = best
    path = jnp.concatenate(cols, axis=1)                   # (B, S)
    out_ref[...] = path[None, :, :]


def init_params(key, embedding_dim, num_tags):
    E = embedding_dim
    H = E
    T = num_tags + 2
    ks = jax.random.split(key, 14)

    def u(k, shape, scale):
        return jax.random.uniform(k, shape, jnp.float32, -scale, scale)

    s_lstm = 1.0 / math.sqrt(H)
    s_fc = 1.0 / math.sqrt(2 * H)
    return dict(
        embedding=jax.random.normal(ks[0], (VOCAB_SIZE, E), jnp.float32),
        w_ih_f=u(ks[1], (4 * H, E), s_lstm),
        w_hh_f=u(ks[2], (4 * H, H), s_lstm),
        b_ih_f=u(ks[3], (4 * H,), s_lstm),
        b_hh_f=u(ks[4], (4 * H,), s_lstm),
        w_ih_b=u(ks[5], (4 * H, E), s_lstm),
        w_hh_b=u(ks[6], (4 * H, H), s_lstm),
        b_ih_b=u(ks[7], (4 * H,), s_lstm),
        b_hh_b=u(ks[8], (4 * H,), s_lstm),
        w_fc=u(ks[9], (T, 2 * H), s_fc),
        b_fc=u(ks[10], (T,), s_fc),
        crf_start=u(ks[11], (T,), 0.1),
        crf_end=u(ks[12], (T,), 0.1),
        crf_trans=u(ks[13], (T, T), 0.1),
    )


def net_decode(sentences, params, *, batch_block=None):
    """Inference branch of Net.forward (tags=None): CRF Viterbi decode.

    sentences: (seq_len, batch) int tokens. Returns (batch, seq_len) int32 tags.
    batch_block: per-grid-step batch size (grid parallelism over batch; lets
    v7x's second TensorCore decode the other half of the batch).
    """
    S, B = sentences.shape
    E = params["embedding"].shape[1]
    H = E
    T = params["crf_trans"].shape[0]
    V = VOCAB_SIZE

    Bb = batch_block if batch_block is not None else B
    if B % Bb != 0:
        Bb = B
    NB = B // Bb
    if NB > 1 and (S * Bb) % 8 != 0:     # keep token block sublane-aligned
        Bb, NB = B, 1

    tok = sentences.astype(jnp.int32)                         # (S, B)
    # per-block, time-major token slabs: row = block*S*Bb + s*Bb + b'
    tok_fwd = tok.reshape(S, NB, Bb).transpose(1, 0, 2).reshape(NB * S * Bb, 1)
    tok_bwd = tok[::-1].reshape(S, NB, Bb).transpose(1, 0, 2).reshape(NB * S * Bb, 1)

    emb = params["embedding"]

    def interleave(m_f, m_b):
        # (..., 4H) x2 in PyTorch gate order -> (..., 8H) interleaved
        parts = []
        for k in range(4):
            parts.append(m_f[..., k * H:(k + 1) * H])
            parts.append(m_b[..., k * H:(k + 1) * H])
        return jnp.concatenate(parts, axis=-1)

    zeros_v = jnp.zeros((V, 4 * H), jnp.float32)
    zeros_h = jnp.zeros((H, 4 * H), jnp.float32)

    # embedding folded into input projection, gate-interleaved fused layout
    wx_f = interleave(emb @ params["w_ih_f"].T, zeros_v)      # (V, 8H)
    wx_b = interleave(zeros_v, emb @ params["w_ih_b"].T)      # (V, 8H)
    bx = interleave(params["b_ih_f"] + params["b_hh_f"],
                    params["b_ih_b"] + params["b_hh_b"]).reshape(1, 8 * H)
    # block-diagonal fused recurrent weight: [h_f | h_b] -> interleaved gates
    whh = jnp.concatenate([interleave(params["w_hh_f"].T, zeros_h),
                           interleave(zeros_h, params["w_hh_b"].T)],
                          axis=0)                             # (2H, 8H)

    w_fc_t = params["w_fc"].T                                 # (2H, T)
    args = (
        tok_fwd, tok_bwd,
        wx_f, wx_b, bx,
        whh,
        w_fc_t[:H, :], w_fc_t[H:, :],
        params["b_fc"].reshape(1, T),
        params["crf_start"].reshape(1, T),
        params["crf_end"].reshape(1, T),
        params["crf_trans"].T,                                # (to, from)
    )

    tok_spec = pl.BlockSpec((S * Bb, 1), lambda b: (b, 0))
    full_specs = [pl.BlockSpec(a.shape, lambda b: (0, 0)) for a in args[2:]]
    in_specs = [tok_spec, tok_spec] + full_specs

    kernel = functools.partial(_net_decode_kernel, S=S, B=Bb, H=H, T=T, V=V)
    out = pl.pallas_call(
        kernel,
        out_shape=jax.ShapeDtypeStruct((NB, Bb, S), jnp.int32),
        grid=(NB,),
        in_specs=in_specs,
        out_specs=pl.BlockSpec((1, Bb, S), lambda b: (b, 0, 0)),
        compiler_params=pltpu.CompilerParams(
            dimension_semantics=("parallel",)),
    )(*args)
    return out.reshape(B, S)


if __name__ == "__main__":
    key = jax.random.PRNGKey(0)
    k_param, k_tok = jax.random.split(key)

    embedding_dim = 32
    num_tags = 5          # -> num_tags + 2 = 7 CRF tags
    seq_len, batch = 8, 8

    params = init_params(k_param, embedding_dim, num_tags)
    sentences = jax.random.randint(k_tok, (seq_len, batch), 0, VOCAB_SIZE,
                                   dtype=jnp.int32)

    out = net_decode(sentences, params, batch_block=4)   # (batch, seq_len) tags
    jax.block_until_ready(out)
    print("KERNEL_OK")
</pallas_src>

<mosaic_0001>
module attributes {stable_mosaic.version = 11 : i64} {
  func.func @_net_decode_kernel(%arg0: i32, %arg1: memref<32x1xi32, #tpu.memory_space<vmem>>, %arg2: memref<32x1xi32, #tpu.memory_space<vmem>>, %arg3: memref<14x256xf32, #tpu.memory_space<vmem>>, %arg4: memref<14x256xf32, #tpu.memory_space<vmem>>, %arg5: memref<1x256xf32, #tpu.memory_space<vmem>>, %arg6: memref<64x256xf32, #tpu.memory_space<vmem>>, %arg7: memref<32x7xf32, #tpu.memory_space<vmem>>, %arg8: memref<32x7xf32, #tpu.memory_space<vmem>>, %arg9: memref<1x7xf32, #tpu.memory_space<vmem>>, %arg10: memref<1x7xf32, #tpu.memory_space<vmem>>, %arg11: memref<1x7xf32, #tpu.memory_space<vmem>>, %arg12: memref<7x7xf32, #tpu.memory_space<vmem>>, %arg13: memref<1x4x8xi32, #tpu.memory_space<vmem>>) attributes {dimension_semantics = [#tpu.dimension_semantics<parallel>], iteration_bounds = array<i64: 2>, scalar_prefetch = 0 : i64, scratch_operands = 0 : i64, tpu.core_type = #tpu.core_type<tc>, window_params = [{transform_indices = @transform_0, window_bounds = array<i64: 32, 1>}, {transform_indices = @transform_1, window_bounds = array<i64: 32, 1>}, {pipeline_mode = #tpu.pipeline_mode<synchronous>, transform_indices = @transform_2, window_bounds = array<i64: 14, 256>}, {pipeline_mode = #tpu.pipeline_mode<synchronous>, transform_indices = @transform_3, window_bounds = array<i64: 14, 256>}, {pipeline_mode = #tpu.pipeline_mode<synchronous>, transform_indices = @transform_4, window_bounds = array<i64: 1, 256>}, {pipeline_mode = #tpu.pipeline_mode<synchronous>, transform_indices = @transform_5, window_bounds = array<i64: 64, 256>}, {pipeline_mode = #tpu.pipeline_mode<synchronous>, transform_indices = @transform_6, window_bounds = array<i64: 32, 7>}, {pipeline_mode = #tpu.pipeline_mode<synchronous>, transform_indices = @transform_7, window_bounds = array<i64: 32, 7>}, {pipeline_mode = #tpu.pipeline_mode<synchronous>, transform_indices = @transform_8, window_bounds = array<i64: 1, 7>}, {pipeline_mode = #tpu.pipeline_mode<synchronous>, transform_indices = @transform_9, window_bounds = array<i64: 1, 7>}, {pipeline_mode = #tpu.pipeline_mode<synchronous>, transform_indices = @transform_10, window_bounds = array<i64: 1, 7>}, {pipeline_mode = #tpu.pipeline_mode<synchronous>, transform_indices = @transform_11, window_bounds = array<i64: 7, 7>}, {transform_indices = @transform_12, window_bounds = array<i64: 1, 4, 8>}]} {
    %0 = tpu.iota {dimensions = array<i32: 1>} : vector<32x14xi32>
    %c0 = arith.constant 0 : index
    %c0_0 = arith.constant 0 : index
    %1 = vector.load %arg1[%c0, %c0_0] : memref<32x1xi32, #tpu.memory_space<vmem>>, vector<32x1xi32>
    %2 = vector.broadcast %1 : vector<32x1xi32> to vector<32x14xi32>
    %3 = arith.cmpi eq, %2, %0 : vector<32x14xi32>
    %4 = arith.extui %3 : vector<32x14xi1> to vector<32x14xi32>
    %5 = arith.sitofp %4 : vector<32x14xi32> to vector<32x14xf32>
    %c0_1 = arith.constant 0 : index
    %c0_2 = arith.constant 0 : index
    %6 = vector.load %arg2[%c0_1, %c0_2] : memref<32x1xi32, #tpu.memory_space<vmem>>, vector<32x1xi32>
    %7 = vector.broadcast %6 : vector<32x1xi32> to vector<32x14xi32>
    %8 = arith.cmpi eq, %7, %0 : vector<32x14xi32>
    %9 = arith.extui %8 : vector<32x14xi1> to vector<32x14xi32>
    %10 = arith.sitofp %9 : vector<32x14xi32> to vector<32x14xf32>
    %c0_3 = arith.constant 0 : index
    %c0_4 = arith.constant 0 : index
    %11 = vector.load %arg3[%c0_3, %c0_4] : memref<14x256xf32, #tpu.memory_space<vmem>>, vector<14x256xf32>
    %cst = arith.constant dense<0.000000e+00> : vector<32x256xf32>
    %12 = tpu.matmul %5, %11, %cst {dimension_numbers = #tpu.dot_dimension_numbers<[1], [0], [0], [1], [0, 0, 1, 1], [], []>} : vector<32x14xf32>, vector<14x256xf32>, vector<32x256xf32> -> vector<32x256xf32>
    %c0_5 = arith.constant 0 : index
    %c0_6 = arith.constant 0 : index
    %13 = vector.load %arg4[%c0_5, %c0_6] : memref<14x256xf32, #tpu.memory_space<vmem>>, vector<14x256xf32>
    %cst_7 = arith.constant dense<0.000000e+00> : vector<32x256xf32>
    %14 = tpu.matmul %10, %13, %cst_7 {dimension_numbers = #tpu.dot_dimension_numbers<[1], [0], [0], [1], [0, 0, 1, 1], [], []>} : vector<32x14xf32>, vector<14x256xf32>, vector<32x256xf32> -> vector<32x256xf32>
    %15 = arith.addf %12, %14 : vector<32x256xf32>
    %c0_8 = arith.constant 0 : index
    %c0_9 = arith.constant 0 : index
    %16 = vector.load %arg5[%c0_8, %c0_9] : memref<1x256xf32, #tpu.memory_space<vmem>>, vector<1x256xf32>
    %17 = vector.broadcast %16 : vector<1x256xf32> to vector<32x256xf32>
    %18 = arith.addf %15, %17 : vector<32x256xf32>
    %c0_10 = arith.constant 0 : index
    %c0_11 = arith.constant 0 : index
    %19 = vector.load %arg6[%c0_10, %c0_11] : memref<64x256xf32, #tpu.memory_space<vmem>>, vector<64x256xf32>
    %cst_12 = arith.constant 0.000000e+00 : f32
    %20 = vector.broadcast %cst_12 : f32 to vector<4x64xf32>
    %cst_13 = arith.constant 0.000000e+00 : f32
    %21 = vector.broadcast %cst_13 : f32 to vector<4x64xf32>
    %22 = vector.extract_strided_slice %18 {offsets = [0, 0], sizes = [4, 256], strides = [1, 1]} : vector<32x256xf32> to vector<4x256xf32>
    %cst_14 = arith.constant dense<0.000000e+00> : vector<4x256xf32>
    %23 = tpu.matmul %20, %19, %cst_14 {dimension_numbers = #tpu.dot_dimension_numbers<[1], [0], [0], [1], [0, 0, 1, 1], [], []>} : vector<4x64xf32>, vector<64x256xf32>, vector<4x256xf32> -> vector<4x256xf32>
    %24 = arith.addf %22, %23 : vector<4x256xf32>
    %25 = vector.extract_strided_slice %24 {offsets = [0, 0], sizes = [4, 64], strides = [1, 1]} : vector<4x256xf32> to vector<4x64xf32>
    %26 = arith.negf %25 : vector<4x64xf32>
    %27 = math.exp %26 : vector<4x64xf32>
    %cst_15 = arith.constant 1.000000e+00 : f32
    %28 = vector.broadcast %cst_15 : f32 to vector<4x64xf32>
    %29 = arith.addf %28, %27 : vector<4x64xf32>
    %30 = arith.divf %28, %29 : vector<4x64xf32>
    %31 = vector.extract_strided_slice %24 {offsets = [0, 64], sizes = [4, 64], strides = [1, 1]} : vector<4x256xf32> to vector<4x64xf32>
    %32 = arith.negf %31 : vector<4x64xf32>
    %33 = math.exp %32 : vector<4x64xf32>
    %cst_16 = arith.constant 1.000000e+00 : f32
    %34 = vector.broadcast %cst_16 : f32 to vector<4x64xf32>
    %35 = arith.addf %34, %33 : vector<4x64xf32>
    %36 = arith.divf %34, %35 : vector<4x64xf32>
    %37 = vector.extract_strided_slice %24 {offsets = [0, 128], sizes = [4, 64], strides = [1, 1]} : vector<4x256xf32> to vector<4x64xf32>
    %38 = math.tanh %37 : vector<4x64xf32>
    %39 = vector.extract_strided_slice %24 {offsets = [0, 192], sizes = [4, 64], strides = [1, 1]} : vector<4x256xf32> to vector<4x64xf32>
    %40 = arith.negf %39 : vector<4x64xf32>
    %41 = math.exp %40 : vector<4x64xf32>
    %cst_17 = arith.constant 1.000000e+00 : f32
    %42 = vector.broadcast %cst_17 : f32 to vector<4x64xf32>
    %43 = arith.addf %42, %41 : vector<4x64xf32>
    %44 = arith.divf %42, %43 : vector<4x64xf32>
    %45 = arith.mulf %36, %21 : vector<4x64xf32>
    %46 = arith.mulf %30, %38 : vector<4x64xf32>
    %47 = arith.addf %45, %46 : vector<4x64xf32>
    %48 = math.tanh %47 : vector<4x64xf32>
    %49 = arith.mulf %44, %48 : vector<4x64xf32>
    %50 = vector.extract_strided_slice %18 {offsets = [4, 0], sizes = [4, 256], strides = [1, 1]} : vector<32x256xf32> to vector<4x256xf32>
    %cst_18 = arith.constant dense<0.000000e+00> : vector<4x256xf32>
    %51 = tpu.matmul %49, %19, %cst_18 {dimension_numbers = #tpu.dot_dimension_numbers<[1], [0], [0], [1], [0, 0, 1, 1], [], []>} : vector<4x64xf32>, vector<64x256xf32>, vector<4x256xf32> -> vector<4x256xf32>
    %52 = arith.addf %50, %51 : vector<4x256xf32>
    %53 = vector.extract_strided_slice %52 {offsets = [0, 0], sizes = [4, 64], strides = [1, 1]} : vector<4x256xf32> to vector<4x64xf32>
    %54 = arith.negf %53 : vector<4x64xf32>
    %55 = math.exp %54 : vector<4x64xf32>
    %cst_19 = arith.constant 1.000000e+00 : f32
    %56 = vector.broadcast %cst_19 : f32 to vector<4x64xf32>
    %57 = arith.addf %56, %55 : vector<4x64xf32>
    %58 = arith.divf %56, %57 : vector<4x64xf32>
    %59 = vector.extract_strided_slice %52 {offsets = [0, 64], sizes = [4, 64], strides = [1, 1]} : vector<4x256xf32> to vector<4x64xf32>
    %60 = arith.negf %59 : vector<4x64xf32>
    %61 = math.exp %60 : vector<4x64xf32>
    %cst_20 = arith.constant 1.000000e+00 : f32
    %62 = vector.broadcast %cst_20 : f32 to vector<4x64xf32>
    %63 = arith.addf %62, %61 : vector<4x64xf32>
    %64 = arith.divf %62, %63 : vector<4x64xf32>
    %65 = vector.extract_strided_slice %52 {offsets = [0, 128], sizes = [4, 64], strides = [1, 1]} : vector<4x256xf32> to vector<4x64xf32>
    %66 = math.tanh %65 : vector<4x64xf32>
    %67 = vector.extract_strided_slice %52 {offsets = [0, 192], sizes = [4, 64], strides = [1, 1]} : vector<4x256xf32> to vector<4x64xf32>
    %68 = arith.negf %67 : vector<4x64xf32>
    %69 = math.exp %68 : vector<4x64xf32>
    %cst_21 = arith.constant 1.000000e+00 : f32
    %70 = vector.broadcast %cst_21 : f32 to vector<4x64xf32>
    %71 = arith.addf %70, %69 : vector<4x64xf32>
    %72 = arith.divf %70, %71 : vector<4x64xf32>
    %73 = arith.mulf %64, %47 : vector<4x64xf32>
    %74 = arith.mulf %58, %66 : vector<4x64xf32>
    %75 = arith.addf %73, %74 : vector<4x64xf32>
    %76 = math.tanh %75 : vector<4x64xf32>
    %77 = arith.mulf %72, %76 : vector<4x64xf32>
    %78 = vector.extract_strided_slice %18 {offsets = [8, 0], sizes = [4, 256], strides = [1, 1]} : vector<32x256xf32> to vector<4x256xf32>
    %cst_22 = arith.constant dense<0.000000e+00> : vector<4x256xf32>
    %79 = tpu.matmul %77, %19, %cst_22 {dimension_numbers = #tpu.dot_dimension_numbers<[1], [0], [0], [1], [0, 0, 1, 1], [], []>} : vector<4x64xf32>, vector<64x256xf32>, vector<4x256xf32> -> vector<4x256xf32>
    %80 = arith.addf %78, %79 : vector<4x256xf32>
    %81 = vector.extract_strided_slice %80 {offsets = [0, 0], sizes = [4, 64], strides = [1, 1]} : vector<4x256xf32> to vector<4x64xf32>
    %82 = arith.negf %81 : vector<4x64xf32>
    %83 = math.exp %82 : vector<4x64xf32>
    %cst_23 = arith.constant 1.000000e+00 : f32
    %84 = vector.broadcast %cst_23 : f32 to vector<4x64xf32>
    %85 = arith.addf %84, %83 : vector<4x64xf32>
    %86 = arith.divf %84, %85 : vector<4x64xf32>
    %87 = vector.extract_strided_slice %80 {offsets = [0, 64], sizes = [4, 64], strides = [1, 1]} : vector<4x256xf32> to vector<4x64xf32>
    %88 = arith.negf %87 : vector<4x64xf32>
    %89 = math.exp %88 : vector<4x64xf32>
    %cst_24 = arith.constant 1.000000e+00 : f32
    %90 = vector.broadcast %cst_24 : f32 to vector<4x64xf32>
    %91 = arith.addf %90, %89 : vector<4x64xf32>
    %92 = arith.divf %90, %91 : vector<4x64xf32>
    %93 = vector.extract_strided_slice %80 {offsets = [0, 128], sizes = [4, 64], strides = [1, 1]} : vector<4x256xf32> to vector<4x64xf32>
    %94 = math.tanh %93 : vector<4x64xf32>
    %95 = vector.extract_strided_slice %80 {offsets = [0, 192], sizes = [4, 64], strides = [1, 1]} : vector<4x256xf32> to vector<4x64xf32>
    %96 = arith.negf %95 : vector<4x64xf32>
    %97 = math.exp %96 : vector<4x64xf32>
    %cst_25 = arith.constant 1.000000e+00 : f32
    %98 = vector.broadcast %cst_25 : f32 to vector<4x64xf32>
    %99 = arith.addf %98, %97 : vector<4x64xf32>
    %100 = arith.divf %98, %99 : vector<4x64xf32>
    %101 = arith.mulf %92, %75 : vector<4x64xf32>
    %102 = arith.mulf %86, %94 : vector<4x64xf32>
    %103 = arith.addf %101, %102 : vector<4x64xf32>
    %104 = math.tanh %103 : vector<4x64xf32>
    %105 = arith.mulf %100, %104 : vector<4x64xf32>
    %106 = vector.extract_strided_slice %18 {offsets = [12, 0], sizes = [4, 256], strides = [1, 1]} : vector<32x256xf32> to vector<4x256xf32>
    %cst_26 = arith.constant dense<0.000000e+00> : vector<4x256xf32>
    %107 = tpu.matmul %105, %19, %cst_26 {dimension_numbers = #tpu.dot_dimension_numbers<[1], [0], [0], [1], [0, 0, 1, 1], [], []>} : vector<4x64xf32>, vector<64x256xf32>, vector<4x256xf32> -> vector<4x256xf32>
    %108 = arith.addf %106, %107 : vector<4x256xf32>
    %109 = vector.extract_strided_slice %108 {offsets = [0, 0], sizes = [4, 64], strides = [1, 1]} : vector<4x256xf32> to vector<4x64xf32>
    %110 = arith.negf %109 : vector<4x64xf32>
    %111 = math.exp %110 : vector<4x64xf32>
    %cst_27 = arith.constant 1.000000e+00 : f32
    %112 = vector.broadcast %cst_27 : f32 to vector<4x64xf32>
    %113 = arith.addf %112, %111 : vector<4x64xf32>
    %114 = arith.divf %112, %113 : vector<4x64xf32>
    %115 = vector.extract_strided_slice %108 {offsets = [0, 64], sizes = [4, 64], strides = [1, 1]} : vector<4x256xf32> to vector<4x64xf32>
    %116 = arith.negf %115 : vector<4x64xf32>
    %117 = math.exp %116 : vector<4x64xf32>
    %cst_28 = arith.constant 1.000000e+00 : f32
    %118 = vector.broadcast %cst_28 : f32 to vector<4x64xf32>
    %119 = arith.addf %118, %117 : vector<4x64xf32>
    %120 = arith.divf %118, %119 : vector<4x64xf32>
    %121 = vector.extract_strided_slice %108 {offsets = [0, 128], sizes = [4, 64], strides = [1, 1]} : vector<4x256xf32> to vector<4x64xf32>
    %122 = math.tanh %121 : vector<4x64xf32>
    %123 = vector.extract_strided_slice %108 {offsets = [0, 192], sizes = [4, 64], strides = [1, 1]} : vector<4x256xf32> to vector<4x64xf32>
    %124 = arith.negf %123 : vector<4x64xf32>
    %125 = math.exp %124 : vector<4x64xf32>
    %cst_29 = arith.constant 1.000000e+00 : f32
    %126 = vector.broadcast %cst_29 : f32 to vector<4x64xf32>
    %127 = arith.addf %126, %125 : vector<4x64xf32>
    %128 = arith.divf %126, %127 : vector<4x64xf32>
    %129 = arith.mulf %120, %103 : vector<4x64xf32>
    %130 = arith.mulf %114, %122 : vector<4x64xf32>
    %131 = arith.addf %129, %130 : vector<4x64xf32>
    %132 = math.tanh %131 : vector<4x64xf32>
    %133 = arith.mulf %128, %132 : vector<4x64xf32>
    %134 = vector.extract_strided_slice %18 {offsets = [16, 0], sizes = [4, 256], strides = [1, 1]} : vector<32x256xf32> to vector<4x256xf32>
    %cst_30 = arith.constant dense<0.000000e+00> : vector<4x256xf32>
    %135 = tpu.matmul %133, %19, %cst_30 {dimension_numbers = #tpu.dot_dimension_numbers<[1], [0], [0], [1], [0, 0, 1, 1], [], []>} : vector<4x64xf32>, vector<64x256xf32>, vector<4x256xf32> -> vector<4x256xf32>
    %136 = arith.addf %134, %135 : vector<4x256xf32>
    %137 = vector.extract_strided_slice %136 {offsets = [0, 0], sizes = [4, 64], strides = [1, 1]} : vector<4x256xf32> to vector<4x64xf32>
    %138 = arith.negf %137 : vector<4x64xf32>
    %139 = math.exp %138 : vector<4x64xf32>
    %cst_31 = arith.constant 1.000000e+00 : f32
    %140 = vector.broadcast %cst_31 : f32 to vector<4x64xf32>
    %141 = arith.addf %140, %139 : vector<4x64xf32>
    %142 = arith.divf %140, %141 : vector<4x64xf32>
    %143 = vector.extract_strided_slice %136 {offsets = [0, 64], sizes = [4, 64], strides = [1, 1]} : vector<4x256xf32> to vector<4x64xf32>
    %144 = arith.negf %143 : vector<4x64xf32>
    %145 = math.exp %144 : vector<4x64xf32>
    %cst_32 = arith.constant 1.000000e+00 : f32
    %146 = vector.broadcast %cst_32 : f32 to vector<4x64xf32>
    %147 = arith.addf %146, %145 : vector<4x64xf32>
    %148 = arith.divf %146, %147 : vector<4x64xf32>
    %149 = vector.extract_strided_slice %136 {offsets = [0, 128], sizes = [4, 64], strides = [1, 1]} : vector<4x256xf32> to vector<4x64xf32>
    %150 = math.tanh %149 : vector<4x64xf32>
    %151 = vector.extract_strided_slice %136 {offsets = [0, 192], sizes = [4, 64], strides = [1, 1]} : vector<4x256xf32> to vector<4x64xf32>
    %152 = arith.negf %151 : vector<4x64xf32>
    %153 = math.exp %152 : vector<4x64xf32>
    %cst_33 = arith.constant 1.000000e+00 : f32
    %154 = vector.broadcast %cst_33 : f32 to vector<4x64xf32>
    %155 = arith.addf %154, %153 : vector<4x64xf32>
    %156 = arith.divf %154, %155 : vector<4x64xf32>
    %157 = arith.mulf %148, %131 : vector<4x64xf32>
    %158 = arith.mulf %142, %150 : vector<4x64xf32>
    %159 = arith.addf %157, %158 : vector<4x64xf32>
    %160 = math.tanh %159 : vector<4x64xf32>
    %161 = arith.mulf %156, %160 : vector<4x64xf32>
    %162 = vector.extract_strided_slice %18 {offsets = [20, 0], sizes = [4, 256], strides = [1, 1]} : vector<32x256xf32> to vector<4x256xf32>
    %cst_34 = arith.constant dense<0.000000e+00> : vector<4x256xf32>
    %163 = tpu.matmul %161, %19, %cst_34 {dimension_numbers = #tpu.dot_dimension_numbers<[1], [0], [0], [1], [0, 0, 1, 1], [], []>} : vector<4x64xf32>, vector<64x256xf32>, vector<4x256xf32> -> vector<4x256xf32>
    %164 = arith.addf %162, %163 : vector<4x256xf32>
    %165 = vector.extract_strided_slice %164 {offsets = [0, 0], sizes = [4, 64], strides = [1, 1]} : vector<4x256xf32> to vector<4x64xf32>
    %166 = arith.negf %165 : vector<4x64xf32>
    %167 = math.exp %166 : vector<4x64xf32>
    %cst_35 = arith.constant 1.000000e+00 : f32
    %168 = vector.broadcast %cst_35 : f32 to vector<4x64xf32>
    %169 = arith.addf %168, %167 : vector<4x64xf32>
    %170 = arith.divf %168, %169 : vector<4x64xf32>
    %171 = vector.extract_strided_slice %164 {offsets = [0, 64], sizes = [4, 64], strides = [1, 1]} : vector<4x256xf32> to vector<4x64xf32>
    %172 = arith.negf %171 : vector<4x64xf32>
    %173 = math.exp %172 : vector<4x64xf32>
    %cst_36 = arith.constant 1.000000e+00 : f32
    %174 = vector.broadcast %cst_36 : f32 to vector<4x64xf32>
    %175 = arith.addf %174, %173 : vector<4x64xf32>
    %176 = arith.divf %174, %175 : vector<4x64xf32>
    %177 = vector.extract_strided_slice %164 {offsets = [0, 128], sizes = [4, 64], strides = [1, 1]} : vector<4x256xf32> to vector<4x64xf32>
    %178 = math.tanh %177 : vector<4x64xf32>
    %179 = vector.extract_strided_slice %164 {offsets = [0, 192], sizes = [4, 64], strides = [1, 1]} : vector<4x256xf32> to vector<4x64xf32>
    %180 = arith.negf %179 : vector<4x64xf32>
    %181 = math.exp %180 : vector<4x64xf32>
    %cst_37 = arith.constant 1.000000e+00 : f32
    %182 = vector.broadcast %cst_37 : f32 to vector<4x64xf32>
    %183 = arith.addf %182, %181 : vector<4x64xf32>
    %184 = arith.divf %182, %183 : vector<4x64xf32>
    %185 = arith.mulf %176, %159 : vector<4x64xf32>
    %186 = arith.mulf %170, %178 : vector<4x64xf32>
    %187 = arith.addf %185, %186 : vector<4x64xf32>
    %188 = math.tanh %187 : vector<4x64xf32>
    %189 = arith.mulf %184, %188 : vector<4x64xf32>
    %190 = vector.extract_strided_slice %18 {offsets = [24, 0], sizes = [4, 256], strides = [1, 1]} : vector<32x256xf32> to vector<4x256xf32>
    %cst_38 = arith.constant dense<0.000000e+00> : vector<4x256xf32>
    %191 = tpu.matmul %189, %19, %cst_38 {dimension_numbers = #tpu.dot_dimension_numbers<[1], [0], [0], [1], [0, 0, 1, 1], [], []>} : vector<4x64xf32>, vector<64x256xf32>, vector<4x256xf32> -> vector<4x256xf32>
    %192 = arith.addf %190, %191 : vector<4x256xf32>
    %193 = vector.extract_strided_slice %192 {offsets = [0, 0], sizes = [4, 64], strides = [1, 1]} : vector<4x256xf32> to vector<4x64xf32>
    %194 = arith.negf %193 : vector<4x64xf32>
    %195 = math.exp %194 : vector<4x64xf32>
    %cst_39 = arith.constant 1.000000e+00 : f32
    %196 = vector.broadcast %cst_39 : f32 to vector<4x64xf32>
    %197 = arith.addf %196, %195 : vector<4x64xf32>
    %198 = arith.divf %196, %197 : vector<4x64xf32>
    %199 = vector.extract_strided_slice %192 {offsets = [0, 64], sizes = [4, 64], strides = [1, 1]} : vector<4x256xf32> to vector<4x64xf32>
    %200 = arith.negf %199 : vector<4x64xf32>
    %201 = math.exp %200 : vector<4x64xf32>
    %cst_40 = arith.constant 1.000000e+00 : f32
    %202 = vector.broadcast %cst_40 : f32 to vector<4x64xf32>
    %203 = arith.addf %202, %201 : vector<4x64xf32>
    %204 = arith.divf %202, %203 : vector<4x64xf32>
    %205 = vector.extract_strided_slice %192 {offsets = [0, 128], sizes = [4, 64], strides = [1, 1]} : vector<4x256xf32> to vector<4x64xf32>
    %206 = math.tanh %205 : vector<4x64xf32>
    %207 = vector.extract_strided_slice %192 {offsets = [0, 192], sizes = [4, 64], strides = [1, 1]} : vector<4x256xf32> to vector<4x64xf32>
    %208 = arith.negf %207 : vector<4x64xf32>
    %209 = math.exp %208 : vector<4x64xf32>
    %cst_41 = arith.constant 1.000000e+00 : f32
    %210 = vector.broadcast %cst_41 : f32 to vector<4x64xf32>
    %211 = arith.addf %210, %209 : vector<4x64xf32>
    %212 = arith.divf %210, %211 : vector<4x64xf32>
    %213 = arith.mulf %204, %187 : vector<4x64xf32>
    %214 = arith.mulf %198, %206 : vector<4x64xf32>
    %215 = arith.addf %213, %214 : vector<4x64xf32>
    %216 = math.tanh %215 : vector<4x64xf32>
    %217 = arith.mulf %212, %216 : vector<4x64xf32>
    %218 = vector.extract_strided_slice %18 {offsets = [28, 0], sizes = [4, 256], strides = [1, 1]} : vector<32x256xf32> to vector<4x256xf32>
    %cst_42 = arith.constant dense<0.000000e+00> : vector<4x256xf32>
    %219 = tpu.matmul %217, %19, %cst_42 {dimension_numbers = #tpu.dot_dimension_numbers<[1], [0], [0], [1], [0, 0, 1, 1], [], []>} : vector<4x64xf32>, vector<64x256xf32>, vector<4x256xf32> -> vector<4x256xf32>
    %220 = arith.addf %218, %219 : vector<4x256xf32>
    %221 = vector.extract_strided_slice %220 {offsets = [0, 0], sizes = [4, 64], strides = [1, 1]} : vector<4x256xf32> to vector<4x64xf32>
    %222 = arith.negf %221 : vector<4x64xf32>
    %223 = math.exp %222 : vector<4x64xf32>
    %cst_43 = arith.constant 1.000000e+00 : f32
    %224 = vector.broadcast %cst_43 : f32 to vector<4x64xf32>
    %225 = arith.addf %224, %223 : vector<4x64xf32>
    %226 = arith.divf %224, %225 : vector<4x64xf32>
    %227 = vector.extract_strided_slice %220 {offsets = [0, 64], sizes = [4, 64], strides = [1, 1]} : vector<4x256xf32> to vector<4x64xf32>
    %228 = arith.negf %227 : vector<4x64xf32>
    %229 = math.exp %228 : vector<4x64xf32>
    %cst_44 = arith.constant 1.000000e+00 : f32
    %230 = vector.broadcast %cst_44 : f32 to vector<4x64xf32>
    %231 = arith.addf %230, %229 : vector<4x64xf32>
    %232 = arith.divf %230, %231 : vector<4x64xf32>
    %233 = vector.extract_strided_slice %220 {offsets = [0, 128], sizes = [4, 64], strides = [1, 1]} : vector<4x256xf32> to vector<4x64xf32>
    %234 = math.tanh %233 : vector<4x64xf32>
    %235 = vector.extract_strided_slice %220 {offsets = [0, 192], sizes = [4, 64], strides = [1, 1]} : vector<4x256xf32> to vector<4x64xf32>
    %236 = arith.negf %235 : vector<4x64xf32>
    %237 = math.exp %236 : vector<4x64xf32>
    %cst_45 = arith.constant 1.000000e+00 : f32
    %238 = vector.broadcast %cst_45 : f32 to vector<4x64xf32>
    %239 = arith.addf %238, %237 : vector<4x64xf32>
    %240 = arith.divf %238, %239 : vector<4x64xf32>
    %241 = arith.mulf %232, %215 : vector<4x64xf32>
    %242 = arith.mulf %226, %234 : vector<4x64xf32>
    %243 = arith.addf %241, %242 : vector<4x64xf32>
    %244 = math.tanh %243 : vector<4x64xf32>
    %245 = arith.mulf %240, %244 : vector<4x64xf32>
    %246 = vector.extract_strided_slice %49 {offsets = [0, 0], sizes = [4, 32], strides = [1, 1]} : vector<4x64xf32> to vector<4x32xf32>
    %247 = vector.extract_strided_slice %77 {offsets = [0, 0], sizes = [4, 32], strides = [1, 1]} : vector<4x64xf32> to vector<4x32xf32>
    %248 = vector.extract_strided_slice %105 {offsets = [0, 0], sizes = [4, 32], strides = [1, 1]} : vector<4x64xf32> to vector<4x32xf32>
    %249 = vector.extract_strided_slice %133 {offsets = [0, 0], sizes = [4, 32], strides = [1, 1]} : vector<4x64xf32> to vector<4x32xf32>
    %250 = vector.extract_strided_slice %161 {offsets = [0, 0], sizes = [4, 32], strides = [1, 1]} : vector<4x64xf32> to vector<4x32xf32>
    %251 = vector.extract_strided_slice %189 {offsets = [0, 0], sizes = [4, 32], strides = [1, 1]} : vector<4x64xf32> to vector<4x32xf32>
    %252 = vector.extract_strided_slice %217 {offsets = [0, 0], sizes = [4, 32], strides = [1, 1]} : vector<4x64xf32> to vector<4x32xf32>
    %253 = vector.extract_strided_slice %245 {offsets = [0, 0], sizes = [4, 32], strides = [1, 1]} : vector<4x64xf32> to vector<4x32xf32>
    %254 = tpu.concatenate %246, %247, %248, %249, %250, %251, %252, %253 in 0 : vector<4x32xf32>, vector<4x32xf32>, vector<4x32xf32>, vector<4x32xf32>, vector<4x32xf32>, vector<4x32xf32>, vector<4x32xf32>, vector<4x32xf32> -> vector<32x32xf32>
    %255 = vector.extract_strided_slice %245 {offsets = [0, 32], sizes = [4, 32], strides = [1, 1]} : vector<4x64xf32> to vector<4x32xf32>
    %256 = vector.extract_strided_slice %217 {offsets = [0, 32], sizes = [4, 32], strides = [1, 1]} : vector<4x64xf32> to vector<4x32xf32>
    %257 = vector.extract_strided_slice %189 {offsets = [0, 32], sizes = [4, 32], strides = [1, 1]} : vector<4x64xf32> to vector<4x32xf32>
    %258 = vector.extract_strided_slice %161 {offsets = [0, 32], sizes = [4, 32], strides = [1, 1]} : vector<4x64xf32> to vector<4x32xf32>
    %259 = vector.extract_strided_slice %133 {offsets = [0, 32], sizes = [4, 32], strides = [1, 1]} : vector<4x64xf32> to vector<4x32xf32>
    %260 = vector.extract_strided_slice %105 {offsets = [0, 32], sizes = [4, 32], strides = [1, 1]} : vector<4x64xf32> to vector<4x32xf32>
    %261 = vector.extract_strided_slice %77 {offsets = [0, 32], sizes = [4, 32], strides = [1, 1]} : vector<4x64xf32> to vector<4x32xf32>
    %262 = vector.extract_strided_slice %49 {offsets = [0, 32], sizes = [4, 32], strides = [1, 1]} : vector<4x64xf32> to vector<4x32xf32>
    %263 = tpu.concatenate %255, %256, %257, %258, %259, %260, %261, %262 in 0 : vector<4x32xf32>, vector<4x32xf32>, vector<4x32xf32>, vector<4x32xf32>, vector<4x32xf32>, vector<4x32xf32>, vector<4x32xf32>, vector<4x32xf32> -> vector<32x32xf32>
    %c0_46 = arith.constant 0 : index
    %c0_47 = arith.constant 0 : index
    %264 = vector.load %arg7[%c0_46, %c0_47] : memref<32x7xf32, #tpu.memory_space<vmem>>, vector<32x7xf32>
    %cst_48 = arith.constant dense<0.000000e+00> : vector<32x7xf32>
    %265 = tpu.matmul %254, %264, %cst_48 {dimension_numbers = #tpu.dot_dimension_numbers<[1], [0], [0], [1], [0, 0, 1, 1], [], []>} : vector<32x32xf32>, vector<32x7xf32>, vector<32x7xf32> -> vector<32x7xf32>
    %c0_49 = arith.constant 0 : index
    %c0_50 = arith.constant 0 : index
    %266 = vector.load %arg8[%c0_49, %c0_50] : memref<32x7xf32, #tpu.memory_space<vmem>>, vector<32x7xf32>
    %cst_51 = arith.constant dense<0.000000e+00> : vector<32x7xf32>
    %267 = tpu.matmul %263, %266, %cst_51 {dimension_numbers = #tpu.dot_dimension_numbers<[1], [0], [0], [1], [0, 0, 1, 1], [], []>} : vector<32x32xf32>, vector<32x7xf32>, vector<32x7xf32> -> vector<32x7xf32>
    %268 = arith.addf %265, %267 : vector<32x7xf32>
    %c0_52 = arith.constant 0 : index
    %c0_53 = arith.constant 0 : index
    %269 = vector.load %arg9[%c0_52, %c0_53] : memref<1x7xf32, #tpu.memory_space<vmem>>, vector<1x7xf32>
    %270 = vector.broadcast %269 : vector<1x7xf32> to vector<32x7xf32>
    %271 = arith.addf %268, %270 : vector<32x7xf32>
    %c0_54 = arith.constant 0 : index
    %c0_55 = arith.constant 0 : index
    %272 = vector.load %arg12[%c0_54, %c0_55] : memref<7x7xf32, #tpu.memory_space<vmem>>, vector<7x7xf32>
    %c0_56 = arith.constant 0 : index
    %c0_57 = arith.constant 0 : index
    %273 = vector.load %arg10[%c0_56, %c0_57] : memref<1x7xf32, #tpu.memory_space<vmem>>, vector<1x7xf32>
    %c0_58 = arith.constant 0 : index
    %c0_59 = arith.constant 0 : index
    %274 = vector.load %arg11[%c0_58, %c0_59] : memref<1x7xf32, #tpu.memory_space<vmem>>, vector<1x7xf32>
    %275 = vector.shape_cast %272 : vector<7x7xf32> to vector<1x7x7xf32>
    %276 = vector.shape_cast %275 : vector<1x7x7xf32> to vector<1x7x7xf32>
    %277 = vector.broadcast %276 : vector<1x7x7xf32> to vector<4x7x7xf32>
    %278 = tpu.iota {dimensions = array<i32: 2>} : vector<4x7x7xi32>
    %279 = tpu.iota {dimensions = array<i32: 1>} : vector<4x7xi32>
    %280 = vector.extract_strided_slice %271 {offsets = [0, 0], sizes = [4, 7], strides = [1, 1]} : vector<32x7xf32> to vector<4x7xf32>
    %281 = vector.broadcast %273 : vector<1x7xf32> to vector<4x7xf32>
    %282 = arith.addf %281, %280 : vector<4x7xf32>
    %283 = vector.shape_cast %282 : vector<4x7xf32> to vector<4x1x7xf32>
    %284 = vector.broadcast %283 : vector<4x1x7xf32> to vector<4x7x7xf32>
    %285 = arith.addf %284, %277 : vector<4x7x7xf32>
    %cst_60 = arith.constant dense<0xFF800000> : vector<4x7xf32>
    %286 = vector.multi_reduction <maximumf>, %285, %cst_60 [2] : vector<4x7x7xf32> to vector<4x7xf32>
    %287 = vector.shape_cast %286 : vector<4x7xf32> to vector<4x7x1xf32>
    %288 = vector.broadcast %287 : vector<4x7x1xf32> to vector<4x7x7xf32>
    %289 = arith.cmpf oeq, %285, %288 : vector<4x7x7xf32>
    %c1073741824_i32 = arith.constant 1073741824 : i32
    %290 = vector.broadcast %c1073741824_i32 : i32 to vector<4x7x7xi32>
    %291 = arith.select %289, %278, %290 : vector<4x7x7xi1>, vector<4x7x7xi32>
    %cst_61 = arith.constant dense<2147483647> : vector<4x7xi32>
    %292 = vector.multi_reduction <minsi>, %291, %cst_61 [2] : vector<4x7x7xi32> to vector<4x7xi32>
    %293 = vector.extract_strided_slice %271 {offsets = [4, 0], sizes = [4, 7], strides = [1, 1]} : vector<32x7xf32> to vector<4x7xf32>
    %294 = arith.addf %286, %293 : vector<4x7xf32>
    %295 = vector.shape_cast %294 : vector<4x7xf32> to vector<4x1x7xf32>
    %296 = vector.broadcast %295 : vector<4x1x7xf32> to vector<4x7x7xf32>
    %297 = arith.addf %296, %277 : vector<4x7x7xf32>
    %cst_62 = arith.constant dense<0xFF800000> : vector<4x7xf32>
    %298 = vector.multi_reduction <maximumf>, %297, %cst_62 [2] : vector<4x7x7xf32> to vector<4x7xf32>
    %299 = vector.shape_cast %298 : vector<4x7xf32> to vector<4x7x1xf32>
    %300 = vector.broadcast %299 : vector<4x7x1xf32> to vector<4x7x7xf32>
    %301 = arith.cmpf oeq, %297, %300 : vector<4x7x7xf32>
    %c1073741824_i32_63 = arith.constant 1073741824 : i32
    %302 = vector.broadcast %c1073741824_i32_63 : i32 to vector<4x7x7xi32>
    %303 = arith.select %301, %278, %302 : vector<4x7x7xi1>, vector<4x7x7xi32>
    %cst_64 = arith.constant dense<2147483647> : vector<4x7xi32>
    %304 = vector.multi_reduction <minsi>, %303, %cst_64 [2] : vector<4x7x7xi32> to vector<4x7xi32>
    %305 = vector.extract_strided_slice %271 {offsets = [8, 0], sizes = [4, 7], strides = [1, 1]} : vector<32x7xf32> to vector<4x7xf32>
    %306 = arith.addf %298, %305 : vector<4x7xf32>
    %307 = vector.shape_cast %306 : vector<4x7xf32> to vector<4x1x7xf32>
    %308 = vector.broadcast %307 : vector<4x1x7xf32> to vector<4x7x7xf32>
    %309 = arith.addf %308, %277 : vector<4x7x7xf32>
    %cst_65 = arith.constant dense<0xFF800000> : vector<4x7xf32>
    %310 = vector.multi_reduction <maximumf>, %309, %cst_65 [2] : vector<4x7x7xf32> to vector<4x7xf32>
    %311 = vector.shape_cast %310 : vector<4x7xf32> to vector<4x7x1xf32>
    %312 = vector.broadcast %311 : vector<4x7x1xf32> to vector<4x7x7xf32>
    %313 = arith.cmpf oeq, %309, %312 : vector<4x7x7xf32>
    %c1073741824_i32_66 = arith.constant 1073741824 : i32
    %314 = vector.broadcast %c1073741824_i32_66 : i32 to vector<4x7x7xi32>
    %315 = arith.select %313, %278, %314 : vector<4x7x7xi1>, vector<4x7x7xi32>
    %cst_67 = arith.constant dense<2147483647> : vector<4x7xi32>
    %316 = vector.multi_reduction <minsi>, %315, %cst_67 [2] : vector<4x7x7xi32> to vector<4x7xi32>
    %317 = vector.extract_strided_slice %271 {offsets = [12, 0], sizes = [4, 7], strides = [1, 1]} : vector<32x7xf32> to vector<4x7xf32>
    %318 = arith.addf %310, %317 : vector<4x7xf32>
    %319 = vector.shape_cast %318 : vector<4x7xf32> to vector<4x1x7xf32>
    %320 = vector.broadcast %319 : vector<4x1x7xf32> to vector<4x7x7xf32>
    %321 = arith.addf %320, %277 : vector<4x7x7xf32>
    %cst_68 = arith.constant dense<0xFF800000> : vector<4x7xf32>
    %322 = vector.multi_reduction <maximumf>, %321, %cst_68 [2] : vector<4x7x7xf32> to vector<4x7xf32>
    %323 = vector.shape_cast %322 : vector<4x7xf32> to vector<4x7x1xf32>
    %324 = vector.broadcast %323 : vector<4x7x1xf32> to vector<4x7x7xf32>
    %325 = arith.cmpf oeq, %321, %324 : vector<4x7x7xf32>
    %c1073741824_i32_69 = arith.constant 1073741824 : i32
    %326 = vector.broadcast %c1073741824_i32_69 : i32 to vector<4x7x7xi32>
    %327 = arith.select %325, %278, %326 : vector<4x7x7xi1>, vector<4x7x7xi32>
    %cst_70 = arith.constant dense<2147483647> : vector<4x7xi32>
    %328 = vector.multi_reduction <minsi>, %327, %cst_70 [2] : vector<4x7x7xi32> to vector<4x7xi32>
    %329 = vector.extract_strided_slice %271 {offsets = [16, 0], sizes = [4, 7], strides = [1, 1]} : vector<32x7xf32> to vector<4x7xf32>
    %330 = arith.addf %322, %329 : vector<4x7xf32>
    %331 = vector.shape_cast %330 : vector<4x7xf32> to vector<4x1x7xf32>
    %332 = vector.broadcast %331 : vector<4x1x7xf32> to vector<4x7x7xf32>
    %333 = arith.addf %332, %277 : vector<4x7x7xf32>
    %cst_71 = arith.constant dense<0xFF800000> : vector<4x7xf32>
    %334 = vector.multi_reduction <maximumf>, %333, %cst_71 [2] : vector<4x7x7xf32> to vector<4x7xf32>
    %335 = vector.shape_cast %334 : vector<4x7xf32> to vector<4x7x1xf32>
    %336 = vector.broadcast %335 : vector<4x7x1xf32> to vector<4x7x7xf32>
    %337 = arith.cmpf oeq, %333, %336 : vector<4x7x7xf32>
    %c1073741824_i32_72 = arith.constant 1073741824 : i32
    %338 = vector.broadcast %c1073741824_i32_72 : i32 to vector<4x7x7xi32>
    %339 = arith.select %337, %278, %338 : vector<4x7x7xi1>, vector<4x7x7xi32>
    %cst_73 = arith.constant dense<2147483647> : vector<4x7xi32>
    %340 = vector.multi_reduction <minsi>, %339, %cst_73 [2] : vector<4x7x7xi32> to vector<4x7xi32>
    %341 = vector.extract_strided_slice %271 {offsets = [20, 0], sizes = [4, 7], strides = [1, 1]} : vector<32x7xf32> to vector<4x7xf32>
    %342 = arith.addf %334, %341 : vector<4x7xf32>
    %343 = vector.shape_cast %342 : vector<4x7xf32> to vector<4x1x7xf32>
    %344 = vector.broadcast %343 : vector<4x1x7xf32> to vector<4x7x7xf32>
    %345 = arith.addf %344, %277 : vector<4x7x7xf32>
    %cst_74 = arith.constant dense<0xFF800000> : vector<4x7xf32>
    %346 = vector.multi_reduction <maximumf>, %345, %cst_74 [2] : vector<4x7x7xf32> to vector<4x7xf32>
    %347 = vector.shape_cast %346 : vector<4x7xf32> to vector<4x7x1xf32>
    %348 = vector.broadcast %347 : vector<4x7x1xf32> to vector<4x7x7xf32>
    %349 = arith.cmpf oeq, %345, %348 : vector<4x7x7xf32>
    %c1073741824_i32_75 = arith.constant 1073741824 : i32
    %350 = vector.broadcast %c1073741824_i32_75 : i32 to vector<4x7x7xi32>
    %351 = arith.select %349, %278, %350 : vector<4x7x7xi1>, vector<4x7x7xi32>
    %cst_76 = arith.constant dense<2147483647> : vector<4x7xi32>
    %352 = vector.multi_reduction <minsi>, %351, %cst_76 [2] : vector<4x7x7xi32> to vector<4x7xi32>
    %353 = vector.extract_strided_slice %271 {offsets = [24, 0], sizes = [4, 7], strides = [1, 1]} : vector<32x7xf32> to vector<4x7xf32>
    %354 = arith.addf %346, %353 : vector<4x7xf32>
    %355 = vector.shape_cast %354 : vector<4x7xf32> to vector<4x1x7xf32>
    %356 = vector.broadcast %355 : vector<4x1x7xf32> to vector<4x7x7xf32>
    %357 = arith.addf %356, %277 : vector<4x7x7xf32>
    %cst_77 = arith.constant dense<0xFF800000> : vector<4x7xf32>
    %358 = vector.multi_reduction <maximumf>, %357, %cst_77 [2] : vector<4x7x7xf32> to vector<4x7xf32>
    %359 = vector.shape_cast %358 : vector<4x7xf32> to vector<4x7x1xf32>
    %360 = vector.broadcast %359 : vector<4x7x1xf32> to vector<4x7x7xf32>
    %361 = arith.cmpf oeq, %357, %360 : vector<4x7x7xf32>
    %c1073741824_i32_78 = arith.constant 1073741824 : i32
    %362 = vector.broadcast %c1073741824_i32_78 : i32 to vector<4x7x7xi32>
    %363 = arith.select %361, %278, %362 : vector<4x7x7xi1>, vector<4x7x7xi32>
    %cst_79 = arith.constant dense<2147483647> : vector<4x7xi32>
    %364 = vector.multi_reduction <minsi>, %363, %cst_79 [2] : vector<4x7x7xi32> to vector<4x7xi32>
    %365 = vector.extract_strided_slice %271 {offsets = [28, 0], sizes = [4, 7], strides = [1, 1]} : vector<32x7xf32> to vector<4x7xf32>
    %366 = arith.addf %358, %365 : vector<4x7xf32>
    %367 = vector.broadcast %274 : vector<1x7xf32> to vector<4x7xf32>
    %368 = arith.addf %366, %367 : vector<4x7xf32>
    %cst_80 = arith.constant dense<0xFF800000> : vector<4xf32>
    %369 = vector.multi_reduction <maximumf>, %368, %cst_80 [1] : vector<4x7xf32> to vector<4xf32>
    %370 = vector.shape_cast %369 : vector<4xf32> to vector<4x1xf32>
    %371 = vector.broadcast %370 : vector<4x1xf32> to vector<4x7xf32>
    %372 = arith.cmpf oeq, %368, %371 : vector<4x7xf32>
    %c1073741824_i32_81 = arith.constant 1073741824 : i32
    %373 = vector.broadcast %c1073741824_i32_81 : i32 to vector<4x7xi32>
    %374 = arith.select %372, %279, %373 : vector<4x7xi1>, vector<4x7xi32>
    %cst_82 = arith.constant dense<2147483647> : vector<4xi32>
    %375 = vector.multi_reduction <minsi>, %374, %cst_82 [1] : vector<4x7xi32> to vector<4xi32>
    %376 = vector.shape_cast %375 : vector<4xi32> to vector<4x1xi32>
    %377 = vector.broadcast %376 : vector<4x1xi32> to vector<4x7xi32>
    %378 = arith.cmpi eq, %279, %377 : vector<4x7xi32>
    %c0_i32 = arith.constant 0 : i32
    %379 = vector.broadcast %c0_i32 : i32 to vector<4x7xi32>
    %380 = arith.select %378, %364, %379 : vector<4x7xi1>, vector<4x7xi32>
    %cst_83 = arith.constant dense<0> : vector<4xi32>
    %381 = vector.multi_reduction <add>, %380, %cst_83 [1] : vector<4x7xi32> to vector<4xi32>
    %382 = vector.shape_cast %381 : vector<4xi32> to vector<4x1xi32>
    %383 = vector.broadcast %382 : vector<4x1xi32> to vector<4x7xi32>
    %384 = arith.cmpi eq, %279, %383 : vector<4x7xi32>
    %c0_i32_84 = arith.constant 0 : i32
    %385 = vector.broadcast %c0_i32_84 : i32 to vector<4x7xi32>
    %386 = arith.select %384, %352, %385 : vector<4x7xi1>, vector<4x7xi32>
    %cst_85 = arith.constant dense<0> : vector<4xi32>
    %387 = vector.multi_reduction <add>, %386, %cst_85 [1] : vector<4x7xi32> to vector<4xi32>
    %388 = vector.shape_cast %387 : vector<4xi32> to vector<4x1xi32>
    %389 = vector.broadcast %388 : vector<4x1xi32> to vector<4x7xi32>
    %390 = arith.cmpi eq, %279, %389 : vector<4x7xi32>
    %c0_i32_86 = arith.constant 0 : i32
    %391 = vector.broadcast %c0_i32_86 : i32 to vector<4x7xi32>
    %392 = arith.select %390, %340, %391 : vector<4x7xi1>, vector<4x7xi32>
    %cst_87 = arith.constant dense<0> : vector<4xi32>
    %393 = vector.multi_reduction <add>, %392, %cst_87 [1] : vector<4x7xi32> to vector<4xi32>
    %394 = vector.shape_cast %393 : vector<4xi32> to vector<4x1xi32>
    %395 = vector.broadcast %394 : vector<4x1xi32> to vector<4x7xi32>
    %396 = arith.cmpi eq, %279, %395 : vector<4x7xi32>
    %c0_i32_88 = arith.constant 0 : i32
    %397 = vector.broadcast %c0_i32_88 : i32 to vector<4x7xi32>
    %398 = arith.select %396, %328, %397 : vector<4x7xi1>, vector<4x7xi32>
    %cst_89 = arith.constant dense<0> : vector<4xi32>
    %399 = vector.multi_reduction <add>, %398, %cst_89 [1] : vector<4x7xi32> to vector<4xi32>
    %400 = vector.shape_cast %399 : vector<4xi32> to vector<4x1xi32>
    %401 = vector.broadcast %400 : vector<4x1xi32> to vector<4x7xi32>
    %402 = arith.cmpi eq, %279, %401 : vector<4x7xi32>
    %c0_i32_90 = arith.constant 0 : i32
    %403 = vector.broadcast %c0_i32_90 : i32 to vector<4x7xi32>
    %404 = arith.select %402, %316, %403 : vector<4x7xi1>, vector<4x7xi32>
    %cst_91 = arith.constant dense<0> : vector<4xi32>
    %405 = vector.multi_reduction <add>, %404, %cst_91 [1] : vector<4x7xi32> to vector<4xi32>
    %406 = vector.shape_cast %405 : vector<4xi32> to vector<4x1xi32>
    %407 = vector.broadcast %406 : vector<4x1xi32> to vector<4x7xi32>
    %408 = arith.cmpi eq, %279, %407 : vector<4x7xi32>
    %c0_i32_92 = arith.constant 0 : i32
    %409 = vector.broadcast %c0_i32_92 : i32 to vector<4x7xi32>
    %410 = arith.select %408, %304, %409 : vector<4x7xi1>, vector<4x7xi32>
    %cst_93 = arith.constant dense<0> : vector<4xi32>
    %411 = vector.multi_reduction <add>, %410, %cst_93 [1] : vector<4x7xi32> to vector<4xi32>
    %412 = vector.shape_cast %411 : vector<4xi32> to vector<4x1xi32>
    %413 = vector.broadcast %412 : vector<4x1xi32> to vector<4x7xi32>
    %414 = arith.cmpi eq, %279, %413 : vector<4x7xi32>
    %c0_i32_94 = arith.constant 0 : i32
    %415 = vector.broadcast %c0_i32_94 : i32 to vector<4x7xi32>
    %416 = arith.select %414, %292, %415 : vector<4x7xi1>, vector<4x7xi32>
    %cst_95 = arith.constant dense<0> : vector<4xi32>
    %417 = vector.multi_reduction <add>, %416, %cst_95 [1] : vector<4x7xi32> to vector<4xi32>
    %418 = vector.shape_cast %417 : vector<4xi32> to vector<4x1xi32>
    %419 = tpu.concatenate %418, %412, %406, %400, %394, %388, %382, %376 in 1 : vector<4x1xi32>, vector<4x1xi32>, vector<4x1xi32>, vector<4x1xi32>, vector<4x1xi32>, vector<4x1xi32>, vector<4x1xi32>, vector<4x1xi32> -> vector<4x8xi32>
    %420 = vector.shape_cast %419 : vector<4x8xi32> to vector<1x4x8xi32>
    %c0_96 = arith.constant 0 : index
    %c0_97 = arith.constant 0 : index
    %c0_98 = arith.constant 0 : index
    %421 = vector.load %arg13[%c0_96, %c0_97, %c0_98] : memref<1x4x8xi32, #tpu.memory_space<vmem>>, vector<1x4x8xi32>
    tpu.vector_store %arg13[%c0_96, %c0_97, %c0_98], %420 {strides = array<i32>} : memref<1x4x8xi32, #tpu.memory_space<vmem>>, vector<1x4x8xi32>,
    return
  }
  func.func @transform_0(%arg0: i32) -> (i32, i32) {
    %c0_i32 = arith.constant 0 : i32
    %c0_i32_0 = arith.constant 0 : i32
    return %arg0, %c0_i32 : i32, i32
  }
  func.func @transform_1(%arg0: i32) -> (i32, i32) {
    %c0_i32 = arith.constant 0 : i32
    %c0_i32_0 = arith.constant 0 : i32
    return %arg0, %c0_i32 : i32, i32
  }
  func.func @transform_2(%arg0: i32) -> (i32, i32) {
    %c0_i32 = arith.constant 0 : i32
    %c0_i32_0 = arith.constant 0 : i32
    %c0_i32_1 = arith.constant 0 : i32
    return %c0_i32, %c0_i32_0 : i32, i32
  }
  func.func @transform_3(%arg0: i32) -> (i32, i32) {
    %c0_i32 = arith.constant 0 : i32
    %c0_i32_0 = arith.constant 0 : i32
    %c0_i32_1 = arith.constant 0 : i32
    return %c0_i32, %c0_i32_0 : i32, i32
  }
  func.func @transform_4(%arg0: i32) -> (i32, i32) {
    %c0_i32 = arith.constant 0 : i32
    %c0_i32_0 = arith.constant 0 : i32
    %c0_i32_1 = arith.constant 0 : i32
    return %c0_i32, %c0_i32_0 : i32, i32
  }
  func.func @transform_5(%arg0: i32) -> (i32, i32) {
    %c0_i32 = arith.constant 0 : i32
    %c0_i32_0 = arith.constant 0 : i32
    %c0_i32_1 = arith.constant 0 : i32
    return %c0_i32, %c0_i32_0 : i32, i32
  }
  func.func @transform_6(%arg0: i32) -> (i32, i32) {
    %c0_i32 = arith.constant 0 : i32
    %c0_i32_0 = arith.constant 0 : i32
    %c0_i32_1 = arith.constant 0 : i32
    return %c0_i32, %c0_i32_0 : i32, i32
  }
  func.func @transform_7(%arg0: i32) -> (i32, i32) {
    %c0_i32 = arith.constant 0 : i32
    %c0_i32_0 = arith.constant 0 : i32
    %c0_i32_1 = arith.constant 0 : i32
    return %c0_i32, %c0_i32_0 : i32, i32
  }
  func.func @transform_8(%arg0: i32) -> (i32, i32) {
    %c0_i32 = arith.constant 0 : i32
    %c0_i32_0 = arith.constant 0 : i32
    %c0_i32_1 = arith.constant 0 : i32
    return %c0_i32, %c0_i32_0 : i32, i32
  }
  func.func @transform_9(%arg0: i32) -> (i32, i32) {
    %c0_i32 = arith.constant 0 : i32
    %c0_i32_0 = arith.constant 0 : i32
    %c0_i32_1 = arith.constant 0 : i32
    return %c0_i32, %c0_i32_0 : i32, i32
  }
  func.func @transform_10(%arg0: i32) -> (i32, i32) {
    %c0_i32 = arith.constant 0 : i32
    %c0_i32_0 = arith.constant 0 : i32
    %c0_i32_1 = arith.constant 0 : i32
    return %c0_i32, %c0_i32_0 : i32, i32
  }
  func.func @transform_11(%arg0: i32) -> (i32, i32) {
    %c0_i32 = arith.constant 0 : i32
    %c0_i32_0 = arith.constant 0 : i32
    %c0_i32_1 = arith.constant 0 : i32
    return %c0_i32, %c0_i32_0 : i32, i32
  }
  func.func @transform_12(%arg0: i32) -> (i32, i32, i32) {
    %c0_i32 = arith.constant 0 : i32
    %c0_i32_0 = arith.constant 0 : i32
    %c0_i32_1 = arith.constant 0 : i32
    return %arg0, %c0_i32, %c0_i32_0 : i32, i32, i32
  }
}

</mosaic_0001>

<llo_original>
// kernel: tpu_custom_call.1
$region0: #{tpu_custom_call.1}
  #allocation0 [shape = 'u32[]', space=smem, size = 0x4, offset = 0x4, fixed_abs, tag = 'smem constant byte address 0x4 - core index']
  #allocation1 [shape = 'u32[144,128]{1,0:T(1,128)}', space=vmem, size = 0x12000, scoped, tag = 'internal scratch']
  %s0 = inlined_call_operand.vmem [shape: s32[64,1], index: 0, kind: input, shape index: {}]
  %s1 = inlined_call_operand.vmem [shape: s32[64,1], index: 1, kind: input, shape index: {}]
  %s2 = inlined_call_operand.vmem [shape: f32[14,256], index: 2, kind: input, shape index: {}]
  %s3 = inlined_call_operand.vmem [shape: f32[14,256], index: 3, kind: input, shape index: {}]
  %s4 = inlined_call_operand.vmem [shape: f32[1,256], index: 4, kind: input, shape index: {}]
  %s5 = inlined_call_operand.vmem [shape: f32[64,256], index: 5, kind: input, shape index: {}]
  %s6 = inlined_call_operand.vmem [shape: f32[32,7], index: 6, kind: input, shape index: {}]
  %s7 = inlined_call_operand.vmem [shape: f32[32,7], index: 7, kind: input, shape index: {}]
  %s8 = inlined_call_operand.vmem [shape: f32[1,7], index: 8, kind: input, shape index: {}]
  %s9 = inlined_call_operand.vmem [shape: f32[1,7], index: 9, kind: input, shape index: {}]
  %s10 = inlined_call_operand.vmem [shape: f32[1,7], index: 10, kind: input, shape index: {}]
  %s11 = inlined_call_operand.vmem [shape: f32[7,7], index: 11, kind: input, shape index: {}]
  %s12 = inlined_call_operand.hbm [shape: s32[2,4,8], index: 12, kind: output, shape index: {}]
  %s13 = sld [smem:[#allocation0]]
  $region81: #{tpu_custom_call.1} parent=0
    _
  %s15 = ssub.s32 1, %s13
  %s16 = scalar_select 0, %s15, %s13
  $region1: #{tpu_custom_call.1} parent=0
    #allocation2 [shape = 'u8[4096]{0}', space=vmem, size = 0x1000, scoped, tag = 'output window, operand 0']
    #allocation3 [shape = 's32[2]{0}', space=sflag, size = 0x8, scoped, tag = 'scoped memory for tpu_custom_call.1']
    %17 = vsyncpa [#allocation3], 0
    %s18 = scalar_lea.sflag [#allocation3], 1
    %19 = vsyncpa %s18, 0
    loop: start=0, step=1, limit=4
    $region2: #{tpu_custom_call.1} parent=1 // loop_pre_header
      _
    $region3: #{tpu_custom_call.1} parent=1 // loop_header
      %s21 = sphi 0, %s25
      %p22 = scmp.ge.s32.totalorder %s21, 4
      %s31 = sphi 0, %s33
      %s34 = sphi 0, %s31
      %s35 = sphi 0, %s34
      %s51 = sphi 0, %s35
      %s57 = sphi 0, %s59
      %s60 = sphi 0, %s57
      %s61 = sphi 0, %s60
      %s77 = sphi 0, %s61
      %s81 = sphi 0, %s81
      %s83 = sphi 0, %s81
      %s84 = sphi 0, %s83
      %s98 = sphi 0, %s84
      %s102 = sphi 0, %s102
      %s104 = sphi 0, %s102
      %s105 = sphi 0, %s104
      %s119 = sphi 0, %s105
      %s123 = sphi 0, %s123
      %s125 = sphi 0, %s123
      %s126 = sphi 0, %s125
      %s140 = sphi 0, %s126
      %s144 = sphi 0, %s144
      %s146 = sphi 0, %s144
      %s147 = sphi 0, %s146
      %s161 = sphi 0, %s147
      %s165 = sphi 0, %s165
      %s167 = sphi 0, %s165
      %s168 = sphi 0, %s167
      %s182 = sphi 0, %s168
      %s186 = sphi 0, %s186
      %s188 = sphi 0, %s186
      %s189 = sphi 0, %s188
      %s203 = sphi 0, %s189
      %s207 = sphi 0, %s207
      %s209 = sphi 0, %s207
      %s210 = sphi 0, %s209
      %s224 = sphi 0, %s210
      %s228 = sphi 0, %s228
      %s230 = sphi 0, %s228
      %s231 = sphi 0, %s230
      %s245 = sphi 0, %s231
      %s249 = sphi 0, %s249
      %s251 = sphi 0, %s249
      %s252 = sphi 0, %s251
      %s266 = sphi 0, %s252
      %s270 = sphi 0, %s270
      %s272 = sphi 0, %s270
      %s273 = sphi 0, %s272
      %s287 = sphi 0, %s273
      %s293 = sphi 0, %s295
      %s296 = sphi 0, %s293
      %s297 = sphi 0, %s296
      %s313 = sphi 0, %s297
    $region4: #{tpu_custom_call.1} parent=1 // loop_header_branch
      %24 = sbr.rel (%p22) target = $region8
    $region5: #{tpu_custom_call.1} parent=1 // loop_body
      %s26 = ssub.s32 %s21, 1
      %s27 = ssub.s32 %s21, 2
      %s28 = sadd.s32 %s21, 1
      %s29 = ssub.s32 %s21, %s28
      %p30 = scmp.eq.s32.totalorder %s29, 0
      %s32 = sadd.s32 %s31, 1
      %s33 = scalar_select %p30, %s31, %s32
      %p36 = pneg %p30
      %p37 = scmp.eq.s32.totalorder %s21, 1
      %p38 = por %p36, %p37
      %p39 = scmp.ne.s32.totalorder %s31, %s34
      %p40 = scmp.eq.s32.totalorder %s21, 0
      %p41 = por %p39, %p40
      %p42 = scmp.ne.s32.totalorder %s31, %s34
      %p43 = scmp.eq.s32.totalorder %s26, 1
      %p44 = por %p42, %p43
      %p45 = scmp.ne.s32.totalorder %s34, %s35
      %p46 = scmp.eq.s32.totalorder %s26, 0
      %p47 = por %p45, %p46
      %p48 = scmp.ne.s32.totalorder %s34, %s35
      %p49 = scmp.eq.s32.totalorder %s27, 1
      %p50 = por %p48, %p49
      %p52 = scmp.ne.s32.totalorder %s35, %s51
      %p53 = scmp.eq.s32.totalorder %s27, 0
      %p54 = por %p52, %p53
      %s55 = ssub.s32 %s21, %s28
      %p56 = scmp.eq.s32.totalorder %s55, 0
      %s58 = sadd.s32 %s57, 1
      %s59 = scalar_select %p56, %s57, %s58
      %p62 = pneg %p56
      %p63 = scmp.eq.s32.totalorder %s21, 1
      %p64 = por %p62, %p63
      %p65 = scmp.ne.s32.totalorder %s57, %s60
      %p66 = scmp.eq.s32.totalorder %s21, 0
      %p67 = por %p65, %p66
      %p68 = scmp.ne.s32.totalorder %s57, %s60
      %p69 = scmp.eq.s32.totalorder %s26, 1
      %p70 = por %p68, %p69
      %p71 = scmp.ne.s32.totalorder %s60, %s61
      %p72 = scmp.eq.s32.totalorder %s26, 0
      %p73 = por %p71, %p72
      %p74 = scmp.ne.s32.totalorder %s60, %s61
      %p75 = scmp.eq.s32.totalorder %s27, 1
      %p76 = por %p74, %p75
      %p78 = scmp.ne.s32.totalorder %s61, %s77
      %p79 = scmp.eq.s32.totalorder %s27, 0
      %p80 = por %p78, %p79
      %s82 = sadd.s32 %s81, 1
      %p85 = scmp.eq.s32.totalorder %s21, 1
      %p86 = scmp.ne.s32.totalorder %s81, %s83
      %p87 = scmp.eq.s32.totalorder %s21, 0
      %p88 = por %p86, %p87
      %p89 = scmp.ne.s32.totalorder %s81, %s83
      %p90 = scmp.eq.s32.totalorder %s26, 1
      %p91 = por %p89, %p90
      %p92 = scmp.ne.s32.totalorder %s83, %s84
      %p93 = scmp.eq.s32.totalorder %s26, 0
      %p94 = por %p92, %p93
      %p95 = scmp.ne.s32.totalorder %s83, %s84
      %p96 = scmp.eq.s32.totalorder %s27, 1
      %p97 = por %p95, %p96
      %p99 = scmp.ne.s32.totalorder %s84, %s98
      %p100 = scmp.eq.s32.totalorder %s27, 0
      %p101 = por %p99, %p100
      %s103 = sadd.s32 %s102, 1
      %p106 = scmp.eq.s32.totalorder %s21, 1
      %p107 = scmp.ne.s32.totalorder %s102, %s104
      %p108 = scmp.eq.s32.totalorder %s21, 0
      %p109 = por %p107, %p108
      %p110 = scmp.ne.s32.totalorder %s102, %s104
      %p111 = scmp.eq.s32.totalorder %s26, 1
      %p112 = por %p110, %p111
      %p113 = scmp.ne.s32.totalorder %s104, %s105
      %p114 = scmp.eq.s32.totalorder %s26, 0
      %p115 = por %p113, %p114
      %p116 = scmp.ne.s32.totalorder %s104, %s105
      %p117 = scmp.eq.s32.totalorder %s27, 1
      %p118 = por %p116, %p117
      %p120 = scmp.ne.s32.totalorder %s105, %s119
      %p121 = scmp.eq.s32.totalorder %s27, 0
      %p122 = por %p120, %p121
      %s124 = sadd.s32 %s123, 1
      %p127 = scmp.eq.s32.totalorder %s21, 1
      %p128 = scmp.ne.s32.totalorder %s123, %s125
      %p129 = scmp.eq.s32.totalorder %s21, 0
      %p130 = por %p128, %p129
      %p131 = scmp.ne.s32.totalorder %s123, %s125
      %p132 = scmp.eq.s32.totalorder %s26, 1
      %p133 = por %p131, %p132
      %p134 = scmp.ne.s32.totalorder %s125, %s126
      %p135 = scmp.eq.s32.totalorder %s26, 0
      %p136 = por %p134, %p135
      %p137 = scmp.ne.s32.totalorder %s125, %s126
      %p138 = scmp.eq.s32.totalorder %s27, 1
      %p139 = por %p137, %p138
      %p141 = scmp.ne.s32.totalorder %s126, %s140
      %p142 = scmp.eq.s32.totalorder %s27, 0
      %p143 = por %p141, %p142
      %s145 = sadd.s32 %s144, 1
      %p148 = scmp.eq.s32.totalorder %s21, 1
      %p149 = scmp.ne.s32.totalorder %s144, %s146
      %p150 = scmp.eq.s32.totalorder %s21, 0
      %p151 = por %p149, %p150
      %p152 = scmp.ne.s32.totalorder %s144, %s146
      %p153 = scmp.eq.s32.totalorder %s26, 1
      %p154 = por %p152, %p153
      %p155 = scmp.ne.s32.totalorder %s146, %s147
      %p156 = scmp.eq.s32.totalorder %s26, 0
      %p157 = por %p155, %p156
      %p158 = scmp.ne.s32.totalorder %s146, %s147
      %p159 = scmp.eq.s32.totalorder %s27, 1
      %p160 = por %p158, %p159
      %p162 = scmp.ne.s32.totalorder %s147, %s161
      %p163 = scmp.eq.s32.totalorder %s27, 0
      %p164 = por %p162, %p163
      %s166 = sadd.s32 %s165, 1
      %p169 = scmp.eq.s32.totalorder %s21, 1
      %p170 = scmp.ne.s32.totalorder %s165, %s167
      %p171 = scmp.eq.s32.totalorder %s21, 0
      %p172 = por %p170, %p171
      %p173 = scmp.ne.s32.totalorder %s165, %s167
      %p174 = scmp.eq.s32.totalorder %s26, 1
      %p175 = por %p173, %p174
      %p176 = scmp.ne.s32.totalorder %s167, %s168
      %p177 = scmp.eq.s32.totalorder %s26, 0
      %p178 = por %p176, %p177
      %p179 = scmp.ne.s32.totalorder %s167, %s168
      %p180 = scmp.eq.s32.totalorder %s27, 1
      %p181 = por %p179, %p180
      %p183 = scmp.ne.s32.totalorder %s168, %s182
      %p184 = scmp.eq.s32.totalorder %s27, 0
      %p185 = por %p183, %p184
      %s187 = sadd.s32 %s186, 1
      %p190 = scmp.eq.s32.totalorder %s21, 1
      %p191 = scmp.ne.s32.totalorder %s186, %s188
      %p192 = scmp.eq.s32.totalorder %s21, 0
      %p193 = por %p191, %p192
      %p194 = scmp.ne.s32.totalorder %s186, %s188
      %p195 = scmp.eq.s32.totalorder %s26, 1
      %p196 = por %p194, %p195
      %p197 = scmp.ne.s32.totalorder %s188, %s189
      %p198 = scmp.eq.s32.totalorder %s26, 0
      %p199 = por %p197, %p198
      %p200 = scmp.ne.s32.totalorder %s188, %s189
      %p201 = scmp.eq.s32.totalorder %s27, 1
      %p202 = por %p200, %p201
      %p204 = scmp.ne.s32.totalorder %s189, %s203
      %p205 = scmp.eq.s32.totalorder %s27, 0
      %p206 = por %p204, %p205
      %s208 = sadd.s32 %s207, 1
      %p211 = scmp.eq.s32.totalorder %s21, 1
      %p212 = scmp.ne.s32.totalorder %s207, %s209
      %p213 = scmp.eq.s32.totalorder %s21, 0
      %p214 = por %p212, %p213
      %p215 = scmp.ne.s32.totalorder %s207, %s209
      %p216 = scmp.eq.s32.totalorder %s26, 1
      %p217 = por %p215, %p216
      %p218 = scmp.ne.s32.totalorder %s209, %s210
      %p219 = scmp.eq.s32.totalorder %s26, 0
      %p220 = por %p218, %p219
      %p221 = scmp.ne.s32.totalorder %s209, %s210
      %p222 = scmp.eq.s32.totalorder %s27, 1
      %p223 = por %p221, %p222
      %p225 = scmp.ne.s32.totalorder %s210, %s224
      %p226 = scmp.eq.s32.totalorder %s27, 0
      %p227 = por %p225, %p226
      %s229 = sadd.s32 %s228, 1
      %p232 = scmp.eq.s32.totalorder %s21, 1
      %p233 = scmp.ne.s32.totalorder %s228, %s230
      %p234 = scmp.eq.s32.totalorder %s21, 0
      %p235 = por %p233, %p234
      %p236 = scmp.ne.s32.totalorder %s228, %s230
      %p237 = scmp.eq.s32.totalorder %s26, 1
      %p238 = por %p236, %p237
      %p239 = scmp.ne.s32.totalorder %s230, %s231
      %p240 = scmp.eq.s32.totalorder %s26, 0
      %p241 = por %p239, %p240
      %p242 = scmp.ne.s32.totalorder %s230, %s231
      %p243 = scmp.eq.s32.totalorder %s27, 1
      %p244 = por %p242, %p243
      %p246 = scmp.ne.s32.totalorder %s231, %s245
      %p247 = scmp.eq.s32.totalorder %s27, 0
      %p248 = por %p246, %p247
      %s250 = sadd.s32 %s249, 1
      %p253 = scmp.eq.s32.totalorder %s21, 1
      %p254 = scmp.ne.s32.totalorder %s249, %s251
      %p255 = scmp.eq.s32.totalorder %s21, 0
      %p256 = por %p254, %p255
      %p257 = scmp.ne.s32.totalorder %s249, %s251
      %p258 = scmp.eq.s32.totalorder %s26, 1
      %p259 = por %p257, %p258
      %p260 = scmp.ne.s32.totalorder %s251, %s252
      %p261 = scmp.eq.s32.totalorder %s26, 0
      %p262 = por %p260, %p261
      %p263 = scmp.ne.s32.totalorder %s251, %s252
      %p264 = scmp.eq.s32.totalorder %s27, 1
      %p265 = por %p263, %p264
      %p267 = scmp.ne.s32.totalorder %s252, %s266
      %p268 = scmp.eq.s32.totalorder %s27, 0
      %p269 = por %p267, %p268
      %s271 = sadd.s32 %s270, 1
      %p274 = scmp.eq.s32.totalorder %s21, 1
      %p275 = scmp.ne.s32.totalorder %s270, %s272
      %p276 = scmp.eq.s32.totalorder %s21, 0
      %p277 = por %p275, %p276
      %p278 = scmp.ne.s32.totalorder %s270, %s272
      %p279 = scmp.eq.s32.totalorder %s26, 1
      %p280 = por %p278, %p279
      %p281 = scmp.ne.s32.totalorder %s272, %s273
      %p282 = scmp.eq.s32.totalorder %s26, 0
      %p283 = por %p281, %p282
      %p284 = scmp.ne.s32.totalorder %s272, %s273
      %p285 = scmp.eq.s32.totalorder %s27, 1
      %p286 = por %p284, %p285
      %p288 = scmp.ne.s32.totalorder %s273, %s287
      %p289 = scmp.eq.s32.totalorder %s27, 0
      %p290 = por %p288, %p289
      %s291 = ssub.s32 %s21, %s28
      %p292 = scmp.eq.s32.totalorder %s291, 0
      %s294 = sadd.s32 %s293, 1
      %s295 = scalar_select %p292, %s293, %s294
      %p298 = pneg %p292
      %p299 = scmp.eq.s32.totalorder %s21, 1
      %p300 = por %p298, %p299
      %p301 = scmp.ne.s32.totalorder %s293, %s296
      %p302 = scmp.eq.s32.totalorder %s21, 0
      %p303 = por %p301, %p302
      %p304 = scmp.ne.s32.totalorder %s293, %s296
      %p305 = scmp.eq.s32.totalorder %s26, 1
      %p306 = por %p304, %p305
      %p307 = scmp.ne.s32.totalorder %s296, %s297
      %p308 = scmp.eq.s32.totalorder %s26, 0
      %p309 = por %p307, %p308
      %p310 = scmp.ne.s32.totalorder %s296, %s297
      %p311 = scmp.eq.s32.totalorder %s27, 1
      %p312 = por %p310, %p311
      %p314 = scmp.ne.s32.totalorder %s297, %s313
      %p315 = scmp.eq.s32.totalorder %s27, 0
      %p316 = por %p314, %p315
      %p317 = scmp.le.s32.totalorder 1, %s21
      %p318 = scmp.lt.s32.totalorder %s21, 3
      %p319 = pnand %p317, %p318
      %p320 = pneg %p319
      // Predicated region
      $region9: #{tpu_custom_call.1} parent=5 // pred_check
        _
      $region10: #{tpu_custom_call.1} parent=5 // pred_check_branch
        %322 = sbr.rel (%p319) target = $region12
      $region11: #{tpu_custom_call.1} parent=5 // pred_region
        %s323 = ssub.s32 %s21, 1
        // Predicated region
        $region13: #{tpu_custom_call.1} parent=11 // pred_check
          %p324 = pneg %p94
        $region14: #{tpu_custom_call.1} parent=11 // pred_check_branch
          %326 = sbr.rel (%p324) target = $region16
        $region15: #{tpu_custom_call.1} parent=11 // pred_region
          _
        $region16: #{tpu_custom_call.1} parent=11 // pred_fallthru
          _
        // Predicated region
        $region17: #{tpu_custom_call.1} parent=11 // pred_check
          %p327 = pneg %p115
        $region18: #{tpu_custom_call.1} parent=11 // pred_check_branch
          %329 = sbr.rel (%p327) target = $region20
        $region19: #{tpu_custom_call.1} parent=11 // pred_region
          _
        $region20: #{tpu_custom_call.1} parent=11 // pred_fallthru
          _
        // Predicated region
        $region21: #{tpu_custom_call.1} parent=11 // pred_check
          %p330 = pneg %p136
        $region22: #{tpu_custom_call.1} parent=11 // pred_check_branch
          %332 = sbr.rel (%p330) target = $region24
        $region23: #{tpu_custom_call.1} parent=11 // pred_region
          _
        $region24: #{tpu_custom_call.1} parent=11 // pred_fallthru
          _
        // Predicated region
        $region25: #{tpu_custom_call.1} parent=11 // pred_check
          %p333 = pneg %p157
        $region26: #{tpu_custom_call.1} parent=11 // pred_check_branch
          %335 = sbr.rel (%p333) target = $region28
        $region27: #{tpu_custom_call.1} parent=11 // pred_region
          _
        $region28: #{tpu_custom_call.1} parent=11 // pred_fallthru
          _
        // Predicated region
        $region29: #{tpu_custom_call.1} parent=11 // pred_check
          %p336 = pneg %p178
        $region30: #{tpu_custom_call.1} parent=11 // pred_check_branch
          %338 = sbr.rel (%p336) target = $region32
        $region31: #{tpu_custom_call.1} parent=11 // pred_region
          _
        $region32: #{tpu_custom_call.1} parent=11 // pred_fallthru
          _
        // Predicated region
        $region33: #{tpu_custom_call.1} parent=11 // pred_check
          %p339 = pneg %p199
        $region34: #{tpu_custom_call.1} parent=11 // pred_check_branch
          %341 = sbr.rel (%p339) target = $region36
        $region35: #{tpu_custom_call.1} parent=11 // pred_region
          _
        $region36: #{tpu_custom_call.1} parent=11 // pred_fallthru
          _
        // Predicated region
        $region37: #{tpu_custom_call.1} parent=11 // pred_check
          %p342 = pneg %p220
        $region38: #{tpu_custom_call.1} parent=11 // pred_check_branch
          %344 = sbr.rel (%p342) target = $region40
        $region39: #{tpu_custom_call.1} parent=11 // pred_region
          _
        $region40: #{tpu_custom_call.1} parent=11 // pred_fallthru
          _
        // Predicated region
        $region41: #{tpu_custom_call.1} parent=11 // pred_check
          %p345 = pneg %p241
        $region42: #{tpu_custom_call.1} parent=11 // pred_check_branch
          %347 = sbr.rel (%p345) target = $region44
        $region43: #{tpu_custom_call.1} parent=11 // pred_region
          _
        $region44: #{tpu_custom_call.1} parent=11 // pred_fallthru
          _
        // Predicated region
        $region45: #{tpu_custom_call.1} parent=11 // pred_check
          %p348 = pneg %p262
        $region46: #{tpu_custom_call.1} parent=11 // pred_check_branch
          %350 = sbr.rel (%p348) target = $region48
        $region47: #{tpu_custom_call.1} parent=11 // pred_region
          _
        $region48: #{tpu_custom_call.1} parent=11 // pred_fallthru
          _
        // Predicated region
        $region49: #{tpu_custom_call.1} parent=11 // pred_check
          %p351 = pneg %p283
        $region50: #{tpu_custom_call.1} parent=11 // pred_check_branch
          %353 = sbr.rel (%p351) target = $region52
        $region51: #{tpu_custom_call.1} parent=11 // pred_region
          _
        $region52: #{tpu_custom_call.1} parent=11 // pred_fallthru
          _
      $region12: #{tpu_custom_call.1} parent=5 // pred_fallthru
        _
      %p354 = scmp.lt.s32.totalorder %s21, 2
      // Predicated region
      $region53: #{tpu_custom_call.1} parent=5 // pred_check
        %p355 = pneg %p354
      $region54: #{tpu_custom_call.1} parent=5 // pred_check_branch
        %357 = sbr.rel (%p355) target = $region56
      $region55: #{tpu_custom_call.1} parent=5 // pred_region
        // Predicated region
        $region57: #{tpu_custom_call.1} parent=55 // pred_check
          %p358 = pneg %p41
        $region58: #{tpu_custom_call.1} parent=55 // pred_check_branch
          %360 = sbr.rel (%p358) target = $region60
        $region59: #{tpu_custom_call.1} parent=55 // pred_region
          %s361 = smul.u32 4, %s21
          %p362 = scmp.lt.s32.totalorder %s361, 7
          %s363 = scalar_select %p362, %s361, 7
          %s364 = smul.addr %s363, 8
          %s365 = scalar_lea.vmem %s0, %s364
          %s366 = smul.u32 4, %s21
        $region60: #{tpu_custom_call.1} parent=55 // pred_fallthru
          _
        // Predicated region
        $region61: #{tpu_custom_call.1} parent=55 // pred_check
          %p367 = pneg %p67
        $region62: #{tpu_custom_call.1} parent=55 // pred_check_branch
          %369 = sbr.rel (%p367) target = $region64
        $region63: #{tpu_custom_call.1} parent=55 // pred_region
          %s370 = smul.u32 4, %s21
          %p371 = scmp.lt.s32.totalorder %s370, 7
          %s372 = scalar_select %p371, %s370, 7
          %s373 = smul.addr %s372, 8
          %s374 = scalar_lea.vmem %s1, %s373
          %s375 = smul.u32 4, %s21
        $region64: #{tpu_custom_call.1} parent=55 // pred_fallthru
          _
      $region56: #{tpu_custom_call.1} parent=5 // pred_fallthru
        _
      %p376 = scmp.le.s32.totalorder 1, %s21
      %p377 = scmp.lt.s32.totalorder %s21, 3
      %p378 = pnand %p376, %p377
      %p379 = pneg %p378
      // Predicated region
      $region65: #{tpu_custom_call.1} parent=5 // pred_check
        _
      $region66: #{tpu_custom_call.1} parent=5 // pred_check_branch
        %381 = sbr.rel (%p378) target = $region68
      $region67: #{tpu_custom_call.1} parent=5 // pred_region
        %s382 = ssub.s32 %s21, 1
        %s383 = smul.u32 4, %s26
        %p384 = scmp.lt.s32.totalorder %s383, 7
        %s385 = scalar_select %p384, %s383, 7
        %s386 = smul.addr %s385, 8
        %s387 = scalar_lea.vmem %s0, %s386
        %p388 = pneg %p47
        %p389 = pneg %p44
        %s390 = smul.u32 4, %s26
        %p391 = scmp.lt.s32.totalorder %s390, 7
        %s392 = scalar_select %p391, %s390, 7
        %s393 = smul.addr %s392, 8
        %s394 = scalar_lea.vmem %s1, %s393
        %p395 = pneg %p73
        %p396 = pneg %p70
        %p397 = pneg %p94
        %p398 = pneg %p91
        %p399 = pneg %p115
        %p400 = pneg %p112
        %p401 = pneg %p136
        %p402 = pneg %p133
        %p403 = pneg %p157
        %p404 = pneg %p154
        %p405 = pneg %p178
        %p406 = pneg %p175
        %p407 = pneg %p199
        %p408 = pneg %p196
        %p409 = pneg %p220
        %p410 = pneg %p217
        %p411 = pneg %p241
        %p412 = pneg %p238
        %p413 = pneg %p262
        %p414 = pneg %p259
        %p415 = pneg %p283
        %p416 = pneg %p280
        %p417 = pneg %p309
        %p418 = pneg %p306
        %s419 = sand.u32 %s296, 1
        %s420 = scalar_lea.sflag [#allocation3], %s419
        %s421 = sand.u32 %s296, 1
        %s422 = smul.addr %s421, 4
        %s423 = scalar_lea.vmem [#allocation2], %s422
        %s424 = smul.u32 4, %s26
        %p425 = scmp.lt.s32.totalorder %s424, 7
        %s426 = scalar_select %p425, %s424, 7
        %s427 = smul.addr %s426, 8
        %s428 = scalar_lea.vmem %s0, %s427
        %s429 = smul.u32 4, %s26
        %s430 = smul.u32 4, %s26
        %p431 = scmp.lt.s32.totalorder %s430, 7
        %s432 = scalar_select %p431, %s430, 7
        %s433 = smul.addr %s432, 8
        %s434 = scalar_lea.vmem %s1, %s433
        %s435 = smul.u32 4, %s26
        %v436 = vlaneseq
        %v437 = vand.u32 %v436, 127
        %v438 = vld [vmem:[%s428] sm:$0xff]
        %v439 = vld [vmem:[%s428 + $0x8] sm:$0xff]
        %v440 = vld [vmem:[%s428 + $0x10] sm:$0xff]
        %v441 = vld [vmem:[%s428 + $0x18] sm:$0xff]
        %442 = vset.pattern.permute.xlu0 0
        %443 = vperm.xlu0 %442, %v438
        %v444 = vpop.permute.xlu0 %443
        %445 = vset.pattern.permute.xlu0 0
        %446 = vperm.xlu0 %445, %v439
        %v447 = vpop.permute.xlu0 %446
        %448 = vset.pattern.permute.xlu0 0
        %449 = vperm.xlu0 %448, %v440
        %v450 = vpop.permute.xlu0 %449
        %451 = vset.pattern.permute.xlu0 0
        %452 = vperm.xlu0 %451, %v441
        %v453 = vpop.permute.xlu0 %452
        %vm454 = vcmp.eq.s32.totalorder %v444, %v437
        %vm455 = vcmp.eq.s32.totalorder %v447, %v437
        %vm456 = vcmp.eq.s32.totalorder %v450, %v437
        %vm457 = vcmp.eq.s32.totalorder %v453, %v437
        %v458 = vsel %vm454, 1, 0
        %v459 = vsel %vm455, 1, 0
        %v460 = vsel %vm456, 1, 0
        %v461 = vsel %vm457, 1, 0
        %v462 = vcvt.s32.f32 %v458
        %v463 = vcvt.s32.f32 %v459
        %v464 = vcvt.s32.f32 %v460
        %v465 = vcvt.s32.f32 %v461
        %v466 = vld [vmem:[%s434] sm:$0xff]
        %v467 = vld [vmem:[%s434 + $0x8] sm:$0xff]
        %v468 = vld [vmem:[%s434 + $0x10] sm:$0xff]
        %v469 = vld [vmem:[%s434 + $0x18] sm:$0xff]
        %470 = vset.pattern.permute.xlu0 0
        %471 = vperm.xlu0 %470, %v466
        %v472 = vpop.permute.xlu0 %471
        %473 = vset.pattern.permute.xlu0 0
        %474 = vperm.xlu0 %473, %v467
        %v475 = vpop.permute.xlu0 %474
        %476 = vset.pattern.permute.xlu0 0
        %477 = vperm.xlu0 %476, %v468
        %v478 = vpop.permute.xlu0 %477
        %479 = vset.pattern.permute.xlu0 0
        %480 = vperm.xlu0 %479, %v469
        %v481 = vpop.permute.xlu0 %480
        %vm482 = vcmp.eq.s32.totalorder %v472, %v437
        %vm483 = vcmp.eq.s32.totalorder %v475, %v437
        %vm484 = vcmp.eq.s32.totalorder %v478, %v437
        %vm485 = vcmp.eq.s32.totalorder %v481, %v437
        %v486 = vsel %vm482, 1, 0
        %v487 = vsel %vm483, 1, 0
        %v488 = vsel %vm484, 1, 0
        %v489 = vsel %vm485, 1, 0
        %v490 = vcvt.s32.f32 %v486
        %v491 = vcvt.s32.f32 %v487
        %v492 = vcvt.s32.f32 %v488
        %v493 = vcvt.s32.f32 %v489
        %v494 = vld [vmem:[%s2] sm:$0xff]
        %v495 = vld [vmem:[%s2 + $0x8] sm:$0xff]
        %v496 = vld [vmem:[%s2 + $0x10] sm:$0x3f]
        %v497 = vld [vmem:[%s2 + $0x18] sm:$0x3f]
        %v498 = vld [vmem:[%s3] sm:$0xff]
        %v499 = vld [vmem:[%s3 + $0x8] sm:$0xff]
        %v500 = vld [vmem:[%s3 + $0x10] sm:$0x3f]
        %v501 = vld [vmem:[%s3 + $0x18] sm:$0x3f]
        %vm502 = vcmask 113664
        %v504 = vsel %vm502, %v490, 0
        %v507 = vsel %vm502, %v491, 0
        %v510 = vsel %vm502, %v492, 0
        %v513 = vsel %vm502, %v493, 0
        %vm515 = vcmask 1045504
        %v517 = vsel %vm515, %v500, 0
        %v520 = vsel %vm515, %v501, 0
        %522 = vmatprep.subr.mxu0 0.0
        %523 = vmatpush1.msra.mxu0 0.0
        %524 = vmatprep.subr.mxu0 0.0
        %525 = vmatpush1.msra.mxu0 0.0
        %526 = vmatprep.subr.mxu0 0.0
        %527 = vmatpush1.msra.mxu0 0.0
        %528 = vmatprep.subr.mxu0 0.0
        %529 = vmatpush1.msra.mxu0 0.0
        %530 = vmatprep.subr.mxu0 0.0
        %531 = vmatpush1.msra.mxu0 0.0
        %532 = vmatprep.subr.mxu0 0.0
        %533 = vmatpush1.msra.mxu0 0.0
        %534 = vmatprep.subr.mxu0 0.0
        %535 = vmatpush1.msra.mxu0 0.0
        %536 = vmatprep.subr.mxu0 0.0
        %537 = vmatpush1.msra.mxu0 0.0
        %538 = vmatprep.subr.mxu0 0.0
        %539 = vmatpush1.msra.mxu0 0.0
        %540 = vmatprep.subr.mxu0 0.0
        %541 = vmatpush1.msra.mxu0 0.0
        %542 = vmatprep.subr.mxu0 0.0
        %543 = vmatpush1.msra.mxu0 0.0
        %544 = vmatprep.subr.mxu0 0.0
        %545 = vmatpush1.msra.mxu0 0.0
        %546 = vmatprep.subr.mxu0 0.0
        %547 = vmatpush1.msra.mxu0 0.0
        %548 = vmatprep.subr.mxu0 0.0
        %549 = vmatpush1.msra.mxu0 0.0
        %550 = vmatprep.subr.mxu0 %v520
        %551 = vmatpush1.msra.mxu0 %v517
        %552 = vmatprep.subr.mxu0 %v499
        %553 = vmatpush1.msra.mxu0 %v498
        %554 = vmatprep.subr.mxu0 0.0
        %555 = vmatpush2.msra.mxu0 0.0
        %556 = vmatprep.subr.mxu0 0.0
        %557 = vmatpush2.msra.mxu0 0.0
        %558 = vmatprep.subr.mxu0 0.0
        %559 = vmatpush2.msra.mxu0 0.0
        %560 = vmatprep.subr.mxu0 0.0
        %561 = vmatpush2.msra.mxu0 0.0
        %562 = vmatprep.subr.mxu0 0.0
        %563 = vmatpush2.msra.mxu0 0.0
        %564 = vmatprep.subr.mxu0 0.0
        %565 = vmatpush2.msra.mxu0 0.0
        %566 = vmatprep.subr.mxu0 0.0
        %567 = vmatpush2.msra.mxu0 0.0
        %568 = vmatprep.subr.mxu0 0.0
        %569 = vmatpush2.msra.mxu0 0.0
        %570 = vmatprep.subr.mxu0 0.0
        %571 = vmatpush2.msra.mxu0 0.0
        %572 = vmatprep.subr.mxu0 0.0
        %573 = vmatpush2.msra.mxu0 0.0
        %574 = vmatprep.subr.mxu0 0.0
        %575 = vmatpush2.msra.mxu0 0.0
        %576 = vmatprep.subr.mxu0 0.0
        %577 = vmatpush2.msra.mxu0 0.0
        %578 = vmatprep.subr.mxu0 0.0
        %579 = vmatpush2.msra.mxu0 0.0
        %580 = vmatprep.subr.mxu0 0.0
        %581 = vmatpush2.msra.mxu0 0.0
        %582 = vmatprep.subr.mxu0 0.0
        %583 = vmatpush2.msra.mxu0 0.0
        %584 = vmatprep.subr.mxu0 0.0
        %585 = vmatpush2.msra.mxu0 0.0
        %586 = vmatprep.mubr.f32.mxu0 0.0
        %587 = vmatmul.mubr.f32.gmra.mxu0 %v504
        %v588 = vpop.f32.mrf.mxu0
        %v589 = vadd.f32 0.0, %v588
        %v590 = vpop.f32.mrf.mxu0
        %v591 = vadd.f32 0.0, %v590
        %592 = vmatprep.mubr.f32.mxu0 0.0
        %593 = vmatmul.mubr.f32.gmra.mxu0 %v507
        %v594 = vpop.f32.mrf.mxu0
        %v595 = vadd.f32 0.0, %v594
        %v596 = vpop.f32.mrf.mxu0
        %v597 = vadd.f32 0.0, %v596
        %598 = vmatprep.mubr.f32.mxu0 0.0
        %599 = vmatmul.mubr.f32.gmra.mxu0 %v510
        %v600 = vpop.f32.mrf.mxu0
        %v601 = vadd.f32 0.0, %v600
        %v602 = vpop.f32.mrf.mxu0
        %v603 = vadd.f32 0.0, %v602
        %604 = vmatprep.mubr.f32.mxu0 0.0
        %605 = vmatmul.mubr.f32.gmra.mxu0 %v513
        %v606 = vpop.f32.mrf.mxu0
        %v607 = vadd.f32 0.0, %v606
        %v608 = vpop.f32.mrf.mxu0
        %v609 = vadd.f32 0.0, %v608
        %610 = vdwg.mxu0
        %v612 = vsel %vm502, %v462, 0
        %v615 = vsel %vm502, %v463, 0
        %v618 = vsel %vm502, %v464, 0
        %v621 = vsel %vm502, %v465, 0
        %v624 = vsel %vm515, %v496, 0
        %v627 = vsel %vm515, %v497, 0
        %629 = vmatprep.subr.mxu0 0.0
        %630 = vmatpush1.msra.mxu0 0.0
        %631 = vmatprep.subr.mxu0 0.0
        %632 = vmatpush1.msra.mxu0 0.0
        %633 = vmatprep.subr.mxu0 0.0
        %634 = vmatpush1.msra.mxu0 0.0
        %635 = vmatprep.subr.mxu0 0.0
        %636 = vmatpush1.msra.mxu0 0.0
        %637 = vmatprep.subr.mxu0 0.0
        %638 = vmatpush1.msra.mxu0 0.0
        %639 = vmatprep.subr.mxu0 0.0
        %640 = vmatpush1.msra.mxu0 0.0
        %641 = vmatprep.subr.mxu0 0.0
        %642 = vmatpush1.msra.mxu0 0.0
        %643 = vmatprep.subr.mxu0 0.0
        %644 = vmatpush1.msra.mxu0 0.0
        %645 = vmatprep.subr.mxu0 0.0
        %646 = vmatpush1.msra.mxu0 0.0
        %647 = vmatprep.subr.mxu0 0.0
        %648 = vmatpush1.msra.mxu0 0.0
        %649 = vmatprep.subr.mxu0 0.0
        %650 = vmatpush1.msra.mxu0 0.0
        %651 = vmatprep.subr.mxu0 0.0
        %652 = vmatpush1.msra.mxu0 0.0
        %653 = vmatprep.subr.mxu0 0.0
        %654 = vmatpush1.msra.mxu0 0.0
        %655 = vmatprep.subr.mxu0 0.0
        %656 = vmatpush1.msra.mxu0 0.0
        %657 = vmatprep.subr.mxu0 %v627
        %658 = vmatpush1.msra.mxu0 %v624
        %659 = vmatprep.subr.mxu0 %v495
        %660 = vmatpush1.msra.mxu0 %v494
        %661 = vmatprep.subr.mxu0 0.0
        %662 = vmatpush2.msra.mxu0 0.0
        %663 = vmatprep.subr.mxu0 0.0
        %664 = vmatpush2.msra.mxu0 0.0
        %665 = vmatprep.subr.mxu0 0.0
        %666 = vmatpush2.msra.mxu0 0.0
        %667 = vmatprep.subr.mxu0 0.0
        %668 = vmatpush2.msra.mxu0 0.0
        %669 = vmatprep.subr.mxu0 0.0
        %670 = vmatpush2.msra.mxu0 0.0
        %671 = vmatprep.subr.mxu0 0.0
        %672 = vmatpush2.msra.mxu0 0.0
        %673 = vmatprep.subr.mxu0 0.0
        %674 = vmatpush2.msra.mxu0 0.0
        %675 = vmatprep.subr.mxu0 0.0
        %676 = vmatpush2.msra.mxu0 0.0
        %677 = vmatprep.subr.mxu0 0.0
        %678 = vmatpush2.msra.mxu0 0.0
        %679 = vmatprep.subr.mxu0 0.0
        %680 = vmatpush2.msra.mxu0 0.0
        %681 = vmatprep.subr.mxu0 0.0
        %682 = vmatpush2.msra.mxu0 0.0
        %683 = vmatprep.subr.mxu0 0.0
        %684 = vmatpush2.msra.mxu0 0.0
        %685 = vmatprep.subr.mxu0 0.0
        %686 = vmatpush2.msra.mxu0 0.0
        %687 = vmatprep.subr.mxu0 0.0
        %688 = vmatpush2.msra.mxu0 0.0
        %689 = vmatprep.subr.mxu0 0.0
        %690 = vmatpush2.msra.mxu0 0.0
        %691 = vmatprep.subr.mxu0 0.0
        %692 = vmatpush2.msra.mxu0 0.0
        %693 = vmatprep.mubr.f32.mxu0 0.0
        %694 = vmatmul.mubr.f32.gmra.mxu0 %v612
        %v695 = vpop.f32.mrf.mxu0
        %v696 = vadd.f32 %v589, %v695
        %v697 = vpop.f32.mrf.mxu0
        %v698 = vadd.f32 %v591, %v697
        %699 = vmatprep.mubr.f32.mxu0 0.0
        %700 = vmatmul.mubr.f32.gmra.mxu0 %v615
        %v701 = vpop.f32.mrf.mxu0
        %v702 = vadd.f32 %v595, %v701
        %v703 = vpop.f32.mrf.mxu0
        %v704 = vadd.f32 %v597, %v703
        %705 = vmatprep.mubr.f32.mxu0 0.0
        %706 = vmatmul.mubr.f32.gmra.mxu0 %v618
        %v707 = vpop.f32.mrf.mxu0
        %v708 = vadd.f32 %v601, %v707
        %v709 = vpop.f32.mrf.mxu0
        %v710 = vadd.f32 %v603, %v709
        %711 = vmatprep.mubr.f32.mxu0 0.0
        %712 = vmatmul.mubr.f32.gmra.mxu0 %v621
        %v713 = vpop.f32.mrf.mxu0
        %v714 = vadd.f32 %v607, %v713
        %v715 = vpop.f32.mrf.mxu0
        %v716 = vadd.f32 %v609, %v715
        %717 = vdwg.mxu0
        %v718 = vld [vmem:[%s4] sm:$0x3]
        %v720 = vlaneseq
        %v721 = vshrl.u32 %v720, 7
        %v722 = vsub.s32 0, %v721
        %v723 = vrot.slane %v718, %v722
        %v724 = vlaneseq
        %v725 = vshrl.u32 %v724, 7
        %v726 = vsub.s32 1, %v725
        %v727 = vrot.slane %v718, %v726
        %v730 = vadd.f32 %v696, %v723
        %v731 = vadd.f32 %v698, %v727
        %v732 = vadd.f32 %v702, %v723
        %v733 = vadd.f32 %v704, %v727
        %v734 = vadd.f32 %v708, %v723
        %v735 = vadd.f32 %v710, %v727
        %v736 = vadd.f32 %v714, %v723
        %v737 = vadd.f32 %v716, %v727
        %v738 = vld [vmem:[%s5] sm:$0xff]
        %v739 = vld [vmem:[%s5 + $0x8] sm:$0xff]
        %v740 = vld [vmem:[%s5 + $0x10] sm:$0xff]
        %v741 = vld [vmem:[%s5 + $0x18] sm:$0xff]
        %v742 = vld [vmem:[%s5 + $0x20] sm:$0xff]
        %v743 = vld [vmem:[%s5 + $0x28] sm:$0xff]
        %v744 = vld [vmem:[%s5 + $0x30] sm:$0xff]
        %v745 = vld [vmem:[%s5 + $0x38] sm:$0xff]
        %v746 = vld [vmem:[%s5 + $0x40] sm:$0xff]
        %v747 = vld [vmem:[%s5 + $0x48] sm:$0xff]
        %v748 = vld [vmem:[%s5 + $0x50] sm:$0xff]
        %v749 = vld [vmem:[%s5 + $0x58] sm:$0xff]
        %v750 = vld [vmem:[%s5 + $0x60] sm:$0xff]
        %v751 = vld [vmem:[%s5 + $0x68] sm:$0xff]
        %v752 = vld [vmem:[%s5 + $0x70] sm:$0xff]
        %v753 = vld [vmem:[%s5 + $0x78] sm:$0xff]
        %vm754 = vcmask 523264
        %v756 = vsel %vm754, 0.0, 0
        %758 = vmatprep.subr.mxu0 0.0
        %759 = vmatpush1.msra.mxu0 0.0
        %760 = vmatprep.subr.mxu0 0.0
        %761 = vmatpush1.msra.mxu0 0.0
        %762 = vmatprep.subr.mxu0 0.0
        %763 = vmatpush1.msra.mxu0 0.0
        %764 = vmatprep.subr.mxu0 0.0
        %765 = vmatpush1.msra.mxu0 0.0
        %766 = vmatprep.subr.mxu0 0.0
        %767 = vmatpush1.msra.mxu0 0.0
        %768 = vmatprep.subr.mxu0 0.0
        %769 = vmatpush1.msra.mxu0 0.0
        %770 = vmatprep.subr.mxu0 0.0
        %771 = vmatpush1.msra.mxu0 0.0
        %772 = vmatprep.subr.mxu0 0.0
        %773 = vmatpush1.msra.mxu0 0.0
        %774 = vmatprep.subr.mxu0 %v753
        %775 = vmatpush1.msra.mxu0 %v752
        %776 = vmatprep.subr.mxu0 %v751
        %777 = vmatpush1.msra.mxu0 %v750
        %778 = vmatprep.subr.mxu0 %v749
        %779 = vmatpush1.msra.mxu0 %v748
        %780 = vmatprep.subr.mxu0 %v747
        %781 = vmatpush1.msra.mxu0 %v746
        %782 = vmatprep.subr.mxu0 %v745
        %783 = vmatpush1.msra.mxu0 %v744
        %784 = vmatprep.subr.mxu0 %v743
        %785 = vmatpush1.msra.mxu0 %v742
        %786 = vmatprep.subr.mxu0 %v741
        %787 = vmatpush1.msra.mxu0 %v740
        %788 = vmatprep.subr.mxu0 %v739
        %789 = vmatpush1.msra.mxu0 %v738
        %790 = vmatprep.subr.mxu0 0.0
        %791 = vmatpush2.msra.mxu0 0.0
        %792 = vmatprep.subr.mxu0 0.0
        %793 = vmatpush2.msra.mxu0 0.0
        %794 = vmatprep.subr.mxu0 0.0
        %795 = vmatpush2.msra.mxu0 0.0
        %796 = vmatprep.subr.mxu0 0.0
        %797 = vmatpush2.msra.mxu0 0.0
        %798 = vmatprep.subr.mxu0 0.0
        %799 = vmatpush2.msra.mxu0 0.0
        %800 = vmatprep.subr.mxu0 0.0
        %801 = vmatpush2.msra.mxu0 0.0
        %802 = vmatprep.subr.mxu0 0.0
        %803 = vmatpush2.msra.mxu0 0.0
        %804 = vmatprep.subr.mxu0 0.0
        %805 = vmatpush2.msra.mxu0 0.0
        %806 = vmatprep.subr.mxu0 0.0
        %807 = vmatpush2.msra.mxu0 0.0
        %808 = vmatprep.subr.mxu0 0.0
        %809 = vmatpush2.msra.mxu0 0.0
        %810 = vmatprep.subr.mxu0 0.0
        %811 = vmatpush2.msra.mxu0 0.0
        %812 = vmatprep.subr.mxu0 0.0
        %813 = vmatpush2.msra.mxu0 0.0
        %814 = vmatprep.subr.mxu0 0.0
        %815 = vmatpush2.msra.mxu0 0.0
        %816 = vmatprep.subr.mxu0 0.0
        %817 = vmatpush2.msra.mxu0 0.0
        %818 = vmatprep.subr.mxu0 0.0
        %819 = vmatpush2.msra.mxu0 0.0
        %820 = vmatprep.subr.mxu0 0.0
        %821 = vmatpush2.msra.mxu0 0.0
        %822 = vmatprep.mubr.f32.mxu0 0.0
        %823 = vmatmul.mubr.f32.gmra.mxu0 %v756
        %v824 = vpop.f32.mrf.mxu0
        %v825 = vadd.f32 0.0, %v824
        %v826 = vpop.f32.mrf.mxu0
        %v827 = vadd.f32 0.0, %v826
        %828 = vdwg.mxu0
        %v829 = vadd.f32 %v730, %v825
        %v830 = vadd.f32 %v731, %v827
        %v831 = vxor.u32 %v829, 2147483648
        %v832 = vmul.f32 %v831, 1.442695
        %v833 = vpow.pop %v832
        %v834 = vadd.f32 %v833, 1.0
        %v835 = vrcp.pop %v834
        %v836 = vmul.f32 1.0, %v835
        %v837 = vtanh.pop %v830
        %v838 = vxor.u32 %v830, 2147483648
        %v839 = vmul.f32 %v838, 1.442695
        %v840 = vpow.pop %v839
        %v841 = vadd.f32 %v840, 1.0
        %v842 = vrcp.pop %v841
        %v843 = vmul.f32 1.0, %v842
        %v844 = vmul.f32 %v836, 0.0
        %v845 = vmul.f32 %v836, %v837
        %847 = vrot.lane.b32.xlu0 %v845, 64
        %v848 = vpop.permute.xlu0 %847
        %v850 = vadd.f32 %v844, %v848
        %v851 = vtanh.pop %v850
        %v852 = vmul.f32 %v843, %v851
        %854 = vrot.lane.b32.xlu0 %v852, 64
        %v855 = vpop.permute.xlu0 %854
        %v856 = vsel %vm754, %v855, 0
        %858 = vmatprep.subr.mxu0 0.0
        %859 = vmatpush1.msra.mxu0 0.0
        %860 = vmatprep.subr.mxu0 0.0
        %861 = vmatpush1.msra.mxu0 0.0
        %862 = vmatprep.subr.mxu0 0.0
        %863 = vmatpush1.msra.mxu0 0.0
        %864 = vmatprep.subr.mxu0 0.0
        %865 = vmatpush1.msra.mxu0 0.0
        %866 = vmatprep.subr.mxu0 0.0
        %867 = vmatpush1.msra.mxu0 0.0
        %868 = vmatprep.subr.mxu0 0.0
        %869 = vmatpush1.msra.mxu0 0.0
        %870 = vmatprep.subr.mxu0 0.0
        %871 = vmatpush1.msra.mxu0 0.0
        %872 = vmatprep.subr.mxu0 0.0
        %873 = vmatpush1.msra.mxu0 0.0
        %874 = vmatprep.subr.mxu0 %v753
        %875 = vmatpush1.msra.mxu0 %v752
        %876 = vmatprep.subr.mxu0 %v751
        %877 = vmatpush1.msra.mxu0 %v750
        %878 = vmatprep.subr.mxu0 %v749
        %879 = vmatpush1.msra.mxu0 %v748
        %880 = vmatprep.subr.mxu0 %v747
        %881 = vmatpush1.msra.mxu0 %v746
        %882 = vmatprep.subr.mxu0 %v745
        %883 = vmatpush1.msra.mxu0 %v744
        %884 = vmatprep.subr.mxu0 %v743
        %885 = vmatpush1.msra.mxu0 %v742
        %886 = vmatprep.subr.mxu0 %v741
        %887 = vmatpush1.msra.mxu0 %v740
        %888 = vmatprep.subr.mxu0 %v739
        %889 = vmatpush1.msra.mxu0 %v738
        %890 = vmatprep.subr.mxu0 0.0
        %891 = vmatpush2.msra.mxu0 0.0
        %892 = vmatprep.subr.mxu0 0.0
        %893 = vmatpush2.msra.mxu0 0.0
        %894 = vmatprep.subr.mxu0 0.0
        %895 = vmatpush2.msra.mxu0 0.0
        %896 = vmatprep.subr.mxu0 0.0
        %897 = vmatpush2.msra.mxu0 0.0
        %898 = vmatprep.subr.mxu0 0.0
        %899 = vmatpush2.msra.mxu0 0.0
        %900 = vmatprep.subr.mxu0 0.0
        %901 = vmatpush2.msra.mxu0 0.0
        %902 = vmatprep.subr.mxu0 0.0
        %903 = vmatpush2.msra.mxu0 0.0
        %904 = vmatprep.subr.mxu0 0.0
        %905 = vmatpush2.msra.mxu0 0.0
        %906 = vmatprep.subr.mxu0 0.0
        %907 = vmatpush2.msra.mxu0 0.0
        %908 = vmatprep.subr.mxu0 0.0
        %909 = vmatpush2.msra.mxu0 0.0
        %910 = vmatprep.subr.mxu0 0.0
        %911 = vmatpush2.msra.mxu0 0.0
        %912 = vmatprep.subr.mxu0 0.0
        %913 = vmatpush2.msra.mxu0 0.0
        %914 = vmatprep.subr.mxu0 0.0
        %915 = vmatpush2.msra.mxu0 0.0
        %916 = vmatprep.subr.mxu0 0.0
        %917 = vmatpush2.msra.mxu0 0.0
        %918 = vmatprep.subr.mxu0 0.0
        %919 = vmatpush2.msra.mxu0 0.0
        %920 = vmatprep.subr.mxu0 0.0
        %921 = vmatpush2.msra.mxu0 0.0
        %922 = vmatprep.mubr.f32.mxu0 0.0
        %923 = vmatmul.mubr.f32.gmra.mxu0 %v856
        %v924 = vpop.f32.mrf.mxu0
        %v925 = vadd.f32 0.0, %v924
        %v926 = vpop.f32.mrf.mxu0
        %v927 = vadd.f32 0.0, %v926
        %928 = vdwg.mxu0
        %v931 = vrot.slane %v925, 4
        %v932 = vrot.slane %v927, 4
        %v935 = vadd.f32 %v730, %v931
        %v936 = vadd.f32 %v731, %v932
        %v937 = vxor.u32 %v935, 2147483648
        %v938 = vmul.f32 %v937, 1.442695
        %v939 = vpow.pop %v938
        %v940 = vadd.f32 %v939, 1.0
        %v941 = vrcp.pop %v940
        %v942 = vmul.f32 1.0, %v941
        %v943 = vtanh.pop %v936
        %v944 = vxor.u32 %v936, 2147483648
        %v945 = vmul.f32 %v944, 1.442695
        %v946 = vpow.pop %v945
        %v947 = vadd.f32 %v946, 1.0
        %v948 = vrcp.pop %v947
        %v949 = vmul.f32 1.0, %v948
        %v951 = vrot.slane %v850, 4
        %v953 = vmul.f32 %v942, %v951
        %v954 = vmul.f32 %v942, %v943
        %956 = vrot.lane.b32.xlu0 %v954, 64
        %v957 = vpop.permute.xlu0 %956
        %v959 = vadd.f32 %v953, %v957
        %v960 = vtanh.pop %v959
        %v961 = vmul.f32 %v949, %v960
        %v963 = vrot.slane %v961, 4
        %964 = vrot.lane.b32.xlu0 %v963, 64
        %v965 = vpop.permute.xlu0 %964
        %v966 = vsel %vm754, %v965, 0
        %968 = vmatprep.subr.mxu0 0.0
        %969 = vmatpush1.msra.mxu0 0.0
        %970 = vmatprep.subr.mxu0 0.0
        %971 = vmatpush1.msra.mxu0 0.0
        %972 = vmatprep.subr.mxu0 0.0
        %973 = vmatpush1.msra.mxu0 0.0
        %974 = vmatprep.subr.mxu0 0.0
        %975 = vmatpush1.msra.mxu0 0.0
        %976 = vmatprep.subr.mxu0 0.0
        %977 = vmatpush1.msra.mxu0 0.0
        %978 = vmatprep.subr.mxu0 0.0
        %979 = vmatpush1.msra.mxu0 0.0
        %980 = vmatprep.subr.mxu0 0.0
        %981 = vmatpush1.msra.mxu0 0.0
        %982 = vmatprep.subr.mxu0 0.0
        %983 = vmatpush1.msra.mxu0 0.0
        %984 = vmatprep.subr.mxu0 %v753
        %985 = vmatpush1.msra.mxu0 %v752
        %986 = vmatprep.subr.mxu0 %v751
        %987 = vmatpush1.msra.mxu0 %v750
        %988 = vmatprep.subr.mxu0 %v749
        %989 = vmatpush1.msra.mxu0 %v748
        %990 = vmatprep.subr.mxu0 %v747
        %991 = vmatpush1.msra.mxu0 %v746
        %992 = vmatprep.subr.mxu0 %v745
        %993 = vmatpush1.msra.mxu0 %v744
        %994 = vmatprep.subr.mxu0 %v743
        %995 = vmatpush1.msra.mxu0 %v742
        %996 = vmatprep.subr.mxu0 %v741
        %997 = vmatpush1.msra.mxu0 %v740
        %998 = vmatprep.subr.mxu0 %v739
        %999 = vmatpush1.msra.mxu0 %v738
        %1000 = vmatprep.subr.mxu0 0.0
        %1001 = vmatpush2.msra.mxu0 0.0
        %1002 = vmatprep.subr.mxu0 0.0
        %1003 = vmatpush2.msra.mxu0 0.0
        %1004 = vmatprep.subr.mxu0 0.0
        %1005 = vmatpush2.msra.mxu0 0.0
        %1006 = vmatprep.subr.mxu0 0.0
        %1007 = vmatpush2.msra.mxu0 0.0
        %1008 = vmatprep.subr.mxu0 0.0
        %1009 = vmatpush2.msra.mxu0 0.0
        %1010 = vmatprep.subr.mxu0 0.0
        %1011 = vmatpush2.msra.mxu0 0.0
        %1012 = vmatprep.subr.mxu0 0.0
        %1013 = vmatpush2.msra.mxu0 0.0
        %1014 = vmatprep.subr.mxu0 0.0
        %1015 = vmatpush2.msra.mxu0 0.0
        %1016 = vmatprep.subr.mxu0 0.0
        %1017 = vmatpush2.msra.mxu0 0.0
        %1018 = vmatprep.subr.mxu0 0.0
        %1019 = vmatpush2.msra.mxu0 0.0
        %1020 = vmatprep.subr.mxu0 0.0
        %1021 = vmatpush2.msra.mxu0 0.0
        %1022 = vmatprep.subr.mxu0 0.0
        %1023 = vmatpush2.msra.mxu0 0.0
        %1024 = vmatprep.subr.mxu0 0.0
        %1025 = vmatpush2.msra.mxu0 0.0
        %1026 = vmatprep.subr.mxu0 0.0
        %1027 = vmatpush2.msra.mxu0 0.0
        %1028 = vmatprep.subr.mxu0 0.0
        %1029 = vmatpush2.msra.mxu0 0.0
        %1030 = vmatprep.subr.mxu0 0.0
        %1031 = vmatpush2.msra.mxu0 0.0
        %1032 = vmatprep.mubr.f32.mxu0 0.0
        %1033 = vmatmul.mubr.f32.gmra.mxu0 %v966
        %v1034 = vpop.f32.mrf.mxu0
        %v1035 = vadd.f32 0.0, %v1034
        %v1036 = vpop.f32.mrf.mxu0
        %v1037 = vadd.f32 0.0, %v1036
        %1038 = vdwg.mxu0
        %v1039 = vadd.f32 %v732, %v1035
        %v1040 = vadd.f32 %v733, %v1037
        %v1041 = vxor.u32 %v1039, 2147483648
        %v1042 = vmul.f32 %v1041, 1.442695
        %v1043 = vpow.pop %v1042
        %v1044 = vadd.f32 %v1043, 1.0
        %v1045 = vrcp.pop %v1044
        %v1046 = vmul.f32 1.0, %v1045
        %v1047 = vtanh.pop %v1040
        %v1048 = vxor.u32 %v1040, 2147483648
        %v1049 = vmul.f32 %v1048, 1.442695
        %v1050 = vpow.pop %v1049
        %v1051 = vadd.f32 %v1050, 1.0
        %v1052 = vrcp.pop %v1051
        %v1053 = vmul.f32 1.0, %v1052
        %v1055 = vrot.slane %v959, 4
        %v1057 = vmul.f32 %v1046, %v1055
        %v1058 = vmul.f32 %v1046, %v1047
        %1060 = vrot.lane.b32.xlu0 %v1058, 64
        %v1061 = vpop.permute.xlu0 %1060
        %v1063 = vadd.f32 %v1057, %v1061
        %v1064 = vtanh.pop %v1063
        %v1065 = vmul.f32 %v1053, %v1064
        %1067 = vrot.lane.b32.xlu0 %v1065, 64
        %v1068 = vpop.permute.xlu0 %1067
        %v1069 = vsel %vm754, %v1068, 0
        %1071 = vmatprep.subr.mxu0 0.0
        %1072 = vmatpush1.msra.mxu0 0.0
        %1073 = vmatprep.subr.mxu0 0.0
        %1074 = vmatpush1.msra.mxu0 0.0
        %1075 = vmatprep.subr.mxu0 0.0
        %1076 = vmatpush1.msra.mxu0 0.0
        %1077 = vmatprep.subr.mxu0 0.0
        %1078 = vmatpush1.msra.mxu0 0.0
        %1079 = vmatprep.subr.mxu0 0.0
        %1080 = vmatpush1.msra.mxu0 0.0
        %1081 = vmatprep.subr.mxu0 0.0
        %1082 = vmatpush1.msra.mxu0 0.0
        %1083 = vmatprep.subr.mxu0 0.0
        %1084 = vmatpush1.msra.mxu0 0.0
        %1085 = vmatprep.subr.mxu0 0.0
        %1086 = vmatpush1.msra.mxu0 0.0
        %1087 = vmatprep.subr.mxu0 %v753
        %1088 = vmatpush1.msra.mxu0 %v752
        %1089 = vmatprep.subr.mxu0 %v751
        %1090 = vmatpush1.msra.mxu0 %v750
        %1091 = vmatprep.subr.mxu0 %v749
        %1092 = vmatpush1.msra.mxu0 %v748
        %1093 = vmatprep.subr.mxu0 %v747
        %1094 = vmatpush1.msra.mxu0 %v746
        %1095 = vmatprep.subr.mxu0 %v745
        %1096 = vmatpush1.msra.mxu0 %v744
        %1097 = vmatprep.subr.mxu0 %v743
        %1098 = vmatpush1.msra.mxu0 %v742
        %1099 = vmatprep.subr.mxu0 %v741
        %1100 = vmatpush1.msra.mxu0 %v740
        %1101 = vmatprep.subr.mxu0 %v739
        %1102 = vmatpush1.msra.mxu0 %v738
        %1103 = vmatprep.subr.mxu0 0.0
        %1104 = vmatpush2.msra.mxu0 0.0
        %1105 = vmatprep.subr.mxu0 0.0
        %1106 = vmatpush2.msra.mxu0 0.0
        %1107 = vmatprep.subr.mxu0 0.0
        %1108 = vmatpush2.msra.mxu0 0.0
        %1109 = vmatprep.subr.mxu0 0.0
        %1110 = vmatpush2.msra.mxu0 0.0
        %1111 = vmatprep.subr.mxu0 0.0
        %1112 = vmatpush2.msra.mxu0 0.0
        %1113 = vmatprep.subr.mxu0 0.0
        %1114 = vmatpush2.msra.mxu0 0.0
        %1115 = vmatprep.subr.mxu0 0.0
        %1116 = vmatpush2.msra.mxu0 0.0
        %1117 = vmatprep.subr.mxu0 0.0
        %1118 = vmatpush2.msra.mxu0 0.0
        %1119 = vmatprep.subr.mxu0 0.0
        %1120 = vmatpush2.msra.mxu0 0.0
        %1121 = vmatprep.subr.mxu0 0.0
        %1122 = vmatpush2.msra.mxu0 0.0
        %1123 = vmatprep.subr.mxu0 0.0
        %1124 = vmatpush2.msra.mxu0 0.0
        %1125 = vmatprep.subr.mxu0 0.0
        %1126 = vmatpush2.msra.mxu0 0.0
        %1127 = vmatprep.subr.mxu0 0.0
        %1128 = vmatpush2.msra.mxu0 0.0
        %1129 = vmatprep.subr.mxu0 0.0
        %1130 = vmatpush2.msra.mxu0 0.0
        %1131 = vmatprep.subr.mxu0 0.0
        %1132 = vmatpush2.msra.mxu0 0.0
        %1133 = vmatprep.subr.mxu0 0.0
        %1134 = vmatpush2.msra.mxu0 0.0
        %1135 = vmatprep.mubr.f32.mxu0 0.0
        %1136 = vmatmul.mubr.f32.gmra.mxu0 %v1069
        %v1137 = vpop.f32.mrf.mxu0
        %v1138 = vadd.f32 0.0, %v1137
        %v1139 = vpop.f32.mrf.mxu0
        %v1140 = vadd.f32 0.0, %v1139
        %1141 = vdwg.mxu0
        %v1144 = vrot.slane %v1138, 4
        %v1145 = vrot.slane %v1140, 4
        %v1148 = vadd.f32 %v732, %v1144
        %v1149 = vadd.f32 %v733, %v1145
        %v1150 = vxor.u32 %v1148, 2147483648
        %v1151 = vmul.f32 %v1150, 1.442695
        %v1152 = vpow.pop %v1151
        %v1153 = vadd.f32 %v1152, 1.0
        %v1154 = vrcp.pop %v1153
        %v1155 = vmul.f32 1.0, %v1154
        %v1156 = vtanh.pop %v1149
        %v1157 = vxor.u32 %v1149, 2147483648
        %v1158 = vmul.f32 %v1157, 1.442695
        %v1159 = vpow.pop %v1158
        %v1160 = vadd.f32 %v1159, 1.0
        %v1161 = vrcp.pop %v1160
        %v1162 = vmul.f32 1.0, %v1161
        %v1164 = vrot.slane %v1063, 4
        %v1166 = vmul.f32 %v1155, %v1164
        %v1167 = vmul.f32 %v1155, %v1156
        %1169 = vrot.lane.b32.xlu0 %v1167, 64
        %v1170 = vpop.permute.xlu0 %1169
        %v1172 = vadd.f32 %v1166, %v1170
        %v1173 = vtanh.pop %v1172
        %v1174 = vmul.f32 %v1162, %v1173
        %v1176 = vrot.slane %v1174, 4
        %1177 = vrot.lane.b32.xlu0 %v1176, 64
        %v1178 = vpop.permute.xlu0 %1177
        %v1179 = vsel %vm754, %v1178, 0
        %1181 = vmatprep.subr.mxu0 0.0
        %1182 = vmatpush1.msra.mxu0 0.0
        %1183 = vmatprep.subr.mxu0 0.0
        %1184 = vmatpush1.msra.mxu0 0.0
        %1185 = vmatprep.subr.mxu0 0.0
        %1186 = vmatpush1.msra.mxu0 0.0
        %1187 = vmatprep.subr.mxu0 0.0
        %1188 = vmatpush1.msra.mxu0 0.0
        %1189 = vmatprep.subr.mxu0 0.0
        %1190 = vmatpush1.msra.mxu0 0.0
        %1191 = vmatprep.subr.mxu0 0.0
        %1192 = vmatpush1.msra.mxu0 0.0
        %1193 = vmatprep.subr.mxu0 0.0
        %1194 = vmatpush1.msra.mxu0 0.0
        %1195 = vmatprep.subr.mxu0 0.0
        %1196 = vmatpush1.msra.mxu0 0.0
        %1197 = vmatprep.subr.mxu0 %v753
        %1198 = vmatpush1.msra.mxu0 %v752
        %1199 = vmatprep.subr.mxu0 %v751
        %1200 = vmatpush1.msra.mxu0 %v750
        %1201 = vmatprep.subr.mxu0 %v749
        %1202 = vmatpush1.msra.mxu0 %v748
        %1203 = vmatprep.subr.mxu0 %v747
        %1204 = vmatpush1.msra.mxu0 %v746
        %1205 = vmatprep.subr.mxu0 %v745
        %1206 = vmatpush1.msra.mxu0 %v744
        %1207 = vmatprep.subr.mxu0 %v743
        %1208 = vmatpush1.msra.mxu0 %v742
        %1209 = vmatprep.subr.mxu0 %v741
        %1210 = vmatpush1.msra.mxu0 %v740
        %1211 = vmatprep.subr.mxu0 %v739
        %1212 = vmatpush1.msra.mxu0 %v738
        %1213 = vmatprep.subr.mxu0 0.0
        %1214 = vmatpush2.msra.mxu0 0.0
        %1215 = vmatprep.subr.mxu0 0.0
        %1216 = vmatpush2.msra.mxu0 0.0
        %1217 = vmatprep.subr.mxu0 0.0
        %1218 = vmatpush2.msra.mxu0 0.0
        %1219 = vmatprep.subr.mxu0 0.0
        %1220 = vmatpush2.msra.mxu0 0.0
        %1221 = vmatprep.subr.mxu0 0.0
        %1222 = vmatpush2.msra.mxu0 0.0
        %1223 = vmatprep.subr.mxu0 0.0
        %1224 = vmatpush2.msra.mxu0 0.0
        %1225 = vmatprep.subr.mxu0 0.0
        %1226 = vmatpush2.msra.mxu0 0.0
        %1227 = vmatprep.subr.mxu0 0.0
        %1228 = vmatpush2.msra.mxu0 0.0
        %1229 = vmatprep.subr.mxu0 0.0
        %1230 = vmatpush2.msra.mxu0 0.0
        %1231 = vmatprep.subr.mxu0 0.0
        %1232 = vmatpush2.msra.mxu0 0.0
        %1233 = vmatprep.subr.mxu0 0.0
        %1234 = vmatpush2.msra.mxu0 0.0
        %1235 = vmatprep.subr.mxu0 0.0
        %1236 = vmatpush2.msra.mxu0 0.0
        %1237 = vmatprep.subr.mxu0 0.0
        %1238 = vmatpush2.msra.mxu0 0.0
        %1239 = vmatprep.subr.mxu0 0.0
        %1240 = vmatpush2.msra.mxu0 0.0
        %1241 = vmatprep.subr.mxu0 0.0
        %1242 = vmatpush2.msra.mxu0 0.0
        %1243 = vmatprep.subr.mxu0 0.0
        %1244 = vmatpush2.msra.mxu0 0.0
        %1245 = vmatprep.mubr.f32.mxu0 0.0
        %1246 = vmatmul.mubr.f32.gmra.mxu0 %v1179
        %v1247 = vpop.f32.mrf.mxu0
        %v1248 = vadd.f32 0.0, %v1247
        %v1249 = vpop.f32.mrf.mxu0
        %v1250 = vadd.f32 0.0, %v1249
        %1251 = vdwg.mxu0
        %v1252 = vadd.f32 %v734, %v1248
        %v1253 = vadd.f32 %v735, %v1250
        %v1254 = vxor.u32 %v1252, 2147483648
        %v1255 = vmul.f32 %v1254, 1.442695
        %v1256 = vpow.pop %v1255
        %v1257 = vadd.f32 %v1256, 1.0
        %v1258 = vrcp.pop %v1257
        %v1259 = vmul.f32 1.0, %v1258
        %v1260 = vtanh.pop %v1253
        %v1261 = vxor.u32 %v1253, 2147483648
        %v1262 = vmul.f32 %v1261, 1.442695
        %v1263 = vpow.pop %v1262
        %v1264 = vadd.f32 %v1263, 1.0
        %v1265 = vrcp.pop %v1264
        %v1266 = vmul.f32 1.0, %v1265
        %v1268 = vrot.slane %v1172, 4
        %v1270 = vmul.f32 %v1259, %v1268
        %v1271 = vmul.f32 %v1259, %v1260
        %1273 = vrot.lane.b32.xlu0 %v1271, 64
        %v1274 = vpop.permute.xlu0 %1273
        %v1276 = vadd.f32 %v1270, %v1274
        %v1277 = vtanh.pop %v1276
        %v1278 = vmul.f32 %v1266, %v1277
        %1280 = vrot.lane.b32.xlu0 %v1278, 64
        %v1281 = vpop.permute.xlu0 %1280
        %v1282 = vsel %vm754, %v1281, 0
        %1284 = vmatprep.subr.mxu0 0.0
        %1285 = vmatpush1.msra.mxu0 0.0
        %1286 = vmatprep.subr.mxu0 0.0
        %1287 = vmatpush1.msra.mxu0 0.0
        %1288 = vmatprep.subr.mxu0 0.0
        %1289 = vmatpush1.msra.mxu0 0.0
        %1290 = vmatprep.subr.mxu0 0.0
        %1291 = vmatpush1.msra.mxu0 0.0
        %1292 = vmatprep.subr.mxu0 0.0
        %1293 = vmatpush1.msra.mxu0 0.0
        %1294 = vmatprep.subr.mxu0 0.0
        %1295 = vmatpush1.msra.mxu0 0.0
        %1296 = vmatprep.subr.mxu0 0.0
        %1297 = vmatpush1.msra.mxu0 0.0
        %1298 = vmatprep.subr.mxu0 0.0
        %1299 = vmatpush1.msra.mxu0 0.0
        %1300 = vmatprep.subr.mxu0 %v753
        %1301 = vmatpush1.msra.mxu0 %v752
        %1302 = vmatprep.subr.mxu0 %v751
        %1303 = vmatpush1.msra.mxu0 %v750
        %1304 = vmatprep.subr.mxu0 %v749
        %1305 = vmatpush1.msra.mxu0 %v748
        %1306 = vmatprep.subr.mxu0 %v747
        %1307 = vmatpush1.msra.mxu0 %v746
        %1308 = vmatprep.subr.mxu0 %v745
        %1309 = vmatpush1.msra.mxu0 %v744
        %1310 = vmatprep.subr.mxu0 %v743
        %1311 = vmatpush1.msra.mxu0 %v742
        %1312 = vmatprep.subr.mxu0 %v741
        %1313 = vmatpush1.msra.mxu0 %v740
        %1314 = vmatprep.subr.mxu0 %v739
        %1315 = vmatpush1.msra.mxu0 %v738
        %1316 = vmatprep.subr.mxu0 0.0
        %1317 = vmatpush2.msra.mxu0 0.0
        %1318 = vmatprep.subr.mxu0 0.0
        %1319 = vmatpush2.msra.mxu0 0.0
        %1320 = vmatprep.subr.mxu0 0.0
        %1321 = vmatpush2.msra.mxu0 0.0
        %1322 = vmatprep.subr.mxu0 0.0
        %1323 = vmatpush2.msra.mxu0 0.0
        %1324 = vmatprep.subr.mxu0 0.0
        %1325 = vmatpush2.msra.mxu0 0.0
        %1326 = vmatprep.subr.mxu0 0.0
        %1327 = vmatpush2.msra.mxu0 0.0
        %1328 = vmatprep.subr.mxu0 0.0
        %1329 = vmatpush2.msra.mxu0 0.0
        %1330 = vmatprep.subr.mxu0 0.0
        %1331 = vmatpush2.msra.mxu0 0.0
        %1332 = vmatprep.subr.mxu0 0.0
        %1333 = vmatpush2.msra.mxu0 0.0
        %1334 = vmatprep.subr.mxu0 0.0
        %1335 = vmatpush2.msra.mxu0 0.0
        %1336 = vmatprep.subr.mxu0 0.0
        %1337 = vmatpush2.msra.mxu0 0.0
        %1338 = vmatprep.subr.mxu0 0.0
        %1339 = vmatpush2.msra.mxu0 0.0
        %1340 = vmatprep.subr.mxu0 0.0
        %1341 = vmatpush2.msra.mxu0 0.0
        %1342 = vmatprep.subr.mxu0 0.0
        %1343 = vmatpush2.msra.mxu0 0.0
        %1344 = vmatprep.subr.mxu0 0.0
        %1345 = vmatpush2.msra.mxu0 0.0
        %1346 = vmatprep.subr.mxu0 0.0
        %1347 = vmatpush2.msra.mxu0 0.0
        %1348 = vmatprep.mubr.f32.mxu0 0.0
        %1349 = vmatmul.mubr.f32.gmra.mxu0 %v1282
        %v1350 = vpop.f32.mrf.mxu0
        %v1351 = vadd.f32 0.0, %v1350
        %v1352 = vpop.f32.mrf.mxu0
        %v1353 = vadd.f32 0.0, %v1352
        %1354 = vdwg.mxu0
        %v1357 = vrot.slane %v1351, 4
        %v1358 = vrot.slane %v1353, 4
        %v1361 = vadd.f32 %v734, %v1357
        %v1362 = vadd.f32 %v735, %v1358
        %v1363 = vxor.u32 %v1361, 2147483648
        %v1364 = vmul.f32 %v1363, 1.442695
        %v1365 = vpow.pop %v1364
        %v1366 = vadd.f32 %v1365, 1.0
        %v1367 = vrcp.pop %v1366
        %v1368 = vmul.f32 1.0, %v1367
        %v1369 = vtanh.pop %v1362
        %v1370 = vxor.u32 %v1362, 2147483648
        %v1371 = vmul.f32 %v1370, 1.442695
        %v1372 = vpow.pop %v1371
        %v1373 = vadd.f32 %v1372, 1.0
        %v1374 = vrcp.pop %v1373
        %v1375 = vmul.f32 1.0, %v1374
        %v1377 = vrot.slane %v1276, 4
        %v1379 = vmul.f32 %v1368, %v1377
        %v1380 = vmul.f32 %v1368, %v1369
        %1382 = vrot.lane.b32.xlu0 %v1380, 64
        %v1383 = vpop.permute.xlu0 %1382
        %v1385 = vadd.f32 %v1379, %v1383
        %v1386 = vtanh.pop %v1385
        %v1387 = vmul.f32 %v1375, %v1386
        %v1389 = vrot.slane %v1387, 4
        %1390 = vrot.lane.b32.xlu0 %v1389, 64
        %v1391 = vpop.permute.xlu0 %1390
        %v1392 = vsel %vm754, %v1391, 0
        %1394 = vmatprep.subr.mxu0 0.0
        %1395 = vmatpush1.msra.mxu0 0.0
        %1396 = vmatprep.subr.mxu0 0.0
        %1397 = vmatpush1.msra.mxu0 0.0
        %1398 = vmatprep.subr.mxu0 0.0
        %1399 = vmatpush1.msra.mxu0 0.0
        %1400 = vmatprep.subr.mxu0 0.0
        %1401 = vmatpush1.msra.mxu0 0.0
        %1402 = vmatprep.subr.mxu0 0.0
        %1403 = vmatpush1.msra.mxu0 0.0
        %1404 = vmatprep.subr.mxu0 0.0
        %1405 = vmatpush1.msra.mxu0 0.0
        %1406 = vmatprep.subr.mxu0 0.0
        %1407 = vmatpush1.msra.mxu0 0.0
        %1408 = vmatprep.subr.mxu0 0.0
        %1409 = vmatpush1.msra.mxu0 0.0
        %1410 = vmatprep.subr.mxu0 %v753
        %1411 = vmatpush1.msra.mxu0 %v752
        %1412 = vmatprep.subr.mxu0 %v751
        %1413 = vmatpush1.msra.mxu0 %v750
        %1414 = vmatprep.subr.mxu0 %v749
        %1415 = vmatpush1.msra.mxu0 %v748
        %1416 = vmatprep.subr.mxu0 %v747
        %1417 = vmatpush1.msra.mxu0 %v746
        %1418 = vmatprep.subr.mxu0 %v745
        %1419 = vmatpush1.msra.mxu0 %v744
        %1420 = vmatprep.subr.mxu0 %v743
        %1421 = vmatpush1.msra.mxu0 %v742
        %1422 = vmatprep.subr.mxu0 %v741
        %1423 = vmatpush1.msra.mxu0 %v740
        %1424 = vmatprep.subr.mxu0 %v739
        %1425 = vmatpush1.msra.mxu0 %v738
        %1426 = vmatprep.subr.mxu0 0.0
        %1427 = vmatpush2.msra.mxu0 0.0
        %1428 = vmatprep.subr.mxu0 0.0
        %1429 = vmatpush2.msra.mxu0 0.0
        %1430 = vmatprep.subr.mxu0 0.0
        %1431 = vmatpush2.msra.mxu0 0.0
        %1432 = vmatprep.subr.mxu0 0.0
        %1433 = vmatpush2.msra.mxu0 0.0
        %1434 = vmatprep.subr.mxu0 0.0
        %1435 = vmatpush2.msra.mxu0 0.0
        %1436 = vmatprep.subr.mxu0 0.0
        %1437 = vmatpush2.msra.mxu0 0.0
        %1438 = vmatprep.subr.mxu0 0.0
        %1439 = vmatpush2.msra.mxu0 0.0
        %1440 = vmatprep.subr.mxu0 0.0
        %1441 = vmatpush2.msra.mxu0 0.0
        %1442 = vmatprep.subr.mxu0 0.0
        %1443 = vmatpush2.msra.mxu0 0.0
        %1444 = vmatprep.subr.mxu0 0.0
        %1445 = vmatpush2.msra.mxu0 0.0
        %1446 = vmatprep.subr.mxu0 0.0
        %1447 = vmatpush2.msra.mxu0 0.0
        %1448 = vmatprep.subr.mxu0 0.0
        %1449 = vmatpush2.msra.mxu0 0.0
        %1450 = vmatprep.subr.mxu0 0.0
        %1451 = vmatpush2.msra.mxu0 0.0
        %1452 = vmatprep.subr.mxu0 0.0
        %1453 = vmatpush2.msra.mxu0 0.0
        %1454 = vmatprep.subr.mxu0 0.0
        %1455 = vmatpush2.msra.mxu0 0.0
        %1456 = vmatprep.subr.mxu0 0.0
        %1457 = vmatpush2.msra.mxu0 0.0
        %1458 = vmatprep.mubr.f32.mxu0 0.0
        %1459 = vmatmul.mubr.f32.gmra.mxu0 %v1392
        %v1460 = vpop.f32.mrf.mxu0
        %v1461 = vadd.f32 0.0, %v1460
        %v1462 = vpop.f32.mrf.mxu0
        %v1463 = vadd.f32 0.0, %v1462
        %1464 = vdwg.mxu0
        %v1465 = vadd.f32 %v736, %v1461
        %v1466 = vadd.f32 %v737, %v1463
        %v1467 = vxor.u32 %v1465, 2147483648
        %v1468 = vmul.f32 %v1467, 1.442695
        %v1469 = vpow.pop %v1468
        %v1470 = vadd.f32 %v1469, 1.0
        %v1471 = vrcp.pop %v1470
        %v1472 = vmul.f32 1.0, %v1471
        %v1473 = vtanh.pop %v1466
        %v1474 = vxor.u32 %v1466, 2147483648
        %v1475 = vmul.f32 %v1474, 1.442695
        %v1476 = vpow.pop %v1475
        %v1477 = vadd.f32 %v1476, 1.0
        %v1478 = vrcp.pop %v1477
        %v1479 = vmul.f32 1.0, %v1478
        %v1481 = vrot.slane %v1385, 4
        %v1483 = vmul.f32 %v1472, %v1481
        %v1484 = vmul.f32 %v1472, %v1473
        %1486 = vrot.lane.b32.xlu0 %v1484, 64
        %v1487 = vpop.permute.xlu0 %1486
        %v1489 = vadd.f32 %v1483, %v1487
        %v1490 = vtanh.pop %v1489
        %v1491 = vmul.f32 %v1479, %v1490
        %1493 = vrot.lane.b32.xlu0 %v1491, 64
        %v1494 = vpop.permute.xlu0 %1493
        %v1495 = vsel %vm754, %v1494, 0
        %1497 = vmatprep.subr.mxu0 0.0
        %1498 = vmatpush1.msra.mxu0 0.0
        %1499 = vmatprep.subr.mxu0 0.0
        %1500 = vmatpush1.msra.mxu0 0.0
        %1501 = vmatprep.subr.mxu0 0.0
        %1502 = vmatpush1.msra.mxu0 0.0
        %1503 = vmatprep.subr.mxu0 0.0
        %1504 = vmatpush1.msra.mxu0 0.0
        %1505 = vmatprep.subr.mxu0 0.0
        %1506 = vmatpush1.msra.mxu0 0.0
        %1507 = vmatprep.subr.mxu0 0.0
        %1508 = vmatpush1.msra.mxu0 0.0
        %1509 = vmatprep.subr.mxu0 0.0
        %1510 = vmatpush1.msra.mxu0 0.0
        %1511 = vmatprep.subr.mxu0 0.0
        %1512 = vmatpush1.msra.mxu0 0.0
        %1513 = vmatprep.subr.mxu0 %v753
        %1514 = vmatpush1.msra.mxu0 %v752
        %1515 = vmatprep.subr.mxu0 %v751
        %1516 = vmatpush1.msra.mxu0 %v750
        %1517 = vmatprep.subr.mxu0 %v749
        %1518 = vmatpush1.msra.mxu0 %v748
        %1519 = vmatprep.subr.mxu0 %v747
        %1520 = vmatpush1.msra.mxu0 %v746
        %1521 = vmatprep.subr.mxu0 %v745
        %1522 = vmatpush1.msra.mxu0 %v744
        %1523 = vmatprep.subr.mxu0 %v743
        %1524 = vmatpush1.msra.mxu0 %v742
        %1525 = vmatprep.subr.mxu0 %v741
        %1526 = vmatpush1.msra.mxu0 %v740
        %1527 = vmatprep.subr.mxu0 %v739
        %1528 = vmatpush1.msra.mxu0 %v738
        %1529 = vmatprep.subr.mxu0 0.0
        %1530 = vmatpush2.msra.mxu0 0.0
        %1531 = vmatprep.subr.mxu0 0.0
        %1532 = vmatpush2.msra.mxu0 0.0
        %1533 = vmatprep.subr.mxu0 0.0
        %1534 = vmatpush2.msra.mxu0 0.0
        %1535 = vmatprep.subr.mxu0 0.0
        %1536 = vmatpush2.msra.mxu0 0.0
        %1537 = vmatprep.subr.mxu0 0.0
        %1538 = vmatpush2.msra.mxu0 0.0
        %1539 = vmatprep.subr.mxu0 0.0
        %1540 = vmatpush2.msra.mxu0 0.0
        %1541 = vmatprep.subr.mxu0 0.0
        %1542 = vmatpush2.msra.mxu0 0.0
        %1543 = vmatprep.subr.mxu0 0.0
        %1544 = vmatpush2.msra.mxu0 0.0
        %1545 = vmatprep.subr.mxu0 0.0
        %1546 = vmatpush2.msra.mxu0 0.0
        %1547 = vmatprep.subr.mxu0 0.0
        %1548 = vmatpush2.msra.mxu0 0.0
        %1549 = vmatprep.subr.mxu0 0.0
        %1550 = vmatpush2.msra.mxu0 0.0
        %1551 = vmatprep.subr.mxu0 0.0
        %1552 = vmatpush2.msra.mxu0 0.0
        %1553 = vmatprep.subr.mxu0 0.0
        %1554 = vmatpush2.msra.mxu0 0.0
        %1555 = vmatprep.subr.mxu0 0.0
        %1556 = vmatpush2.msra.mxu0 0.0
        %1557 = vmatprep.subr.mxu0 0.0
        %1558 = vmatpush2.msra.mxu0 0.0
        %1559 = vmatprep.subr.mxu0 0.0
        %1560 = vmatpush2.msra.mxu0 0.0
        %1561 = vmatprep.mubr.f32.mxu0 0.0
        %1562 = vmatmul.mubr.f32.gmra.mxu0 %v1495
        %v1563 = vpop.f32.mrf.mxu0
        %v1564 = vadd.f32 0.0, %v1563
        %v1565 = vpop.f32.mrf.mxu0
        %v1566 = vadd.f32 0.0, %v1565
        %1567 = vdwg.mxu0
        %v1570 = vrot.slane %v1564, 4
        %v1571 = vrot.slane %v1566, 4
        %v1574 = vadd.f32 %v736, %v1570
        %v1575 = vadd.f32 %v737, %v1571
        %v1576 = vxor.u32 %v1574, 2147483648
        %v1577 = vmul.f32 %v1576, 1.442695
        %v1578 = vpow.pop %v1577
        %v1579 = vadd.f32 %v1578, 1.0
        %v1580 = vrcp.pop %v1579
        %v1581 = vmul.f32 1.0, %v1580
        %v1582 = vtanh.pop %v1575
        %v1583 = vxor.u32 %v1575, 2147483648
        %v1584 = vmul.f32 %v1583, 1.442695
        %v1585 = vpow.pop %v1584
        %v1586 = vadd.f32 %v1585, 1.0
        %v1587 = vrcp.pop %v1586
        %v1588 = vmul.f32 1.0, %v1587
        %v1590 = vrot.slane %v1489, 4
        %v1592 = vmul.f32 %v1581, %v1590
        %v1593 = vmul.f32 %v1581, %v1582
        %1595 = vrot.lane.b32.xlu0 %v1593, 64
        %v1596 = vpop.permute.xlu0 %1595
        %v1598 = vadd.f32 %v1592, %v1596
        %v1599 = vtanh.pop %v1598
        %v1600 = vmul.f32 %v1588, %v1599
        %vm1601 = vcmask 1043456
        %v1602 = vsel %vm1601, %v852, %v961
        %v1603 = vsel %vm1601, %v1065, %v1174
        %v1604 = vsel %vm1601, %v1278, %v1387
        %v1605 = vsel %vm1601, %v1491, %v1600
        %v1607 = vrot.slane %v1600, 4
        %v1609 = vrot.slane %v1491, 4
        %v1612 = vrot.slane %v1278, 4
        %v1615 = vrot.slane %v1065, 4
        %v1618 = vrot.slane %v852, 4
        %v1620 = vsel %vm1601, %v1607, %v1609
        %v1621 = vsel %vm1601, %v1389, %v1612
        %v1622 = vsel %vm1601, %v1176, %v1615
        %v1623 = vsel %vm1601, %v963, %v1618
        %v1624 = vld [vmem:[%s6] sm:$0xff]
        %v1625 = vld [vmem:[%s6 + $0x8] sm:$0xff]
        %v1626 = vld [vmem:[%s6 + $0x10] sm:$0xff]
        %v1627 = vld [vmem:[%s6 + $0x18] sm:$0xff]
        %v1628 = vld [vmem:[%s7] sm:$0xff]
        %v1629 = vld [vmem:[%s7 + $0x8] sm:$0xff]
        %v1630 = vld [vmem:[%s7 + $0x10] sm:$0xff]
        %v1631 = vld [vmem:[%s7 + $0x18] sm:$0xff]
        %1636 = vrot.lane.b32.xlu0 %v1620, 32
        %v1637 = vpop.permute.xlu0 %1636
        %1638 = vrot.lane.b32.xlu0 %v1621, 32
        %v1639 = vpop.permute.xlu0 %1638
        %1640 = vrot.lane.b32.xlu0 %v1622, 32
        %v1641 = vpop.permute.xlu0 %1640
        %1642 = vrot.lane.b32.xlu0 %v1623, 32
        %v1643 = vpop.permute.xlu0 %1642
        %vm1644 = vcmask 261120
        %v1645 = vsel %vm1644, %v1637, 0
        %v1647 = vsel %vm1644, %v1639, 0
        %v1649 = vsel %vm1644, %v1641, 0
        %v1651 = vsel %vm1644, %v1643, 0
        %1653 = vmatprep.subr.mxu0 0.0
        %1654 = vmatpush1.msra.mxu0 0.0
        %1655 = vmatprep.subr.mxu0 0.0
        %1656 = vmatpush1.msra.mxu0 0.0
        %1657 = vmatprep.subr.mxu0 0.0
        %1658 = vmatpush1.msra.mxu0 0.0
        %1659 = vmatprep.subr.mxu0 0.0
        %1660 = vmatpush1.msra.mxu0 0.0
        %1661 = vmatprep.subr.mxu0 0.0
        %1662 = vmatpush1.msra.mxu0 0.0
        %1663 = vmatprep.subr.mxu0 0.0
        %1664 = vmatpush1.msra.mxu0 0.0
        %1665 = vmatprep.subr.mxu0 0.0
        %1666 = vmatpush1.msra.mxu0 0.0
        %1667 = vmatprep.subr.mxu0 0.0
        %1668 = vmatpush1.msra.mxu0 0.0
        %1669 = vmatprep.subr.mxu0 0.0
        %1670 = vmatpush1.msra.mxu0 0.0
        %1671 = vmatprep.subr.mxu0 0.0
        %1672 = vmatpush1.msra.mxu0 0.0
        %1673 = vmatprep.subr.mxu0 0.0
        %1674 = vmatpush1.msra.mxu0 0.0
        %1675 = vmatprep.subr.mxu0 0.0
        %1676 = vmatpush1.msra.mxu0 0.0
        %1677 = vmatprep.subr.mxu0 0.0
        %1678 = vmatpush1.msra.mxu0 %v1631
        %1679 = vmatprep.subr.mxu0 0.0
        %1680 = vmatpush1.msra.mxu0 %v1630
        %1681 = vmatprep.subr.mxu0 0.0
        %1682 = vmatpush1.msra.mxu0 %v1629
        %1683 = vmatprep.subr.mxu0 0.0
        %1684 = vmatpush1.msra.mxu0 %v1628
        %1685 = vmatprep.subr.mxu0 0.0
        %1686 = vmatpush2.msra.mxu0 0.0
        %1687 = vmatprep.subr.mxu0 0.0
        %1688 = vmatpush2.msra.mxu0 0.0
        %1689 = vmatprep.subr.mxu0 0.0
        %1690 = vmatpush2.msra.mxu0 0.0
        %1691 = vmatprep.subr.mxu0 0.0
        %1692 = vmatpush2.msra.mxu0 0.0
        %1693 = vmatprep.subr.mxu0 0.0
        %1694 = vmatpush2.msra.mxu0 0.0
        %1695 = vmatprep.subr.mxu0 0.0
        %1696 = vmatpush2.msra.mxu0 0.0
        %1697 = vmatprep.subr.mxu0 0.0
        %1698 = vmatpush2.msra.mxu0 0.0
        %1699 = vmatprep.subr.mxu0 0.0
        %1700 = vmatpush2.msra.mxu0 0.0
        %1701 = vmatprep.subr.mxu0 0.0
        %1702 = vmatpush2.msra.mxu0 0.0
        %1703 = vmatprep.subr.mxu0 0.0
        %1704 = vmatpush2.msra.mxu0 0.0
        %1705 = vmatprep.subr.mxu0 0.0
        %1706 = vmatpush2.msra.mxu0 0.0
        %1707 = vmatprep.subr.mxu0 0.0
        %1708 = vmatpush2.msra.mxu0 0.0
        %1709 = vmatprep.subr.mxu0 0.0
        %1710 = vmatpush2.msra.mxu0 0.0
        %1711 = vmatprep.subr.mxu0 0.0
        %1712 = vmatpush2.msra.mxu0 0.0
        %1713 = vmatprep.subr.mxu0 0.0
        %1714 = vmatpush2.msra.mxu0 0.0
        %1715 = vmatprep.subr.mxu0 0.0
        %1716 = vmatpush2.msra.mxu0 0.0
        %1717 = vmatprep.mubr.f32.mxu0 0.0
        %1718 = vmatmul.mubr.f32.gmra.mxu0 %v1645
        %v1719 = vpop.f32.mrf.mxu0
        %v1720 = vadd.f32 0.0, %v1719
        %v1721 = vpop.f32.mrf.mxu0
        %1722 = vmatprep.mubr.f32.mxu0 0.0
        %1723 = vmatmul.mubr.f32.gmra.mxu0 %v1647
        %v1724 = vpop.f32.mrf.mxu0
        %v1725 = vadd.f32 0.0, %v1724
        %v1726 = vpop.f32.mrf.mxu0
        %1727 = vmatprep.mubr.f32.mxu0 0.0
        %1728 = vmatmul.mubr.f32.gmra.mxu0 %v1649
        %v1729 = vpop.f32.mrf.mxu0
        %v1730 = vadd.f32 0.0, %v1729
        %v1731 = vpop.f32.mrf.mxu0
        %1732 = vmatprep.mubr.f32.mxu0 0.0
        %1733 = vmatmul.mubr.f32.gmra.mxu0 %v1651
        %v1734 = vpop.f32.mrf.mxu0
        %v1735 = vadd.f32 0.0, %v1734
        %v1736 = vpop.f32.mrf.mxu0
        %1737 = vdwg.mxu0
        %1742 = vrot.lane.b32.xlu0 %v1602, 64
        %v1743 = vpop.permute.xlu0 %1742
        %1744 = vrot.lane.b32.xlu0 %v1603, 64
        %v1745 = vpop.permute.xlu0 %1744
        %1746 = vrot.lane.b32.xlu0 %v1604, 64
        %v1747 = vpop.permute.xlu0 %1746
        %1748 = vrot.lane.b32.xlu0 %v1605, 64
        %v1749 = vpop.permute.xlu0 %1748
        %v1750 = vsel %vm1644, %v1743, 0
        %v1752 = vsel %vm1644, %v1745, 0
        %v1754 = vsel %vm1644, %v1747, 0
        %v1756 = vsel %vm1644, %v1749, 0
        %1758 = vmatprep.subr.mxu0 0.0
        %1759 = vmatpush1.msra.mxu0 0.0
        %1760 = vmatprep.subr.mxu0 0.0
        %1761 = vmatpush1.msra.mxu0 0.0
        %1762 = vmatprep.subr.mxu0 0.0
        %1763 = vmatpush1.msra.mxu0 0.0
        %1764 = vmatprep.subr.mxu0 0.0
        %1765 = vmatpush1.msra.mxu0 0.0
        %1766 = vmatprep.subr.mxu0 0.0
        %1767 = vmatpush1.msra.mxu0 0.0
        %1768 = vmatprep.subr.mxu0 0.0
        %1769 = vmatpush1.msra.mxu0 0.0
        %1770 = vmatprep.subr.mxu0 0.0
        %1771 = vmatpush1.msra.mxu0 0.0
        %1772 = vmatprep.subr.mxu0 0.0
        %1773 = vmatpush1.msra.mxu0 0.0
        %1774 = vmatprep.subr.mxu0 0.0
        %1775 = vmatpush1.msra.mxu0 0.0
        %1776 = vmatprep.subr.mxu0 0.0
        %1777 = vmatpush1.msra.mxu0 0.0
        %1778 = vmatprep.subr.mxu0 0.0
        %1779 = vmatpush1.msra.mxu0 0.0
        %1780 = vmatprep.subr.mxu0 0.0
        %1781 = vmatpush1.msra.mxu0 0.0
        %1782 = vmatprep.subr.mxu0 0.0
        %1783 = vmatpush1.msra.mxu0 %v1627
        %1784 = vmatprep.subr.mxu0 0.0
        %1785 = vmatpush1.msra.mxu0 %v1626
        %1786 = vmatprep.subr.mxu0 0.0
        %1787 = vmatpush1.msra.mxu0 %v1625
        %1788 = vmatprep.subr.mxu0 0.0
        %1789 = vmatpush1.msra.mxu0 %v1624
        %1790 = vmatprep.subr.mxu0 0.0
        %1791 = vmatpush2.msra.mxu0 0.0
        %1792 = vmatprep.subr.mxu0 0.0
        %1793 = vmatpush2.msra.mxu0 0.0
        %1794 = vmatprep.subr.mxu0 0.0
        %1795 = vmatpush2.msra.mxu0 0.0
        %1796 = vmatprep.subr.mxu0 0.0
        %1797 = vmatpush2.msra.mxu0 0.0
        %1798 = vmatprep.subr.mxu0 0.0
        %1799 = vmatpush2.msra.mxu0 0.0
        %1800 = vmatprep.subr.mxu0 0.0
        %1801 = vmatpush2.msra.mxu0 0.0
        %1802 = vmatprep.subr.mxu0 0.0
        %1803 = vmatpush2.msra.mxu0 0.0
        %1804 = vmatprep.subr.mxu0 0.0
        %1805 = vmatpush2.msra.mxu0 0.0
        %1806 = vmatprep.subr.mxu0 0.0
        %1807 = vmatpush2.msra.mxu0 0.0
        %1808 = vmatprep.subr.mxu0 0.0
        %1809 = vmatpush2.msra.mxu0 0.0
        %1810 = vmatprep.subr.mxu0 0.0
        %1811 = vmatpush2.msra.mxu0 0.0
        %1812 = vmatprep.subr.mxu0 0.0
        %1813 = vmatpush2.msra.mxu0 0.0
        %1814 = vmatprep.subr.mxu0 0.0
        %1815 = vmatpush2.msra.mxu0 0.0
        %1816 = vmatprep.subr.mxu0 0.0
        %1817 = vmatpush2.msra.mxu0 0.0
        %1818 = vmatprep.subr.mxu0 0.0
        %1819 = vmatpush2.msra.mxu0 0.0
        %1820 = vmatprep.subr.mxu0 0.0
        %1821 = vmatpush2.msra.mxu0 0.0
        %1822 = vmatprep.mubr.f32.mxu0 0.0
        %1823 = vmatmul.mubr.f32.gmra.mxu0 %v1750
        %v1824 = vpop.f32.mrf.mxu0
        %v1825 = vadd.f32 %v1720, %v1824
        %v1826 = vpop.f32.mrf.mxu0
        %1827 = vmatprep.mubr.f32.mxu0 0.0
        %1828 = vmatmul.mubr.f32.gmra.mxu0 %v1752
        %v1829 = vpop.f32.mrf.mxu0
        %v1830 = vadd.f32 %v1725, %v1829
        %v1831 = vpop.f32.mrf.mxu0
        %1832 = vmatprep.mubr.f32.mxu0 0.0
        %1833 = vmatmul.mubr.f32.gmra.mxu0 %v1754
        %v1834 = vpop.f32.mrf.mxu0
        %v1835 = vadd.f32 %v1730, %v1834
        %v1836 = vpop.f32.mrf.mxu0
        %1837 = vmatprep.mubr.f32.mxu0 0.0
        %1838 = vmatmul.mubr.f32.gmra.mxu0 %v1756
        %v1839 = vpop.f32.mrf.mxu0
        %v1840 = vadd.f32 %v1735, %v1839
        %v1841 = vpop.f32.mrf.mxu0
        %1842 = vdwg.mxu0
        %v1843 = vld [vmem:[%s8] sm:$0x1]
        %v1845 = vlaneseq
        %v1846 = vshrl.u32 %v1845, 7
        %v1847 = vsub.s32 0, %v1846
        %v1848 = vrot.slane %v1843, %v1847
        %v1850 = vadd.f32 %v1825, %v1848
        %v1851 = vadd.f32 %v1830, %v1848
        %v1852 = vadd.f32 %v1835, %v1848
        %v1853 = vadd.f32 %v1840, %v1848
        %v1854 = vld [vmem:[%s11] sm:$0x7f]
        %v1855 = vld [vmem:[%s9] sm:$0x1]
        %v1856 = vld [vmem:[%s10] sm:$0x1]
        %v1858 = vlaneseq
        %v1859 = vshrl.u32 %v1858, 7
        %v1860 = vsub.s32 0, %v1859
        %v1861 = vrot.slane %v1855, %v1860
        %v1863 = vadd.f32 %v1861, %v1850
        %v1866 = vunpack.c.l.s4 1966171168
        %v1867 = vunpack.c.0.s8 %v1866
        %v1868 = vlaneseq
        %v1869 = vshrl.u32 %v1868, 7
        %v1870 = vsub.s32 %v1867, %v1869
        %v1871 = vrot.slane %v1863, %v1870
        %v1872 = vcombine.high %v1871, %v1871
        %v1874 = vunpack.c.l.s4 1966171168
        %v1875 = vunpack.c.0.s8 %v1874
        %v1876 = vlaneseq
        %v1877 = vshrl.u32 %v1876, 7
        %v1878 = vsub.s32 %v1875, %v1877
        %v1879 = vrot.slane %v1871, %v1878
        %v1881 = vunpack.c.l.s4 1966171168
        %v1882 = vunpack.c.0.s8 %v1881
        %v1883 = vlaneseq
        %v1884 = vshrl.u32 %v1883, 7
        %v1885 = vsub.s32 %v1882, %v1884
        %v1886 = vrot.slane %v1872, %v1885
        %v1887 = vcombine.high %v1879, %v1879
        %v1888 = vcombine.high %v1886, %v1886
        %v1889 = vlaneseq
        %v1890 = vshrl.u32 %v1889, 7
        %v1891 = vsub.s32 0, %v1890
        %v1892 = vrot.slane %v1879, %v1891
        %v1893 = vlaneseq
        %v1894 = vshrl.u32 %v1893, 7
        %v1895 = vsub.s32 0, %v1894
        %v1896 = vrot.slane %v1886, %v1895
        %v1897 = vlaneseq
        %v1898 = vshrl.u32 %v1897, 7
        %v1899 = vsub.s32 0, %v1898
        %v1900 = vrot.slane %v1887, %v1899
        %v1901 = vlaneseq
        %v1902 = vshrl.u32 %v1901, 7
        %v1903 = vsub.s32 0, %v1902
        %v1904 = vrot.slane %v1888, %v1903
        %v1909 = vadd.f32 %v1892, %v1854
        %v1910 = vadd.f32 %v1896, %v1854
        %v1911 = vadd.f32 %v1900, %v1854
        %v1912 = vadd.f32 %v1904, %v1854
        %vm1913 = vcmask 55296
        %v1914 = vsel %vm1913, %v1909, -inf
        %1915 = vmax.xlane.f32.xlu0 %v1914
        %v1916 = vpop.xlane.xlu0 %1915
        %v1917 = vsel %vm1913, %v1910, -inf
        %1918 = vmax.xlane.f32.xlu0 %v1917
        %v1919 = vpop.xlane.xlu0 %1918
        %v1920 = vsel %vm1913, %v1911, -inf
        %1921 = vmax.xlane.f32.xlu0 %v1920
        %v1922 = vpop.xlane.xlu0 %1921
        %v1923 = vsel %vm1913, %v1912, -inf
        %1924 = vmax.xlane.f32.xlu0 %v1923
        %v1925 = vpop.xlane.xlu0 %1924
        %vm1926 = vcmp.eq.f32.partialorder %v1909, %v1916
        %vm1927 = vcmp.eq.f32.partialorder %v1910, %v1919
        %vm1928 = vcmp.eq.f32.partialorder %v1911, %v1922
        %vm1929 = vcmp.eq.f32.partialorder %v1912, %v1925
        %v1930 = vsel %vm1926, %v437, 1073741824
        %v1931 = vsel %vm1927, %v437, 1073741824
        %v1932 = vsel %vm1928, %v437, 1073741824
        %v1933 = vsel %vm1929, %v437, 1073741824
        %v1934 = vsel %vm1913, %v1930, 2147483647
        %v1935 = vand.u32 %v1934, 65535
        %v1936 = vshra.s32 %v1934, 16
        %v1937 = vcvt.s32.f32 %v1935
        %v1938 = vcvt.s32.f32 %v1936
        %1939 = vmin.xlane.f32.xlu0 %v1938
        %v1940 = vpop.xlane.xlu0 %1939
        %vm1941 = vcmp.eq.f32.partialorder %v1938, %v1940
        %v1942 = vsel %vm1941, %v1937, inf
        %1943 = vmin.xlane.f32.xlu0 %v1942
        %v1944 = vpop.xlane.xlu0 %1943
        %v1945 = vcvt.f32.s32 %v1944
        %v1946 = vcvt.f32.s32 %v1940
        %v1947 = vshll.u32 %v1946, 16
        %v1948 = vadd.s32 %v1947, %v1945
        %v1949 = vsel %vm1913, %v1931, 2147483647
        %v1950 = vand.u32 %v1949, 65535
        %v1951 = vshra.s32 %v1949, 16
        %v1952 = vcvt.s32.f32 %v1950
        %v1953 = vcvt.s32.f32 %v1951
        %1954 = vmin.xlane.f32.xlu0 %v1953
        %v1955 = vpop.xlane.xlu0 %1954
        %vm1956 = vcmp.eq.f32.partialorder %v1953, %v1955
        %v1957 = vsel %vm1956, %v1952, inf
        %1958 = vmin.xlane.f32.xlu0 %v1957
        %v1959 = vpop.xlane.xlu0 %1958
        %v1960 = vcvt.f32.s32 %v1959
        %v1961 = vcvt.f32.s32 %v1955
        %v1962 = vshll.u32 %v1961, 16
        %v1963 = vadd.s32 %v1962, %v1960
        %v1964 = vsel %vm1913, %v1932, 2147483647
        %v1965 = vand.u32 %v1964, 65535
        %v1966 = vshra.s32 %v1964, 16
        %v1967 = vcvt.s32.f32 %v1965
        %v1968 = vcvt.s32.f32 %v1966
        %1969 = vmin.xlane.f32.xlu0 %v1968
        %v1970 = vpop.xlane.xlu0 %1969
        %vm1971 = vcmp.eq.f32.partialorder %v1968, %v1970
        %v1972 = vsel %vm1971, %v1967, inf
        %1973 = vmin.xlane.f32.xlu0 %v1972
        %v1974 = vpop.xlane.xlu0 %1973
        %v1975 = vcvt.f32.s32 %v1974
        %v1976 = vcvt.f32.s32 %v1970
        %v1977 = vshll.u32 %v1976, 16
        %v1978 = vadd.s32 %v1977, %v1975
        %v1979 = vsel %vm1913, %v1933, 2147483647
        %v1980 = vand.u32 %v1979, 65535
        %v1981 = vshra.s32 %v1979, 16
        %v1982 = vcvt.s32.f32 %v1980
        %v1983 = vcvt.s32.f32 %v1981
        %1984 = vmin.xlane.f32.xlu0 %v1983
        %v1985 = vpop.xlane.xlu0 %1984
        %vm1986 = vcmp.eq.f32.partialorder %v1983, %v1985
        %v1987 = vsel %vm1986, %v1982, inf
        %1988 = vmin.xlane.f32.xlu0 %v1987
        %v1989 = vpop.xlane.xlu0 %1988
        %v1990 = vcvt.f32.s32 %v1989
        %v1991 = vcvt.f32.s32 %v1985
        %v1992 = vshll.u32 %v1991, 16
        %v1993 = vadd.s32 %v1992, %v1990
        %v1995 = vlaneseq
        %v1996 = vshrl.u32 %v1995, 7
        %v1997 = vsub.s32 4, %v1996
        %v1998 = vrot.slane %v1850, %v1997
        %2000 = vbcast.lane.b32.xlu0 %v1998, 256
        %v2001 = vpop.permute.xlu0 %2000
        %v2002 = vlaneseq
        %v2003 = vshrl.u32 %v2002, 7
        %v2004 = vsub.s32 5, %v2003
        %v2005 = vrot.slane %v1850, %v2004
        %2007 = vbcast.lane.b32.xlu0 %v2005, 256
        %v2008 = vpop.permute.xlu0 %2007
        %v2009 = vlaneseq
        %v2010 = vshrl.u32 %v2009, 7
        %v2011 = vsub.s32 6, %v2010
        %v2012 = vrot.slane %v1850, %v2011
        %2014 = vbcast.lane.b32.xlu0 %v2012, 256
        %v2015 = vpop.permute.xlu0 %2014
        %v2016 = vlaneseq
        %v2017 = vshrl.u32 %v2016, 7
        %v2018 = vsub.s32 7, %v2017
        %v2019 = vrot.slane %v1850, %v2018
        %2021 = vbcast.lane.b32.xlu0 %v2019, 256
        %v2022 = vpop.permute.xlu0 %2021
        %v2027 = vadd.f32 %v1916, %v2001
        %v2028 = vadd.f32 %v1919, %v2008
        %v2029 = vadd.f32 %v1922, %v2015
        %v2030 = vadd.f32 %v1925, %v2022
        %v2032 = vlaneseq
        %v2033 = vshrl.u32 %v2032, 7
        %v2034 = vsub.s32 0, %v2033
        %v2035 = vrot.slane %v1854, %v2034
        %2037 = vbcast.lane.b32.xlu0 %v2035, 256
        %v2038 = vpop.permute.xlu0 %2037
        %v2039 = vlaneseq
        %v2040 = vshrl.u32 %v2039, 7
        %v2041 = vsub.s32 1, %v2040
        %v2042 = vrot.slane %v1854, %v2041
        %2044 = vbcast.lane.b32.xlu0 %v2042, 256
        %v2045 = vpop.permute.xlu0 %2044
        %v2046 = vlaneseq
        %v2047 = vshrl.u32 %v2046, 7
        %v2048 = vsub.s32 2, %v2047
        %v2049 = vrot.slane %v1854, %v2048
        %2051 = vbcast.lane.b32.xlu0 %v2049, 256
        %v2052 = vpop.permute.xlu0 %2051
        %v2053 = vlaneseq
        %v2054 = vshrl.u32 %v2053, 7
        %v2055 = vsub.s32 3, %v2054
        %v2056 = vrot.slane %v1854, %v2055
        %2058 = vbcast.lane.b32.xlu0 %v2056, 256
        %v2059 = vpop.permute.xlu0 %2058
        %v2060 = vlaneseq
        %v2061 = vshrl.u32 %v2060, 7
        %v2062 = vsub.s32 4, %v2061
        %v2063 = vrot.slane %v1854, %v2062
        %2065 = vbcast.lane.b32.xlu0 %v2063, 256
        %v2066 = vpop.permute.xlu0 %2065
        %v2067 = vlaneseq
        %v2068 = vshrl.u32 %v2067, 7
        %v2069 = vsub.s32 5, %v2068
        %v2070 = vrot.slane %v1854, %v2069
        %2072 = vbcast.lane.b32.xlu0 %v2070, 256
        %v2073 = vpop.permute.xlu0 %2072
        %v2074 = vlaneseq
        %v2075 = vshrl.u32 %v2074, 7
        %v2076 = vsub.s32 6, %v2075
        %v2077 = vrot.slane %v1854, %v2076
        %2079 = vbcast.lane.b32.xlu0 %v2077, 256
        %v2080 = vpop.permute.xlu0 %2079
        %v2088 = vadd.f32 %v2027, %v2038
        %v2089 = vadd.f32 %v2027, %v2045
        %v2090 = vadd.f32 %v2027, %v2052
        %v2091 = vadd.f32 %v2027, %v2059
        %v2092 = vadd.f32 %v2027, %v2066
        %v2093 = vadd.f32 %v2027, %v2073
        %v2094 = vadd.f32 %v2027, %v2080
        %v2095 = vadd.f32 %v2028, %v2038
        %v2096 = vadd.f32 %v2028, %v2045
        %v2097 = vadd.f32 %v2028, %v2052
        %v2098 = vadd.f32 %v2028, %v2059
        %v2099 = vadd.f32 %v2028, %v2066
        %v2100 = vadd.f32 %v2028, %v2073
        %v2101 = vadd.f32 %v2028, %v2080
        %v2102 = vadd.f32 %v2029, %v2038
        %v2103 = vadd.f32 %v2029, %v2045
        %v2104 = vadd.f32 %v2029, %v2052
        %v2105 = vadd.f32 %v2029, %v2059
        %v2106 = vadd.f32 %v2029, %v2066
        %v2107 = vadd.f32 %v2029, %v2073
        %v2108 = vadd.f32 %v2029, %v2080
        %v2109 = vadd.f32 %v2030, %v2038
        %v2110 = vadd.f32 %v2030, %v2045
        %v2111 = vadd.f32 %v2030, %v2052
        %v2112 = vadd.f32 %v2030, %v2059
        %v2113 = vadd.f32 %v2030, %v2066
        %v2114 = vadd.f32 %v2030, %v2073
        %v2115 = vadd.f32 %v2030, %v2080
        %2144 = vset.pattern.permute.xlu0 0
        %2145 = vperm.xlu0 %2144, %v2088
        %v2146 = vpop.permute.xlu0 %2145
        %2147 = vset.pattern.permute.xlu0 0
        %2148 = vperm.xlu0 %2147, %v2089
        %v2149 = vpop.permute.xlu0 %2148
        %2150 = vset.pattern.permute.xlu0 0
        %2151 = vperm.xlu0 %2150, %v2090
        %v2152 = vpop.permute.xlu0 %2151
        %2153 = vset.pattern.permute.xlu0 0
        %2154 = vperm.xlu0 %2153, %v2091
        %v2155 = vpop.permute.xlu0 %2154
        %2156 = vset.pattern.permute.xlu0 0
        %2157 = vperm.xlu0 %2156, %v2092
        %v2158 = vpop.permute.xlu0 %2157
        %2159 = vset.pattern.permute.xlu0 0
        %2160 = vperm.xlu0 %2159, %v2093
        %v2161 = vpop.permute.xlu0 %2160
        %2162 = vset.pattern.permute.xlu0 0
        %2163 = vperm.xlu0 %2162, %v2094
        %v2164 = vpop.permute.xlu0 %2163
        %2165 = vset.pattern.permute.xlu0 0
        %2166 = vperm.xlu0 %2165, %v2095
        %v2167 = vpop.permute.xlu0 %2166
        %2168 = vset.pattern.permute.xlu0 0
        %2169 = vperm.xlu0 %2168, %v2096
        %v2170 = vpop.permute.xlu0 %2169
        %2171 = vset.pattern.permute.xlu0 0
        %2172 = vperm.xlu0 %2171, %v2097
        %v2173 = vpop.permute.xlu0 %2172
        %2174 = vset.pattern.permute.xlu0 0
        %2175 = vperm.xlu0 %2174, %v2098
        %v2176 = vpop.permute.xlu0 %2175
        %2177 = vset.pattern.permute.xlu0 0
        %2178 = vperm.xlu0 %2177, %v2099
        %v2179 = vpop.permute.xlu0 %2178
        %2180 = vset.pattern.permute.xlu0 0
        %2181 = vperm.xlu0 %2180, %v2100
        %v2182 = vpop.permute.xlu0 %2181
        %2183 = vset.pattern.permute.xlu0 0
        %2184 = vperm.xlu0 %2183, %v2101
        %v2185 = vpop.permute.xlu0 %2184
        %2186 = vset.pattern.permute.xlu0 0
        %2187 = vperm.xlu0 %2186, %v2102
        %v2188 = vpop.permute.xlu0 %2187
        %2189 = vset.pattern.permute.xlu0 0
        %2190 = vperm.xlu0 %2189, %v2103
        %v2191 = vpop.permute.xlu0 %2190
        %2192 = vset.pattern.permute.xlu0 0
        %2193 = vperm.xlu0 %2192, %v2104
        %v2194 = vpop.permute.xlu0 %2193
        %2195 = vset.pattern.permute.xlu0 0
        %2196 = vperm.xlu0 %2195, %v2105
        %v2197 = vpop.permute.xlu0 %2196
        %2198 = vset.pattern.permute.xlu0 0
        %2199 = vperm.xlu0 %2198, %v2106
        %v2200 = vpop.permute.xlu0 %2199
        %2201 = vset.pattern.permute.xlu0 0
        %2202 = vperm.xlu0 %2201, %v2107
        %v2203 = vpop.permute.xlu0 %2202
        %2204 = vset.pattern.permute.xlu0 0
        %2205 = vperm.xlu0 %2204, %v2108
        %v2206 = vpop.permute.xlu0 %2205
        %2207 = vset.pattern.permute.xlu0 0
        %2208 = vperm.xlu0 %2207, %v2109
        %v2209 = vpop.permute.xlu0 %2208
        %2210 = vset.pattern.permute.xlu0 0
        %2211 = vperm.xlu0 %2210, %v2110
        %v2212 = vpop.permute.xlu0 %2211
        %2213 = vset.pattern.permute.xlu0 0
        %2214 = vperm.xlu0 %2213, %v2111
        %v2215 = vpop.permute.xlu0 %2214
        %2216 = vset.pattern.permute.xlu0 0
        %2217 = vperm.xlu0 %2216, %v2112
        %v2218 = vpop.permute.xlu0 %2217
        %2219 = vset.pattern.permute.xlu0 0
        %2220 = vperm.xlu0 %2219, %v2113
        %v2221 = vpop.permute.xlu0 %2220
        %2222 = vset.pattern.permute.xlu0 0
        %2223 = vperm.xlu0 %2222, %v2114
        %v2224 = vpop.permute.xlu0 %2223
        %2225 = vset.pattern.permute.xlu0 0
        %2226 = vperm.xlu0 %2225, %v2115
        %v2227 = vpop.permute.xlu0 %2226
        %v2228 = vlaneseq
        %v2229 = vshrl.u32 %v2228, 7
        %v2230 = vsub.s32 %v437, %v2229
        %v2231 = vrot.slane %v2146, %v2230
        %v2232 = vlaneseq
        %v2233 = vshrl.u32 %v2232, 7
        %v2234 = vsub.s32 %v437, %v2233
        %v2235 = vrot.slane %v2149, %v2234
        %v2236 = vlaneseq
        %v2237 = vshrl.u32 %v2236, 7
        %v2238 = vsub.s32 %v437, %v2237
        %v2239 = vrot.slane %v2152, %v2238
        %v2240 = vlaneseq
        %v2241 = vshrl.u32 %v2240, 7
        %v2242 = vsub.s32 %v437, %v2241
        %v2243 = vrot.slane %v2155, %v2242
        %v2244 = vlaneseq
        %v2245 = vshrl.u32 %v2244, 7
        %v2246 = vsub.s32 %v437, %v2245
        %v2247 = vrot.slane %v2158, %v2246
        %v2248 = vlaneseq
        %v2249 = vshrl.u32 %v2248, 7
        %v2250 = vsub.s32 %v437, %v2249
        %v2251 = vrot.slane %v2161, %v2250
        %v2252 = vlaneseq
        %v2253 = vshrl.u32 %v2252, 7
        %v2254 = vsub.s32 %v437, %v2253
        %v2255 = vrot.slane %v2164, %v2254
        %v2256 = vlaneseq
        %v2257 = vshrl.u32 %v2256, 7
        %v2258 = vsub.s32 %v437, %v2257
        %v2259 = vrot.slane %v2167, %v2258
        %v2260 = vlaneseq
        %v2261 = vshrl.u32 %v2260, 7
        %v2262 = vsub.s32 %v437, %v2261
        %v2263 = vrot.slane %v2170, %v2262
        %v2264 = vlaneseq
        %v2265 = vshrl.u32 %v2264, 7
        %v2266 = vsub.s32 %v437, %v2265
        %v2267 = vrot.slane %v2173, %v2266
        %v2268 = vlaneseq
        %v2269 = vshrl.u32 %v2268, 7
        %v2270 = vsub.s32 %v437, %v2269
        %v2271 = vrot.slane %v2176, %v2270
        %v2272 = vlaneseq
        %v2273 = vshrl.u32 %v2272, 7
        %v2274 = vsub.s32 %v437, %v2273
        %v2275 = vrot.slane %v2179, %v2274
        %v2276 = vlaneseq
        %v2277 = vshrl.u32 %v2276, 7
        %v2278 = vsub.s32 %v437, %v2277
        %v2279 = vrot.slane %v2182, %v2278
        %v2280 = vlaneseq
        %v2281 = vshrl.u32 %v2280, 7
        %v2282 = vsub.s32 %v437, %v2281
        %v2283 = vrot.slane %v2185, %v2282
        %v2284 = vlaneseq
        %v2285 = vshrl.u32 %v2284, 7
        %v2286 = vsub.s32 %v437, %v2285
        %v2287 = vrot.slane %v2188, %v2286
        %v2288 = vlaneseq
        %v2289 = vshrl.u32 %v2288, 7
        %v2290 = vsub.s32 %v437, %v2289
        %v2291 = vrot.slane %v2191, %v2290
        %v2292 = vlaneseq
        %v2293 = vshrl.u32 %v2292, 7
        %v2294 = vsub.s32 %v437, %v2293
        %v2295 = vrot.slane %v2194, %v2294
        %v2296 = vlaneseq
        %v2297 = vshrl.u32 %v2296, 7
        %v2298 = vsub.s32 %v437, %v2297
        %v2299 = vrot.slane %v2197, %v2298
        %v2300 = vlaneseq
        %v2301 = vshrl.u32 %v2300, 7
        %v2302 = vsub.s32 %v437, %v2301
        %v2303 = vrot.slane %v2200, %v2302
        %v2304 = vlaneseq
        %v2305 = vshrl.u32 %v2304, 7
        %v2306 = vsub.s32 %v437, %v2305
        %v2307 = vrot.slane %v2203, %v2306
        %v2308 = vlaneseq
        %v2309 = vshrl.u32 %v2308, 7
        %v2310 = vsub.s32 %v437, %v2309
        %v2311 = vrot.slane %v2206, %v2310
        %v2312 = vlaneseq
        %v2313 = vshrl.u32 %v2312, 7
        %v2314 = vsub.s32 %v437, %v2313
        %v2315 = vrot.slane %v2209, %v2314
        %v2316 = vlaneseq
        %v2317 = vshrl.u32 %v2316, 7
        %v2318 = vsub.s32 %v437, %v2317
        %v2319 = vrot.slane %v2212, %v2318
        %v2320 = vlaneseq
        %v2321 = vshrl.u32 %v2320, 7
        %v2322 = vsub.s32 %v437, %v2321
        %v2323 = vrot.slane %v2215, %v2322
        %v2324 = vlaneseq
        %v2325 = vshrl.u32 %v2324, 7
        %v2326 = vsub.s32 %v437, %v2325
        %v2327 = vrot.slane %v2218, %v2326
        %v2328 = vlaneseq
        %v2329 = vshrl.u32 %v2328, 7
        %v2330 = vsub.s32 %v437, %v2329
        %v2331 = vrot.slane %v2221, %v2330
        %v2332 = vlaneseq
        %v2333 = vshrl.u32 %v2332, 7
        %v2334 = vsub.s32 %v437, %v2333
        %v2335 = vrot.slane %v2224, %v2334
        %v2336 = vlaneseq
        %v2337 = vshrl.u32 %v2336, 7
        %v2338 = vsub.s32 %v437, %v2337
        %v2339 = vrot.slane %v2227, %v2338
        %vm2340 = vcmask 1041409
        %v2341 = vsel %vm2340, %v2235, %v2231
        %vm2342 = vcmask 1042434
        %v2343 = vsel %vm2342, %v2239, %v2341
        %vm2344 = vcmask 1043459
        %v2345 = vsel %vm2344, %v2243, %v2343
        %vm2346 = vcmask 1044484
        %v2347 = vsel %vm2346, %v2247, %v2345
        %vm2348 = vcmask 1045509
        %v2349 = vsel %vm2348, %v2251, %v2347
        %vm2350 = vcmask 1046534
        %v2351 = vsel %vm2350, %v2255, %v2349
        %v2352 = vsel %vm2340, %v2263, %v2259
        %v2353 = vsel %vm2342, %v2267, %v2352
        %v2354 = vsel %vm2344, %v2271, %v2353
        %v2355 = vsel %vm2346, %v2275, %v2354
        %v2356 = vsel %vm2348, %v2279, %v2355
        %v2357 = vsel %vm2350, %v2283, %v2356
        %v2358 = vsel %vm2340, %v2291, %v2287
        %v2359 = vsel %vm2342, %v2295, %v2358
        %v2360 = vsel %vm2344, %v2299, %v2359
        %v2361 = vsel %vm2346, %v2303, %v2360
        %v2362 = vsel %vm2348, %v2307, %v2361
        %v2363 = vsel %vm2350, %v2311, %v2362
        %v2364 = vsel %vm2340, %v2319, %v2315
        %v2365 = vsel %vm2342, %v2323, %v2364
        %v2366 = vsel %vm2344, %v2327, %v2365
        %v2367 = vsel %vm2346, %v2331, %v2366
        %v2368 = vsel %vm2348, %v2335, %v2367
        %v2369 = vsel %vm2350, %v2339, %v2368
        %v2374 = vsel %vm1913, %v2351, -inf
        %2375 = vmax.xlane.f32.xlu0 %v2374
        %v2376 = vpop.xlane.xlu0 %2375
        %v2377 = vsel %vm1913, %v2357, -inf
        %2378 = vmax.xlane.f32.xlu0 %v2377
        %v2379 = vpop.xlane.xlu0 %2378
        %v2380 = vsel %vm1913, %v2363, -inf
        %2381 = vmax.xlane.f32.xlu0 %v2380
        %v2382 = vpop.xlane.xlu0 %2381
        %v2383 = vsel %vm1913, %v2369, -inf
        %2384 = vmax.xlane.f32.xlu0 %v2383
        %v2385 = vpop.xlane.xlu0 %2384
        %v2390 = vlaneseq
        %v2391 = vshrl.u32 %v2390, 7
        %v2392 = vsub.s32 0, %v2391
        %v2393 = vrot.slane %v2376, %v2392
        %v2394 = vlaneseq
        %v2395 = vshrl.u32 %v2394, 7
        %v2396 = vsub.s32 1, %v2395
        %v2397 = vrot.slane %v2376, %v2396
        %v2398 = vlaneseq
        %v2399 = vshrl.u32 %v2398, 7
        %v2400 = vsub.s32 2, %v2399
        %v2401 = vrot.slane %v2376, %v2400
        %v2402 = vlaneseq
        %v2403 = vshrl.u32 %v2402, 7
        %v2404 = vsub.s32 3, %v2403
        %v2405 = vrot.slane %v2376, %v2404
        %v2406 = vlaneseq
        %v2407 = vshrl.u32 %v2406, 7
        %v2408 = vsub.s32 4, %v2407
        %v2409 = vrot.slane %v2376, %v2408
        %v2410 = vlaneseq
        %v2411 = vshrl.u32 %v2410, 7
        %v2412 = vsub.s32 5, %v2411
        %v2413 = vrot.slane %v2376, %v2412
        %v2414 = vlaneseq
        %v2415 = vshrl.u32 %v2414, 7
        %v2416 = vsub.s32 6, %v2415
        %v2417 = vrot.slane %v2376, %v2416
        %v2418 = vlaneseq
        %v2419 = vshrl.u32 %v2418, 7
        %v2420 = vsub.s32 0, %v2419
        %v2421 = vrot.slane %v2379, %v2420
        %v2422 = vlaneseq
        %v2423 = vshrl.u32 %v2422, 7
        %v2424 = vsub.s32 1, %v2423
        %v2425 = vrot.slane %v2379, %v2424
        %v2426 = vlaneseq
        %v2427 = vshrl.u32 %v2426, 7
        %v2428 = vsub.s32 2, %v2427
        %v2429 = vrot.slane %v2379, %v2428
        %v2430 = vlaneseq
        %v2431 = vshrl.u32 %v2430, 7
        %v2432 = vsub.s32 3, %v2431
        %v2433 = vrot.slane %v2379, %v2432
        %v2434 = vlaneseq
        %v2435 = vshrl.u32 %v2434, 7
        %v2436 = vsub.s32 4, %v2435
        %v2437 = vrot.slane %v2379, %v2436
        %v2438 = vlaneseq
        %v2439 = vshrl.u32 %v2438, 7
        %v2440 = vsub.s32 5, %v2439
        %v2441 = vrot.slane %v2379, %v2440
        %v2442 = vlaneseq
        %v2443 = vshrl.u32 %v2442, 7
        %v2444 = vsub.s32 6, %v2443
        %v2445 = vrot.slane %v2379, %v2444
        %v2446 = vlaneseq
        %v2447 = vshrl.u32 %v2446, 7
        %v2448 = vsub.s32 0, %v2447
        %v2449 = vrot.slane %v2382, %v2448
        %v2450 = vlaneseq
        %v2451 = vshrl.u32 %v2450, 7
        %v2452 = vsub.s32 1, %v2451
        %v2453 = vrot.slane %v2382, %v2452
        %v2454 = vlaneseq
        %v2455 = vshrl.u32 %v2454, 7
        %v2456 = vsub.s32 2, %v2455
        %v2457 = vrot.slane %v2382, %v2456
        %v2458 = vlaneseq
        %v2459 = vshrl.u32 %v2458, 7
        %v2460 = vsub.s32 3, %v2459
        %v2461 = vrot.slane %v2382, %v2460
        %v2462 = vlaneseq
        %v2463 = vshrl.u32 %v2462, 7
        %v2464 = vsub.s32 4, %v2463
        %v2465 = vrot.slane %v2382, %v2464
        %v2466 = vlaneseq
        %v2467 = vshrl.u32 %v2466, 7
        %v2468 = vsub.s32 5, %v2467
        %v2469 = vrot.slane %v2382, %v2468
        %v2470 = vlaneseq
        %v2471 = vshrl.u32 %v2470, 7
        %v2472 = vsub.s32 6, %v2471
        %v2473 = vrot.slane %v2382, %v2472
        %v2474 = vlaneseq
        %v2475 = vshrl.u32 %v2474, 7
        %v2476 = vsub.s32 0, %v2475
        %v2477 = vrot.slane %v2385, %v2476
        %v2478 = vlaneseq
        %v2479 = vshrl.u32 %v2478, 7
        %v2480 = vsub.s32 1, %v2479
        %v2481 = vrot.slane %v2385, %v2480
        %v2482 = vlaneseq
        %v2483 = vshrl.u32 %v2482, 7
        %v2484 = vsub.s32 2, %v2483
        %v2485 = vrot.slane %v2385, %v2484
        %v2486 = vlaneseq
        %v2487 = vshrl.u32 %v2486, 7
        %v2488 = vsub.s32 3, %v2487
        %v2489 = vrot.slane %v2385, %v2488
        %v2490 = vlaneseq
        %v2491 = vshrl.u32 %v2490, 7
        %v2492 = vsub.s32 4, %v2491
        %v2493 = vrot.slane %v2385, %v2492
        %v2494 = vlaneseq
        %v2495 = vshrl.u32 %v2494, 7
        %v2496 = vsub.s32 5, %v2495
        %v2497 = vrot.slane %v2385, %v2496
        %v2498 = vlaneseq
        %v2499 = vshrl.u32 %v2498, 7
        %v2500 = vsub.s32 6, %v2499
        %v2501 = vrot.slane %v2385, %v2500
        %vm2530 = vcmp.eq.f32.partialorder %v2088, %v2393
        %vm2531 = vcmp.eq.f32.partialorder %v2089, %v2397
        %vm2532 = vcmp.eq.f32.partialorder %v2090, %v2401
        %vm2533 = vcmp.eq.f32.partialorder %v2091, %v2405
        %vm2534 = vcmp.eq.f32.partialorder %v2092, %v2409
        %vm2535 = vcmp.eq.f32.partialorder %v2093, %v2413
        %vm2536 = vcmp.eq.f32.partialorder %v2094, %v2417
        %vm2537 = vcmp.eq.f32.partialorder %v2095, %v2421
        %vm2538 = vcmp.eq.f32.partialorder %v2096, %v2425
        %vm2539 = vcmp.eq.f32.partialorder %v2097, %v2429
        %vm2540 = vcmp.eq.f32.partialorder %v2098, %v2433
        %vm2541 = vcmp.eq.f32.partialorder %v2099, %v2437
        %vm2542 = vcmp.eq.f32.partialorder %v2100, %v2441
        %vm2543 = vcmp.eq.f32.partialorder %v2101, %v2445
        %vm2544 = vcmp.eq.f32.partialorder %v2102, %v2449
        %vm2545 = vcmp.eq.f32.partialorder %v2103, %v2453
        %vm2546 = vcmp.eq.f32.partialorder %v2104, %v2457
        %vm2547 = vcmp.eq.f32.partialorder %v2105, %v2461
        %vm2548 = vcmp.eq.f32.partialorder %v2106, %v2465
        %vm2549 = vcmp.eq.f32.partialorder %v2107, %v2469
        %vm2550 = vcmp.eq.f32.partialorder %v2108, %v2473
        %vm2551 = vcmp.eq.f32.partialorder %v2109, %v2477
        %vm2552 = vcmp.eq.f32.partialorder %v2110, %v2481
        %vm2553 = vcmp.eq.f32.partialorder %v2111, %v2485
        %vm2554 = vcmp.eq.f32.partialorder %v2112, %v2489
        %vm2555 = vcmp.eq.f32.partialorder %v2113, %v2493
        %vm2556 = vcmp.eq.f32.partialorder %v2114, %v2497
        %vm2557 = vcmp.eq.f32.partialorder %v2115, %v2501
        %2559 = vbcast.lane.b32.xlu0 %v437, 256
        %v2560 = vpop.permute.xlu0 %2559
        %v2561 = vsel %vm2530, %v2560, 1073741824
        %v2562 = vsel %vm2531, %v2560, 1073741824
        %v2563 = vsel %vm2532, %v2560, 1073741824
        %v2564 = vsel %vm2533, %v2560, 1073741824
        %v2565 = vsel %vm2534, %v2560, 1073741824
        %v2566 = vsel %vm2535, %v2560, 1073741824
        %v2567 = vsel %vm2536, %v2560, 1073741824
        %v2568 = vsel %vm2537, %v2560, 1073741824
        %v2569 = vsel %vm2538, %v2560, 1073741824
        %v2570 = vsel %vm2539, %v2560, 1073741824
        %v2571 = vsel %vm2540, %v2560, 1073741824
        %v2572 = vsel %vm2541, %v2560, 1073741824
        %v2573 = vsel %vm2542, %v2560, 1073741824
        %v2574 = vsel %vm2543, %v2560, 1073741824
        %v2575 = vsel %vm2544, %v2560, 1073741824
        %v2576 = vsel %vm2545, %v2560, 1073741824
        %v2577 = vsel %vm2546, %v2560, 1073741824
        %v2578 = vsel %vm2547, %v2560, 1073741824
        %v2579 = vsel %vm2548, %v2560, 1073741824
        %v2580 = vsel %vm2549, %v2560, 1073741824
        %v2581 = vsel %vm2550, %v2560, 1073741824
        %v2582 = vsel %vm2551, %v2560, 1073741824
        %v2583 = vsel %vm2552, %v2560, 1073741824
        %v2584 = vsel %vm2553, %v2560, 1073741824
        %v2585 = vsel %vm2554, %v2560, 1073741824
        %v2586 = vsel %vm2555, %v2560, 1073741824
        %v2587 = vsel %vm2556, %v2560, 1073741824
        %v2588 = vsel %vm2557, %v2560, 1073741824
        %2589 = vset.pattern.permute.xlu0 0
        %2590 = vperm.xlu0 %2589, %v2561
        %v2591 = vpop.permute.xlu0 %2590
        %2592 = vset.pattern.permute.xlu0 0
        %2593 = vperm.xlu0 %2592, %v2562
        %v2594 = vpop.permute.xlu0 %2593
        %2595 = vset.pattern.permute.xlu0 0
        %2596 = vperm.xlu0 %2595, %v2563
        %v2597 = vpop.permute.xlu0 %2596
        %2598 = vset.pattern.permute.xlu0 0
        %2599 = vperm.xlu0 %2598, %v2564
        %v2600 = vpop.permute.xlu0 %2599
        %2601 = vset.pattern.permute.xlu0 0
        %2602 = vperm.xlu0 %2601, %v2565
        %v2603 = vpop.permute.xlu0 %2602
        %2604 = vset.pattern.permute.xlu0 0
        %2605 = vperm.xlu0 %2604, %v2566
        %v2606 = vpop.permute.xlu0 %2605
        %2607 = vset.pattern.permute.xlu0 0
        %2608 = vperm.xlu0 %2607, %v2567
        %v2609 = vpop.permute.xlu0 %2608
        %2610 = vset.pattern.permute.xlu0 0
        %2611 = vperm.xlu0 %2610, %v2568
        %v2612 = vpop.permute.xlu0 %2611
        %2613 = vset.pattern.permute.xlu0 0
        %2614 = vperm.xlu0 %2613, %v2569
        %v2615 = vpop.permute.xlu0 %2614
        %2616 = vset.pattern.permute.xlu0 0
        %2617 = vperm.xlu0 %2616, %v2570
        %v2618 = vpop.permute.xlu0 %2617
        %2619 = vset.pattern.permute.xlu0 0
        %2620 = vperm.xlu0 %2619, %v2571
        %v2621 = vpop.permute.xlu0 %2620
        %2622 = vset.pattern.permute.xlu0 0
        %2623 = vperm.xlu0 %2622, %v2572
        %v2624 = vpop.permute.xlu0 %2623
        %2625 = vset.pattern.permute.xlu0 0
        %2626 = vperm.xlu0 %2625, %v2573
        %v2627 = vpop.permute.xlu0 %2626
        %2628 = vset.pattern.permute.xlu0 0
        %2629 = vperm.xlu0 %2628, %v2574
        %v2630 = vpop.permute.xlu0 %2629
        %2631 = vset.pattern.permute.xlu0 0
        %2632 = vperm.xlu0 %2631, %v2575
        %v2633 = vpop.permute.xlu0 %2632
        %2634 = vset.pattern.permute.xlu0 0
        %2635 = vperm.xlu0 %2634, %v2576
        %v2636 = vpop.permute.xlu0 %2635
        %2637 = vset.pattern.permute.xlu0 0
        %2638 = vperm.xlu0 %2637, %v2577
        %v2639 = vpop.permute.xlu0 %2638
        %2640 = vset.pattern.permute.xlu0 0
        %2641 = vperm.xlu0 %2640, %v2578
        %v2642 = vpop.permute.xlu0 %2641
        %2643 = vset.pattern.permute.xlu0 0
        %2644 = vperm.xlu0 %2643, %v2579
        %v2645 = vpop.permute.xlu0 %2644
        %2646 = vset.pattern.permute.xlu0 0
        %2647 = vperm.xlu0 %2646, %v2580
        %v2648 = vpop.permute.xlu0 %2647
        %2649 = vset.pattern.permute.xlu0 0
        %2650 = vperm.xlu0 %2649, %v2581
        %v2651 = vpop.permute.xlu0 %2650
        %2652 = vset.pattern.permute.xlu0 0
        %2653 = vperm.xlu0 %2652, %v2582
        %v2654 = vpop.permute.xlu0 %2653
        %2655 = vset.pattern.permute.xlu0 0
        %2656 = vperm.xlu0 %2655, %v2583
        %v2657 = vpop.permute.xlu0 %2656
        %2658 = vset.pattern.permute.xlu0 0
        %2659 = vperm.xlu0 %2658, %v2584
        %v2660 = vpop.permute.xlu0 %2659
        %2661 = vset.pattern.permute.xlu0 0
        %2662 = vperm.xlu0 %2661, %v2585
        %v2663 = vpop.permute.xlu0 %2662
        %2664 = vset.pattern.permute.xlu0 0
        %2665 = vperm.xlu0 %2664, %v2586
        %v2666 = vpop.permute.xlu0 %2665
        %2667 = vset.pattern.permute.xlu0 0
        %2668 = vperm.xlu0 %2667, %v2587
        %v2669 = vpop.permute.xlu0 %2668
        %2670 = vset.pattern.permute.xlu0 0
        %2671 = vperm.xlu0 %2670, %v2588
        %v2672 = vpop.permute.xlu0 %2671
        %v2673 = vlaneseq
        %v2674 = vshrl.u32 %v2673, 7
        %v2675 = vsub.s32 %v437, %v2674
        %v2676 = vrot.slane %v2591, %v2675
        %v2677 = vlaneseq
        %v2678 = vshrl.u32 %v2677, 7
        %v2679 = vsub.s32 %v437, %v2678
        %v2680 = vrot.slane %v2594, %v2679
        %v2681 = vlaneseq
        %v2682 = vshrl.u32 %v2681, 7
        %v2683 = vsub.s32 %v437, %v2682
        %v2684 = vrot.slane %v2597, %v2683
        %v2685 = vlaneseq
        %v2686 = vshrl.u32 %v2685, 7
        %v2687 = vsub.s32 %v437, %v2686
        %v2688 = vrot.slane %v2600, %v2687
        %v2689 = vlaneseq
        %v2690 = vshrl.u32 %v2689, 7
        %v2691 = vsub.s32 %v437, %v2690
        %v2692 = vrot.slane %v2603, %v2691
        %v2693 = vlaneseq
        %v2694 = vshrl.u32 %v2693, 7
        %v2695 = vsub.s32 %v437, %v2694
        %v2696 = vrot.slane %v2606, %v2695
        %v2697 = vlaneseq
        %v2698 = vshrl.u32 %v2697, 7
        %v2699 = vsub.s32 %v437, %v2698
        %v2700 = vrot.slane %v2609, %v2699
        %v2701 = vlaneseq
        %v2702 = vshrl.u32 %v2701, 7
        %v2703 = vsub.s32 %v437, %v2702
        %v2704 = vrot.slane %v2612, %v2703
        %v2705 = vlaneseq
        %v2706 = vshrl.u32 %v2705, 7
        %v2707 = vsub.s32 %v437, %v2706
        %v2708 = vrot.slane %v2615, %v2707
        %v2709 = vlaneseq
        %v2710 = vshrl.u32 %v2709, 7
        %v2711 = vsub.s32 %v437, %v2710
        %v2712 = vrot.slane %v2618, %v2711
        %v2713 = vlaneseq
        %v2714 = vshrl.u32 %v2713, 7
        %v2715 = vsub.s32 %v437, %v2714
        %v2716 = vrot.slane %v2621, %v2715
        %v2717 = vlaneseq
        %v2718 = vshrl.u32 %v2717, 7
        %v2719 = vsub.s32 %v437, %v2718
        %v2720 = vrot.slane %v2624, %v2719
        %v2721 = vlaneseq
        %v2722 = vshrl.u32 %v2721, 7
        %v2723 = vsub.s32 %v437, %v2722
        %v2724 = vrot.slane %v2627, %v2723
        %v2725 = vlaneseq
        %v2726 = vshrl.u32 %v2725, 7
        %v2727 = vsub.s32 %v437, %v2726
        %v2728 = vrot.slane %v2630, %v2727
        %v2729 = vlaneseq
        %v2730 = vshrl.u32 %v2729, 7
        %v2731 = vsub.s32 %v437, %v2730
        %v2732 = vrot.slane %v2633, %v2731
        %v2733 = vlaneseq
        %v2734 = vshrl.u32 %v2733, 7
        %v2735 = vsub.s32 %v437, %v2734
        %v2736 = vrot.slane %v2636, %v2735
        %v2737 = vlaneseq
        %v2738 = vshrl.u32 %v2737, 7
        %v2739 = vsub.s32 %v437, %v2738
        %v2740 = vrot.slane %v2639, %v2739
        %v2741 = vlaneseq
        %v2742 = vshrl.u32 %v2741, 7
        %v2743 = vsub.s32 %v437, %v2742
        %v2744 = vrot.slane %v2642, %v2743
        %v2745 = vlaneseq
        %v2746 = vshrl.u32 %v2745, 7
        %v2747 = vsub.s32 %v437, %v2746
        %v2748 = vrot.slane %v2645, %v2747
        %v2749 = vlaneseq
        %v2750 = vshrl.u32 %v2749, 7
        %v2751 = vsub.s32 %v437, %v2750
        %v2752 = vrot.slane %v2648, %v2751
        %v2753 = vlaneseq
        %v2754 = vshrl.u32 %v2753, 7
        %v2755 = vsub.s32 %v437, %v2754
        %v2756 = vrot.slane %v2651, %v2755
        %v2757 = vlaneseq
        %v2758 = vshrl.u32 %v2757, 7
        %v2759 = vsub.s32 %v437, %v2758
        %v2760 = vrot.slane %v2654, %v2759
        %v2761 = vlaneseq
        %v2762 = vshrl.u32 %v2761, 7
        %v2763 = vsub.s32 %v437, %v2762
        %v2764 = vrot.slane %v2657, %v2763
        %v2765 = vlaneseq
        %v2766 = vshrl.u32 %v2765, 7
        %v2767 = vsub.s32 %v437, %v2766
        %v2768 = vrot.slane %v2660, %v2767
        %v2769 = vlaneseq
        %v2770 = vshrl.u32 %v2769, 7
        %v2771 = vsub.s32 %v437, %v2770
        %v2772 = vrot.slane %v2663, %v2771
        %v2773 = vlaneseq
        %v2774 = vshrl.u32 %v2773, 7
        %v2775 = vsub.s32 %v437, %v2774
        %v2776 = vrot.slane %v2666, %v2775
        %v2777 = vlaneseq
        %v2778 = vshrl.u32 %v2777, 7
        %v2779 = vsub.s32 %v437, %v2778
        %v2780 = vrot.slane %v2669, %v2779
        %v2781 = vlaneseq
        %v2782 = vshrl.u32 %v2781, 7
        %v2783 = vsub.s32 %v437, %v2782
        %v2784 = vrot.slane %v2672, %v2783
        %v2785 = vsel %vm2340, %v2680, %v2676
        %v2786 = vsel %vm2342, %v2684, %v2785
        %v2787 = vsel %vm2344, %v2688, %v2786
        %v2788 = vsel %vm2346, %v2692, %v2787
        %v2789 = vsel %vm2348, %v2696, %v2788
        %v2790 = vsel %vm2350, %v2700, %v2789
        %v2791 = vsel %vm2340, %v2708, %v2704
        %v2792 = vsel %vm2342, %v2712, %v2791
        %v2793 = vsel %vm2344, %v2716, %v2792
        %v2794 = vsel %vm2346, %v2720, %v2793
        %v2795 = vsel %vm2348, %v2724, %v2794
        %v2796 = vsel %vm2350, %v2728, %v2795
        %v2797 = vsel %vm2340, %v2736, %v2732
        %v2798 = vsel %vm2342, %v2740, %v2797
        %v2799 = vsel %vm2344, %v2744, %v2798
        %v2800 = vsel %vm2346, %v2748, %v2799
        %v2801 = vsel %vm2348, %v2752, %v2800
        %v2802 = vsel %vm2350, %v2756, %v2801
        %v2803 = vsel %vm2340, %v2764, %v2760
        %v2804 = vsel %vm2342, %v2768, %v2803
        %v2805 = vsel %vm2344, %v2772, %v2804
        %v2806 = vsel %vm2346, %v2776, %v2805
        %v2807 = vsel %vm2348, %v2780, %v2806
        %v2808 = vsel %vm2350, %v2784, %v2807
        %v2809 = vsel %vm1913, %v2790, 2147483647
        %v2810 = vand.u32 %v2809, 65535
        %v2811 = vshra.s32 %v2809, 16
        %v2812 = vcvt.s32.f32 %v2810
        %v2813 = vcvt.s32.f32 %v2811
        %2814 = vmin.xlane.f32.xlu0 %v2813
        %v2815 = vpop.xlane.xlu0 %2814
        %vm2816 = vcmp.eq.f32.partialorder %v2813, %v2815
        %v2817 = vsel %vm2816, %v2812, inf
        %2818 = vmin.xlane.f32.xlu0 %v2817
        %v2819 = vpop.xlane.xlu0 %2818
        %v2820 = vcvt.f32.s32 %v2819
        %v2821 = vcvt.f32.s32 %v2815
        %v2822 = vshll.u32 %v2821, 16
        %v2823 = vadd.s32 %v2822, %v2820
        %v2824 = vsel %vm1913, %v2796, 2147483647
        %v2825 = vand.u32 %v2824, 65535
        %v2826 = vshra.s32 %v2824, 16
        %v2827 = vcvt.s32.f32 %v2825
        %v2828 = vcvt.s32.f32 %v2826
        %2829 = vmin.xlane.f32.xlu0 %v2828
        %v2830 = vpop.xlane.xlu0 %2829
        %vm2831 = vcmp.eq.f32.partialorder %v2828, %v2830
        %v2832 = vsel %vm2831, %v2827, inf
        %2833 = vmin.xlane.f32.xlu0 %v2832
        %v2834 = vpop.xlane.xlu0 %2833
        %v2835 = vcvt.f32.s32 %v2834
        %v2836 = vcvt.f32.s32 %v2830
        %v2837 = vshll.u32 %v2836, 16
        %v2838 = vadd.s32 %v2837, %v2835
        %v2839 = vsel %vm1913, %v2802, 2147483647
        %v2840 = vand.u32 %v2839, 65535
        %v2841 = vshra.s32 %v2839, 16
        %v2842 = vcvt.s32.f32 %v2840
        %v2843 = vcvt.s32.f32 %v2841
        %2844 = vmin.xlane.f32.xlu0 %v2843
        %v2845 = vpop.xlane.xlu0 %2844
        %vm2846 = vcmp.eq.f32.partialorder %v2843, %v2845
        %v2847 = vsel %vm2846, %v2842, inf
        %2848 = vmin.xlane.f32.xlu0 %v2847
        %v2849 = vpop.xlane.xlu0 %2848
        %v2850 = vcvt.f32.s32 %v2849
        %v2851 = vcvt.f32.s32 %v2845
        %v2852 = vshll.u32 %v2851, 16
        %v2853 = vadd.s32 %v2852, %v2850
        %v2854 = vsel %vm1913, %v2808, 2147483647
        %v2855 = vand.u32 %v2854, 65535
        %v2856 = vshra.s32 %v2854, 16
        %v2857 = vcvt.s32.f32 %v2855
        %v2858 = vcvt.s32.f32 %v2856
        %2859 = vmin.xlane.f32.xlu0 %v2858
        %v2860 = vpop.xlane.xlu0 %2859
        %vm2861 = vcmp.eq.f32.partialorder %v2858, %v2860
        %v2862 = vsel %vm2861, %v2857, inf
        %2863 = vmin.xlane.f32.xlu0 %v2862
        %v2864 = vpop.xlane.xlu0 %2863
        %v2865 = vcvt.f32.s32 %v2864
        %v2866 = vcvt.f32.s32 %v2860
        %v2867 = vshll.u32 %v2866, 16
        %v2868 = vadd.s32 %v2867, %v2865
        %v2870 = vlaneseq
        %v2871 = vshrl.u32 %v2870, 7
        %v2872 = vsub.s32 0, %v2871
        %v2873 = vrot.slane %v1851, %v2872
        %2875 = vbcast.lane.b32.xlu0 %v2873, 256
        %v2876 = vpop.permute.xlu0 %2875
        %v2877 = vlaneseq
        %v2878 = vshrl.u32 %v2877, 7
        %v2879 = vsub.s32 1, %v2878
        %v2880 = vrot.slane %v1851, %v2879
        %2882 = vbcast.lane.b32.xlu0 %v2880, 256
        %v2883 = vpop.permute.xlu0 %2882
        %v2884 = vlaneseq
        %v2885 = vshrl.u32 %v2884, 7
        %v2886 = vsub.s32 2, %v2885
        %v2887 = vrot.slane %v1851, %v2886
        %2889 = vbcast.lane.b32.xlu0 %v2887, 256
        %v2890 = vpop.permute.xlu0 %2889
        %v2891 = vlaneseq
        %v2892 = vshrl.u32 %v2891, 7
        %v2893 = vsub.s32 3, %v2892
        %v2894 = vrot.slane %v1851, %v2893
        %2896 = vbcast.lane.b32.xlu0 %v2894, 256
        %v2897 = vpop.permute.xlu0 %2896
        %v2902 = vadd.f32 %v2376, %v2876
        %v2903 = vadd.f32 %v2379, %v2883
        %v2904 = vadd.f32 %v2382, %v2890
        %v2905 = vadd.f32 %v2385, %v2897
        %v2906 = vadd.f32 %v2902, %v2038
        %v2907 = vadd.f32 %v2902, %v2045
        %v2908 = vadd.f32 %v2902, %v2052
        %v2909 = vadd.f32 %v2902, %v2059
        %v2910 = vadd.f32 %v2902, %v2066
        %v2911 = vadd.f32 %v2902, %v2073
        %v2912 = vadd.f32 %v2902, %v2080
        %v2913 = vadd.f32 %v2903, %v2038
        %v2914 = vadd.f32 %v2903, %v2045
        %v2915 = vadd.f32 %v2903, %v2052
        %v2916 = vadd.f32 %v2903, %v2059
        %v2917 = vadd.f32 %v2903, %v2066
        %v2918 = vadd.f32 %v2903, %v2073
        %v2919 = vadd.f32 %v2903, %v2080
        %v2920 = vadd.f32 %v2904, %v2038
        %v2921 = vadd.f32 %v2904, %v2045
        %v2922 = vadd.f32 %v2904, %v2052
        %v2923 = vadd.f32 %v2904, %v2059
        %v2924 = vadd.f32 %v2904, %v2066
        %v2925 = vadd.f32 %v2904, %v2073
        %v2926 = vadd.f32 %v2904, %v2080
        %v2927 = vadd.f32 %v2905, %v2038
        %v2928 = vadd.f32 %v2905, %v2045
        %v2929 = vadd.f32 %v2905, %v2052
        %v2930 = vadd.f32 %v2905, %v2059
        %v2931 = vadd.f32 %v2905, %v2066
        %v2932 = vadd.f32 %v2905, %v2073
        %v2933 = vadd.f32 %v2905, %v2080
        %2962 = vset.pattern.permute.xlu0 0
        %2963 = vperm.xlu0 %2962, %v2906
        %v2964 = vpop.permute.xlu0 %2963
        %2965 = vset.pattern.permute.xlu0 0
        %2966 = vperm.xlu0 %2965, %v2907
        %v2967 = vpop.permute.xlu0 %2966
        %2968 = vset.pattern.permute.xlu0 0
        %2969 = vperm.xlu0 %2968, %v2908
        %v2970 = vpop.permute.xlu0 %2969
        %2971 = vset.pattern.permute.xlu0 0
        %2972 = vperm.xlu0 %2971, %v2909
        %v2973 = vpop.permute.xlu0 %2972
        %2974 = vset.pattern.permute.xlu0 0
        %2975 = vperm.xlu0 %2974, %v2910
        %v2976 = vpop.permute.xlu0 %2975
        %2977 = vset.pattern.permute.xlu0 0
        %2978 = vperm.xlu0 %2977, %v2911
        %v2979 = vpop.permute.xlu0 %2978
        %2980 = vset.pattern.permute.xlu0 0
        %2981 = vperm.xlu0 %2980, %v2912
        %v2982 = vpop.permute.xlu0 %2981
        %2983 = vset.pattern.permute.xlu0 0
        %2984 = vperm.xlu0 %2983, %v2913
        %v2985 = vpop.permute.xlu0 %2984
        %2986 = vset.pattern.permute.xlu0 0
        %2987 = vperm.xlu0 %2986, %v2914
        %v2988 = vpop.permute.xlu0 %2987
        %2989 = vset.pattern.permute.xlu0 0
        %2990 = vperm.xlu0 %2989, %v2915
        %v2991 = vpop.permute.xlu0 %2990
        %2992 = vset.pattern.permute.xlu0 0
        %2993 = vperm.xlu0 %2992, %v2916
        %v2994 = vpop.permute.xlu0 %2993
        %2995 = vset.pattern.permute.xlu0 0
        %2996 = vperm.xlu0 %2995, %v2917
        %v2997 = vpop.permute.xlu0 %2996
        %2998 = vset.pattern.permute.xlu0 0
        %2999 = vperm.xlu0 %2998, %v2918
        %v3000 = vpop.permute.xlu0 %2999
        %3001 = vset.pattern.permute.xlu0 0
        %3002 = vperm.xlu0 %3001, %v2919
        %v3003 = vpop.permute.xlu0 %3002
        %3004 = vset.pattern.permute.xlu0 0
        %3005 = vperm.xlu0 %3004, %v2920
        %v3006 = vpop.permute.xlu0 %3005
        %3007 = vset.pattern.permute.xlu0 0
        %3008 = vperm.xlu0 %3007, %v2921
        %v3009 = vpop.permute.xlu0 %3008
        %3010 = vset.pattern.permute.xlu0 0
        %3011 = vperm.xlu0 %3010, %v2922
        %v3012 = vpop.permute.xlu0 %3011
        %3013 = vset.pattern.permute.xlu0 0
        %3014 = vperm.xlu0 %3013, %v2923
        %v3015 = vpop.permute.xlu0 %3014
        %3016 = vset.pattern.permute.xlu0 0
        %3017 = vperm.xlu0 %3016, %v2924
        %v3018 = vpop.permute.xlu0 %3017
        %3019 = vset.pattern.permute.xlu0 0
        %3020 = vperm.xlu0 %3019, %v2925
        %v3021 = vpop.permute.xlu0 %3020
        %3022 = vset.pattern.permute.xlu0 0
        %3023 = vperm.xlu0 %3022, %v2926
        %v3024 = vpop.permute.xlu0 %3023
        %3025 = vset.pattern.permute.xlu0 0
        %3026 = vperm.xlu0 %3025, %v2927
        %v3027 = vpop.permute.xlu0 %3026
        %3028 = vset.pattern.permute.xlu0 0
        %3029 = vperm.xlu0 %3028, %v2928
        %v3030 = vpop.permute.xlu0 %3029
        %3031 = vset.pattern.permute.xlu0 0
        %3032 = vperm.xlu0 %3031, %v2929
        %v3033 = vpop.permute.xlu0 %3032
        %3034 = vset.pattern.permute.xlu0 0
        %3035 = vperm.xlu0 %3034, %v2930
        %v3036 = vpop.permute.xlu0 %3035
        %3037 = vset.pattern.permute.xlu0 0
        %3038 = vperm.xlu0 %3037, %v2931
        %v3039 = vpop.permute.xlu0 %3038
        %3040 = vset.pattern.permute.xlu0 0
        %3041 = vperm.xlu0 %3040, %v2932
        %v3042 = vpop.permute.xlu0 %3041
        %3043 = vset.pattern.permute.xlu0 0
        %3044 = vperm.xlu0 %3043, %v2933
        %v3045 = vpop.permute.xlu0 %3044
        %v3046 = vlaneseq
        %v3047 = vshrl.u32 %v3046, 7
        %v3048 = vsub.s32 %v437, %v3047
        %v3049 = vrot.slane %v2964, %v3048
        %v3050 = vlaneseq
        %v3051 = vshrl.u32 %v3050, 7
        %v3052 = vsub.s32 %v437, %v3051
        %v3053 = vrot.slane %v2967, %v3052
        %v3054 = vlaneseq
        %v3055 = vshrl.u32 %v3054, 7
        %v3056 = vsub.s32 %v437, %v3055
        %v3057 = vrot.slane %v2970, %v3056
        %v3058 = vlaneseq
        %v3059 = vshrl.u32 %v3058, 7
        %v3060 = vsub.s32 %v437, %v3059
        %v3061 = vrot.slane %v2973, %v3060
        %v3062 = vlaneseq
        %v3063 = vshrl.u32 %v3062, 7
        %v3064 = vsub.s32 %v437, %v3063
        %v3065 = vrot.slane %v2976, %v3064
        %v3066 = vlaneseq
        %v3067 = vshrl.u32 %v3066, 7
        %v3068 = vsub.s32 %v437, %v3067
        %v3069 = vrot.slane %v2979, %v3068
        %v3070 = vlaneseq
        %v3071 = vshrl.u32 %v3070, 7
        %v3072 = vsub.s32 %v437, %v3071
        %v3073 = vrot.slane %v2982, %v3072
        %v3074 = vlaneseq
        %v3075 = vshrl.u32 %v3074, 7
        %v3076 = vsub.s32 %v437, %v3075
        %v3077 = vrot.slane %v2985, %v3076
        %v3078 = vlaneseq
        %v3079 = vshrl.u32 %v3078, 7
        %v3080 = vsub.s32 %v437, %v3079
        %v3081 = vrot.slane %v2988, %v3080
        %v3082 = vlaneseq
        %v3083 = vshrl.u32 %v3082, 7
        %v3084 = vsub.s32 %v437, %v3083
        %v3085 = vrot.slane %v2991, %v3084
        %v3086 = vlaneseq
        %v3087 = vshrl.u32 %v3086, 7
        %v3088 = vsub.s32 %v437, %v3087
        %v3089 = vrot.slane %v2994, %v3088
        %v3090 = vlaneseq
        %v3091 = vshrl.u32 %v3090, 7
        %v3092 = vsub.s32 %v437, %v3091
        %v3093 = vrot.slane %v2997, %v3092
        %v3094 = vlaneseq
        %v3095 = vshrl.u32 %v3094, 7
        %v3096 = vsub.s32 %v437, %v3095
        %v3097 = vrot.slane %v3000, %v3096
        %v3098 = vlaneseq
        %v3099 = vshrl.u32 %v3098, 7
        %v3100 = vsub.s32 %v437, %v3099
        %v3101 = vrot.slane %v3003, %v3100
        %v3102 = vlaneseq
        %v3103 = vshrl.u32 %v3102, 7
        %v3104 = vsub.s32 %v437, %v3103
        %v3105 = vrot.slane %v3006, %v3104
        %v3106 = vlaneseq
        %v3107 = vshrl.u32 %v3106, 7
        %v3108 = vsub.s32 %v437, %v3107
        %v3109 = vrot.slane %v3009, %v3108
        %v3110 = vlaneseq
        %v3111 = vshrl.u32 %v3110, 7
        %v3112 = vsub.s32 %v437, %v3111
        %v3113 = vrot.slane %v3012, %v3112
        %v3114 = vlaneseq
        %v3115 = vshrl.u32 %v3114, 7
        %v3116 = vsub.s32 %v437, %v3115
        %v3117 = vrot.slane %v3015, %v3116
        %v3118 = vlaneseq
        %v3119 = vshrl.u32 %v3118, 7
        %v3120 = vsub.s32 %v437, %v3119
        %v3121 = vrot.slane %v3018, %v3120
        %v3122 = vlaneseq
        %v3123 = vshrl.u32 %v3122, 7
        %v3124 = vsub.s32 %v437, %v3123
        %v3125 = vrot.slane %v3021, %v3124
        %v3126 = vlaneseq
        %v3127 = vshrl.u32 %v3126, 7
        %v3128 = vsub.s32 %v437, %v3127
        %v3129 = vrot.slane %v3024, %v3128
        %v3130 = vlaneseq
        %v3131 = vshrl.u32 %v3130, 7
        %v3132 = vsub.s32 %v437, %v3131
        %v3133 = vrot.slane %v3027, %v3132
        %v3134 = vlaneseq
        %v3135 = vshrl.u32 %v3134, 7
        %v3136 = vsub.s32 %v437, %v3135
        %v3137 = vrot.slane %v3030, %v3136
        %v3138 = vlaneseq
        %v3139 = vshrl.u32 %v3138, 7
        %v3140 = vsub.s32 %v437, %v3139
        %v3141 = vrot.slane %v3033, %v3140
        %v3142 = vlaneseq
        %v3143 = vshrl.u32 %v3142, 7
        %v3144 = vsub.s32 %v437, %v3143
        %v3145 = vrot.slane %v3036, %v3144
        %v3146 = vlaneseq
        %v3147 = vshrl.u32 %v3146, 7
        %v3148 = vsub.s32 %v437, %v3147
        %v3149 = vrot.slane %v3039, %v3148
        %v3150 = vlaneseq
        %v3151 = vshrl.u32 %v3150, 7
        %v3152 = vsub.s32 %v437, %v3151
        %v3153 = vrot.slane %v3042, %v3152
        %v3154 = vlaneseq
        %v3155 = vshrl.u32 %v3154, 7
        %v3156 = vsub.s32 %v437, %v3155
        %v3157 = vrot.slane %v3045, %v3156
        %v3158 = vsel %vm2340, %v3053, %v3049
        %v3159 = vsel %vm2342, %v3057, %v3158
        %v3160 = vsel %vm2344, %v3061, %v3159
        %v3161 = vsel %vm2346, %v3065, %v3160
        %v3162 = vsel %vm2348, %v3069, %v3161
        %v3163 = vsel %vm2350, %v3073, %v3162
        %v3164 = vsel %vm2340, %v3081, %v3077
        %v3165 = vsel %vm2342, %v3085, %v3164
        %v3166 = vsel %vm2344, %v3089, %v3165
        %v3167 = vsel %vm2346, %v3093, %v3166
        %v3168 = vsel %vm2348, %v3097, %v3167
        %v3169 = vsel %vm2350, %v3101, %v3168
        %v3170 = vsel %vm2340, %v3109, %v3105
        %v3171 = vsel %vm2342, %v3113, %v3170
        %v3172 = vsel %vm2344, %v3117, %v3171
        %v3173 = vsel %vm2346, %v3121, %v3172
        %v3174 = vsel %vm2348, %v3125, %v3173
        %v3175 = vsel %vm2350, %v3129, %v3174
        %v3176 = vsel %vm2340, %v3137, %v3133
        %v3177 = vsel %vm2342, %v3141, %v3176
        %v3178 = vsel %vm2344, %v3145, %v3177
        %v3179 = vsel %vm2346, %v3149, %v3178
        %v3180 = vsel %vm2348, %v3153, %v3179
        %v3181 = vsel %vm2350, %v3157, %v3180
        %v3186 = vsel %vm1913, %v3163, -inf
        %3187 = vmax.xlane.f32.xlu0 %v3186
        %v3188 = vpop.xlane.xlu0 %3187
        %v3189 = vsel %vm1913, %v3169, -inf
        %3190 = vmax.xlane.f32.xlu0 %v3189
        %v3191 = vpop.xlane.xlu0 %3190
        %v3192 = vsel %vm1913, %v3175, -inf
        %3193 = vmax.xlane.f32.xlu0 %v3192
        %v3194 = vpop.xlane.xlu0 %3193
        %v3195 = vsel %vm1913, %v3181, -inf
        %3196 = vmax.xlane.f32.xlu0 %v3195
        %v3197 = vpop.xlane.xlu0 %3196
        %v3202 = vlaneseq
        %v3203 = vshrl.u32 %v3202, 7
        %v3204 = vsub.s32 0, %v3203
        %v3205 = vrot.slane %v3188, %v3204
        %v3206 = vlaneseq
        %v3207 = vshrl.u32 %v3206, 7
        %v3208 = vsub.s32 1, %v3207
        %v3209 = vrot.slane %v3188, %v3208
        %v3210 = vlaneseq
        %v3211 = vshrl.u32 %v3210, 7
        %v3212 = vsub.s32 2, %v3211
        %v3213 = vrot.slane %v3188, %v3212
        %v3214 = vlaneseq
        %v3215 = vshrl.u32 %v3214, 7
        %v3216 = vsub.s32 3, %v3215
        %v3217 = vrot.slane %v3188, %v3216
        %v3218 = vlaneseq
        %v3219 = vshrl.u32 %v3218, 7
        %v3220 = vsub.s32 4, %v3219
        %v3221 = vrot.slane %v3188, %v3220
        %v3222 = vlaneseq
        %v3223 = vshrl.u32 %v3222, 7
        %v3224 = vsub.s32 5, %v3223
        %v3225 = vrot.slane %v3188, %v3224
        %v3226 = vlaneseq
        %v3227 = vshrl.u32 %v3226, 7
        %v3228 = vsub.s32 6, %v3227
        %v3229 = vrot.slane %v3188, %v3228
        %v3230 = vlaneseq
        %v3231 = vshrl.u32 %v3230, 7
        %v3232 = vsub.s32 0, %v3231
        %v3233 = vrot.slane %v3191, %v3232
        %v3234 = vlaneseq
        %v3235 = vshrl.u32 %v3234, 7
        %v3236 = vsub.s32 1, %v3235
        %v3237 = vrot.slane %v3191, %v3236
        %v3238 = vlaneseq
        %v3239 = vshrl.u32 %v3238, 7
        %v3240 = vsub.s32 2, %v3239
        %v3241 = vrot.slane %v3191, %v3240
        %v3242 = vlaneseq
        %v3243 = vshrl.u32 %v3242, 7
        %v3244 = vsub.s32 3, %v3243
        %v3245 = vrot.slane %v3191, %v3244
        %v3246 = vlaneseq
        %v3247 = vshrl.u32 %v3246, 7
        %v3248 = vsub.s32 4, %v3247
        %v3249 = vrot.slane %v3191, %v3248
        %v3250 = vlaneseq
        %v3251 = vshrl.u32 %v3250, 7
        %v3252 = vsub.s32 5, %v3251
        %v3253 = vrot.slane %v3191, %v3252
        %v3254 = vlaneseq
        %v3255 = vshrl.u32 %v3254, 7
        %v3256 = vsub.s32 6, %v3255
        %v3257 = vrot.slane %v3191, %v3256
        %v3258 = vlaneseq
        %v3259 = vshrl.u32 %v3258, 7
        %v3260 = vsub.s32 0, %v3259
        %v3261 = vrot.slane %v3194, %v3260
        %v3262 = vlaneseq
        %v3263 = vshrl.u32 %v3262, 7
        %v3264 = vsub.s32 1, %v3263
        %v3265 = vrot.slane %v3194, %v3264
        %v3266 = vlaneseq
        %v3267 = vshrl.u32 %v3266, 7
        %v3268 = vsub.s32 2, %v3267
        %v3269 = vrot.slane %v3194, %v3268
        %v3270 = vlaneseq
        %v3271 = vshrl.u32 %v3270, 7
        %v3272 = vsub.s32 3, %v3271
        %v3273 = vrot.slane %v3194, %v3272
        %v3274 = vlaneseq
        %v3275 = vshrl.u32 %v3274, 7
        %v3276 = vsub.s32 4, %v3275
        %v3277 = vrot.slane %v3194, %v3276
        %v3278 = vlaneseq
        %v3279 = vshrl.u32 %v3278, 7
        %v3280 = vsub.s32 5, %v3279
        %v3281 = vrot.slane %v3194, %v3280
        %v3282 = vlaneseq
        %v3283 = vshrl.u32 %v3282, 7
        %v3284 = vsub.s32 6, %v3283
        %v3285 = vrot.slane %v3194, %v3284
        %v3286 = vlaneseq
        %v3287 = vshrl.u32 %v3286, 7
        %v3288 = vsub.s32 0, %v3287
        %v3289 = vrot.slane %v3197, %v3288
        %v3290 = vlaneseq
        %v3291 = vshrl.u32 %v3290, 7
        %v3292 = vsub.s32 1, %v3291
        %v3293 = vrot.slane %v3197, %v3292
        %v3294 = vlaneseq
        %v3295 = vshrl.u32 %v3294, 7
        %v3296 = vsub.s32 2, %v3295
        %v3297 = vrot.slane %v3197, %v3296
        %v3298 = vlaneseq
        %v3299 = vshrl.u32 %v3298, 7
        %v3300 = vsub.s32 3, %v3299
        %v3301 = vrot.slane %v3197, %v3300
        %v3302 = vlaneseq
        %v3303 = vshrl.u32 %v3302, 7
        %v3304 = vsub.s32 4, %v3303
        %v3305 = vrot.slane %v3197, %v3304
        %v3306 = vlaneseq
        %v3307 = vshrl.u32 %v3306, 7
        %v3308 = vsub.s32 5, %v3307
        %v3309 = vrot.slane %v3197, %v3308
        %v3310 = vlaneseq
        %v3311 = vshrl.u32 %v3310, 7
        %v3312 = vsub.s32 6, %v3311
        %v3313 = vrot.slane %v3197, %v3312
        %vm3342 = vcmp.eq.f32.partialorder %v2906, %v3205
        %vm3343 = vcmp.eq.f32.partialorder %v2907, %v3209
        %vm3344 = vcmp.eq.f32.partialorder %v2908, %v3213
        %vm3345 = vcmp.eq.f32.partialorder %v2909, %v3217
        %vm3346 = vcmp.eq.f32.partialorder %v2910, %v3221
        %vm3347 = vcmp.eq.f32.partialorder %v2911, %v3225
        %vm3348 = vcmp.eq.f32.partialorder %v2912, %v3229
        %vm3349 = vcmp.eq.f32.partialorder %v2913, %v3233
        %vm3350 = vcmp.eq.f32.partialorder %v2914, %v3237
        %vm3351 = vcmp.eq.f32.partialorder %v2915, %v3241
        %vm3352 = vcmp.eq.f32.partialorder %v2916, %v3245
        %vm3353 = vcmp.eq.f32.partialorder %v2917, %v3249
        %vm3354 = vcmp.eq.f32.partialorder %v2918, %v3253
        %vm3355 = vcmp.eq.f32.partialorder %v2919, %v3257
        %vm3356 = vcmp.eq.f32.partialorder %v2920, %v3261
        %vm3357 = vcmp.eq.f32.partialorder %v2921, %v3265
        %vm3358 = vcmp.eq.f32.partialorder %v2922, %v3269
        %vm3359 = vcmp.eq.f32.partialorder %v2923, %v3273
        %vm3360 = vcmp.eq.f32.partialorder %v2924, %v3277
        %vm3361 = vcmp.eq.f32.partialorder %v2925, %v3281
        %vm3362 = vcmp.eq.f32.partialorder %v2926, %v3285
        %vm3363 = vcmp.eq.f32.partialorder %v2927, %v3289
        %vm3364 = vcmp.eq.f32.partialorder %v2928, %v3293
        %vm3365 = vcmp.eq.f32.partialorder %v2929, %v3297
        %vm3366 = vcmp.eq.f32.partialorder %v2930, %v3301
        %vm3367 = vcmp.eq.f32.partialorder %v2931, %v3305
        %vm3368 = vcmp.eq.f32.partialorder %v2932, %v3309
        %vm3369 = vcmp.eq.f32.partialorder %v2933, %v3313
        %v3370 = vsel %vm3342, %v2560, 1073741824
        %v3371 = vsel %vm3343, %v2560, 1073741824
        %v3372 = vsel %vm3344, %v2560, 1073741824
        %v3373 = vsel %vm3345, %v2560, 1073741824
        %v3374 = vsel %vm3346, %v2560, 1073741824
        %v3375 = vsel %vm3347, %v2560, 1073741824
        %v3376 = vsel %vm3348, %v2560, 1073741824
        %v3377 = vsel %vm3349, %v2560, 1073741824
        %v3378 = vsel %vm3350, %v2560, 1073741824
        %v3379 = vsel %vm3351, %v2560, 1073741824
        %v3380 = vsel %vm3352, %v2560, 1073741824
        %v3381 = vsel %vm3353, %v2560, 1073741824
        %v3382 = vsel %vm3354, %v2560, 1073741824
        %v3383 = vsel %vm3355, %v2560, 1073741824
        %v3384 = vsel %vm3356, %v2560, 1073741824
        %v3385 = vsel %vm3357, %v2560, 1073741824
        %v3386 = vsel %vm3358, %v2560, 1073741824
        %v3387 = vsel %vm3359, %v2560, 1073741824
        %v3388 = vsel %vm3360, %v2560, 1073741824
        %v3389 = vsel %vm3361, %v2560, 1073741824
        %v3390 = vsel %vm3362, %v2560, 1073741824
        %v3391 = vsel %vm3363, %v2560, 1073741824
        %v3392 = vsel %vm3364, %v2560, 1073741824
        %v3393 = vsel %vm3365, %v2560, 1073741824
        %v3394 = vsel %vm3366, %v2560, 1073741824
        %v3395 = vsel %vm3367, %v2560, 1073741824
        %v3396 = vsel %vm3368, %v2560, 1073741824
        %v3397 = vsel %vm3369, %v2560, 1073741824
        %3398 = vset.pattern.permute.xlu0 0
        %3399 = vperm.xlu0 %3398, %v3370
        %v3400 = vpop.permute.xlu0 %3399
        %3401 = vset.pattern.permute.xlu0 0
        %3402 = vperm.xlu0 %3401, %v3371
        %v3403 = vpop.permute.xlu0 %3402
        %3404 = vset.pattern.permute.xlu0 0
        %3405 = vperm.xlu0 %3404, %v3372
        %v3406 = vpop.permute.xlu0 %3405
        %3407 = vset.pattern.permute.xlu0 0
        %3408 = vperm.xlu0 %3407, %v3373
        %v3409 = vpop.permute.xlu0 %3408
        %3410 = vset.pattern.permute.xlu0 0
        %3411 = vperm.xlu0 %3410, %v3374
        %v3412 = vpop.permute.xlu0 %3411
        %3413 = vset.pattern.permute.xlu0 0
        %3414 = vperm.xlu0 %3413, %v3375
        %v3415 = vpop.permute.xlu0 %3414
        %3416 = vset.pattern.permute.xlu0 0
        %3417 = vperm.xlu0 %3416, %v3376
        %v3418 = vpop.permute.xlu0 %3417
        %3419 = vset.pattern.permute.xlu0 0
        %3420 = vperm.xlu0 %3419, %v3377
        %v3421 = vpop.permute.xlu0 %3420
        %3422 = vset.pattern.permute.xlu0 0
        %3423 = vperm.xlu0 %3422, %v3378
        %v3424 = vpop.permute.xlu0 %3423
        %3425 = vset.pattern.permute.xlu0 0
        %3426 = vperm.xlu0 %3425, %v3379
        %v3427 = vpop.permute.xlu0 %3426
        %3428 = vset.pattern.permute.xlu0 0
        %3429 = vperm.xlu0 %3428, %v3380
        %v3430 = vpop.permute.xlu0 %3429
        %3431 = vset.pattern.permute.xlu0 0
        %3432 = vperm.xlu0 %3431, %v3381
        %v3433 = vpop.permute.xlu0 %3432
        %3434 = vset.pattern.permute.xlu0 0
        %3435 = vperm.xlu0 %3434, %v3382
        %v3436 = vpop.permute.xlu0 %3435
        %3437 = vset.pattern.permute.xlu0 0
        %3438 = vperm.xlu0 %3437, %v3383
        %v3439 = vpop.permute.xlu0 %3438
        %3440 = vset.pattern.permute.xlu0 0
        %3441 = vperm.xlu0 %3440, %v3384
        %v3442 = vpop.permute.xlu0 %3441
        %3443 = vset.pattern.permute.xlu0 0
        %3444 = vperm.xlu0 %3443, %v3385
        %v3445 = vpop.permute.xlu0 %3444
        %3446 = vset.pattern.permute.xlu0 0
        %3447 = vperm.xlu0 %3446, %v3386
        %v3448 = vpop.permute.xlu0 %3447
        %3449 = vset.pattern.permute.xlu0 0
        %3450 = vperm.xlu0 %3449, %v3387
        %v3451 = vpop.permute.xlu0 %3450
        %3452 = vset.pattern.permute.xlu0 0
        %3453 = vperm.xlu0 %3452, %v3388
        %v3454 = vpop.permute.xlu0 %3453
        %3455 = vset.pattern.permute.xlu0 0
        %3456 = vperm.xlu0 %3455, %v3389
        %v3457 = vpop.permute.xlu0 %3456
        %3458 = vset.pattern.permute.xlu0 0
        %3459 = vperm.xlu0 %3458, %v3390
        %v3460 = vpop.permute.xlu0 %3459
        %3461 = vset.pattern.permute.xlu0 0
        %3462 = vperm.xlu0 %3461, %v3391
        %v3463 = vpop.permute.xlu0 %3462
        %3464 = vset.pattern.permute.xlu0 0
        %3465 = vperm.xlu0 %3464, %v3392
        %v3466 = vpop.permute.xlu0 %3465
        %3467 = vset.pattern.permute.xlu0 0
        %3468 = vperm.xlu0 %3467, %v3393
        %v3469 = vpop.permute.xlu0 %3468
        %3470 = vset.pattern.permute.xlu0 0
        %3471 = vperm.xlu0 %3470, %v3394
        %v3472 = vpop.permute.xlu0 %3471
        %3473 = vset.pattern.permute.xlu0 0
        %3474 = vperm.xlu0 %3473, %v3395
        %v3475 = vpop.permute.xlu0 %3474
        %3476 = vset.pattern.permute.xlu0 0
        %3477 = vperm.xlu0 %3476, %v3396
        %v3478 = vpop.permute.xlu0 %3477
        %3479 = vset.pattern.permute.xlu0 0
        %3480 = vperm.xlu0 %3479, %v3397
        %v3481 = vpop.permute.xlu0 %3480
        %v3482 = vlaneseq
        %v3483 = vshrl.u32 %v3482, 7
        %v3484 = vsub.s32 %v437, %v3483
        %v3485 = vrot.slane %v3400, %v3484
        %v3486 = vlaneseq
        %v3487 = vshrl.u32 %v3486, 7
        %v3488 = vsub.s32 %v437, %v3487
        %v3489 = vrot.slane %v3403, %v3488
        %v3490 = vlaneseq
        %v3491 = vshrl.u32 %v3490, 7
        %v3492 = vsub.s32 %v437, %v3491
        %v3493 = vrot.slane %v3406, %v3492
        %v3494 = vlaneseq
        %v3495 = vshrl.u32 %v3494, 7
        %v3496 = vsub.s32 %v437, %v3495
        %v3497 = vrot.slane %v3409, %v3496
        %v3498 = vlaneseq
        %v3499 = vshrl.u32 %v3498, 7
        %v3500 = vsub.s32 %v437, %v3499
        %v3501 = vrot.slane %v3412, %v3500
        %v3502 = vlaneseq
        %v3503 = vshrl.u32 %v3502, 7
        %v3504 = vsub.s32 %v437, %v3503
        %v3505 = vrot.slane %v3415, %v3504
        %v3506 = vlaneseq
        %v3507 = vshrl.u32 %v3506, 7
        %v3508 = vsub.s32 %v437, %v3507
        %v3509 = vrot.slane %v3418, %v3508
        %v3510 = vlaneseq
        %v3511 = vshrl.u32 %v3510, 7
        %v3512 = vsub.s32 %v437, %v3511
        %v3513 = vrot.slane %v3421, %v3512
        %v3514 = vlaneseq
        %v3515 = vshrl.u32 %v3514, 7
        %v3516 = vsub.s32 %v437, %v3515
        %v3517 = vrot.slane %v3424, %v3516
        %v3518 = vlaneseq
        %v3519 = vshrl.u32 %v3518, 7
        %v3520 = vsub.s32 %v437, %v3519
        %v3521 = vrot.slane %v3427, %v3520
        %v3522 = vlaneseq
        %v3523 = vshrl.u32 %v3522, 7
        %v3524 = vsub.s32 %v437, %v3523
        %v3525 = vrot.slane %v3430, %v3524
        %v3526 = vlaneseq
        %v3527 = vshrl.u32 %v3526, 7
        %v3528 = vsub.s32 %v437, %v3527
        %v3529 = vrot.slane %v3433, %v3528
        %v3530 = vlaneseq
        %v3531 = vshrl.u32 %v3530, 7
        %v3532 = vsub.s32 %v437, %v3531
        %v3533 = vrot.slane %v3436, %v3532
        %v3534 = vlaneseq
        %v3535 = vshrl.u32 %v3534, 7
        %v3536 = vsub.s32 %v437, %v3535
        %v3537 = vrot.slane %v3439, %v3536
        %v3538 = vlaneseq
        %v3539 = vshrl.u32 %v3538, 7
        %v3540 = vsub.s32 %v437, %v3539
        %v3541 = vrot.slane %v3442, %v3540
        %v3542 = vlaneseq
        %v3543 = vshrl.u32 %v3542, 7
        %v3544 = vsub.s32 %v437, %v3543
        %v3545 = vrot.slane %v3445, %v3544
        %v3546 = vlaneseq
        %v3547 = vshrl.u32 %v3546, 7
        %v3548 = vsub.s32 %v437, %v3547
        %v3549 = vrot.slane %v3448, %v3548
        %v3550 = vlaneseq
        %v3551 = vshrl.u32 %v3550, 7
        %v3552 = vsub.s32 %v437, %v3551
        %v3553 = vrot.slane %v3451, %v3552
        %v3554 = vlaneseq
        %v3555 = vshrl.u32 %v3554, 7
        %v3556 = vsub.s32 %v437, %v3555
        %v3557 = vrot.slane %v3454, %v3556
        %v3558 = vlaneseq
        %v3559 = vshrl.u32 %v3558, 7
        %v3560 = vsub.s32 %v437, %v3559
        %v3561 = vrot.slane %v3457, %v3560
        %v3562 = vlaneseq
        %v3563 = vshrl.u32 %v3562, 7
        %v3564 = vsub.s32 %v437, %v3563
        %v3565 = vrot.slane %v3460, %v3564
        %v3566 = vlaneseq
        %v3567 = vshrl.u32 %v3566, 7
        %v3568 = vsub.s32 %v437, %v3567
        %v3569 = vrot.slane %v3463, %v3568
        %v3570 = vlaneseq
        %v3571 = vshrl.u32 %v3570, 7
        %v3572 = vsub.s32 %v437, %v3571
        %v3573 = vrot.slane %v3466, %v3572
        %v3574 = vlaneseq
        %v3575 = vshrl.u32 %v3574, 7
        %v3576 = vsub.s32 %v437, %v3575
        %v3577 = vrot.slane %v3469, %v3576
        %v3578 = vlaneseq
        %v3579 = vshrl.u32 %v3578, 7
        %v3580 = vsub.s32 %v437, %v3579
        %v3581 = vrot.slane %v3472, %v3580
        %v3582 = vlaneseq
        %v3583 = vshrl.u32 %v3582, 7
        %v3584 = vsub.s32 %v437, %v3583
        %v3585 = vrot.slane %v3475, %v3584
        %v3586 = vlaneseq
        %v3587 = vshrl.u32 %v3586, 7
        %v3588 = vsub.s32 %v437, %v3587
        %v3589 = vrot.slane %v3478, %v3588
        %v3590 = vlaneseq
        %v3591 = vshrl.u32 %v3590, 7
        %v3592 = vsub.s32 %v437, %v3591
        %v3593 = vrot.slane %v3481, %v3592
        %v3594 = vsel %vm2340, %v3489, %v3485
        %v3595 = vsel %vm2342, %v3493, %v3594
        %v3596 = vsel %vm2344, %v3497, %v3595
        %v3597 = vsel %vm2346, %v3501, %v3596
        %v3598 = vsel %vm2348, %v3505, %v3597
        %v3599 = vsel %vm2350, %v3509, %v3598
        %v3600 = vsel %vm2340, %v3517, %v3513
        %v3601 = vsel %vm2342, %v3521, %v3600
        %v3602 = vsel %vm2344, %v3525, %v3601
        %v3603 = vsel %vm2346, %v3529, %v3602
        %v3604 = vsel %vm2348, %v3533, %v3603
        %v3605 = vsel %vm2350, %v3537, %v3604
        %v3606 = vsel %vm2340, %v3545, %v3541
        %v3607 = vsel %vm2342, %v3549, %v3606
        %v3608 = vsel %vm2344, %v3553, %v3607
        %v3609 = vsel %vm2346, %v3557, %v3608
        %v3610 = vsel %vm2348, %v3561, %v3609
        %v3611 = vsel %vm2350, %v3565, %v3610
        %v3612 = vsel %vm2340, %v3573, %v3569
        %v3613 = vsel %vm2342, %v3577, %v3612
        %v3614 = vsel %vm2344, %v3581, %v3613
        %v3615 = vsel %vm2346, %v3585, %v3614
        %v3616 = vsel %vm2348, %v3589, %v3615
        %v3617 = vsel %vm2350, %v3593, %v3616
        %v3618 = vsel %vm1913, %v3599, 2147483647
        %v3619 = vand.u32 %v3618, 65535
        %v3620 = vshra.s32 %v3618, 16
        %v3621 = vcvt.s32.f32 %v3619
        %v3622 = vcvt.s32.f32 %v3620
        %3623 = vmin.xlane.f32.xlu0 %v3622
        %v3624 = vpop.xlane.xlu0 %3623
        %vm3625 = vcmp.eq.f32.partialorder %v3622, %v3624
        %v3626 = vsel %vm3625, %v3621, inf
        %3627 = vmin.xlane.f32.xlu0 %v3626
        %v3628 = vpop.xlane.xlu0 %3627
        %v3629 = vcvt.f32.s32 %v3628
        %v3630 = vcvt.f32.s32 %v3624
        %v3631 = vshll.u32 %v3630, 16
        %v3632 = vadd.s32 %v3631, %v3629
        %v3633 = vsel %vm1913, %v3605, 2147483647
        %v3634 = vand.u32 %v3633, 65535
        %v3635 = vshra.s32 %v3633, 16
        %v3636 = vcvt.s32.f32 %v3634
        %v3637 = vcvt.s32.f32 %v3635
        %3638 = vmin.xlane.f32.xlu0 %v3637
        %v3639 = vpop.xlane.xlu0 %3638
        %vm3640 = vcmp.eq.f32.partialorder %v3637, %v3639
        %v3641 = vsel %vm3640, %v3636, inf
        %3642 = vmin.xlane.f32.xlu0 %v3641
        %v3643 = vpop.xlane.xlu0 %3642
        %v3644 = vcvt.f32.s32 %v3643
        %v3645 = vcvt.f32.s32 %v3639
        %v3646 = vshll.u32 %v3645, 16
        %v3647 = vadd.s32 %v3646, %v3644
        %v3648 = vsel %vm1913, %v3611, 2147483647
        %v3649 = vand.u32 %v3648, 65535
        %v3650 = vshra.s32 %v3648, 16
        %v3651 = vcvt.s32.f32 %v3649
        %v3652 = vcvt.s32.f32 %v3650
        %3653 = vmin.xlane.f32.xlu0 %v3652
        %v3654 = vpop.xlane.xlu0 %3653
        %vm3655 = vcmp.eq.f32.partialorder %v3652, %v3654
        %v3656 = vsel %vm3655, %v3651, inf
        %3657 = vmin.xlane.f32.xlu0 %v3656
        %v3658 = vpop.xlane.xlu0 %3657
        %v3659 = vcvt.f32.s32 %v3658
        %v3660 = vcvt.f32.s32 %v3654
        %v3661 = vshll.u32 %v3660, 16
        %v3662 = vadd.s32 %v3661, %v3659
        %v3663 = vsel %vm1913, %v3617, 2147483647
        %v3664 = vand.u32 %v3663, 65535
        %v3665 = vshra.s32 %v3663, 16
        %v3666 = vcvt.s32.f32 %v3664
        %v3667 = vcvt.s32.f32 %v3665
        %3668 = vmin.xlane.f32.xlu0 %v3667
        %v3669 = vpop.xlane.xlu0 %3668
        %vm3670 = vcmp.eq.f32.partialorder %v3667, %v3669
        %v3671 = vsel %vm3670, %v3666, inf
        %3672 = vmin.xlane.f32.xlu0 %v3671
        %v3673 = vpop.xlane.xlu0 %3672
        %v3674 = vcvt.f32.s32 %v3673
        %v3675 = vcvt.f32.s32 %v3669
        %v3676 = vshll.u32 %v3675, 16
        %v3677 = vadd.s32 %v3676, %v3674
        %v3678 = vlaneseq
        %v3679 = vshrl.u32 %v3678, 7
        %v3680 = vsub.s32 4, %v3679
        %v3681 = vrot.slane %v1851, %v3680
        %3683 = vbcast.lane.b32.xlu0 %v3681, 256
        %v3684 = vpop.permute.xlu0 %3683
        %v3685 = vlaneseq
        %v3686 = vshrl.u32 %v3685, 7
        %v3687 = vsub.s32 5, %v3686
        %v3688 = vrot.slane %v1851, %v3687
        %3690 = vbcast.lane.b32.xlu0 %v3688, 256
        %v3691 = vpop.permute.xlu0 %3690
        %v3692 = vlaneseq
        %v3693 = vshrl.u32 %v3692, 7
        %v3694 = vsub.s32 6, %v3693
        %v3695 = vrot.slane %v1851, %v3694
        %3697 = vbcast.lane.b32.xlu0 %v3695, 256
        %v3698 = vpop.permute.xlu0 %3697
        %v3699 = vlaneseq
        %v3700 = vshrl.u32 %v3699, 7
        %v3701 = vsub.s32 7, %v3700
        %v3702 = vrot.slane %v1851, %v3701
        %3704 = vbcast.lane.b32.xlu0 %v3702, 256
        %v3705 = vpop.permute.xlu0 %3704
        %v3710 = vadd.f32 %v3188, %v3684
        %v3711 = vadd.f32 %v3191, %v3691
        %v3712 = vadd.f32 %v3194, %v3698
        %v3713 = vadd.f32 %v3197, %v3705
        %v3714 = vadd.f32 %v3710, %v2038
        %v3715 = vadd.f32 %v3710, %v2045
        %v3716 = vadd.f32 %v3710, %v2052
        %v3717 = vadd.f32 %v3710, %v2059
        %v3718 = vadd.f32 %v3710, %v2066
        %v3719 = vadd.f32 %v3710, %v2073
        %v3720 = vadd.f32 %v3710, %v2080
        %v3721 = vadd.f32 %v3711, %v2038
        %v3722 = vadd.f32 %v3711, %v2045
        %v3723 = vadd.f32 %v3711, %v2052
        %v3724 = vadd.f32 %v3711, %v2059
        %v3725 = vadd.f32 %v3711, %v2066
        %v3726 = vadd.f32 %v3711, %v2073
        %v3727 = vadd.f32 %v3711, %v2080
        %v3728 = vadd.f32 %v3712, %v2038
        %v3729 = vadd.f32 %v3712, %v2045
        %v3730 = vadd.f32 %v3712, %v2052
        %v3731 = vadd.f32 %v3712, %v2059
        %v3732 = vadd.f32 %v3712, %v2066
        %v3733 = vadd.f32 %v3712, %v2073
        %v3734 = vadd.f32 %v3712, %v2080
        %v3735 = vadd.f32 %v3713, %v2038
        %v3736 = vadd.f32 %v3713, %v2045
        %v3737 = vadd.f32 %v3713, %v2052
        %v3738 = vadd.f32 %v3713, %v2059
        %v3739 = vadd.f32 %v3713, %v2066
        %v3740 = vadd.f32 %v3713, %v2073
        %v3741 = vadd.f32 %v3713, %v2080
        %3770 = vset.pattern.permute.xlu0 0
        %3771 = vperm.xlu0 %3770, %v3714
        %v3772 = vpop.permute.xlu0 %3771
        %3773 = vset.pattern.permute.xlu0 0
        %3774 = vperm.xlu0 %3773, %v3715
        %v3775 = vpop.permute.xlu0 %3774
        %3776 = vset.pattern.permute.xlu0 0
        %3777 = vperm.xlu0 %3776, %v3716
        %v3778 = vpop.permute.xlu0 %3777
        %3779 = vset.pattern.permute.xlu0 0
        %3780 = vperm.xlu0 %3779, %v3717
        %v3781 = vpop.permute.xlu0 %3780
        %3782 = vset.pattern.permute.xlu0 0
        %3783 = vperm.xlu0 %3782, %v3718
        %v3784 = vpop.permute.xlu0 %3783
        %3785 = vset.pattern.permute.xlu0 0
        %3786 = vperm.xlu0 %3785, %v3719
        %v3787 = vpop.permute.xlu0 %3786
        %3788 = vset.pattern.permute.xlu0 0
        %3789 = vperm.xlu0 %3788, %v3720
        %v3790 = vpop.permute.xlu0 %3789
        %3791 = vset.pattern.permute.xlu0 0
        %3792 = vperm.xlu0 %3791, %v3721
        %v3793 = vpop.permute.xlu0 %3792
        %3794 = vset.pattern.permute.xlu0 0
        %3795 = vperm.xlu0 %3794, %v3722
        %v3796 = vpop.permute.xlu0 %3795
        %3797 = vset.pattern.permute.xlu0 0
        %3798 = vperm.xlu0 %3797, %v3723
        %v3799 = vpop.permute.xlu0 %3798
        %3800 = vset.pattern.permute.xlu0 0
        %3801 = vperm.xlu0 %3800, %v3724
        %v3802 = vpop.permute.xlu0 %3801
        %3803 = vset.pattern.permute.xlu0 0
        %3804 = vperm.xlu0 %3803, %v3725
        %v3805 = vpop.permute.xlu0 %3804
        %3806 = vset.pattern.permute.xlu0 0
        %3807 = vperm.xlu0 %3806, %v3726
        %v3808 = vpop.permute.xlu0 %3807
        %3809 = vset.pattern.permute.xlu0 0
        %3810 = vperm.xlu0 %3809, %v3727
        %v3811 = vpop.permute.xlu0 %3810
        %3812 = vset.pattern.permute.xlu0 0
        %3813 = vperm.xlu0 %3812, %v3728
        %v3814 = vpop.permute.xlu0 %3813
        %3815 = vset.pattern.permute.xlu0 0
        %3816 = vperm.xlu0 %3815, %v3729
        %v3817 = vpop.permute.xlu0 %3816
        %3818 = vset.pattern.permute.xlu0 0
        %3819 = vperm.xlu0 %3818, %v3730
        %v3820 = vpop.permute.xlu0 %3819
        %3821 = vset.pattern.permute.xlu0 0
        %3822 = vperm.xlu0 %3821, %v3731
        %v3823 = vpop.permute.xlu0 %3822
        %3824 = vset.pattern.permute.xlu0 0
        %3825 = vperm.xlu0 %3824, %v3732
        %v3826 = vpop.permute.xlu0 %3825
        %3827 = vset.pattern.permute.xlu0 0
        %3828 = vperm.xlu0 %3827, %v3733
        %v3829 = vpop.permute.xlu0 %3828
        %3830 = vset.pattern.permute.xlu0 0
        %3831 = vperm.xlu0 %3830, %v3734
        %v3832 = vpop.permute.xlu0 %3831
        %3833 = vset.pattern.permute.xlu0 0
        %3834 = vperm.xlu0 %3833, %v3735
        %v3835 = vpop.permute.xlu0 %3834
        %3836 = vset.pattern.permute.xlu0 0
        %3837 = vperm.xlu0 %3836, %v3736
        %v3838 = vpop.permute.xlu0 %3837
        %3839 = vset.pattern.permute.xlu0 0
        %3840 = vperm.xlu0 %3839, %v3737
        %v3841 = vpop.permute.xlu0 %3840
        %3842 = vset.pattern.permute.xlu0 0
        %3843 = vperm.xlu0 %3842, %v3738
        %v3844 = vpop.permute.xlu0 %3843
        %3845 = vset.pattern.permute.xlu0 0
        %3846 = vperm.xlu0 %3845, %v3739
        %v3847 = vpop.permute.xlu0 %3846
        %3848 = vset.pattern.permute.xlu0 0
        %3849 = vperm.xlu0 %3848, %v3740
        %v3850 = vpop.permute.xlu0 %3849
        %3851 = vset.pattern.permute.xlu0 0
        %3852 = vperm.xlu0 %3851, %v3741
        %v3853 = vpop.permute.xlu0 %3852
        %v3854 = vlaneseq
        %v3855 = vshrl.u32 %v3854, 7
        %v3856 = vsub.s32 %v437, %v3855
        %v3857 = vrot.slane %v3772, %v3856
        %v3858 = vlaneseq
        %v3859 = vshrl.u32 %v3858, 7
        %v3860 = vsub.s32 %v437, %v3859
        %v3861 = vrot.slane %v3775, %v3860
        %v3862 = vlaneseq
        %v3863 = vshrl.u32 %v3862, 7
        %v3864 = vsub.s32 %v437, %v3863
        %v3865 = vrot.slane %v3778, %v3864
        %v3866 = vlaneseq
        %v3867 = vshrl.u32 %v3866, 7
        %v3868 = vsub.s32 %v437, %v3867
        %v3869 = vrot.slane %v3781, %v3868
        %v3870 = vlaneseq
        %v3871 = vshrl.u32 %v3870, 7
        %v3872 = vsub.s32 %v437, %v3871
        %v3873 = vrot.slane %v3784, %v3872
        %v3874 = vlaneseq
        %v3875 = vshrl.u32 %v3874, 7
        %v3876 = vsub.s32 %v437, %v3875
        %v3877 = vrot.slane %v3787, %v3876
        %v3878 = vlaneseq
        %v3879 = vshrl.u32 %v3878, 7
        %v3880 = vsub.s32 %v437, %v3879
        %v3881 = vrot.slane %v3790, %v3880
        %v3882 = vlaneseq
        %v3883 = vshrl.u32 %v3882, 7
        %v3884 = vsub.s32 %v437, %v3883
        %v3885 = vrot.slane %v3793, %v3884
        %v3886 = vlaneseq
        %v3887 = vshrl.u32 %v3886, 7
        %v3888 = vsub.s32 %v437, %v3887
        %v3889 = vrot.slane %v3796, %v3888
        %v3890 = vlaneseq
        %v3891 = vshrl.u32 %v3890, 7
        %v3892 = vsub.s32 %v437, %v3891
        %v3893 = vrot.slane %v3799, %v3892
        %v3894 = vlaneseq
        %v3895 = vshrl.u32 %v3894, 7
        %v3896 = vsub.s32 %v437, %v3895
        %v3897 = vrot.slane %v3802, %v3896
        %v3898 = vlaneseq
        %v3899 = vshrl.u32 %v3898, 7
        %v3900 = vsub.s32 %v437, %v3899
        %v3901 = vrot.slane %v3805, %v3900
        %v3902 = vlaneseq
        %v3903 = vshrl.u32 %v3902, 7
        %v3904 = vsub.s32 %v437, %v3903
        %v3905 = vrot.slane %v3808, %v3904
        %v3906 = vlaneseq
        %v3907 = vshrl.u32 %v3906, 7
        %v3908 = vsub.s32 %v437, %v3907
        %v3909 = vrot.slane %v3811, %v3908
        %v3910 = vlaneseq
        %v3911 = vshrl.u32 %v3910, 7
        %v3912 = vsub.s32 %v437, %v3911
        %v3913 = vrot.slane %v3814, %v3912
        %v3914 = vlaneseq
        %v3915 = vshrl.u32 %v3914, 7
        %v3916 = vsub.s32 %v437, %v3915
        %v3917 = vrot.slane %v3817, %v3916
        %v3918 = vlaneseq
        %v3919 = vshrl.u32 %v3918, 7
        %v3920 = vsub.s32 %v437, %v3919
        %v3921 = vrot.slane %v3820, %v3920
        %v3922 = vlaneseq
        %v3923 = vshrl.u32 %v3922, 7
        %v3924 = vsub.s32 %v437, %v3923
        %v3925 = vrot.slane %v3823, %v3924
        %v3926 = vlaneseq
        %v3927 = vshrl.u32 %v3926, 7
        %v3928 = vsub.s32 %v437, %v3927
        %v3929 = vrot.slane %v3826, %v3928
        %v3930 = vlaneseq
        %v3931 = vshrl.u32 %v3930, 7
        %v3932 = vsub.s32 %v437, %v3931
        %v3933 = vrot.slane %v3829, %v3932
        %v3934 = vlaneseq
        %v3935 = vshrl.u32 %v3934, 7
        %v3936 = vsub.s32 %v437, %v3935
        %v3937 = vrot.slane %v3832, %v3936
        %v3938 = vlaneseq
        %v3939 = vshrl.u32 %v3938, 7
        %v3940 = vsub.s32 %v437, %v3939
        %v3941 = vrot.slane %v3835, %v3940
        %v3942 = vlaneseq
        %v3943 = vshrl.u32 %v3942, 7
        %v3944 = vsub.s32 %v437, %v3943
        %v3945 = vrot.slane %v3838, %v3944
        %v3946 = vlaneseq
        %v3947 = vshrl.u32 %v3946, 7
        %v3948 = vsub.s32 %v437, %v3947
        %v3949 = vrot.slane %v3841, %v3948
        %v3950 = vlaneseq
        %v3951 = vshrl.u32 %v3950, 7
        %v3952 = vsub.s32 %v437, %v3951
        %v3953 = vrot.slane %v3844, %v3952
        %v3954 = vlaneseq
        %v3955 = vshrl.u32 %v3954, 7
        %v3956 = vsub.s32 %v437, %v3955
        %v3957 = vrot.slane %v3847, %v3956
        %v3958 = vlaneseq
        %v3959 = vshrl.u32 %v3958, 7
        %v3960 = vsub.s32 %v437, %v3959
        %v3961 = vrot.slane %v3850, %v3960
        %v3962 = vlaneseq
        %v3963 = vshrl.u32 %v3962, 7
        %v3964 = vsub.s32 %v437, %v3963
        %v3965 = vrot.slane %v3853, %v3964
        %v3966 = vsel %vm2340, %v3861, %v3857
        %v3967 = vsel %vm2342, %v3865, %v3966
        %v3968 = vsel %vm2344, %v3869, %v3967
        %v3969 = vsel %vm2346, %v3873, %v3968
        %v3970 = vsel %vm2348, %v3877, %v3969
        %v3971 = vsel %vm2350, %v3881, %v3970
        %v3972 = vsel %vm2340, %v3889, %v3885
        %v3973 = vsel %vm2342, %v3893, %v3972
        %v3974 = vsel %vm2344, %v3897, %v3973
        %v3975 = vsel %vm2346, %v3901, %v3974
        %v3976 = vsel %vm2348, %v3905, %v3975
        %v3977 = vsel %vm2350, %v3909, %v3976
        %v3978 = vsel %vm2340, %v3917, %v3913
        %v3979 = vsel %vm2342, %v3921, %v3978
        %v3980 = vsel %vm2344, %v3925, %v3979
        %v3981 = vsel %vm2346, %v3929, %v3980
        %v3982 = vsel %vm2348, %v3933, %v3981
        %v3983 = vsel %vm2350, %v3937, %v3982
        %v3984 = vsel %vm2340, %v3945, %v3941
        %v3985 = vsel %vm2342, %v3949, %v3984
        %v3986 = vsel %vm2344, %v3953, %v3985
        %v3987 = vsel %vm2346, %v3957, %v3986
        %v3988 = vsel %vm2348, %v3961, %v3987
        %v3989 = vsel %vm2350, %v3965, %v3988
        %v3994 = vsel %vm1913, %v3971, -inf
        %3995 = vmax.xlane.f32.xlu0 %v3994
        %v3996 = vpop.xlane.xlu0 %3995
        %v3997 = vsel %vm1913, %v3977, -inf
        %3998 = vmax.xlane.f32.xlu0 %v3997
        %v3999 = vpop.xlane.xlu0 %3998
        %v4000 = vsel %vm1913, %v3983, -inf
        %4001 = vmax.xlane.f32.xlu0 %v4000
        %v4002 = vpop.xlane.xlu0 %4001
        %v4003 = vsel %vm1913, %v3989, -inf
        %4004 = vmax.xlane.f32.xlu0 %v4003
        %v4005 = vpop.xlane.xlu0 %4004
        %v4010 = vlaneseq
        %v4011 = vshrl.u32 %v4010, 7
        %v4012 = vsub.s32 0, %v4011
        %v4013 = vrot.slane %v3996, %v4012
        %v4014 = vlaneseq
        %v4015 = vshrl.u32 %v4014, 7
        %v4016 = vsub.s32 1, %v4015
        %v4017 = vrot.slane %v3996, %v4016
        %v4018 = vlaneseq
        %v4019 = vshrl.u32 %v4018, 7
        %v4020 = vsub.s32 2, %v4019
        %v4021 = vrot.slane %v3996, %v4020
        %v4022 = vlaneseq
        %v4023 = vshrl.u32 %v4022, 7
        %v4024 = vsub.s32 3, %v4023
        %v4025 = vrot.slane %v3996, %v4024
        %v4026 = vlaneseq
        %v4027 = vshrl.u32 %v4026, 7
        %v4028 = vsub.s32 4, %v4027
        %v4029 = vrot.slane %v3996, %v4028
        %v4030 = vlaneseq
        %v4031 = vshrl.u32 %v4030, 7
        %v4032 = vsub.s32 5, %v4031
        %v4033 = vrot.slane %v3996, %v4032
        %v4034 = vlaneseq
        %v4035 = vshrl.u32 %v4034, 7
        %v4036 = vsub.s32 6, %v4035
        %v4037 = vrot.slane %v3996, %v4036
        %v4038 = vlaneseq
        %v4039 = vshrl.u32 %v4038, 7
        %v4040 = vsub.s32 0, %v4039
        %v4041 = vrot.slane %v3999, %v4040
        %v4042 = vlaneseq
        %v4043 = vshrl.u32 %v4042, 7
        %v4044 = vsub.s32 1, %v4043
        %v4045 = vrot.slane %v3999, %v4044
        %v4046 = vlaneseq
        %v4047 = vshrl.u32 %v4046, 7
        %v4048 = vsub.s32 2, %v4047
        %v4049 = vrot.slane %v3999, %v4048
        %v4050 = vlaneseq
        %v4051 = vshrl.u32 %v4050, 7
        %v4052 = vsub.s32 3, %v4051
        %v4053 = vrot.slane %v3999, %v4052
        %v4054 = vlaneseq
        %v4055 = vshrl.u32 %v4054, 7
        %v4056 = vsub.s32 4, %v4055
        %v4057 = vrot.slane %v3999, %v4056
        %v4058 = vlaneseq
        %v4059 = vshrl.u32 %v4058, 7
        %v4060 = vsub.s32 5, %v4059
        %v4061 = vrot.slane %v3999, %v4060
        %v4062 = vlaneseq
        %v4063 = vshrl.u32 %v4062, 7
        %v4064 = vsub.s32 6, %v4063
        %v4065 = vrot.slane %v3999, %v4064
        %v4066 = vlaneseq
        %v4067 = vshrl.u32 %v4066, 7
        %v4068 = vsub.s32 0, %v4067
        %v4069 = vrot.slane %v4002, %v4068
        %v4070 = vlaneseq
        %v4071 = vshrl.u32 %v4070, 7
        %v4072 = vsub.s32 1, %v4071
        %v4073 = vrot.slane %v4002, %v4072
        %v4074 = vlaneseq
        %v4075 = vshrl.u32 %v4074, 7
        %v4076 = vsub.s32 2, %v4075
        %v4077 = vrot.slane %v4002, %v4076
        %v4078 = vlaneseq
        %v4079 = vshrl.u32 %v4078, 7
        %v4080 = vsub.s32 3, %v4079
        %v4081 = vrot.slane %v4002, %v4080
        %v4082 = vlaneseq
        %v4083 = vshrl.u32 %v4082, 7
        %v4084 = vsub.s32 4, %v4083
        %v4085 = vrot.slane %v4002, %v4084
        %v4086 = vlaneseq
        %v4087 = vshrl.u32 %v4086, 7
        %v4088 = vsub.s32 5, %v4087
        %v4089 = vrot.slane %v4002, %v4088
        %v4090 = vlaneseq
        %v4091 = vshrl.u32 %v4090, 7
        %v4092 = vsub.s32 6, %v4091
        %v4093 = vrot.slane %v4002, %v4092
        %v4094 = vlaneseq
        %v4095 = vshrl.u32 %v4094, 7
        %v4096 = vsub.s32 0, %v4095
        %v4097 = vrot.slane %v4005, %v4096
        %v4098 = vlaneseq
        %v4099 = vshrl.u32 %v4098, 7
        %v4100 = vsub.s32 1, %v4099
        %v4101 = vrot.slane %v4005, %v4100
        %v4102 = vlaneseq
        %v4103 = vshrl.u32 %v4102, 7
        %v4104 = vsub.s32 2, %v4103
        %v4105 = vrot.slane %v4005, %v4104
        %v4106 = vlaneseq
        %v4107 = vshrl.u32 %v4106, 7
        %v4108 = vsub.s32 3, %v4107
        %v4109 = vrot.slane %v4005, %v4108
        %v4110 = vlaneseq
        %v4111 = vshrl.u32 %v4110, 7
        %v4112 = vsub.s32 4, %v4111
        %v4113 = vrot.slane %v4005, %v4112
        %v4114 = vlaneseq
        %v4115 = vshrl.u32 %v4114, 7
        %v4116 = vsub.s32 5, %v4115
        %v4117 = vrot.slane %v4005, %v4116
        %v4118 = vlaneseq
        %v4119 = vshrl.u32 %v4118, 7
        %v4120 = vsub.s32 6, %v4119
        %v4121 = vrot.slane %v4005, %v4120
        %vm4150 = vcmp.eq.f32.partialorder %v3714, %v4013
        %vm4151 = vcmp.eq.f32.partialorder %v3715, %v4017
        %vm4152 = vcmp.eq.f32.partialorder %v3716, %v4021
        %vm4153 = vcmp.eq.f32.partialorder %v3717, %v4025
        %vm4154 = vcmp.eq.f32.partialorder %v3718, %v4029
        %vm4155 = vcmp.eq.f32.partialorder %v3719, %v4033
        %vm4156 = vcmp.eq.f32.partialorder %v3720, %v4037
        %vm4157 = vcmp.eq.f32.partialorder %v3721, %v4041
        %vm4158 = vcmp.eq.f32.partialorder %v3722, %v4045
        %vm4159 = vcmp.eq.f32.partialorder %v3723, %v4049
        %vm4160 = vcmp.eq.f32.partialorder %v3724, %v4053
        %vm4161 = vcmp.eq.f32.partialorder %v3725, %v4057
        %vm4162 = vcmp.eq.f32.partialorder %v3726, %v4061
        %vm4163 = vcmp.eq.f32.partialorder %v3727, %v4065
        %vm4164 = vcmp.eq.f32.partialorder %v3728, %v4069
        %vm4165 = vcmp.eq.f32.partialorder %v3729, %v4073
        %vm4166 = vcmp.eq.f32.partialorder %v3730, %v4077
        %vm4167 = vcmp.eq.f32.partialorder %v3731, %v4081
        %vm4168 = vcmp.eq.f32.partialorder %v3732, %v4085
        %vm4169 = vcmp.eq.f32.partialorder %v3733, %v4089
        %vm4170 = vcmp.eq.f32.partialorder %v3734, %v4093
        %vm4171 = vcmp.eq.f32.partialorder %v3735, %v4097
        %vm4172 = vcmp.eq.f32.partialorder %v3736, %v4101
        %vm4173 = vcmp.eq.f32.partialorder %v3737, %v4105
        %vm4174 = vcmp.eq.f32.partialorder %v3738, %v4109
        %vm4175 = vcmp.eq.f32.partialorder %v3739, %v4113
        %vm4176 = vcmp.eq.f32.partialorder %v3740, %v4117
        %vm4177 = vcmp.eq.f32.partialorder %v3741, %v4121
        %v4178 = vsel %vm4150, %v2560, 1073741824
        %v4179 = vsel %vm4151, %v2560, 1073741824
        %v4180 = vsel %vm4152, %v2560, 1073741824
        %v4181 = vsel %vm4153, %v2560, 1073741824
        %v4182 = vsel %vm4154, %v2560, 1073741824
        %v4183 = vsel %vm4155, %v2560, 1073741824
        %v4184 = vsel %vm4156, %v2560, 1073741824
        %v4185 = vsel %vm4157, %v2560, 1073741824
        %v4186 = vsel %vm4158, %v2560, 1073741824
        %v4187 = vsel %vm4159, %v2560, 1073741824
        %v4188 = vsel %vm4160, %v2560, 1073741824
        %v4189 = vsel %vm4161, %v2560, 1073741824
        %v4190 = vsel %vm4162, %v2560, 1073741824
        %v4191 = vsel %vm4163, %v2560, 1073741824
        %v4192 = vsel %vm4164, %v2560, 1073741824
        %v4193 = vsel %vm4165, %v2560, 1073741824
        %v4194 = vsel %vm4166, %v2560, 1073741824
        %v4195 = vsel %vm4167, %v2560, 1073741824
        %v4196 = vsel %vm4168, %v2560, 1073741824
        %v4197 = vsel %vm4169, %v2560, 1073741824
        %v4198 = vsel %vm4170, %v2560, 1073741824
        %v4199 = vsel %vm4171, %v2560, 1073741824
        %v4200 = vsel %vm4172, %v2560, 1073741824
        %v4201 = vsel %vm4173, %v2560, 1073741824
        %v4202 = vsel %vm4174, %v2560, 1073741824
        %v4203 = vsel %vm4175, %v2560, 1073741824
        %v4204 = vsel %vm4176, %v2560, 1073741824
        %v4205 = vsel %vm4177, %v2560, 1073741824
        %4206 = vset.pattern.permute.xlu0 0
        %4207 = vperm.xlu0 %4206, %v4178
        %v4208 = vpop.permute.xlu0 %4207
        %4209 = vset.pattern.permute.xlu0 0
        %4210 = vperm.xlu0 %4209, %v4179
        %v4211 = vpop.permute.xlu0 %4210
        %4212 = vset.pattern.permute.xlu0 0
        %4213 = vperm.xlu0 %4212, %v4180
        %v4214 = vpop.permute.xlu0 %4213
        %4215 = vset.pattern.permute.xlu0 0
        %4216 = vperm.xlu0 %4215, %v4181
        %v4217 = vpop.permute.xlu0 %4216
        %4218 = vset.pattern.permute.xlu0 0
        %4219 = vperm.xlu0 %4218, %v4182
        %v4220 = vpop.permute.xlu0 %4219
        %4221 = vset.pattern.permute.xlu0 0
        %4222 = vperm.xlu0 %4221, %v4183
        %v4223 = vpop.permute.xlu0 %4222
        %4224 = vset.pattern.permute.xlu0 0
        %4225 = vperm.xlu0 %4224, %v4184
        %v4226 = vpop.permute.xlu0 %4225
        %4227 = vset.pattern.permute.xlu0 0
        %4228 = vperm.xlu0 %4227, %v4185
        %v4229 = vpop.permute.xlu0 %4228
        %4230 = vset.pattern.permute.xlu0 0
        %4231 = vperm.xlu0 %4230, %v4186
        %v4232 = vpop.permute.xlu0 %4231
        %4233 = vset.pattern.permute.xlu0 0
        %4234 = vperm.xlu0 %4233, %v4187
        %v4235 = vpop.permute.xlu0 %4234
        %4236 = vset.pattern.permute.xlu0 0
        %4237 = vperm.xlu0 %4236, %v4188
        %v4238 = vpop.permute.xlu0 %4237
        %4239 = vset.pattern.permute.xlu0 0
        %4240 = vperm.xlu0 %4239, %v4189
        %v4241 = vpop.permute.xlu0 %4240
        %4242 = vset.pattern.permute.xlu0 0
        %4243 = vperm.xlu0 %4242, %v4190
        %v4244 = vpop.permute.xlu0 %4243
        %4245 = vset.pattern.permute.xlu0 0
        %4246 = vperm.xlu0 %4245, %v4191
        %v4247 = vpop.permute.xlu0 %4246
        %4248 = vset.pattern.permute.xlu0 0
        %4249 = vperm.xlu0 %4248, %v4192
        %v4250 = vpop.permute.xlu0 %4249
        %4251 = vset.pattern.permute.xlu0 0
        %4252 = vperm.xlu0 %4251, %v4193
        %v4253 = vpop.permute.xlu0 %4252
        %4254 = vset.pattern.permute.xlu0 0
        %4255 = vperm.xlu0 %4254, %v4194
        %v4256 = vpop.permute.xlu0 %4255
        %4257 = vset.pattern.permute.xlu0 0
        %4258 = vperm.xlu0 %4257, %v4195
        %v4259 = vpop.permute.xlu0 %4258
        %4260 = vset.pattern.permute.xlu0 0
        %4261 = vperm.xlu0 %4260, %v4196
        %v4262 = vpop.permute.xlu0 %4261
        %4263 = vset.pattern.permute.xlu0 0
        %4264 = vperm.xlu0 %4263, %v4197
        %v4265 = vpop.permute.xlu0 %4264
        %4266 = vset.pattern.permute.xlu0 0
        %4267 = vperm.xlu0 %4266, %v4198
        %v4268 = vpop.permute.xlu0 %4267
        %4269 = vset.pattern.permute.xlu0 0
        %4270 = vperm.xlu0 %4269, %v4199
        %v4271 = vpop.permute.xlu0 %4270
        %4272 = vset.pattern.permute.xlu0 0
        %4273 = vperm.xlu0 %4272, %v4200
        %v4274 = vpop.permute.xlu0 %4273
        %4275 = vset.pattern.permute.xlu0 0
        %4276 = vperm.xlu0 %4275, %v4201
        %v4277 = vpop.permute.xlu0 %4276
        %4278 = vset.pattern.permute.xlu0 0
        %4279 = vperm.xlu0 %4278, %v4202
        %v4280 = vpop.permute.xlu0 %4279
        %4281 = vset.pattern.permute.xlu0 0
        %4282 = vperm.xlu0 %4281, %v4203
        %v4283 = vpop.permute.xlu0 %4282
        %4284 = vset.pattern.permute.xlu0 0
        %4285 = vperm.xlu0 %4284, %v4204
        %v4286 = vpop.permute.xlu0 %4285
        %4287 = vset.pattern.permute.xlu0 0
        %4288 = vperm.xlu0 %4287, %v4205
        %v4289 = vpop.permute.xlu0 %4288
        %v4290 = vlaneseq
        %v4291 = vshrl.u32 %v4290, 7
        %v4292 = vsub.s32 %v437, %v4291
        %v4293 = vrot.slane %v4208, %v4292
        %v4294 = vlaneseq
        %v4295 = vshrl.u32 %v4294, 7
        %v4296 = vsub.s32 %v437, %v4295
        %v4297 = vrot.slane %v4211, %v4296
        %v4298 = vlaneseq
        %v4299 = vshrl.u32 %v4298, 7
        %v4300 = vsub.s32 %v437, %v4299
        %v4301 = vrot.slane %v4214, %v4300
        %v4302 = vlaneseq
        %v4303 = vshrl.u32 %v4302, 7
        %v4304 = vsub.s32 %v437, %v4303
        %v4305 = vrot.slane %v4217, %v4304
        %v4306 = vlaneseq
        %v4307 = vshrl.u32 %v4306, 7
        %v4308 = vsub.s32 %v437, %v4307
        %v4309 = vrot.slane %v4220, %v4308
        %v4310 = vlaneseq
        %v4311 = vshrl.u32 %v4310, 7
        %v4312 = vsub.s32 %v437, %v4311
        %v4313 = vrot.slane %v4223, %v4312
        %v4314 = vlaneseq
        %v4315 = vshrl.u32 %v4314, 7
        %v4316 = vsub.s32 %v437, %v4315
        %v4317 = vrot.slane %v4226, %v4316
        %v4318 = vlaneseq
        %v4319 = vshrl.u32 %v4318, 7
        %v4320 = vsub.s32 %v437, %v4319
        %v4321 = vrot.slane %v4229, %v4320
        %v4322 = vlaneseq
        %v4323 = vshrl.u32 %v4322, 7
        %v4324 = vsub.s32 %v437, %v4323
        %v4325 = vrot.slane %v4232, %v4324
        %v4326 = vlaneseq
        %v4327 = vshrl.u32 %v4326, 7
        %v4328 = vsub.s32 %v437, %v4327
        %v4329 = vrot.slane %v4235, %v4328
        %v4330 = vlaneseq
        %v4331 = vshrl.u32 %v4330, 7
        %v4332 = vsub.s32 %v437, %v4331
        %v4333 = vrot.slane %v4238, %v4332
        %v4334 = vlaneseq
        %v4335 = vshrl.u32 %v4334, 7
        %v4336 = vsub.s32 %v437, %v4335
        %v4337 = vrot.slane %v4241, %v4336
        %v4338 = vlaneseq
        %v4339 = vshrl.u32 %v4338, 7
        %v4340 = vsub.s32 %v437, %v4339
        %v4341 = vrot.slane %v4244, %v4340
        %v4342 = vlaneseq
        %v4343 = vshrl.u32 %v4342, 7
        %v4344 = vsub.s32 %v437, %v4343
        %v4345 = vrot.slane %v4247, %v4344
        %v4346 = vlaneseq
        %v4347 = vshrl.u32 %v4346, 7
        %v4348 = vsub.s32 %v437, %v4347
        %v4349 = vrot.slane %v4250, %v4348
        %v4350 = vlaneseq
        %v4351 = vshrl.u32 %v4350, 7
        %v4352 = vsub.s32 %v437, %v4351
        %v4353 = vrot.slane %v4253, %v4352
        %v4354 = vlaneseq
        %v4355 = vshrl.u32 %v4354, 7
        %v4356 = vsub.s32 %v437, %v4355
        %v4357 = vrot.slane %v4256, %v4356
        %v4358 = vlaneseq
        %v4359 = vshrl.u32 %v4358, 7
        %v4360 = vsub.s32 %v437, %v4359
        %v4361 = vrot.slane %v4259, %v4360
        %v4362 = vlaneseq
        %v4363 = vshrl.u32 %v4362, 7
        %v4364 = vsub.s32 %v437, %v4363
        %v4365 = vrot.slane %v4262, %v4364
        %v4366 = vlaneseq
        %v4367 = vshrl.u32 %v4366, 7
        %v4368 = vsub.s32 %v437, %v4367
        %v4369 = vrot.slane %v4265, %v4368
        %v4370 = vlaneseq
        %v4371 = vshrl.u32 %v4370, 7
        %v4372 = vsub.s32 %v437, %v4371
        %v4373 = vrot.slane %v4268, %v4372
        %v4374 = vlaneseq
        %v4375 = vshrl.u32 %v4374, 7
        %v4376 = vsub.s32 %v437, %v4375
        %v4377 = vrot.slane %v4271, %v4376
        %v4378 = vlaneseq
        %v4379 = vshrl.u32 %v4378, 7
        %v4380 = vsub.s32 %v437, %v4379
        %v4381 = vrot.slane %v4274, %v4380
        %v4382 = vlaneseq
        %v4383 = vshrl.u32 %v4382, 7
        %v4384 = vsub.s32 %v437, %v4383
        %v4385 = vrot.slane %v4277, %v4384
        %v4386 = vlaneseq
        %v4387 = vshrl.u32 %v4386, 7
        %v4388 = vsub.s32 %v437, %v4387
        %v4389 = vrot.slane %v4280, %v4388
        %v4390 = vlaneseq
        %v4391 = vshrl.u32 %v4390, 7
        %v4392 = vsub.s32 %v437, %v4391
        %v4393 = vrot.slane %v4283, %v4392
        %v4394 = vlaneseq
        %v4395 = vshrl.u32 %v4394, 7
        %v4396 = vsub.s32 %v437, %v4395
        %v4397 = vrot.slane %v4286, %v4396
        %v4398 = vlaneseq
        %v4399 = vshrl.u32 %v4398, 7
        %v4400 = vsub.s32 %v437, %v4399
        %v4401 = vrot.slane %v4289, %v4400
        %v4402 = vsel %vm2340, %v4297, %v4293
        %v4403 = vsel %vm2342, %v4301, %v4402
        %v4404 = vsel %vm2344, %v4305, %v4403
        %v4405 = vsel %vm2346, %v4309, %v4404
        %v4406 = vsel %vm2348, %v4313, %v4405
        %v4407 = vsel %vm2350, %v4317, %v4406
        %v4408 = vsel %vm2340, %v4325, %v4321
        %v4409 = vsel %vm2342, %v4329, %v4408
        %v4410 = vsel %vm2344, %v4333, %v4409
        %v4411 = vsel %vm2346, %v4337, %v4410
        %v4412 = vsel %vm2348, %v4341, %v4411
        %v4413 = vsel %vm2350, %v4345, %v4412
        %v4414 = vsel %vm2340, %v4353, %v4349
        %v4415 = vsel %vm2342, %v4357, %v4414
        %v4416 = vsel %vm2344, %v4361, %v4415
        %v4417 = vsel %vm2346, %v4365, %v4416
        %v4418 = vsel %vm2348, %v4369, %v4417
        %v4419 = vsel %vm2350, %v4373, %v4418
        %v4420 = vsel %vm2340, %v4381, %v4377
        %v4421 = vsel %vm2342, %v4385, %v4420
        %v4422 = vsel %vm2344, %v4389, %v4421
        %v4423 = vsel %vm2346, %v4393, %v4422
        %v4424 = vsel %vm2348, %v4397, %v4423
        %v4425 = vsel %vm2350, %v4401, %v4424
        %v4426 = vsel %vm1913, %v4407, 2147483647
        %v4427 = vand.u32 %v4426, 65535
        %v4428 = vshra.s32 %v4426, 16
        %v4429 = vcvt.s32.f32 %v4427
        %v4430 = vcvt.s32.f32 %v4428
        %4431 = vmin.xlane.f32.xlu0 %v4430
        %v4432 = vpop.xlane.xlu0 %4431
        %vm4433 = vcmp.eq.f32.partialorder %v4430, %v4432
        %v4434 = vsel %vm4433, %v4429, inf
        %4435 = vmin.xlane.f32.xlu0 %v4434
        %v4436 = vpop.xlane.xlu0 %4435
        %v4437 = vcvt.f32.s32 %v4436
        %v4438 = vcvt.f32.s32 %v4432
        %v4439 = vshll.u32 %v4438, 16
        %v4440 = vadd.s32 %v4439, %v4437
        %v4441 = vsel %vm1913, %v4413, 2147483647
        %v4442 = vand.u32 %v4441, 65535
        %v4443 = vshra.s32 %v4441, 16
        %v4444 = vcvt.s32.f32 %v4442
        %v4445 = vcvt.s32.f32 %v4443
        %4446 = vmin.xlane.f32.xlu0 %v4445
        %v4447 = vpop.xlane.xlu0 %4446
        %vm4448 = vcmp.eq.f32.partialorder %v4445, %v4447
        %v4449 = vsel %vm4448, %v4444, inf
        %4450 = vmin.xlane.f32.xlu0 %v4449
        %v4451 = vpop.xlane.xlu0 %4450
        %v4452 = vcvt.f32.s32 %v4451
        %v4453 = vcvt.f32.s32 %v4447
        %v4454 = vshll.u32 %v4453, 16
        %v4455 = vadd.s32 %v4454, %v4452
        %v4456 = vsel %vm1913, %v4419, 2147483647
        %v4457 = vand.u32 %v4456, 65535
        %v4458 = vshra.s32 %v4456, 16
        %v4459 = vcvt.s32.f32 %v4457
        %v4460 = vcvt.s32.f32 %v4458
        %4461 = vmin.xlane.f32.xlu0 %v4460
        %v4462 = vpop.xlane.xlu0 %4461
        %vm4463 = vcmp.eq.f32.partialorder %v4460, %v4462
        %v4464 = vsel %vm4463, %v4459, inf
        %4465 = vmin.xlane.f32.xlu0 %v4464
        %v4466 = vpop.xlane.xlu0 %4465
        %v4467 = vcvt.f32.s32 %v4466
        %v4468 = vcvt.f32.s32 %v4462
        %v4469 = vshll.u32 %v4468, 16
        %v4470 = vadd.s32 %v4469, %v4467
        %v4471 = vsel %vm1913, %v4425, 2147483647
        %v4472 = vand.u32 %v4471, 65535
        %v4473 = vshra.s32 %v4471, 16
        %v4474 = vcvt.s32.f32 %v4472
        %v4475 = vcvt.s32.f32 %v4473
        %4476 = vmin.xlane.f32.xlu0 %v4475
        %v4477 = vpop.xlane.xlu0 %4476
        %vm4478 = vcmp.eq.f32.partialorder %v4475, %v4477
        %v4479 = vsel %vm4478, %v4474, inf
        %4480 = vmin.xlane.f32.xlu0 %v4479
        %v4481 = vpop.xlane.xlu0 %4480
        %v4482 = vcvt.f32.s32 %v4481
        %v4483 = vcvt.f32.s32 %v4477
        %v4484 = vshll.u32 %v4483, 16
        %v4485 = vadd.s32 %v4484, %v4482
        %v4487 = vlaneseq
        %v4488 = vshrl.u32 %v4487, 7
        %v4489 = vsub.s32 0, %v4488
        %v4490 = vrot.slane %v1852, %v4489
        %4492 = vbcast.lane.b32.xlu0 %v4490, 256
        %v4493 = vpop.permute.xlu0 %4492
        %v4494 = vlaneseq
        %v4495 = vshrl.u32 %v4494, 7
        %v4496 = vsub.s32 1, %v4495
        %v4497 = vrot.slane %v1852, %v4496
        %4499 = vbcast.lane.b32.xlu0 %v4497, 256
        %v4500 = vpop.permute.xlu0 %4499
        %v4501 = vlaneseq
        %v4502 = vshrl.u32 %v4501, 7
        %v4503 = vsub.s32 2, %v4502
        %v4504 = vrot.slane %v1852, %v4503
        %4506 = vbcast.lane.b32.xlu0 %v4504, 256
        %v4507 = vpop.permute.xlu0 %4506
        %v4508 = vlaneseq
        %v4509 = vshrl.u32 %v4508, 7
        %v4510 = vsub.s32 3, %v4509
        %v4511 = vrot.slane %v1852, %v4510
        %4513 = vbcast.lane.b32.xlu0 %v4511, 256
        %v4514 = vpop.permute.xlu0 %4513
        %v4519 = vadd.f32 %v3996, %v4493
        %v4520 = vadd.f32 %v3999, %v4500
        %v4521 = vadd.f32 %v4002, %v4507
        %v4522 = vadd.f32 %v4005, %v4514
        %v4523 = vadd.f32 %v4519, %v2038
        %v4524 = vadd.f32 %v4519, %v2045
        %v4525 = vadd.f32 %v4519, %v2052
        %v4526 = vadd.f32 %v4519, %v2059
        %v4527 = vadd.f32 %v4519, %v2066
        %v4528 = vadd.f32 %v4519, %v2073
        %v4529 = vadd.f32 %v4519, %v2080
        %v4530 = vadd.f32 %v4520, %v2038
        %v4531 = vadd.f32 %v4520, %v2045
        %v4532 = vadd.f32 %v4520, %v2052
        %v4533 = vadd.f32 %v4520, %v2059
        %v4534 = vadd.f32 %v4520, %v2066
        %v4535 = vadd.f32 %v4520, %v2073
        %v4536 = vadd.f32 %v4520, %v2080
        %v4537 = vadd.f32 %v4521, %v2038
        %v4538 = vadd.f32 %v4521, %v2045
        %v4539 = vadd.f32 %v4521, %v2052
        %v4540 = vadd.f32 %v4521, %v2059
        %v4541 = vadd.f32 %v4521, %v2066
        %v4542 = vadd.f32 %v4521, %v2073
        %v4543 = vadd.f32 %v4521, %v2080
        %v4544 = vadd.f32 %v4522, %v2038
        %v4545 = vadd.f32 %v4522, %v2045
        %v4546 = vadd.f32 %v4522, %v2052
        %v4547 = vadd.f32 %v4522, %v2059
        %v4548 = vadd.f32 %v4522, %v2066
        %v4549 = vadd.f32 %v4522, %v2073
        %v4550 = vadd.f32 %v4522, %v2080
        %4579 = vset.pattern.permute.xlu0 0
        %4580 = vperm.xlu0 %4579, %v4523
        %v4581 = vpop.permute.xlu0 %4580
        %4582 = vset.pattern.permute.xlu0 0
        %4583 = vperm.xlu0 %4582, %v4524
        %v4584 = vpop.permute.xlu0 %4583
        %4585 = vset.pattern.permute.xlu0 0
        %4586 = vperm.xlu0 %4585, %v4525
        %v4587 = vpop.permute.xlu0 %4586
        %4588 = vset.pattern.permute.xlu0 0
        %4589 = vperm.xlu0 %4588, %v4526
        %v4590 = vpop.permute.xlu0 %4589
        %4591 = vset.pattern.permute.xlu0 0
        %4592 = vperm.xlu0 %4591, %v4527
        %v4593 = vpop.permute.xlu0 %4592
        %4594 = vset.pattern.permute.xlu0 0
        %4595 = vperm.xlu0 %4594, %v4528
        %v4596 = vpop.permute.xlu0 %4595
        %4597 = vset.pattern.permute.xlu0 0
        %4598 = vperm.xlu0 %4597, %v4529
        %v4599 = vpop.permute.xlu0 %4598
        %4600 = vset.pattern.permute.xlu0 0
        %4601 = vperm.xlu0 %4600, %v4530
        %v4602 = vpop.permute.xlu0 %4601
        %4603 = vset.pattern.permute.xlu0 0
        %4604 = vperm.xlu0 %4603, %v4531
        %v4605 = vpop.permute.xlu0 %4604
        %4606 = vset.pattern.permute.xlu0 0
        %4607 = vperm.xlu0 %4606, %v4532
        %v4608 = vpop.permute.xlu0 %4607
        %4609 = vset.pattern.permute.xlu0 0
        %4610 = vperm.xlu0 %4609, %v4533
        %v4611 = vpop.permute.xlu0 %4610
        %4612 = vset.pattern.permute.xlu0 0
        %4613 = vperm.xlu0 %4612, %v4534
        %v4614 = vpop.permute.xlu0 %4613
        %4615 = vset.pattern.permute.xlu0 0
        %4616 = vperm.xlu0 %4615, %v4535
        %v4617 = vpop.permute.xlu0 %4616
        %4618 = vset.pattern.permute.xlu0 0
        %4619 = vperm.xlu0 %4618, %v4536
        %v4620 = vpop.permute.xlu0 %4619
        %4621 = vset.pattern.permute.xlu0 0
        %4622 = vperm.xlu0 %4621, %v4537
        %v4623 = vpop.permute.xlu0 %4622
        %4624 = vset.pattern.permute.xlu0 0
        %4625 = vperm.xlu0 %4624, %v4538
        %v4626 = vpop.permute.xlu0 %4625
        %4627 = vset.pattern.permute.xlu0 0
        %4628 = vperm.xlu0 %4627, %v4539
        %v4629 = vpop.permute.xlu0 %4628
        %4630 = vset.pattern.permute.xlu0 0
        %4631 = vperm.xlu0 %4630, %v4540
        %v4632 = vpop.permute.xlu0 %4631
        %4633 = vset.pattern.permute.xlu0 0
        %4634 = vperm.xlu0 %4633, %v4541
        %v4635 = vpop.permute.xlu0 %4634
        %4636 = vset.pattern.permute.xlu0 0
        %4637 = vperm.xlu0 %4636, %v4542
        %v4638 = vpop.permute.xlu0 %4637
        %4639 = vset.pattern.permute.xlu0 0
        %4640 = vperm.xlu0 %4639, %v4543
        %v4641 = vpop.permute.xlu0 %4640
        %4642 = vset.pattern.permute.xlu0 0
        %4643 = vperm.xlu0 %4642, %v4544
        %v4644 = vpop.permute.xlu0 %4643
        %4645 = vset.pattern.permute.xlu0 0
        %4646 = vperm.xlu0 %4645, %v4545
        %v4647 = vpop.permute.xlu0 %4646
        %4648 = vset.pattern.permute.xlu0 0
        %4649 = vperm.xlu0 %4648, %v4546
        %v4650 = vpop.permute.xlu0 %4649
        %4651 = vset.pattern.permute.xlu0 0
        %4652 = vperm.xlu0 %4651, %v4547
        %v4653 = vpop.permute.xlu0 %4652
        %4654 = vset.pattern.permute.xlu0 0
        %4655 = vperm.xlu0 %4654, %v4548
        %v4656 = vpop.permute.xlu0 %4655
        %4657 = vset.pattern.permute.xlu0 0
        %4658 = vperm.xlu0 %4657, %v4549
        %v4659 = vpop.permute.xlu0 %4658
        %4660 = vset.pattern.permute.xlu0 0
        %4661 = vperm.xlu0 %4660, %v4550
        %v4662 = vpop.permute.xlu0 %4661
        %v4663 = vlaneseq
        %v4664 = vshrl.u32 %v4663, 7
        %v4665 = vsub.s32 %v437, %v4664
        %v4666 = vrot.slane %v4581, %v4665
        %v4667 = vlaneseq
        %v4668 = vshrl.u32 %v4667, 7
        %v4669 = vsub.s32 %v437, %v4668
        %v4670 = vrot.slane %v4584, %v4669
        %v4671 = vlaneseq
        %v4672 = vshrl.u32 %v4671, 7
        %v4673 = vsub.s32 %v437, %v4672
        %v4674 = vrot.slane %v4587, %v4673
        %v4675 = vlaneseq
        %v4676 = vshrl.u32 %v4675, 7
        %v4677 = vsub.s32 %v437, %v4676
        %v4678 = vrot.slane %v4590, %v4677
        %v4679 = vlaneseq
        %v4680 = vshrl.u32 %v4679, 7
        %v4681 = vsub.s32 %v437, %v4680
        %v4682 = vrot.slane %v4593, %v4681
        %v4683 = vlaneseq
        %v4684 = vshrl.u32 %v4683, 7
        %v4685 = vsub.s32 %v437, %v4684
        %v4686 = vrot.slane %v4596, %v4685
        %v4687 = vlaneseq
        %v4688 = vshrl.u32 %v4687, 7
        %v4689 = vsub.s32 %v437, %v4688
        %v4690 = vrot.slane %v4599, %v4689
        %v4691 = vlaneseq
        %v4692 = vshrl.u32 %v4691, 7
        %v4693 = vsub.s32 %v437, %v4692
        %v4694 = vrot.slane %v4602, %v4693
        %v4695 = vlaneseq
        %v4696 = vshrl.u32 %v4695, 7
        %v4697 = vsub.s32 %v437, %v4696
        %v4698 = vrot.slane %v4605, %v4697
        %v4699 = vlaneseq
        %v4700 = vshrl.u32 %v4699, 7
        %v4701 = vsub.s32 %v437, %v4700
        %v4702 = vrot.slane %v4608, %v4701
        %v4703 = vlaneseq
        %v4704 = vshrl.u32 %v4703, 7
        %v4705 = vsub.s32 %v437, %v4704
        %v4706 = vrot.slane %v4611, %v4705
        %v4707 = vlaneseq
        %v4708 = vshrl.u32 %v4707, 7
        %v4709 = vsub.s32 %v437, %v4708
        %v4710 = vrot.slane %v4614, %v4709
        %v4711 = vlaneseq
        %v4712 = vshrl.u32 %v4711, 7
        %v4713 = vsub.s32 %v437, %v4712
        %v4714 = vrot.slane %v4617, %v4713
        %v4715 = vlaneseq
        %v4716 = vshrl.u32 %v4715, 7
        %v4717 = vsub.s32 %v437, %v4716
        %v4718 = vrot.slane %v4620, %v4717
        %v4719 = vlaneseq
        %v4720 = vshrl.u32 %v4719, 7
        %v4721 = vsub.s32 %v437, %v4720
        %v4722 = vrot.slane %v4623, %v4721
        %v4723 = vlaneseq
        %v4724 = vshrl.u32 %v4723, 7
        %v4725 = vsub.s32 %v437, %v4724
        %v4726 = vrot.slane %v4626, %v4725
        %v4727 = vlaneseq
        %v4728 = vshrl.u32 %v4727, 7
        %v4729 = vsub.s32 %v437, %v4728
        %v4730 = vrot.slane %v4629, %v4729
        %v4731 = vlaneseq
        %v4732 = vshrl.u32 %v4731, 7
        %v4733 = vsub.s32 %v437, %v4732
        %v4734 = vrot.slane %v4632, %v4733
        %v4735 = vlaneseq
        %v4736 = vshrl.u32 %v4735, 7
        %v4737 = vsub.s32 %v437, %v4736
        %v4738 = vrot.slane %v4635, %v4737
        %v4739 = vlaneseq
        %v4740 = vshrl.u32 %v4739, 7
        %v4741 = vsub.s32 %v437, %v4740
        %v4742 = vrot.slane %v4638, %v4741
        %v4743 = vlaneseq
        %v4744 = vshrl.u32 %v4743, 7
        %v4745 = vsub.s32 %v437, %v4744
        %v4746 = vrot.slane %v4641, %v4745
        %v4747 = vlaneseq
        %v4748 = vshrl.u32 %v4747, 7
        %v4749 = vsub.s32 %v437, %v4748
        %v4750 = vrot.slane %v4644, %v4749
        %v4751 = vlaneseq
        %v4752 = vshrl.u32 %v4751, 7
        %v4753 = vsub.s32 %v437, %v4752
        %v4754 = vrot.slane %v4647, %v4753
        %v4755 = vlaneseq
        %v4756 = vshrl.u32 %v4755, 7
        %v4757 = vsub.s32 %v437, %v4756
        %v4758 = vrot.slane %v4650, %v4757
        %v4759 = vlaneseq
        %v4760 = vshrl.u32 %v4759, 7
        %v4761 = vsub.s32 %v437, %v4760
        %v4762 = vrot.slane %v4653, %v4761
        %v4763 = vlaneseq
        %v4764 = vshrl.u32 %v4763, 7
        %v4765 = vsub.s32 %v437, %v4764
        %v4766 = vrot.slane %v4656, %v4765
        %v4767 = vlaneseq
        %v4768 = vshrl.u32 %v4767, 7
        %v4769 = vsub.s32 %v437, %v4768
        %v4770 = vrot.slane %v4659, %v4769
        %v4771 = vlaneseq
        %v4772 = vshrl.u32 %v4771, 7
        %v4773 = vsub.s32 %v437, %v4772
        %v4774 = vrot.slane %v4662, %v4773
        %v4775 = vsel %vm2340, %v4670, %v4666
        %v4776 = vsel %vm2342, %v4674, %v4775
        %v4777 = vsel %vm2344, %v4678, %v4776
        %v4778 = vsel %vm2346, %v4682, %v4777
        %v4779 = vsel %vm2348, %v4686, %v4778
        %v4780 = vsel %vm2350, %v4690, %v4779
        %v4781 = vsel %vm2340, %v4698, %v4694
        %v4782 = vsel %vm2342, %v4702, %v4781
        %v4783 = vsel %vm2344, %v4706, %v4782
        %v4784 = vsel %vm2346, %v4710, %v4783
        %v4785 = vsel %vm2348, %v4714, %v4784
        %v4786 = vsel %vm2350, %v4718, %v4785
        %v4787 = vsel %vm2340, %v4726, %v4722
        %v4788 = vsel %vm2342, %v4730, %v4787
        %v4789 = vsel %vm2344, %v4734, %v4788
        %v4790 = vsel %vm2346, %v4738, %v4789
        %v4791 = vsel %vm2348, %v4742, %v4790
        %v4792 = vsel %vm2350, %v4746, %v4791
        %v4793 = vsel %vm2340, %v4754, %v4750
        %v4794 = vsel %vm2342, %v4758, %v4793
        %v4795 = vsel %vm2344, %v4762, %v4794
        %v4796 = vsel %vm2346, %v4766, %v4795
        %v4797 = vsel %vm2348, %v4770, %v4796
        %v4798 = vsel %vm2350, %v4774, %v4797
        %v4803 = vsel %vm1913, %v4780, -inf
        %4804 = vmax.xlane.f32.xlu0 %v4803
        %v4805 = vpop.xlane.xlu0 %4804
        %v4806 = vsel %vm1913, %v4786, -inf
        %4807 = vmax.xlane.f32.xlu0 %v4806
        %v4808 = vpop.xlane.xlu0 %4807
        %v4809 = vsel %vm1913, %v4792, -inf
        %4810 = vmax.xlane.f32.xlu0 %v4809
        %v4811 = vpop.xlane.xlu0 %4810
        %v4812 = vsel %vm1913, %v4798, -inf
        %4813 = vmax.xlane.f32.xlu0 %v4812
        %v4814 = vpop.xlane.xlu0 %4813
        %v4819 = vlaneseq
        %v4820 = vshrl.u32 %v4819, 7
        %v4821 = vsub.s32 0, %v4820
        %v4822 = vrot.slane %v4805, %v4821
        %v4823 = vlaneseq
        %v4824 = vshrl.u32 %v4823, 7
        %v4825 = vsub.s32 1, %v4824
        %v4826 = vrot.slane %v4805, %v4825
        %v4827 = vlaneseq
        %v4828 = vshrl.u32 %v4827, 7
        %v4829 = vsub.s32 2, %v4828
        %v4830 = vrot.slane %v4805, %v4829
        %v4831 = vlaneseq
        %v4832 = vshrl.u32 %v4831, 7
        %v4833 = vsub.s32 3, %v4832
        %v4834 = vrot.slane %v4805, %v4833
        %v4835 = vlaneseq
        %v4836 = vshrl.u32 %v4835, 7
        %v4837 = vsub.s32 4, %v4836
        %v4838 = vrot.slane %v4805, %v4837
        %v4839 = vlaneseq
        %v4840 = vshrl.u32 %v4839, 7
        %v4841 = vsub.s32 5, %v4840
        %v4842 = vrot.slane %v4805, %v4841
        %v4843 = vlaneseq
        %v4844 = vshrl.u32 %v4843, 7
        %v4845 = vsub.s32 6, %v4844
        %v4846 = vrot.slane %v4805, %v4845
        %v4847 = vlaneseq
        %v4848 = vshrl.u32 %v4847, 7
        %v4849 = vsub.s32 0, %v4848
        %v4850 = vrot.slane %v4808, %v4849
        %v4851 = vlaneseq
        %v4852 = vshrl.u32 %v4851, 7
        %v4853 = vsub.s32 1, %v4852
        %v4854 = vrot.slane %v4808, %v4853
        %v4855 = vlaneseq
        %v4856 = vshrl.u32 %v4855, 7
        %v4857 = vsub.s32 2, %v4856
        %v4858 = vrot.slane %v4808, %v4857
        %v4859 = vlaneseq
        %v4860 = vshrl.u32 %v4859, 7
        %v4861 = vsub.s32 3, %v4860
        %v4862 = vrot.slane %v4808, %v4861
        %v4863 = vlaneseq
        %v4864 = vshrl.u32 %v4863, 7
        %v4865 = vsub.s32 4, %v4864
        %v4866 = vrot.slane %v4808, %v4865
        %v4867 = vlaneseq
        %v4868 = vshrl.u32 %v4867, 7
        %v4869 = vsub.s32 5, %v4868
        %v4870 = vrot.slane %v4808, %v4869
        %v4871 = vlaneseq
        %v4872 = vshrl.u32 %v4871, 7
        %v4873 = vsub.s32 6, %v4872
        %v4874 = vrot.slane %v4808, %v4873
        %v4875 = vlaneseq
        %v4876 = vshrl.u32 %v4875, 7
        %v4877 = vsub.s32 0, %v4876
        %v4878 = vrot.slane %v4811, %v4877
        %v4879 = vlaneseq
        %v4880 = vshrl.u32 %v4879, 7
        %v4881 = vsub.s32 1, %v4880
        %v4882 = vrot.slane %v4811, %v4881
        %v4883 = vlaneseq
        %v4884 = vshrl.u32 %v4883, 7
        %v4885 = vsub.s32 2, %v4884
        %v4886 = vrot.slane %v4811, %v4885
        %v4887 = vlaneseq
        %v4888 = vshrl.u32 %v4887, 7
        %v4889 = vsub.s32 3, %v4888
        %v4890 = vrot.slane %v4811, %v4889
        %v4891 = vlaneseq
        %v4892 = vshrl.u32 %v4891, 7
        %v4893 = vsub.s32 4, %v4892
        %v4894 = vrot.slane %v4811, %v4893
        %v4895 = vlaneseq
        %v4896 = vshrl.u32 %v4895, 7
        %v4897 = vsub.s32 5, %v4896
        %v4898 = vrot.slane %v4811, %v4897
        %v4899 = vlaneseq
        %v4900 = vshrl.u32 %v4899, 7
        %v4901 = vsub.s32 6, %v4900
        %v4902 = vrot.slane %v4811, %v4901
        %v4903 = vlaneseq
        %v4904 = vshrl.u32 %v4903, 7
        %v4905 = vsub.s32 0, %v4904
        %v4906 = vrot.slane %v4814, %v4905
        %v4907 = vlaneseq
        %v4908 = vshrl.u32 %v4907, 7
        %v4909 = vsub.s32 1, %v4908
        %v4910 = vrot.slane %v4814, %v4909
        %v4911 = vlaneseq
        %v4912 = vshrl.u32 %v4911, 7
        %v4913 = vsub.s32 2, %v4912
        %v4914 = vrot.slane %v4814, %v4913
        %v4915 = vlaneseq
        %v4916 = vshrl.u32 %v4915, 7
        %v4917 = vsub.s32 3, %v4916
        %v4918 = vrot.slane %v4814, %v4917
        %v4919 = vlaneseq
        %v4920 = vshrl.u32 %v4919, 7
        %v4921 = vsub.s32 4, %v4920
        %v4922 = vrot.slane %v4814, %v4921
        %v4923 = vlaneseq
        %v4924 = vshrl.u32 %v4923, 7
        %v4925 = vsub.s32 5, %v4924
        %v4926 = vrot.slane %v4814, %v4925
        %v4927 = vlaneseq
        %v4928 = vshrl.u32 %v4927, 7
        %v4929 = vsub.s32 6, %v4928
        %v4930 = vrot.slane %v4814, %v4929
        %vm4959 = vcmp.eq.f32.partialorder %v4523, %v4822
        %vm4960 = vcmp.eq.f32.partialorder %v4524, %v4826
        %vm4961 = vcmp.eq.f32.partialorder %v4525, %v4830
        %vm4962 = vcmp.eq.f32.partialorder %v4526, %v4834
        %vm4963 = vcmp.eq.f32.partialorder %v4527, %v4838
        %vm4964 = vcmp.eq.f32.partialorder %v4528, %v4842
        %vm4965 = vcmp.eq.f32.partialorder %v4529, %v4846
        %vm4966 = vcmp.eq.f32.partialorder %v4530, %v4850
        %vm4967 = vcmp.eq.f32.partialorder %v4531, %v4854
        %vm4968 = vcmp.eq.f32.partialorder %v4532, %v4858
        %vm4969 = vcmp.eq.f32.partialorder %v4533, %v4862
        %vm4970 = vcmp.eq.f32.partialorder %v4534, %v4866
        %vm4971 = vcmp.eq.f32.partialorder %v4535, %v4870
        %vm4972 = vcmp.eq.f32.partialorder %v4536, %v4874
        %vm4973 = vcmp.eq.f32.partialorder %v4537, %v4878
        %vm4974 = vcmp.eq.f32.partialorder %v4538, %v4882
        %vm4975 = vcmp.eq.f32.partialorder %v4539, %v4886
        %vm4976 = vcmp.eq.f32.partialorder %v4540, %v4890
        %vm4977 = vcmp.eq.f32.partialorder %v4541, %v4894
        %vm4978 = vcmp.eq.f32.partialorder %v4542, %v4898
        %vm4979 = vcmp.eq.f32.partialorder %v4543, %v4902
        %vm4980 = vcmp.eq.f32.partialorder %v4544, %v4906
        %vm4981 = vcmp.eq.f32.partialorder %v4545, %v4910
        %vm4982 = vcmp.eq.f32.partialorder %v4546, %v4914
        %vm4983 = vcmp.eq.f32.partialorder %v4547, %v4918
        %vm4984 = vcmp.eq.f32.partialorder %v4548, %v4922
        %vm4985 = vcmp.eq.f32.partialorder %v4549, %v4926
        %vm4986 = vcmp.eq.f32.partialorder %v4550, %v4930
        %v4987 = vsel %vm4959, %v2560, 1073741824
        %v4988 = vsel %vm4960, %v2560, 1073741824
        %v4989 = vsel %vm4961, %v2560, 1073741824
        %v4990 = vsel %vm4962, %v2560, 1073741824
        %v4991 = vsel %vm4963, %v2560, 1073741824
        %v4992 = vsel %vm4964, %v2560, 1073741824
        %v4993 = vsel %vm4965, %v2560, 1073741824
        %v4994 = vsel %vm4966, %v2560, 1073741824
        %v4995 = vsel %vm4967, %v2560, 1073741824
        %v4996 = vsel %vm4968, %v2560, 1073741824
        %v4997 = vsel %vm4969, %v2560, 1073741824
        %v4998 = vsel %vm4970, %v2560, 1073741824
        %v4999 = vsel %vm4971, %v2560, 1073741824
        %v5000 = vsel %vm4972, %v2560, 1073741824
        %v5001 = vsel %vm4973, %v2560, 1073741824
        %v5002 = vsel %vm4974, %v2560, 1073741824
        %v5003 = vsel %vm4975, %v2560, 1073741824
        %v5004 = vsel %vm4976, %v2560, 1073741824
        %v5005 = vsel %vm4977, %v2560, 1073741824
        %v5006 = vsel %vm4978, %v2560, 1073741824
        %v5007 = vsel %vm4979, %v2560, 1073741824
        %v5008 = vsel %vm4980, %v2560, 1073741824
        %v5009 = vsel %vm4981, %v2560, 1073741824
        %v5010 = vsel %vm4982, %v2560, 1073741824
        %v5011 = vsel %vm4983, %v2560, 1073741824
        %v5012 = vsel %vm4984, %v2560, 1073741824
        %v5013 = vsel %vm4985, %v2560, 1073741824
        %v5014 = vsel %vm4986, %v2560, 1073741824
        %5015 = vset.pattern.permute.xlu0 0
        %5016 = vperm.xlu0 %5015, %v4987
        %v5017 = vpop.permute.xlu0 %5016
        %5018 = vset.pattern.permute.xlu0 0
        %5019 = vperm.xlu0 %5018, %v4988
        %v5020 = vpop.permute.xlu0 %5019
        %5021 = vset.pattern.permute.xlu0 0
        %5022 = vperm.xlu0 %5021, %v4989
        %v5023 = vpop.permute.xlu0 %5022
        %5024 = vset.pattern.permute.xlu0 0
        %5025 = vperm.xlu0 %5024, %v4990
        %v5026 = vpop.permute.xlu0 %5025
        %5027 = vset.pattern.permute.xlu0 0
        %5028 = vperm.xlu0 %5027, %v4991
        %v5029 = vpop.permute.xlu0 %5028
        %5030 = vset.pattern.permute.xlu0 0
        %5031 = vperm.xlu0 %5030, %v4992
        %v5032 = vpop.permute.xlu0 %5031
        %5033 = vset.pattern.permute.xlu0 0
        %5034 = vperm.xlu0 %5033, %v4993
        %v5035 = vpop.permute.xlu0 %5034
        %5036 = vset.pattern.permute.xlu0 0
        %5037 = vperm.xlu0 %5036, %v4994
        %v5038 = vpop.permute.xlu0 %5037
        %5039 = vset.pattern.permute.xlu0 0
        %5040 = vperm.xlu0 %5039, %v4995
        %v5041 = vpop.permute.xlu0 %5040
        %5042 = vset.pattern.permute.xlu0 0
        %5043 = vperm.xlu0 %5042, %v4996
        %v5044 = vpop.permute.xlu0 %5043
        %5045 = vset.pattern.permute.xlu0 0
        %5046 = vperm.xlu0 %5045, %v4997
        %v5047 = vpop.permute.xlu0 %5046
        %5048 = vset.pattern.permute.xlu0 0
        %5049 = vperm.xlu0 %5048, %v4998
        %v5050 = vpop.permute.xlu0 %5049
        %5051 = vset.pattern.permute.xlu0 0
        %5052 = vperm.xlu0 %5051, %v4999
        %v5053 = vpop.permute.xlu0 %5052
        %5054 = vset.pattern.permute.xlu0 0
        %5055 = vperm.xlu0 %5054, %v5000
        %v5056 = vpop.permute.xlu0 %5055
        %5057 = vset.pattern.permute.xlu0 0
        %5058 = vperm.xlu0 %5057, %v5001
        %v5059 = vpop.permute.xlu0 %5058
        %5060 = vset.pattern.permute.xlu0 0
        %5061 = vperm.xlu0 %5060, %v5002
        %v5062 = vpop.permute.xlu0 %5061
        %5063 = vset.pattern.permute.xlu0 0
        %5064 = vperm.xlu0 %5063, %v5003
        %v5065 = vpop.permute.xlu0 %5064
        %5066 = vset.pattern.permute.xlu0 0
        %5067 = vperm.xlu0 %5066, %v5004
        %v5068 = vpop.permute.xlu0 %5067
        %5069 = vset.pattern.permute.xlu0 0
        %5070 = vperm.xlu0 %5069, %v5005
        %v5071 = vpop.permute.xlu0 %5070
        %5072 = vset.pattern.permute.xlu0 0
        %5073 = vperm.xlu0 %5072, %v5006
        %v5074 = vpop.permute.xlu0 %5073
        %5075 = vset.pattern.permute.xlu0 0
        %5076 = vperm.xlu0 %5075, %v5007
        %v5077 = vpop.permute.xlu0 %5076
        %5078 = vset.pattern.permute.xlu0 0
        %5079 = vperm.xlu0 %5078, %v5008
        %v5080 = vpop.permute.xlu0 %5079
        %5081 = vset.pattern.permute.xlu0 0
        %5082 = vperm.xlu0 %5081, %v5009
        %v5083 = vpop.permute.xlu0 %5082
        %5084 = vset.pattern.permute.xlu0 0
        %5085 = vperm.xlu0 %5084, %v5010
        %v5086 = vpop.permute.xlu0 %5085
        %5087 = vset.pattern.permute.xlu0 0
        %5088 = vperm.xlu0 %5087, %v5011
        %v5089 = vpop.permute.xlu0 %5088
        %5090 = vset.pattern.permute.xlu0 0
        %5091 = vperm.xlu0 %5090, %v5012
        %v5092 = vpop.permute.xlu0 %5091
        %5093 = vset.pattern.permute.xlu0 0
        %5094 = vperm.xlu0 %5093, %v5013
        %v5095 = vpop.permute.xlu0 %5094
        %5096 = vset.pattern.permute.xlu0 0
        %5097 = vperm.xlu0 %5096, %v5014
        %v5098 = vpop.permute.xlu0 %5097
        %v5099 = vlaneseq
        %v5100 = vshrl.u32 %v5099, 7
        %v5101 = vsub.s32 %v437, %v5100
        %v5102 = vrot.slane %v5017, %v5101
        %v5103 = vlaneseq
        %v5104 = vshrl.u32 %v5103, 7
        %v5105 = vsub.s32 %v437, %v5104
        %v5106 = vrot.slane %v5020, %v5105
        %v5107 = vlaneseq
        %v5108 = vshrl.u32 %v5107, 7
        %v5109 = vsub.s32 %v437, %v5108
        %v5110 = vrot.slane %v5023, %v5109
        %v5111 = vlaneseq
        %v5112 = vshrl.u32 %v5111, 7
        %v5113 = vsub.s32 %v437, %v5112
        %v5114 = vrot.slane %v5026, %v5113
        %v5115 = vlaneseq
        %v5116 = vshrl.u32 %v5115, 7
        %v5117 = vsub.s32 %v437, %v5116
        %v5118 = vrot.slane %v5029, %v5117
        %v5119 = vlaneseq
        %v5120 = vshrl.u32 %v5119, 7
        %v5121 = vsub.s32 %v437, %v5120
        %v5122 = vrot.slane %v5032, %v5121
        %v5123 = vlaneseq
        %v5124 = vshrl.u32 %v5123, 7
        %v5125 = vsub.s32 %v437, %v5124
        %v5126 = vrot.slane %v5035, %v5125
        %v5127 = vlaneseq
        %v5128 = vshrl.u32 %v5127, 7
        %v5129 = vsub.s32 %v437, %v5128
        %v5130 = vrot.slane %v5038, %v5129
        %v5131 = vlaneseq
        %v5132 = vshrl.u32 %v5131, 7
        %v5133 = vsub.s32 %v437, %v5132
        %v5134 = vrot.slane %v5041, %v5133
        %v5135 = vlaneseq
        %v5136 = vshrl.u32 %v5135, 7
        %v5137 = vsub.s32 %v437, %v5136
        %v5138 = vrot.slane %v5044, %v5137
        %v5139 = vlaneseq
        %v5140 = vshrl.u32 %v5139, 7
        %v5141 = vsub.s32 %v437, %v5140
        %v5142 = vrot.slane %v5047, %v5141
        %v5143 = vlaneseq
        %v5144 = vshrl.u32 %v5143, 7
        %v5145 = vsub.s32 %v437, %v5144
        %v5146 = vrot.slane %v5050, %v5145
        %v5147 = vlaneseq
        %v5148 = vshrl.u32 %v5147, 7
        %v5149 = vsub.s32 %v437, %v5148
        %v5150 = vrot.slane %v5053, %v5149
        %v5151 = vlaneseq
        %v5152 = vshrl.u32 %v5151, 7
        %v5153 = vsub.s32 %v437, %v5152
        %v5154 = vrot.slane %v5056, %v5153
        %v5155 = vlaneseq
        %v5156 = vshrl.u32 %v5155, 7
        %v5157 = vsub.s32 %v437, %v5156
        %v5158 = vrot.slane %v5059, %v5157
        %v5159 = vlaneseq
        %v5160 = vshrl.u32 %v5159, 7
        %v5161 = vsub.s32 %v437, %v5160
        %v5162 = vrot.slane %v5062, %v5161
        %v5163 = vlaneseq
        %v5164 = vshrl.u32 %v5163, 7
        %v5165 = vsub.s32 %v437, %v5164
        %v5166 = vrot.slane %v5065, %v5165
        %v5167 = vlaneseq
        %v5168 = vshrl.u32 %v5167, 7
        %v5169 = vsub.s32 %v437, %v5168
        %v5170 = vrot.slane %v5068, %v5169
        %v5171 = vlaneseq
        %v5172 = vshrl.u32 %v5171, 7
        %v5173 = vsub.s32 %v437, %v5172
        %v5174 = vrot.slane %v5071, %v5173
        %v5175 = vlaneseq
        %v5176 = vshrl.u32 %v5175, 7
        %v5177 = vsub.s32 %v437, %v5176
        %v5178 = vrot.slane %v5074, %v5177
        %v5179 = vlaneseq
        %v5180 = vshrl.u32 %v5179, 7
        %v5181 = vsub.s32 %v437, %v5180
        %v5182 = vrot.slane %v5077, %v5181
        %v5183 = vlaneseq
        %v5184 = vshrl.u32 %v5183, 7
        %v5185 = vsub.s32 %v437, %v5184
        %v5186 = vrot.slane %v5080, %v5185
        %v5187 = vlaneseq
        %v5188 = vshrl.u32 %v5187, 7
        %v5189 = vsub.s32 %v437, %v5188
        %v5190 = vrot.slane %v5083, %v5189
        %v5191 = vlaneseq
        %v5192 = vshrl.u32 %v5191, 7
        %v5193 = vsub.s32 %v437, %v5192
        %v5194 = vrot.slane %v5086, %v5193
        %v5195 = vlaneseq
        %v5196 = vshrl.u32 %v5195, 7
        %v5197 = vsub.s32 %v437, %v5196
        %v5198 = vrot.slane %v5089, %v5197
        %v5199 = vlaneseq
        %v5200 = vshrl.u32 %v5199, 7
        %v5201 = vsub.s32 %v437, %v5200
        %v5202 = vrot.slane %v5092, %v5201
        %v5203 = vlaneseq
        %v5204 = vshrl.u32 %v5203, 7
        %v5205 = vsub.s32 %v437, %v5204
        %v5206 = vrot.slane %v5095, %v5205
        %v5207 = vlaneseq
        %v5208 = vshrl.u32 %v5207, 7
        %v5209 = vsub.s32 %v437, %v5208
        %v5210 = vrot.slane %v5098, %v5209
        %v5211 = vsel %vm2340, %v5106, %v5102
        %v5212 = vsel %vm2342, %v5110, %v5211
        %v5213 = vsel %vm2344, %v5114, %v5212
        %v5214 = vsel %vm2346, %v5118, %v5213
        %v5215 = vsel %vm2348, %v5122, %v5214
        %v5216 = vsel %vm2350, %v5126, %v5215
        %v5217 = vsel %vm2340, %v5134, %v5130
        %v5218 = vsel %vm2342, %v5138, %v5217
        %v5219 = vsel %vm2344, %v5142, %v5218
        %v5220 = vsel %vm2346, %v5146, %v5219
        %v5221 = vsel %vm2348, %v5150, %v5220
        %v5222 = vsel %vm2350, %v5154, %v5221
        %v5223 = vsel %vm2340, %v5162, %v5158
        %v5224 = vsel %vm2342, %v5166, %v5223
        %v5225 = vsel %vm2344, %v5170, %v5224
        %v5226 = vsel %vm2346, %v5174, %v5225
        %v5227 = vsel %vm2348, %v5178, %v5226
        %v5228 = vsel %vm2350, %v5182, %v5227
        %v5229 = vsel %vm2340, %v5190, %v5186
        %v5230 = vsel %vm2342, %v5194, %v5229
        %v5231 = vsel %vm2344, %v5198, %v5230
        %v5232 = vsel %vm2346, %v5202, %v5231
        %v5233 = vsel %vm2348, %v5206, %v5232
        %v5234 = vsel %vm2350, %v5210, %v5233
        %v5235 = vsel %vm1913, %v5216, 2147483647
        %v5236 = vand.u32 %v5235, 65535
        %v5237 = vshra.s32 %v5235, 16
        %v5238 = vcvt.s32.f32 %v5236
        %v5239 = vcvt.s32.f32 %v5237
        %5240 = vmin.xlane.f32.xlu0 %v5239
        %v5241 = vpop.xlane.xlu0 %5240
        %vm5242 = vcmp.eq.f32.partialorder %v5239, %v5241
        %v5243 = vsel %vm5242, %v5238, inf
        %5244 = vmin.xlane.f32.xlu0 %v5243
        %v5245 = vpop.xlane.xlu0 %5244
        %v5246 = vcvt.f32.s32 %v5245
        %v5247 = vcvt.f32.s32 %v5241
        %v5248 = vshll.u32 %v5247, 16
        %v5249 = vadd.s32 %v5248, %v5246
        %v5250 = vsel %vm1913, %v5222, 2147483647
        %v5251 = vand.u32 %v5250, 65535
        %v5252 = vshra.s32 %v5250, 16
        %v5253 = vcvt.s32.f32 %v5251
        %v5254 = vcvt.s32.f32 %v5252
        %5255 = vmin.xlane.f32.xlu0 %v5254
        %v5256 = vpop.xlane.xlu0 %5255
        %vm5257 = vcmp.eq.f32.partialorder %v5254, %v5256
        %v5258 = vsel %vm5257, %v5253, inf
        %5259 = vmin.xlane.f32.xlu0 %v5258
        %v5260 = vpop.xlane.xlu0 %5259
        %v5261 = vcvt.f32.s32 %v5260
        %v5262 = vcvt.f32.s32 %v5256
        %v5263 = vshll.u32 %v5262, 16
        %v5264 = vadd.s32 %v5263, %v5261
        %v5265 = vsel %vm1913, %v5228, 2147483647
        %v5266 = vand.u32 %v5265, 65535
        %v5267 = vshra.s32 %v5265, 16
        %v5268 = vcvt.s32.f32 %v5266
        %v5269 = vcvt.s32.f32 %v5267
        %5270 = vmin.xlane.f32.xlu0 %v5269
        %v5271 = vpop.xlane.xlu0 %5270
        %vm5272 = vcmp.eq.f32.partialorder %v5269, %v5271
        %v5273 = vsel %vm5272, %v5268, inf
        %5274 = vmin.xlane.f32.xlu0 %v5273
        %v5275 = vpop.xlane.xlu0 %5274
        %v5276 = vcvt.f32.s32 %v5275
        %v5277 = vcvt.f32.s32 %v5271
        %v5278 = vshll.u32 %v5277, 16
        %v5279 = vadd.s32 %v5278, %v5276
        %v5280 = vsel %vm1913, %v5234, 2147483647
        %v5281 = vand.u32 %v5280, 65535
        %v5282 = vshra.s32 %v5280, 16
        %v5283 = vcvt.s32.f32 %v5281
        %v5284 = vcvt.s32.f32 %v5282
        %5285 = vmin.xlane.f32.xlu0 %v5284
        %v5286 = vpop.xlane.xlu0 %5285
        %vm5287 = vcmp.eq.f32.partialorder %v5284, %v5286
        %v5288 = vsel %vm5287, %v5283, inf
        %5289 = vmin.xlane.f32.xlu0 %v5288
        %v5290 = vpop.xlane.xlu0 %5289
        %v5291 = vcvt.f32.s32 %v5290
        %v5292 = vcvt.f32.s32 %v5286
        %v5293 = vshll.u32 %v5292, 16
        %v5294 = vadd.s32 %v5293, %v5291
        %v5295 = vlaneseq
        %v5296 = vshrl.u32 %v5295, 7
        %v5297 = vsub.s32 4, %v5296
        %v5298 = vrot.slane %v1852, %v5297
        %5300 = vbcast.lane.b32.xlu0 %v5298, 256
        %v5301 = vpop.permute.xlu0 %5300
        %v5302 = vlaneseq
        %v5303 = vshrl.u32 %v5302, 7
        %v5304 = vsub.s32 5, %v5303
        %v5305 = vrot.slane %v1852, %v5304
        %5307 = vbcast.lane.b32.xlu0 %v5305, 256
        %v5308 = vpop.permute.xlu0 %5307
        %v5309 = vlaneseq
        %v5310 = vshrl.u32 %v5309, 7
        %v5311 = vsub.s32 6, %v5310
        %v5312 = vrot.slane %v1852, %v5311
        %5314 = vbcast.lane.b32.xlu0 %v5312, 256
        %v5315 = vpop.permute.xlu0 %5314
        %v5316 = vlaneseq
        %v5317 = vshrl.u32 %v5316, 7
        %v5318 = vsub.s32 7, %v5317
        %v5319 = vrot.slane %v1852, %v5318
        %5321 = vbcast.lane.b32.xlu0 %v5319, 256
        %v5322 = vpop.permute.xlu0 %5321
        %v5327 = vadd.f32 %v4805, %v5301
        %v5328 = vadd.f32 %v4808, %v5308
        %v5329 = vadd.f32 %v4811, %v5315
        %v5330 = vadd.f32 %v4814, %v5322
        %v5331 = vadd.f32 %v5327, %v2038
        %v5332 = vadd.f32 %v5327, %v2045
        %v5333 = vadd.f32 %v5327, %v2052
        %v5334 = vadd.f32 %v5327, %v2059
        %v5335 = vadd.f32 %v5327, %v2066
        %v5336 = vadd.f32 %v5327, %v2073
        %v5337 = vadd.f32 %v5327, %v2080
        %v5338 = vadd.f32 %v5328, %v2038
        %v5339 = vadd.f32 %v5328, %v2045
        %v5340 = vadd.f32 %v5328, %v2052
        %v5341 = vadd.f32 %v5328, %v2059
        %v5342 = vadd.f32 %v5328, %v2066
        %v5343 = vadd.f32 %v5328, %v2073
        %v5344 = vadd.f32 %v5328, %v2080
        %v5345 = vadd.f32 %v5329, %v2038
        %v5346 = vadd.f32 %v5329, %v2045
        %v5347 = vadd.f32 %v5329, %v2052
        %v5348 = vadd.f32 %v5329, %v2059
        %v5349 = vadd.f32 %v5329, %v2066
        %v5350 = vadd.f32 %v5329, %v2073
        %v5351 = vadd.f32 %v5329, %v2080
        %v5352 = vadd.f32 %v5330, %v2038
        %v5353 = vadd.f32 %v5330, %v2045
        %v5354 = vadd.f32 %v5330, %v2052
        %v5355 = vadd.f32 %v5330, %v2059
        %v5356 = vadd.f32 %v5330, %v2066
        %v5357 = vadd.f32 %v5330, %v2073
        %v5358 = vadd.f32 %v5330, %v2080
        %5387 = vset.pattern.permute.xlu0 0
        %5388 = vperm.xlu0 %5387, %v5331
        %v5389 = vpop.permute.xlu0 %5388
        %5390 = vset.pattern.permute.xlu0 0
        %5391 = vperm.xlu0 %5390, %v5332
        %v5392 = vpop.permute.xlu0 %5391
        %5393 = vset.pattern.permute.xlu0 0
        %5394 = vperm.xlu0 %5393, %v5333
        %v5395 = vpop.permute.xlu0 %5394
        %5396 = vset.pattern.permute.xlu0 0
        %5397 = vperm.xlu0 %5396, %v5334
        %v5398 = vpop.permute.xlu0 %5397
        %5399 = vset.pattern.permute.xlu0 0
        %5400 = vperm.xlu0 %5399, %v5335
        %v5401 = vpop.permute.xlu0 %5400
        %5402 = vset.pattern.permute.xlu0 0
        %5403 = vperm.xlu0 %5402, %v5336
        %v5404 = vpop.permute.xlu0 %5403
        %5405 = vset.pattern.permute.xlu0 0
        %5406 = vperm.xlu0 %5405, %v5337
        %v5407 = vpop.permute.xlu0 %5406
        %5408 = vset.pattern.permute.xlu0 0
        %5409 = vperm.xlu0 %5408, %v5338
        %v5410 = vpop.permute.xlu0 %5409
        %5411 = vset.pattern.permute.xlu0 0
        %5412 = vperm.xlu0 %5411, %v5339
        %v5413 = vpop.permute.xlu0 %5412
        %5414 = vset.pattern.permute.xlu0 0
        %5415 = vperm.xlu0 %5414, %v5340
        %v5416 = vpop.permute.xlu0 %5415
        %5417 = vset.pattern.permute.xlu0 0
        %5418 = vperm.xlu0 %5417, %v5341
        %v5419 = vpop.permute.xlu0 %5418
        %5420 = vset.pattern.permute.xlu0 0
        %5421 = vperm.xlu0 %5420, %v5342
        %v5422 = vpop.permute.xlu0 %5421
        %5423 = vset.pattern.permute.xlu0 0
        %5424 = vperm.xlu0 %5423, %v5343
        %v5425 = vpop.permute.xlu0 %5424
        %5426 = vset.pattern.permute.xlu0 0
        %5427 = vperm.xlu0 %5426, %v5344
        %v5428 = vpop.permute.xlu0 %5427
        %5429 = vset.pattern.permute.xlu0 0
        %5430 = vperm.xlu0 %5429, %v5345
        %v5431 = vpop.permute.xlu0 %5430
        %5432 = vset.pattern.permute.xlu0 0
        %5433 = vperm.xlu0 %5432, %v5346
        %v5434 = vpop.permute.xlu0 %5433
        %5435 = vset.pattern.permute.xlu0 0
        %5436 = vperm.xlu0 %5435, %v5347
        %v5437 = vpop.permute.xlu0 %5436
        %5438 = vset.pattern.permute.xlu0 0
        %5439 = vperm.xlu0 %5438, %v5348
        %v5440 = vpop.permute.xlu0 %5439
        %5441 = vset.pattern.permute.xlu0 0
        %5442 = vperm.xlu0 %5441, %v5349
        %v5443 = vpop.permute.xlu0 %5442
        %5444 = vset.pattern.permute.xlu0 0
        %5445 = vperm.xlu0 %5444, %v5350
        %v5446 = vpop.permute.xlu0 %5445
        %5447 = vset.pattern.permute.xlu0 0
        %5448 = vperm.xlu0 %5447, %v5351
        %v5449 = vpop.permute.xlu0 %5448
        %5450 = vset.pattern.permute.xlu0 0
        %5451 = vperm.xlu0 %5450, %v5352
        %v5452 = vpop.permute.xlu0 %5451
        %5453 = vset.pattern.permute.xlu0 0
        %5454 = vperm.xlu0 %5453, %v5353
        %v5455 = vpop.permute.xlu0 %5454
        %5456 = vset.pattern.permute.xlu0 0
        %5457 = vperm.xlu0 %5456, %v5354
        %v5458 = vpop.permute.xlu0 %5457
        %5459 = vset.pattern.permute.xlu0 0
        %5460 = vperm.xlu0 %5459, %v5355
        %v5461 = vpop.permute.xlu0 %5460
        %5462 = vset.pattern.permute.xlu0 0
        %5463 = vperm.xlu0 %5462, %v5356
        %v5464 = vpop.permute.xlu0 %5463
        %5465 = vset.pattern.permute.xlu0 0
        %5466 = vperm.xlu0 %5465, %v5357
        %v5467 = vpop.permute.xlu0 %5466
        %5468 = vset.pattern.permute.xlu0 0
        %5469 = vperm.xlu0 %5468, %v5358
        %v5470 = vpop.permute.xlu0 %5469
        %v5471 = vlaneseq
        %v5472 = vshrl.u32 %v5471, 7
        %v5473 = vsub.s32 %v437, %v5472
        %v5474 = vrot.slane %v5389, %v5473
        %v5475 = vlaneseq
        %v5476 = vshrl.u32 %v5475, 7
        %v5477 = vsub.s32 %v437, %v5476
        %v5478 = vrot.slane %v5392, %v5477
        %v5479 = vlaneseq
        %v5480 = vshrl.u32 %v5479, 7
        %v5481 = vsub.s32 %v437, %v5480
        %v5482 = vrot.slane %v5395, %v5481
        %v5483 = vlaneseq
        %v5484 = vshrl.u32 %v5483, 7
        %v5485 = vsub.s32 %v437, %v5484
        %v5486 = vrot.slane %v5398, %v5485
        %v5487 = vlaneseq
        %v5488 = vshrl.u32 %v5487, 7
        %v5489 = vsub.s32 %v437, %v5488
        %v5490 = vrot.slane %v5401, %v5489
        %v5491 = vlaneseq
        %v5492 = vshrl.u32 %v5491, 7
        %v5493 = vsub.s32 %v437, %v5492
        %v5494 = vrot.slane %v5404, %v5493
        %v5495 = vlaneseq
        %v5496 = vshrl.u32 %v5495, 7
        %v5497 = vsub.s32 %v437, %v5496
        %v5498 = vrot.slane %v5407, %v5497
        %v5499 = vlaneseq
        %v5500 = vshrl.u32 %v5499, 7
        %v5501 = vsub.s32 %v437, %v5500
        %v5502 = vrot.slane %v5410, %v5501
        %v5503 = vlaneseq
        %v5504 = vshrl.u32 %v5503, 7
        %v5505 = vsub.s32 %v437, %v5504
        %v5506 = vrot.slane %v5413, %v5505
        %v5507 = vlaneseq
        %v5508 = vshrl.u32 %v5507, 7
        %v5509 = vsub.s32 %v437, %v5508
        %v5510 = vrot.slane %v5416, %v5509
        %v5511 = vlaneseq
        %v5512 = vshrl.u32 %v5511, 7
        %v5513 = vsub.s32 %v437, %v5512
        %v5514 = vrot.slane %v5419, %v5513
        %v5515 = vlaneseq
        %v5516 = vshrl.u32 %v5515, 7
        %v5517 = vsub.s32 %v437, %v5516
        %v5518 = vrot.slane %v5422, %v5517
        %v5519 = vlaneseq
        %v5520 = vshrl.u32 %v5519, 7
        %v5521 = vsub.s32 %v437, %v5520
        %v5522 = vrot.slane %v5425, %v5521
        %v5523 = vlaneseq
        %v5524 = vshrl.u32 %v5523, 7
        %v5525 = vsub.s32 %v437, %v5524
        %v5526 = vrot.slane %v5428, %v5525
        %v5527 = vlaneseq
        %v5528 = vshrl.u32 %v5527, 7
        %v5529 = vsub.s32 %v437, %v5528
        %v5530 = vrot.slane %v5431, %v5529
        %v5531 = vlaneseq
        %v5532 = vshrl.u32 %v5531, 7
        %v5533 = vsub.s32 %v437, %v5532
        %v5534 = vrot.slane %v5434, %v5533
        %v5535 = vlaneseq
        %v5536 = vshrl.u32 %v5535, 7
        %v5537 = vsub.s32 %v437, %v5536
        %v5538 = vrot.slane %v5437, %v5537
        %v5539 = vlaneseq
        %v5540 = vshrl.u32 %v5539, 7
        %v5541 = vsub.s32 %v437, %v5540
        %v5542 = vrot.slane %v5440, %v5541
        %v5543 = vlaneseq
        %v5544 = vshrl.u32 %v5543, 7
        %v5545 = vsub.s32 %v437, %v5544
        %v5546 = vrot.slane %v5443, %v5545
        %v5547 = vlaneseq
        %v5548 = vshrl.u32 %v5547, 7
        %v5549 = vsub.s32 %v437, %v5548
        %v5550 = vrot.slane %v5446, %v5549
        %v5551 = vlaneseq
        %v5552 = vshrl.u32 %v5551, 7
        %v5553 = vsub.s32 %v437, %v5552
        %v5554 = vrot.slane %v5449, %v5553
        %v5555 = vlaneseq
        %v5556 = vshrl.u32 %v5555, 7
        %v5557 = vsub.s32 %v437, %v5556
        %v5558 = vrot.slane %v5452, %v5557
        %v5559 = vlaneseq
        %v5560 = vshrl.u32 %v5559, 7
        %v5561 = vsub.s32 %v437, %v5560
        %v5562 = vrot.slane %v5455, %v5561
        %v5563 = vlaneseq
        %v5564 = vshrl.u32 %v5563, 7
        %v5565 = vsub.s32 %v437, %v5564
        %v5566 = vrot.slane %v5458, %v5565
        %v5567 = vlaneseq
        %v5568 = vshrl.u32 %v5567, 7
        %v5569 = vsub.s32 %v437, %v5568
        %v5570 = vrot.slane %v5461, %v5569
        %v5571 = vlaneseq
        %v5572 = vshrl.u32 %v5571, 7
        %v5573 = vsub.s32 %v437, %v5572
        %v5574 = vrot.slane %v5464, %v5573
        %v5575 = vlaneseq
        %v5576 = vshrl.u32 %v5575, 7
        %v5577 = vsub.s32 %v437, %v5576
        %v5578 = vrot.slane %v5467, %v5577
        %v5579 = vlaneseq
        %v5580 = vshrl.u32 %v5579, 7
        %v5581 = vsub.s32 %v437, %v5580
        %v5582 = vrot.slane %v5470, %v5581
        %v5583 = vsel %vm2340, %v5478, %v5474
        %v5584 = vsel %vm2342, %v5482, %v5583
        %v5585 = vsel %vm2344, %v5486, %v5584
        %v5586 = vsel %vm2346, %v5490, %v5585
        %v5587 = vsel %vm2348, %v5494, %v5586
        %v5588 = vsel %vm2350, %v5498, %v5587
        %v5589 = vsel %vm2340, %v5506, %v5502
        %v5590 = vsel %vm2342, %v5510, %v5589
        %v5591 = vsel %vm2344, %v5514, %v5590
        %v5592 = vsel %vm2346, %v5518, %v5591
        %v5593 = vsel %vm2348, %v5522, %v5592
        %v5594 = vsel %vm2350, %v5526, %v5593
        %v5595 = vsel %vm2340, %v5534, %v5530
        %v5596 = vsel %vm2342, %v5538, %v5595
        %v5597 = vsel %vm2344, %v5542, %v5596
        %v5598 = vsel %vm2346, %v5546, %v5597
        %v5599 = vsel %vm2348, %v5550, %v5598
        %v5600 = vsel %vm2350, %v5554, %v5599
        %v5601 = vsel %vm2340, %v5562, %v5558
        %v5602 = vsel %vm2342, %v5566, %v5601
        %v5603 = vsel %vm2344, %v5570, %v5602
        %v5604 = vsel %vm2346, %v5574, %v5603
        %v5605 = vsel %vm2348, %v5578, %v5604
        %v5606 = vsel %vm2350, %v5582, %v5605
        %v5611 = vsel %vm1913, %v5588, -inf
        %5612 = vmax.xlane.f32.xlu0 %v5611
        %v5613 = vpop.xlane.xlu0 %5612
        %v5614 = vsel %vm1913, %v5594, -inf
        %5615 = vmax.xlane.f32.xlu0 %v5614
        %v5616 = vpop.xlane.xlu0 %5615
        %v5617 = vsel %vm1913, %v5600, -inf
        %5618 = vmax.xlane.f32.xlu0 %v5617
        %v5619 = vpop.xlane.xlu0 %5618
        %v5620 = vsel %vm1913, %v5606, -inf
        %5621 = vmax.xlane.f32.xlu0 %v5620
        %v5622 = vpop.xlane.xlu0 %5621
        %v5627 = vlaneseq
        %v5628 = vshrl.u32 %v5627, 7
        %v5629 = vsub.s32 0, %v5628
        %v5630 = vrot.slane %v5613, %v5629
        %v5631 = vlaneseq
        %v5632 = vshrl.u32 %v5631, 7
        %v5633 = vsub.s32 1, %v5632
        %v5634 = vrot.slane %v5613, %v5633
        %v5635 = vlaneseq
        %v5636 = vshrl.u32 %v5635, 7
        %v5637 = vsub.s32 2, %v5636
        %v5638 = vrot.slane %v5613, %v5637
        %v5639 = vlaneseq
        %v5640 = vshrl.u32 %v5639, 7
        %v5641 = vsub.s32 3, %v5640
        %v5642 = vrot.slane %v5613, %v5641
        %v5643 = vlaneseq
        %v5644 = vshrl.u32 %v5643, 7
        %v5645 = vsub.s32 4, %v5644
        %v5646 = vrot.slane %v5613, %v5645
        %v5647 = vlaneseq
        %v5648 = vshrl.u32 %v5647, 7
        %v5649 = vsub.s32 5, %v5648
        %v5650 = vrot.slane %v5613, %v5649
        %v5651 = vlaneseq
        %v5652 = vshrl.u32 %v5651, 7
        %v5653 = vsub.s32 6, %v5652
        %v5654 = vrot.slane %v5613, %v5653
        %v5655 = vlaneseq
        %v5656 = vshrl.u32 %v5655, 7
        %v5657 = vsub.s32 0, %v5656
        %v5658 = vrot.slane %v5616, %v5657
        %v5659 = vlaneseq
        %v5660 = vshrl.u32 %v5659, 7
        %v5661 = vsub.s32 1, %v5660
        %v5662 = vrot.slane %v5616, %v5661
        %v5663 = vlaneseq
        %v5664 = vshrl.u32 %v5663, 7
        %v5665 = vsub.s32 2, %v5664
        %v5666 = vrot.slane %v5616, %v5665
        %v5667 = vlaneseq
        %v5668 = vshrl.u32 %v5667, 7
        %v5669 = vsub.s32 3, %v5668
        %v5670 = vrot.slane %v5616, %v5669
        %v5671 = vlaneseq
        %v5672 = vshrl.u32 %v5671, 7
        %v5673 = vsub.s32 4, %v5672
        %v5674 = vrot.slane %v5616, %v5673
        %v5675 = vlaneseq
        %v5676 = vshrl.u32 %v5675, 7
        %v5677 = vsub.s32 5, %v5676
        %v5678 = vrot.slane %v5616, %v5677
        %v5679 = vlaneseq
        %v5680 = vshrl.u32 %v5679, 7
        %v5681 = vsub.s32 6, %v5680
        %v5682 = vrot.slane %v5616, %v5681
        %v5683 = vlaneseq
        %v5684 = vshrl.u32 %v5683, 7
        %v5685 = vsub.s32 0, %v5684
        %v5686 = vrot.slane %v5619, %v5685
        %v5687 = vlaneseq
        %v5688 = vshrl.u32 %v5687, 7
        %v5689 = vsub.s32 1, %v5688
        %v5690 = vrot.slane %v5619, %v5689
        %v5691 = vlaneseq
        %v5692 = vshrl.u32 %v5691, 7
        %v5693 = vsub.s32 2, %v5692
        %v5694 = vrot.slane %v5619, %v5693
        %v5695 = vlaneseq
        %v5696 = vshrl.u32 %v5695, 7
        %v5697 = vsub.s32 3, %v5696
        %v5698 = vrot.slane %v5619, %v5697
        %v5699 = vlaneseq
        %v5700 = vshrl.u32 %v5699, 7
        %v5701 = vsub.s32 4, %v5700
        %v5702 = vrot.slane %v5619, %v5701
        %v5703 = vlaneseq
        %v5704 = vshrl.u32 %v5703, 7
        %v5705 = vsub.s32 5, %v5704
        %v5706 = vrot.slane %v5619, %v5705
        %v5707 = vlaneseq
        %v5708 = vshrl.u32 %v5707, 7
        %v5709 = vsub.s32 6, %v5708
        %v5710 = vrot.slane %v5619, %v5709
        %v5711 = vlaneseq
        %v5712 = vshrl.u32 %v5711, 7
        %v5713 = vsub.s32 0, %v5712
        %v5714 = vrot.slane %v5622, %v5713
        %v5715 = vlaneseq
        %v5716 = vshrl.u32 %v5715, 7
        %v5717 = vsub.s32 1, %v5716
        %v5718 = vrot.slane %v5622, %v5717
        %v5719 = vlaneseq
        %v5720 = vshrl.u32 %v5719, 7
        %v5721 = vsub.s32 2, %v5720
        %v5722 = vrot.slane %v5622, %v5721
        %v5723 = vlaneseq
        %v5724 = vshrl.u32 %v5723, 7
        %v5725 = vsub.s32 3, %v5724
        %v5726 = vrot.slane %v5622, %v5725
        %v5727 = vlaneseq
        %v5728 = vshrl.u32 %v5727, 7
        %v5729 = vsub.s32 4, %v5728
        %v5730 = vrot.slane %v5622, %v5729
        %v5731 = vlaneseq
        %v5732 = vshrl.u32 %v5731, 7
        %v5733 = vsub.s32 5, %v5732
        %v5734 = vrot.slane %v5622, %v5733
        %v5735 = vlaneseq
        %v5736 = vshrl.u32 %v5735, 7
        %v5737 = vsub.s32 6, %v5736
        %v5738 = vrot.slane %v5622, %v5737
        %vm5767 = vcmp.eq.f32.partialorder %v5331, %v5630
        %vm5768 = vcmp.eq.f32.partialorder %v5332, %v5634
        %vm5769 = vcmp.eq.f32.partialorder %v5333, %v5638
        %vm5770 = vcmp.eq.f32.partialorder %v5334, %v5642
        %vm5771 = vcmp.eq.f32.partialorder %v5335, %v5646
        %vm5772 = vcmp.eq.f32.partialorder %v5336, %v5650
        %vm5773 = vcmp.eq.f32.partialorder %v5337, %v5654
        %vm5774 = vcmp.eq.f32.partialorder %v5338, %v5658
        %vm5775 = vcmp.eq.f32.partialorder %v5339, %v5662
        %vm5776 = vcmp.eq.f32.partialorder %v5340, %v5666
        %vm5777 = vcmp.eq.f32.partialorder %v5341, %v5670
        %vm5778 = vcmp.eq.f32.partialorder %v5342, %v5674
        %vm5779 = vcmp.eq.f32.partialorder %v5343, %v5678
        %vm5780 = vcmp.eq.f32.partialorder %v5344, %v5682
        %vm5781 = vcmp.eq.f32.partialorder %v5345, %v5686
        %vm5782 = vcmp.eq.f32.partialorder %v5346, %v5690
        %vm5783 = vcmp.eq.f32.partialorder %v5347, %v5694
        %vm5784 = vcmp.eq.f32.partialorder %v5348, %v5698
        %vm5785 = vcmp.eq.f32.partialorder %v5349, %v5702
        %vm5786 = vcmp.eq.f32.partialorder %v5350, %v5706
        %vm5787 = vcmp.eq.f32.partialorder %v5351, %v5710
        %vm5788 = vcmp.eq.f32.partialorder %v5352, %v5714
        %vm5789 = vcmp.eq.f32.partialorder %v5353, %v5718
        %vm5790 = vcmp.eq.f32.partialorder %v5354, %v5722
        %vm5791 = vcmp.eq.f32.partialorder %v5355, %v5726
        %vm5792 = vcmp.eq.f32.partialorder %v5356, %v5730
        %vm5793 = vcmp.eq.f32.partialorder %v5357, %v5734
        %vm5794 = vcmp.eq.f32.partialorder %v5358, %v5738
        %v5795 = vsel %vm5767, %v2560, 1073741824
        %v5796 = vsel %vm5768, %v2560, 1073741824
        %v5797 = vsel %vm5769, %v2560, 1073741824
        %v5798 = vsel %vm5770, %v2560, 1073741824
        %v5799 = vsel %vm5771, %v2560, 1073741824
        %v5800 = vsel %vm5772, %v2560, 1073741824
        %v5801 = vsel %vm5773, %v2560, 1073741824
        %v5802 = vsel %vm5774, %v2560, 1073741824
        %v5803 = vsel %vm5775, %v2560, 1073741824
        %v5804 = vsel %vm5776, %v2560, 1073741824
        %v5805 = vsel %vm5777, %v2560, 1073741824
        %v5806 = vsel %vm5778, %v2560, 1073741824
        %v5807 = vsel %vm5779, %v2560, 1073741824
        %v5808 = vsel %vm5780, %v2560, 1073741824
        %v5809 = vsel %vm5781, %v2560, 1073741824
        %v5810 = vsel %vm5782, %v2560, 1073741824
        %v5811 = vsel %vm5783, %v2560, 1073741824
        %v5812 = vsel %vm5784, %v2560, 1073741824
        %v5813 = vsel %vm5785, %v2560, 1073741824
        %v5814 = vsel %vm5786, %v2560, 1073741824
        %v5815 = vsel %vm5787, %v2560, 1073741824
        %v5816 = vsel %vm5788, %v2560, 1073741824
        %v5817 = vsel %vm5789, %v2560, 1073741824
        %v5818 = vsel %vm5790, %v2560, 1073741824
        %v5819 = vsel %vm5791, %v2560, 1073741824
        %v5820 = vsel %vm5792, %v2560, 1073741824
        %v5821 = vsel %vm5793, %v2560, 1073741824
        %v5822 = vsel %vm5794, %v2560, 1073741824
        %5823 = vset.pattern.permute.xlu0 0
        %5824 = vperm.xlu0 %5823, %v5795
        %v5825 = vpop.permute.xlu0 %5824
        %5826 = vset.pattern.permute.xlu0 0
        %5827 = vperm.xlu0 %5826, %v5796
        %v5828 = vpop.permute.xlu0 %5827
        %5829 = vset.pattern.permute.xlu0 0
        %5830 = vperm.xlu0 %5829, %v5797
        %v5831 = vpop.permute.xlu0 %5830
        %5832 = vset.pattern.permute.xlu0 0
        %5833 = vperm.xlu0 %5832, %v5798
        %v5834 = vpop.permute.xlu0 %5833
        %5835 = vset.pattern.permute.xlu0 0
        %5836 = vperm.xlu0 %5835, %v5799
        %v5837 = vpop.permute.xlu0 %5836
        %5838 = vset.pattern.permute.xlu0 0
        %5839 = vperm.xlu0 %5838, %v5800
        %v5840 = vpop.permute.xlu0 %5839
        %5841 = vset.pattern.permute.xlu0 0
        %5842 = vperm.xlu0 %5841, %v5801
        %v5843 = vpop.permute.xlu0 %5842
        %5844 = vset.pattern.permute.xlu0 0
        %5845 = vperm.xlu0 %5844, %v5802
        %v5846 = vpop.permute.xlu0 %5845
        %5847 = vset.pattern.permute.xlu0 0
        %5848 = vperm.xlu0 %5847, %v5803
        %v5849 = vpop.permute.xlu0 %5848
        %5850 = vset.pattern.permute.xlu0 0
        %5851 = vperm.xlu0 %5850, %v5804
        %v5852 = vpop.permute.xlu0 %5851
        %5853 = vset.pattern.permute.xlu0 0
        %5854 = vperm.xlu0 %5853, %v5805
        %v5855 = vpop.permute.xlu0 %5854
        %5856 = vset.pattern.permute.xlu0 0
        %5857 = vperm.xlu0 %5856, %v5806
        %v5858 = vpop.permute.xlu0 %5857
        %5859 = vset.pattern.permute.xlu0 0
        %5860 = vperm.xlu0 %5859, %v5807
        %v5861 = vpop.permute.xlu0 %5860
        %5862 = vset.pattern.permute.xlu0 0
        %5863 = vperm.xlu0 %5862, %v5808
        %v5864 = vpop.permute.xlu0 %5863
        %5865 = vset.pattern.permute.xlu0 0
        %5866 = vperm.xlu0 %5865, %v5809
        %v5867 = vpop.permute.xlu0 %5866
        %5868 = vset.pattern.permute.xlu0 0
        %5869 = vperm.xlu0 %5868, %v5810
        %v5870 = vpop.permute.xlu0 %5869
        %5871 = vset.pattern.permute.xlu0 0
        %5872 = vperm.xlu0 %5871, %v5811
        %v5873 = vpop.permute.xlu0 %5872
        %5874 = vset.pattern.permute.xlu0 0
        %5875 = vperm.xlu0 %5874, %v5812
        %v5876 = vpop.permute.xlu0 %5875
        %5877 = vset.pattern.permute.xlu0 0
        %5878 = vperm.xlu0 %5877, %v5813
        %v5879 = vpop.permute.xlu0 %5878
        %5880 = vset.pattern.permute.xlu0 0
        %5881 = vperm.xlu0 %5880, %v5814
        %v5882 = vpop.permute.xlu0 %5881
        %5883 = vset.pattern.permute.xlu0 0
        %5884 = vperm.xlu0 %5883, %v5815
        %v5885 = vpop.permute.xlu0 %5884
        %5886 = vset.pattern.permute.xlu0 0
        %5887 = vperm.xlu0 %5886, %v5816
        %v5888 = vpop.permute.xlu0 %5887
        %5889 = vset.pattern.permute.xlu0 0
        %5890 = vperm.xlu0 %5889, %v5817
        %v5891 = vpop.permute.xlu0 %5890
        %5892 = vset.pattern.permute.xlu0 0
        %5893 = vperm.xlu0 %5892, %v5818
        %v5894 = vpop.permute.xlu0 %5893
        %5895 = vset.pattern.permute.xlu0 0
        %5896 = vperm.xlu0 %5895, %v5819
        %v5897 = vpop.permute.xlu0 %5896
        %5898 = vset.pattern.permute.xlu0 0
        %5899 = vperm.xlu0 %5898, %v5820
        %v5900 = vpop.permute.xlu0 %5899
        %5901 = vset.pattern.permute.xlu0 0
        %5902 = vperm.xlu0 %5901, %v5821
        %v5903 = vpop.permute.xlu0 %5902
        %5904 = vset.pattern.permute.xlu0 0
        %5905 = vperm.xlu0 %5904, %v5822
        %v5906 = vpop.permute.xlu0 %5905
        %v5907 = vlaneseq
        %v5908 = vshrl.u32 %v5907, 7
        %v5909 = vsub.s32 %v437, %v5908
        %v5910 = vrot.slane %v5825, %v5909
        %v5911 = vlaneseq
        %v5912 = vshrl.u32 %v5911, 7
        %v5913 = vsub.s32 %v437, %v5912
        %v5914 = vrot.slane %v5828, %v5913
        %v5915 = vlaneseq
        %v5916 = vshrl.u32 %v5915, 7
        %v5917 = vsub.s32 %v437, %v5916
        %v5918 = vrot.slane %v5831, %v5917
        %v5919 = vlaneseq
        %v5920 = vshrl.u32 %v5919, 7
        %v5921 = vsub.s32 %v437, %v5920
        %v5922 = vrot.slane %v5834, %v5921
        %v5923 = vlaneseq
        %v5924 = vshrl.u32 %v5923, 7
        %v5925 = vsub.s32 %v437, %v5924
        %v5926 = vrot.slane %v5837, %v5925
        %v5927 = vlaneseq
        %v5928 = vshrl.u32 %v5927, 7
        %v5929 = vsub.s32 %v437, %v5928
        %v5930 = vrot.slane %v5840, %v5929
        %v5931 = vlaneseq
        %v5932 = vshrl.u32 %v5931, 7
        %v5933 = vsub.s32 %v437, %v5932
        %v5934 = vrot.slane %v5843, %v5933
        %v5935 = vlaneseq
        %v5936 = vshrl.u32 %v5935, 7
        %v5937 = vsub.s32 %v437, %v5936
        %v5938 = vrot.slane %v5846, %v5937
        %v5939 = vlaneseq
        %v5940 = vshrl.u32 %v5939, 7
        %v5941 = vsub.s32 %v437, %v5940
        %v5942 = vrot.slane %v5849, %v5941
        %v5943 = vlaneseq
        %v5944 = vshrl.u32 %v5943, 7
        %v5945 = vsub.s32 %v437, %v5944
        %v5946 = vrot.slane %v5852, %v5945
        %v5947 = vlaneseq
        %v5948 = vshrl.u32 %v5947, 7
        %v5949 = vsub.s32 %v437, %v5948
        %v5950 = vrot.slane %v5855, %v5949
        %v5951 = vlaneseq
        %v5952 = vshrl.u32 %v5951, 7
        %v5953 = vsub.s32 %v437, %v5952
        %v5954 = vrot.slane %v5858, %v5953
        %v5955 = vlaneseq
        %v5956 = vshrl.u32 %v5955, 7
        %v5957 = vsub.s32 %v437, %v5956
        %v5958 = vrot.slane %v5861, %v5957
        %v5959 = vlaneseq
        %v5960 = vshrl.u32 %v5959, 7
        %v5961 = vsub.s32 %v437, %v5960
        %v5962 = vrot.slane %v5864, %v5961
        %v5963 = vlaneseq
        %v5964 = vshrl.u32 %v5963, 7
        %v5965 = vsub.s32 %v437, %v5964
        %v5966 = vrot.slane %v5867, %v5965
        %v5967 = vlaneseq
        %v5968 = vshrl.u32 %v5967, 7
        %v5969 = vsub.s32 %v437, %v5968
        %v5970 = vrot.slane %v5870, %v5969
        %v5971 = vlaneseq
        %v5972 = vshrl.u32 %v5971, 7
        %v5973 = vsub.s32 %v437, %v5972
        %v5974 = vrot.slane %v5873, %v5973
        %v5975 = vlaneseq
        %v5976 = vshrl.u32 %v5975, 7
        %v5977 = vsub.s32 %v437, %v5976
        %v5978 = vrot.slane %v5876, %v5977
        %v5979 = vlaneseq
        %v5980 = vshrl.u32 %v5979, 7
        %v5981 = vsub.s32 %v437, %v5980
        %v5982 = vrot.slane %v5879, %v5981
        %v5983 = vlaneseq
        %v5984 = vshrl.u32 %v5983, 7
        %v5985 = vsub.s32 %v437, %v5984
        %v5986 = vrot.slane %v5882, %v5985
        %v5987 = vlaneseq
        %v5988 = vshrl.u32 %v5987, 7
        %v5989 = vsub.s32 %v437, %v5988
        %v5990 = vrot.slane %v5885, %v5989
        %v5991 = vlaneseq
        %v5992 = vshrl.u32 %v5991, 7
        %v5993 = vsub.s32 %v437, %v5992
        %v5994 = vrot.slane %v5888, %v5993
        %v5995 = vlaneseq
        %v5996 = vshrl.u32 %v5995, 7
        %v5997 = vsub.s32 %v437, %v5996
        %v5998 = vrot.slane %v5891, %v5997
        %v5999 = vlaneseq
        %v6000 = vshrl.u32 %v5999, 7
        %v6001 = vsub.s32 %v437, %v6000
        %v6002 = vrot.slane %v5894, %v6001
        %v6003 = vlaneseq
        %v6004 = vshrl.u32 %v6003, 7
        %v6005 = vsub.s32 %v437, %v6004
        %v6006 = vrot.slane %v5897, %v6005
        %v6007 = vlaneseq
        %v6008 = vshrl.u32 %v6007, 7
        %v6009 = vsub.s32 %v437, %v6008
        %v6010 = vrot.slane %v5900, %v6009
        %v6011 = vlaneseq
        %v6012 = vshrl.u32 %v6011, 7
        %v6013 = vsub.s32 %v437, %v6012
        %v6014 = vrot.slane %v5903, %v6013
        %v6015 = vlaneseq
        %v6016 = vshrl.u32 %v6015, 7
        %v6017 = vsub.s32 %v437, %v6016
        %v6018 = vrot.slane %v5906, %v6017
        %v6019 = vsel %vm2340, %v5914, %v5910
        %v6020 = vsel %vm2342, %v5918, %v6019
        %v6021 = vsel %vm2344, %v5922, %v6020
        %v6022 = vsel %vm2346, %v5926, %v6021
        %v6023 = vsel %vm2348, %v5930, %v6022
        %v6024 = vsel %vm2350, %v5934, %v6023
        %v6025 = vsel %vm2340, %v5942, %v5938
        %v6026 = vsel %vm2342, %v5946, %v6025
        %v6027 = vsel %vm2344, %v5950, %v6026
        %v6028 = vsel %vm2346, %v5954, %v6027
        %v6029 = vsel %vm2348, %v5958, %v6028
        %v6030 = vsel %vm2350, %v5962, %v6029
        %v6031 = vsel %vm2340, %v5970, %v5966
        %v6032 = vsel %vm2342, %v5974, %v6031
        %v6033 = vsel %vm2344, %v5978, %v6032
        %v6034 = vsel %vm2346, %v5982, %v6033
        %v6035 = vsel %vm2348, %v5986, %v6034
        %v6036 = vsel %vm2350, %v5990, %v6035
        %v6037 = vsel %vm2340, %v5998, %v5994
        %v6038 = vsel %vm2342, %v6002, %v6037
        %v6039 = vsel %vm2344, %v6006, %v6038
        %v6040 = vsel %vm2346, %v6010, %v6039
        %v6041 = vsel %vm2348, %v6014, %v6040
        %v6042 = vsel %vm2350, %v6018, %v6041
        %v6043 = vsel %vm1913, %v6024, 2147483647
        %v6044 = vand.u32 %v6043, 65535
        %v6045 = vshra.s32 %v6043, 16
        %v6046 = vcvt.s32.f32 %v6044
        %v6047 = vcvt.s32.f32 %v6045
        %6048 = vmin.xlane.f32.xlu0 %v6047
        %v6049 = vpop.xlane.xlu0 %6048
        %vm6050 = vcmp.eq.f32.partialorder %v6047, %v6049
        %v6051 = vsel %vm6050, %v6046, inf
        %6052 = vmin.xlane.f32.xlu0 %v6051
        %v6053 = vpop.xlane.xlu0 %6052
        %v6054 = vcvt.f32.s32 %v6053
        %v6055 = vcvt.f32.s32 %v6049
        %v6056 = vshll.u32 %v6055, 16
        %v6057 = vadd.s32 %v6056, %v6054
        %v6058 = vsel %vm1913, %v6030, 2147483647
        %v6059 = vand.u32 %v6058, 65535
        %v6060 = vshra.s32 %v6058, 16
        %v6061 = vcvt.s32.f32 %v6059
        %v6062 = vcvt.s32.f32 %v6060
        %6063 = vmin.xlane.f32.xlu0 %v6062
        %v6064 = vpop.xlane.xlu0 %6063
        %vm6065 = vcmp.eq.f32.partialorder %v6062, %v6064
        %v6066 = vsel %vm6065, %v6061, inf
        %6067 = vmin.xlane.f32.xlu0 %v6066
        %v6068 = vpop.xlane.xlu0 %6067
        %v6069 = vcvt.f32.s32 %v6068
        %v6070 = vcvt.f32.s32 %v6064
        %v6071 = vshll.u32 %v6070, 16
        %v6072 = vadd.s32 %v6071, %v6069
        %v6073 = vsel %vm1913, %v6036, 2147483647
        %v6074 = vand.u32 %v6073, 65535
        %v6075 = vshra.s32 %v6073, 16
        %v6076 = vcvt.s32.f32 %v6074
        %v6077 = vcvt.s32.f32 %v6075
        %6078 = vmin.xlane.f32.xlu0 %v6077
        %v6079 = vpop.xlane.xlu0 %6078
        %vm6080 = vcmp.eq.f32.partialorder %v6077, %v6079
        %v6081 = vsel %vm6080, %v6076, inf
        %6082 = vmin.xlane.f32.xlu0 %v6081
        %v6083 = vpop.xlane.xlu0 %6082
        %v6084 = vcvt.f32.s32 %v6083
        %v6085 = vcvt.f32.s32 %v6079
        %v6086 = vshll.u32 %v6085, 16
        %v6087 = vadd.s32 %v6086, %v6084
        %v6088 = vsel %vm1913, %v6042, 2147483647
        %v6089 = vand.u32 %v6088, 65535
        %v6090 = vshra.s32 %v6088, 16
        %v6091 = vcvt.s32.f32 %v6089
        %v6092 = vcvt.s32.f32 %v6090
        %6093 = vmin.xlane.f32.xlu0 %v6092
        %v6094 = vpop.xlane.xlu0 %6093
        %vm6095 = vcmp.eq.f32.partialorder %v6092, %v6094
        %v6096 = vsel %vm6095, %v6091, inf
        %6097 = vmin.xlane.f32.xlu0 %v6096
        %v6098 = vpop.xlane.xlu0 %6097
        %v6099 = vcvt.f32.s32 %v6098
        %v6100 = vcvt.f32.s32 %v6094
        %v6101 = vshll.u32 %v6100, 16
        %v6102 = vadd.s32 %v6101, %v6099
        %v6104 = vlaneseq
        %v6105 = vshrl.u32 %v6104, 7
        %v6106 = vsub.s32 0, %v6105
        %v6107 = vrot.slane %v1853, %v6106
        %6109 = vbcast.lane.b32.xlu0 %v6107, 256
        %v6110 = vpop.permute.xlu0 %6109
        %v6111 = vlaneseq
        %v6112 = vshrl.u32 %v6111, 7
        %v6113 = vsub.s32 1, %v6112
        %v6114 = vrot.slane %v1853, %v6113
        %6116 = vbcast.lane.b32.xlu0 %v6114, 256
        %v6117 = vpop.permute.xlu0 %6116
        %v6118 = vlaneseq
        %v6119 = vshrl.u32 %v6118, 7
        %v6120 = vsub.s32 2, %v6119
        %v6121 = vrot.slane %v1853, %v6120
        %6123 = vbcast.lane.b32.xlu0 %v6121, 256
        %v6124 = vpop.permute.xlu0 %6123
        %v6125 = vlaneseq
        %v6126 = vshrl.u32 %v6125, 7
        %v6127 = vsub.s32 3, %v6126
        %v6128 = vrot.slane %v1853, %v6127
        %6130 = vbcast.lane.b32.xlu0 %v6128, 256
        %v6131 = vpop.permute.xlu0 %6130
        %v6136 = vadd.f32 %v5613, %v6110
        %v6137 = vadd.f32 %v5616, %v6117
        %v6138 = vadd.f32 %v5619, %v6124
        %v6139 = vadd.f32 %v5622, %v6131
        %v6140 = vadd.f32 %v6136, %v2038
        %v6141 = vadd.f32 %v6136, %v2045
        %v6142 = vadd.f32 %v6136, %v2052
        %v6143 = vadd.f32 %v6136, %v2059
        %v6144 = vadd.f32 %v6136, %v2066
        %v6145 = vadd.f32 %v6136, %v2073
        %v6146 = vadd.f32 %v6136, %v2080
        %v6147 = vadd.f32 %v6137, %v2038
        %v6148 = vadd.f32 %v6137, %v2045
        %v6149 = vadd.f32 %v6137, %v2052
        %v6150 = vadd.f32 %v6137, %v2059
        %v6151 = vadd.f32 %v6137, %v2066
        %v6152 = vadd.f32 %v6137, %v2073
        %v6153 = vadd.f32 %v6137, %v2080
        %v6154 = vadd.f32 %v6138, %v2038
        %v6155 = vadd.f32 %v6138, %v2045
        %v6156 = vadd.f32 %v6138, %v2052
        %v6157 = vadd.f32 %v6138, %v2059
        %v6158 = vadd.f32 %v6138, %v2066
        %v6159 = vadd.f32 %v6138, %v2073
        %v6160 = vadd.f32 %v6138, %v2080
        %v6161 = vadd.f32 %v6139, %v2038
        %v6162 = vadd.f32 %v6139, %v2045
        %v6163 = vadd.f32 %v6139, %v2052
        %v6164 = vadd.f32 %v6139, %v2059
        %v6165 = vadd.f32 %v6139, %v2066
        %v6166 = vadd.f32 %v6139, %v2073
        %v6167 = vadd.f32 %v6139, %v2080
        %6196 = vset.pattern.permute.xlu0 0
        %6197 = vperm.xlu0 %6196, %v6140
        %v6198 = vpop.permute.xlu0 %6197
        %6199 = vset.pattern.permute.xlu0 0
        %6200 = vperm.xlu0 %6199, %v6141
        %v6201 = vpop.permute.xlu0 %6200
        %6202 = vset.pattern.permute.xlu0 0
        %6203 = vperm.xlu0 %6202, %v6142
        %v6204 = vpop.permute.xlu0 %6203
        %6205 = vset.pattern.permute.xlu0 0
        %6206 = vperm.xlu0 %6205, %v6143
        %v6207 = vpop.permute.xlu0 %6206
        %6208 = vset.pattern.permute.xlu0 0
        %6209 = vperm.xlu0 %6208, %v6144
        %v6210 = vpop.permute.xlu0 %6209
        %6211 = vset.pattern.permute.xlu0 0
        %6212 = vperm.xlu0 %6211, %v6145
        %v6213 = vpop.permute.xlu0 %6212
        %6214 = vset.pattern.permute.xlu0 0
        %6215 = vperm.xlu0 %6214, %v6146
        %v6216 = vpop.permute.xlu0 %6215
        %6217 = vset.pattern.permute.xlu0 0
        %6218 = vperm.xlu0 %6217, %v6147
        %v6219 = vpop.permute.xlu0 %6218
        %6220 = vset.pattern.permute.xlu0 0
        %6221 = vperm.xlu0 %6220, %v6148
        %v6222 = vpop.permute.xlu0 %6221
        %6223 = vset.pattern.permute.xlu0 0
        %6224 = vperm.xlu0 %6223, %v6149
        %v6225 = vpop.permute.xlu0 %6224
        %6226 = vset.pattern.permute.xlu0 0
        %6227 = vperm.xlu0 %6226, %v6150
        %v6228 = vpop.permute.xlu0 %6227
        %6229 = vset.pattern.permute.xlu0 0
        %6230 = vperm.xlu0 %6229, %v6151
        %v6231 = vpop.permute.xlu0 %6230
        %6232 = vset.pattern.permute.xlu0 0
        %6233 = vperm.xlu0 %6232, %v6152
        %v6234 = vpop.permute.xlu0 %6233
        %6235 = vset.pattern.permute.xlu0 0
        %6236 = vperm.xlu0 %6235, %v6153
        %v6237 = vpop.permute.xlu0 %6236
        %6238 = vset.pattern.permute.xlu0 0
        %6239 = vperm.xlu0 %6238, %v6154
        %v6240 = vpop.permute.xlu0 %6239
        %6241 = vset.pattern.permute.xlu0 0
        %6242 = vperm.xlu0 %6241, %v6155
        %v6243 = vpop.permute.xlu0 %6242
        %6244 = vset.pattern.permute.xlu0 0
        %6245 = vperm.xlu0 %6244, %v6156
        %v6246 = vpop.permute.xlu0 %6245
        %6247 = vset.pattern.permute.xlu0 0
        %6248 = vperm.xlu0 %6247, %v6157
        %v6249 = vpop.permute.xlu0 %6248
        %6250 = vset.pattern.permute.xlu0 0
        %6251 = vperm.xlu0 %6250, %v6158
        %v6252 = vpop.permute.xlu0 %6251
        %6253 = vset.pattern.permute.xlu0 0
        %6254 = vperm.xlu0 %6253, %v6159
        %v6255 = vpop.permute.xlu0 %6254
        %6256 = vset.pattern.permute.xlu0 0
        %6257 = vperm.xlu0 %6256, %v6160
        %v6258 = vpop.permute.xlu0 %6257
        %6259 = vset.pattern.permute.xlu0 0
        %6260 = vperm.xlu0 %6259, %v6161
        %v6261 = vpop.permute.xlu0 %6260
        %6262 = vset.pattern.permute.xlu0 0
        %6263 = vperm.xlu0 %6262, %v6162
        %v6264 = vpop.permute.xlu0 %6263
        %6265 = vset.pattern.permute.xlu0 0
        %6266 = vperm.xlu0 %6265, %v6163
        %v6267 = vpop.permute.xlu0 %6266
        %6268 = vset.pattern.permute.xlu0 0
        %6269 = vperm.xlu0 %6268, %v6164
        %v6270 = vpop.permute.xlu0 %6269
        %6271 = vset.pattern.permute.xlu0 0
        %6272 = vperm.xlu0 %6271, %v6165
        %v6273 = vpop.permute.xlu0 %6272
        %6274 = vset.pattern.permute.xlu0 0
        %6275 = vperm.xlu0 %6274, %v6166
        %v6276 = vpop.permute.xlu0 %6275
        %6277 = vset.pattern.permute.xlu0 0
        %6278 = vperm.xlu0 %6277, %v6167
        %v6279 = vpop.permute.xlu0 %6278
        %v6280 = vlaneseq
        %v6281 = vshrl.u32 %v6280, 7
        %v6282 = vsub.s32 %v437, %v6281
        %v6283 = vrot.slane %v6198, %v6282
        %v6284 = vlaneseq
        %v6285 = vshrl.u32 %v6284, 7
        %v6286 = vsub.s32 %v437, %v6285
        %v6287 = vrot.slane %v6201, %v6286
        %v6288 = vlaneseq
        %v6289 = vshrl.u32 %v6288, 7
        %v6290 = vsub.s32 %v437, %v6289
        %v6291 = vrot.slane %v6204, %v6290
        %v6292 = vlaneseq
        %v6293 = vshrl.u32 %v6292, 7
        %v6294 = vsub.s32 %v437, %v6293
        %v6295 = vrot.slane %v6207, %v6294
        %v6296 = vlaneseq
        %v6297 = vshrl.u32 %v6296, 7
        %v6298 = vsub.s32 %v437, %v6297
        %v6299 = vrot.slane %v6210, %v6298
        %v6300 = vlaneseq
        %v6301 = vshrl.u32 %v6300, 7
        %v6302 = vsub.s32 %v437, %v6301
        %v6303 = vrot.slane %v6213, %v6302
        %v6304 = vlaneseq
        %v6305 = vshrl.u32 %v6304, 7
        %v6306 = vsub.s32 %v437, %v6305
        %v6307 = vrot.slane %v6216, %v6306
        %v6308 = vlaneseq
        %v6309 = vshrl.u32 %v6308, 7
        %v6310 = vsub.s32 %v437, %v6309
        %v6311 = vrot.slane %v6219, %v6310
        %v6312 = vlaneseq
        %v6313 = vshrl.u32 %v6312, 7
        %v6314 = vsub.s32 %v437, %v6313
        %v6315 = vrot.slane %v6222, %v6314
        %v6316 = vlaneseq
        %v6317 = vshrl.u32 %v6316, 7
        %v6318 = vsub.s32 %v437, %v6317
        %v6319 = vrot.slane %v6225, %v6318
        %v6320 = vlaneseq
        %v6321 = vshrl.u32 %v6320, 7
        %v6322 = vsub.s32 %v437, %v6321
        %v6323 = vrot.slane %v6228, %v6322
        %v6324 = vlaneseq
        %v6325 = vshrl.u32 %v6324, 7
        %v6326 = vsub.s32 %v437, %v6325
        %v6327 = vrot.slane %v6231, %v6326
        %v6328 = vlaneseq
        %v6329 = vshrl.u32 %v6328, 7
        %v6330 = vsub.s32 %v437, %v6329
        %v6331 = vrot.slane %v6234, %v6330
        %v6332 = vlaneseq
        %v6333 = vshrl.u32 %v6332, 7
        %v6334 = vsub.s32 %v437, %v6333
        %v6335 = vrot.slane %v6237, %v6334
        %v6336 = vlaneseq
        %v6337 = vshrl.u32 %v6336, 7
        %v6338 = vsub.s32 %v437, %v6337
        %v6339 = vrot.slane %v6240, %v6338
        %v6340 = vlaneseq
        %v6341 = vshrl.u32 %v6340, 7
        %v6342 = vsub.s32 %v437, %v6341
        %v6343 = vrot.slane %v6243, %v6342
        %v6344 = vlaneseq
        %v6345 = vshrl.u32 %v6344, 7
        %v6346 = vsub.s32 %v437, %v6345
        %v6347 = vrot.slane %v6246, %v6346
        %v6348 = vlaneseq
        %v6349 = vshrl.u32 %v6348, 7
        %v6350 = vsub.s32 %v437, %v6349
        %v6351 = vrot.slane %v6249, %v6350
        %v6352 = vlaneseq
        %v6353 = vshrl.u32 %v6352, 7
        %v6354 = vsub.s32 %v437, %v6353
        %v6355 = vrot.slane %v6252, %v6354
        %v6356 = vlaneseq
        %v6357 = vshrl.u32 %v6356, 7
        %v6358 = vsub.s32 %v437, %v6357
        %v6359 = vrot.slane %v6255, %v6358
        %v6360 = vlaneseq
        %v6361 = vshrl.u32 %v6360, 7
        %v6362 = vsub.s32 %v437, %v6361
        %v6363 = vrot.slane %v6258, %v6362
        %v6364 = vlaneseq
        %v6365 = vshrl.u32 %v6364, 7
        %v6366 = vsub.s32 %v437, %v6365
        %v6367 = vrot.slane %v6261, %v6366
        %v6368 = vlaneseq
        %v6369 = vshrl.u32 %v6368, 7
        %v6370 = vsub.s32 %v437, %v6369
        %v6371 = vrot.slane %v6264, %v6370
        %v6372 = vlaneseq
        %v6373 = vshrl.u32 %v6372, 7
        %v6374 = vsub.s32 %v437, %v6373
        %v6375 = vrot.slane %v6267, %v6374
        %v6376 = vlaneseq
        %v6377 = vshrl.u32 %v6376, 7
        %v6378 = vsub.s32 %v437, %v6377
        %v6379 = vrot.slane %v6270, %v6378
        %v6380 = vlaneseq
        %v6381 = vshrl.u32 %v6380, 7
        %v6382 = vsub.s32 %v437, %v6381
        %v6383 = vrot.slane %v6273, %v6382
        %v6384 = vlaneseq
        %v6385 = vshrl.u32 %v6384, 7
        %v6386 = vsub.s32 %v437, %v6385
        %v6387 = vrot.slane %v6276, %v6386
        %v6388 = vlaneseq
        %v6389 = vshrl.u32 %v6388, 7
        %v6390 = vsub.s32 %v437, %v6389
        %v6391 = vrot.slane %v6279, %v6390
        %v6392 = vsel %vm2340, %v6287, %v6283
        %v6393 = vsel %vm2342, %v6291, %v6392
        %v6394 = vsel %vm2344, %v6295, %v6393
        %v6395 = vsel %vm2346, %v6299, %v6394
        %v6396 = vsel %vm2348, %v6303, %v6395
        %v6397 = vsel %vm2350, %v6307, %v6396
        %v6398 = vsel %vm2340, %v6315, %v6311
        %v6399 = vsel %vm2342, %v6319, %v6398
        %v6400 = vsel %vm2344, %v6323, %v6399
        %v6401 = vsel %vm2346, %v6327, %v6400
        %v6402 = vsel %vm2348, %v6331, %v6401
        %v6403 = vsel %vm2350, %v6335, %v6402
        %v6404 = vsel %vm2340, %v6343, %v6339
        %v6405 = vsel %vm2342, %v6347, %v6404
        %v6406 = vsel %vm2344, %v6351, %v6405
        %v6407 = vsel %vm2346, %v6355, %v6406
        %v6408 = vsel %vm2348, %v6359, %v6407
        %v6409 = vsel %vm2350, %v6363, %v6408
        %v6410 = vsel %vm2340, %v6371, %v6367
        %v6411 = vsel %vm2342, %v6375, %v6410
        %v6412 = vsel %vm2344, %v6379, %v6411
        %v6413 = vsel %vm2346, %v6383, %v6412
        %v6414 = vsel %vm2348, %v6387, %v6413
        %v6415 = vsel %vm2350, %v6391, %v6414
        %v6420 = vsel %vm1913, %v6397, -inf
        %6421 = vmax.xlane.f32.xlu0 %v6420
        %v6422 = vpop.xlane.xlu0 %6421
        %v6423 = vsel %vm1913, %v6403, -inf
        %6424 = vmax.xlane.f32.xlu0 %v6423
        %v6425 = vpop.xlane.xlu0 %6424
        %v6426 = vsel %vm1913, %v6409, -inf
        %6427 = vmax.xlane.f32.xlu0 %v6426
        %v6428 = vpop.xlane.xlu0 %6427
        %v6429 = vsel %vm1913, %v6415, -inf
        %6430 = vmax.xlane.f32.xlu0 %v6429
        %v6431 = vpop.xlane.xlu0 %6430
        %v6436 = vlaneseq
        %v6437 = vshrl.u32 %v6436, 7
        %v6438 = vsub.s32 0, %v6437
        %v6439 = vrot.slane %v6422, %v6438
        %v6440 = vlaneseq
        %v6441 = vshrl.u32 %v6440, 7
        %v6442 = vsub.s32 1, %v6441
        %v6443 = vrot.slane %v6422, %v6442
        %v6444 = vlaneseq
        %v6445 = vshrl.u32 %v6444, 7
        %v6446 = vsub.s32 2, %v6445
        %v6447 = vrot.slane %v6422, %v6446
        %v6448 = vlaneseq
        %v6449 = vshrl.u32 %v6448, 7
        %v6450 = vsub.s32 3, %v6449
        %v6451 = vrot.slane %v6422, %v6450
        %v6452 = vlaneseq
        %v6453 = vshrl.u32 %v6452, 7
        %v6454 = vsub.s32 4, %v6453
        %v6455 = vrot.slane %v6422, %v6454
        %v6456 = vlaneseq
        %v6457 = vshrl.u32 %v6456, 7
        %v6458 = vsub.s32 5, %v6457
        %v6459 = vrot.slane %v6422, %v6458
        %v6460 = vlaneseq
        %v6461 = vshrl.u32 %v6460, 7
        %v6462 = vsub.s32 6, %v6461
        %v6463 = vrot.slane %v6422, %v6462
        %v6464 = vlaneseq
        %v6465 = vshrl.u32 %v6464, 7
        %v6466 = vsub.s32 0, %v6465
        %v6467 = vrot.slane %v6425, %v6466
        %v6468 = vlaneseq
        %v6469 = vshrl.u32 %v6468, 7
        %v6470 = vsub.s32 1, %v6469
        %v6471 = vrot.slane %v6425, %v6470
        %v6472 = vlaneseq
        %v6473 = vshrl.u32 %v6472, 7
        %v6474 = vsub.s32 2, %v6473
        %v6475 = vrot.slane %v6425, %v6474
        %v6476 = vlaneseq
        %v6477 = vshrl.u32 %v6476, 7
        %v6478 = vsub.s32 3, %v6477
        %v6479 = vrot.slane %v6425, %v6478
        %v6480 = vlaneseq
        %v6481 = vshrl.u32 %v6480, 7
        %v6482 = vsub.s32 4, %v6481
        %v6483 = vrot.slane %v6425, %v6482
        %v6484 = vlaneseq
        %v6485 = vshrl.u32 %v6484, 7
        %v6486 = vsub.s32 5, %v6485
        %v6487 = vrot.slane %v6425, %v6486
        %v6488 = vlaneseq
        %v6489 = vshrl.u32 %v6488, 7
        %v6490 = vsub.s32 6, %v6489
        %v6491 = vrot.slane %v6425, %v6490
        %v6492 = vlaneseq
        %v6493 = vshrl.u32 %v6492, 7
        %v6494 = vsub.s32 0, %v6493
        %v6495 = vrot.slane %v6428, %v6494
        %v6496 = vlaneseq
        %v6497 = vshrl.u32 %v6496, 7
        %v6498 = vsub.s32 1, %v6497
        %v6499 = vrot.slane %v6428, %v6498
        %v6500 = vlaneseq
        %v6501 = vshrl.u32 %v6500, 7
        %v6502 = vsub.s32 2, %v6501
        %v6503 = vrot.slane %v6428, %v6502
        %v6504 = vlaneseq
        %v6505 = vshrl.u32 %v6504, 7
        %v6506 = vsub.s32 3, %v6505
        %v6507 = vrot.slane %v6428, %v6506
        %v6508 = vlaneseq
        %v6509 = vshrl.u32 %v6508, 7
        %v6510 = vsub.s32 4, %v6509
        %v6511 = vrot.slane %v6428, %v6510
        %v6512 = vlaneseq
        %v6513 = vshrl.u32 %v6512, 7
        %v6514 = vsub.s32 5, %v6513
        %v6515 = vrot.slane %v6428, %v6514
        %v6516 = vlaneseq
        %v6517 = vshrl.u32 %v6516, 7
        %v6518 = vsub.s32 6, %v6517
        %v6519 = vrot.slane %v6428, %v6518
        %v6520 = vlaneseq
        %v6521 = vshrl.u32 %v6520, 7
        %v6522 = vsub.s32 0, %v6521
        %v6523 = vrot.slane %v6431, %v6522
        %v6524 = vlaneseq
        %v6525 = vshrl.u32 %v6524, 7
        %v6526 = vsub.s32 1, %v6525
        %v6527 = vrot.slane %v6431, %v6526
        %v6528 = vlaneseq
        %v6529 = vshrl.u32 %v6528, 7
        %v6530 = vsub.s32 2, %v6529
        %v6531 = vrot.slane %v6431, %v6530
        %v6532 = vlaneseq
        %v6533 = vshrl.u32 %v6532, 7
        %v6534 = vsub.s32 3, %v6533
        %v6535 = vrot.slane %v6431, %v6534
        %v6536 = vlaneseq
        %v6537 = vshrl.u32 %v6536, 7
        %v6538 = vsub.s32 4, %v6537
        %v6539 = vrot.slane %v6431, %v6538
        %v6540 = vlaneseq
        %v6541 = vshrl.u32 %v6540, 7
        %v6542 = vsub.s32 5, %v6541
        %v6543 = vrot.slane %v6431, %v6542
        %v6544 = vlaneseq
        %v6545 = vshrl.u32 %v6544, 7
        %v6546 = vsub.s32 6, %v6545
        %v6547 = vrot.slane %v6431, %v6546
        %vm6576 = vcmp.eq.f32.partialorder %v6140, %v6439
        %vm6577 = vcmp.eq.f32.partialorder %v6141, %v6443
        %vm6578 = vcmp.eq.f32.partialorder %v6142, %v6447
        %vm6579 = vcmp.eq.f32.partialorder %v6143, %v6451
        %vm6580 = vcmp.eq.f32.partialorder %v6144, %v6455
        %vm6581 = vcmp.eq.f32.partialorder %v6145, %v6459
        %vm6582 = vcmp.eq.f32.partialorder %v6146, %v6463
        %vm6583 = vcmp.eq.f32.partialorder %v6147, %v6467
        %vm6584 = vcmp.eq.f32.partialorder %v6148, %v6471
        %vm6585 = vcmp.eq.f32.partialorder %v6149, %v6475
        %vm6586 = vcmp.eq.f32.partialorder %v6150, %v6479
        %vm6587 = vcmp.eq.f32.partialorder %v6151, %v6483
        %vm6588 = vcmp.eq.f32.partialorder %v6152, %v6487
        %vm6589 = vcmp.eq.f32.partialorder %v6153, %v6491
        %vm6590 = vcmp.eq.f32.partialorder %v6154, %v6495
        %vm6591 = vcmp.eq.f32.partialorder %v6155, %v6499
        %vm6592 = vcmp.eq.f32.partialorder %v6156, %v6503
        %vm6593 = vcmp.eq.f32.partialorder %v6157, %v6507
        %vm6594 = vcmp.eq.f32.partialorder %v6158, %v6511
        %vm6595 = vcmp.eq.f32.partialorder %v6159, %v6515
        %vm6596 = vcmp.eq.f32.partialorder %v6160, %v6519
        %vm6597 = vcmp.eq.f32.partialorder %v6161, %v6523
        %vm6598 = vcmp.eq.f32.partialorder %v6162, %v6527
        %vm6599 = vcmp.eq.f32.partialorder %v6163, %v6531
        %vm6600 = vcmp.eq.f32.partialorder %v6164, %v6535
        %vm6601 = vcmp.eq.f32.partialorder %v6165, %v6539
        %vm6602 = vcmp.eq.f32.partialorder %v6166, %v6543
        %vm6603 = vcmp.eq.f32.partialorder %v6167, %v6547
        %v6604 = vsel %vm6576, %v2560, 1073741824
        %v6605 = vsel %vm6577, %v2560, 1073741824
        %v6606 = vsel %vm6578, %v2560, 1073741824
        %v6607 = vsel %vm6579, %v2560, 1073741824
        %v6608 = vsel %vm6580, %v2560, 1073741824
        %v6609 = vsel %vm6581, %v2560, 1073741824
        %v6610 = vsel %vm6582, %v2560, 1073741824
        %v6611 = vsel %vm6583, %v2560, 1073741824
        %v6612 = vsel %vm6584, %v2560, 1073741824
        %v6613 = vsel %vm6585, %v2560, 1073741824
        %v6614 = vsel %vm6586, %v2560, 1073741824
        %v6615 = vsel %vm6587, %v2560, 1073741824
        %v6616 = vsel %vm6588, %v2560, 1073741824
        %v6617 = vsel %vm6589, %v2560, 1073741824
        %v6618 = vsel %vm6590, %v2560, 1073741824
        %v6619 = vsel %vm6591, %v2560, 1073741824
        %v6620 = vsel %vm6592, %v2560, 1073741824
        %v6621 = vsel %vm6593, %v2560, 1073741824
        %v6622 = vsel %vm6594, %v2560, 1073741824
        %v6623 = vsel %vm6595, %v2560, 1073741824
        %v6624 = vsel %vm6596, %v2560, 1073741824
        %v6625 = vsel %vm6597, %v2560, 1073741824
        %v6626 = vsel %vm6598, %v2560, 1073741824
        %v6627 = vsel %vm6599, %v2560, 1073741824
        %v6628 = vsel %vm6600, %v2560, 1073741824
        %v6629 = vsel %vm6601, %v2560, 1073741824
        %v6630 = vsel %vm6602, %v2560, 1073741824
        %v6631 = vsel %vm6603, %v2560, 1073741824
        %6632 = vset.pattern.permute.xlu0 0
        %6633 = vperm.xlu0 %6632, %v6604
        %v6634 = vpop.permute.xlu0 %6633
        %6635 = vset.pattern.permute.xlu0 0
        %6636 = vperm.xlu0 %6635, %v6605
        %v6637 = vpop.permute.xlu0 %6636
        %6638 = vset.pattern.permute.xlu0 0
        %6639 = vperm.xlu0 %6638, %v6606
        %v6640 = vpop.permute.xlu0 %6639
        %6641 = vset.pattern.permute.xlu0 0
        %6642 = vperm.xlu0 %6641, %v6607
        %v6643 = vpop.permute.xlu0 %6642
        %6644 = vset.pattern.permute.xlu0 0
        %6645 = vperm.xlu0 %6644, %v6608
        %v6646 = vpop.permute.xlu0 %6645
        %6647 = vset.pattern.permute.xlu0 0
        %6648 = vperm.xlu0 %6647, %v6609
        %v6649 = vpop.permute.xlu0 %6648
        %6650 = vset.pattern.permute.xlu0 0
        %6651 = vperm.xlu0 %6650, %v6610
        %v6652 = vpop.permute.xlu0 %6651
        %6653 = vset.pattern.permute.xlu0 0
        %6654 = vperm.xlu0 %6653, %v6611
        %v6655 = vpop.permute.xlu0 %6654
        %6656 = vset.pattern.permute.xlu0 0
        %6657 = vperm.xlu0 %6656, %v6612
        %v6658 = vpop.permute.xlu0 %6657
        %6659 = vset.pattern.permute.xlu0 0
        %6660 = vperm.xlu0 %6659, %v6613
        %v6661 = vpop.permute.xlu0 %6660
        %6662 = vset.pattern.permute.xlu0 0
        %6663 = vperm.xlu0 %6662, %v6614
        %v6664 = vpop.permute.xlu0 %6663
        %6665 = vset.pattern.permute.xlu0 0
        %6666 = vperm.xlu0 %6665, %v6615
        %v6667 = vpop.permute.xlu0 %6666
        %6668 = vset.pattern.permute.xlu0 0
        %6669 = vperm.xlu0 %6668, %v6616
        %v6670 = vpop.permute.xlu0 %6669
        %6671 = vset.pattern.permute.xlu0 0
        %6672 = vperm.xlu0 %6671, %v6617
        %v6673 = vpop.permute.xlu0 %6672
        %6674 = vset.pattern.permute.xlu0 0
        %6675 = vperm.xlu0 %6674, %v6618
        %v6676 = vpop.permute.xlu0 %6675
        %6677 = vset.pattern.permute.xlu0 0
        %6678 = vperm.xlu0 %6677, %v6619
        %v6679 = vpop.permute.xlu0 %6678
        %6680 = vset.pattern.permute.xlu0 0
        %6681 = vperm.xlu0 %6680, %v6620
        %v6682 = vpop.permute.xlu0 %6681
        %6683 = vset.pattern.permute.xlu0 0
        %6684 = vperm.xlu0 %6683, %v6621
        %v6685 = vpop.permute.xlu0 %6684
        %6686 = vset.pattern.permute.xlu0 0
        %6687 = vperm.xlu0 %6686, %v6622
        %v6688 = vpop.permute.xlu0 %6687
        %6689 = vset.pattern.permute.xlu0 0
        %6690 = vperm.xlu0 %6689, %v6623
        %v6691 = vpop.permute.xlu0 %6690
        %6692 = vset.pattern.permute.xlu0 0
        %6693 = vperm.xlu0 %6692, %v6624
        %v6694 = vpop.permute.xlu0 %6693
        %6695 = vset.pattern.permute.xlu0 0
        %6696 = vperm.xlu0 %6695, %v6625
        %v6697 = vpop.permute.xlu0 %6696
        %6698 = vset.pattern.permute.xlu0 0
        %6699 = vperm.xlu0 %6698, %v6626
        %v6700 = vpop.permute.xlu0 %6699
        %6701 = vset.pattern.permute.xlu0 0
        %6702 = vperm.xlu0 %6701, %v6627
        %v6703 = vpop.permute.xlu0 %6702
        %6704 = vset.pattern.permute.xlu0 0
        %6705 = vperm.xlu0 %6704, %v6628
        %v6706 = vpop.permute.xlu0 %6705
        %6707 = vset.pattern.permute.xlu0 0
        %6708 = vperm.xlu0 %6707, %v6629
        %v6709 = vpop.permute.xlu0 %6708
        %6710 = vset.pattern.permute.xlu0 0
        %6711 = vperm.xlu0 %6710, %v6630
        %v6712 = vpop.permute.xlu0 %6711
        %6713 = vset.pattern.permute.xlu0 0
        %6714 = vperm.xlu0 %6713, %v6631
        %v6715 = vpop.permute.xlu0 %6714
        %v6716 = vlaneseq
        %v6717 = vshrl.u32 %v6716, 7
        %v6718 = vsub.s32 %v437, %v6717
        %v6719 = vrot.slane %v6634, %v6718
        %v6720 = vlaneseq
        %v6721 = vshrl.u32 %v6720, 7
        %v6722 = vsub.s32 %v437, %v6721
        %v6723 = vrot.slane %v6637, %v6722
        %v6724 = vlaneseq
        %v6725 = vshrl.u32 %v6724, 7
        %v6726 = vsub.s32 %v437, %v6725
        %v6727 = vrot.slane %v6640, %v6726
        %v6728 = vlaneseq
        %v6729 = vshrl.u32 %v6728, 7
        %v6730 = vsub.s32 %v437, %v6729
        %v6731 = vrot.slane %v6643, %v6730
        %v6732 = vlaneseq
        %v6733 = vshrl.u32 %v6732, 7
        %v6734 = vsub.s32 %v437, %v6733
        %v6735 = vrot.slane %v6646, %v6734
        %v6736 = vlaneseq
        %v6737 = vshrl.u32 %v6736, 7
        %v6738 = vsub.s32 %v437, %v6737
        %v6739 = vrot.slane %v6649, %v6738
        %v6740 = vlaneseq
        %v6741 = vshrl.u32 %v6740, 7
        %v6742 = vsub.s32 %v437, %v6741
        %v6743 = vrot.slane %v6652, %v6742
        %v6744 = vlaneseq
        %v6745 = vshrl.u32 %v6744, 7
        %v6746 = vsub.s32 %v437, %v6745
        %v6747 = vrot.slane %v6655, %v6746
        %v6748 = vlaneseq
        %v6749 = vshrl.u32 %v6748, 7
        %v6750 = vsub.s32 %v437, %v6749
        %v6751 = vrot.slane %v6658, %v6750
        %v6752 = vlaneseq
        %v6753 = vshrl.u32 %v6752, 7
        %v6754 = vsub.s32 %v437, %v6753
        %v6755 = vrot.slane %v6661, %v6754
        %v6756 = vlaneseq
        %v6757 = vshrl.u32 %v6756, 7
        %v6758 = vsub.s32 %v437, %v6757
        %v6759 = vrot.slane %v6664, %v6758
        %v6760 = vlaneseq
        %v6761 = vshrl.u32 %v6760, 7
        %v6762 = vsub.s32 %v437, %v6761
        %v6763 = vrot.slane %v6667, %v6762
        %v6764 = vlaneseq
        %v6765 = vshrl.u32 %v6764, 7
        %v6766 = vsub.s32 %v437, %v6765
        %v6767 = vrot.slane %v6670, %v6766
        %v6768 = vlaneseq
        %v6769 = vshrl.u32 %v6768, 7
        %v6770 = vsub.s32 %v437, %v6769
        %v6771 = vrot.slane %v6673, %v6770
        %v6772 = vlaneseq
        %v6773 = vshrl.u32 %v6772, 7
        %v6774 = vsub.s32 %v437, %v6773
        %v6775 = vrot.slane %v6676, %v6774
        %v6776 = vlaneseq
        %v6777 = vshrl.u32 %v6776, 7
        %v6778 = vsub.s32 %v437, %v6777
        %v6779 = vrot.slane %v6679, %v6778
        %v6780 = vlaneseq
        %v6781 = vshrl.u32 %v6780, 7
        %v6782 = vsub.s32 %v437, %v6781
        %v6783 = vrot.slane %v6682, %v6782
        %v6784 = vlaneseq
        %v6785 = vshrl.u32 %v6784, 7
        %v6786 = vsub.s32 %v437, %v6785
        %v6787 = vrot.slane %v6685, %v6786
        %v6788 = vlaneseq
        %v6789 = vshrl.u32 %v6788, 7
        %v6790 = vsub.s32 %v437, %v6789
        %v6791 = vrot.slane %v6688, %v6790
        %v6792 = vlaneseq
        %v6793 = vshrl.u32 %v6792, 7
        %v6794 = vsub.s32 %v437, %v6793
        %v6795 = vrot.slane %v6691, %v6794
        %v6796 = vlaneseq
        %v6797 = vshrl.u32 %v6796, 7
        %v6798 = vsub.s32 %v437, %v6797
        %v6799 = vrot.slane %v6694, %v6798
        %v6800 = vlaneseq
        %v6801 = vshrl.u32 %v6800, 7
        %v6802 = vsub.s32 %v437, %v6801
        %v6803 = vrot.slane %v6697, %v6802
        %v6804 = vlaneseq
        %v6805 = vshrl.u32 %v6804, 7
        %v6806 = vsub.s32 %v437, %v6805
        %v6807 = vrot.slane %v6700, %v6806
        %v6808 = vlaneseq
        %v6809 = vshrl.u32 %v6808, 7
        %v6810 = vsub.s32 %v437, %v6809
        %v6811 = vrot.slane %v6703, %v6810
        %v6812 = vlaneseq
        %v6813 = vshrl.u32 %v6812, 7
        %v6814 = vsub.s32 %v437, %v6813
        %v6815 = vrot.slane %v6706, %v6814
        %v6816 = vlaneseq
        %v6817 = vshrl.u32 %v6816, 7
        %v6818 = vsub.s32 %v437, %v6817
        %v6819 = vrot.slane %v6709, %v6818
        %v6820 = vlaneseq
        %v6821 = vshrl.u32 %v6820, 7
        %v6822 = vsub.s32 %v437, %v6821
        %v6823 = vrot.slane %v6712, %v6822
        %v6824 = vlaneseq
        %v6825 = vshrl.u32 %v6824, 7
        %v6826 = vsub.s32 %v437, %v6825
        %v6827 = vrot.slane %v6715, %v6826
        %v6828 = vsel %vm2340, %v6723, %v6719
        %v6829 = vsel %vm2342, %v6727, %v6828
        %v6830 = vsel %vm2344, %v6731, %v6829
        %v6831 = vsel %vm2346, %v6735, %v6830
        %v6832 = vsel %vm2348, %v6739, %v6831
        %v6833 = vsel %vm2350, %v6743, %v6832
        %v6834 = vsel %vm2340, %v6751, %v6747
        %v6835 = vsel %vm2342, %v6755, %v6834
        %v6836 = vsel %vm2344, %v6759, %v6835
        %v6837 = vsel %vm2346, %v6763, %v6836
        %v6838 = vsel %vm2348, %v6767, %v6837
        %v6839 = vsel %vm2350, %v6771, %v6838
        %v6840 = vsel %vm2340, %v6779, %v6775
        %v6841 = vsel %vm2342, %v6783, %v6840
        %v6842 = vsel %vm2344, %v6787, %v6841
        %v6843 = vsel %vm2346, %v6791, %v6842
        %v6844 = vsel %vm2348, %v6795, %v6843
        %v6845 = vsel %vm2350, %v6799, %v6844
        %v6846 = vsel %vm2340, %v6807, %v6803
        %v6847 = vsel %vm2342, %v6811, %v6846
        %v6848 = vsel %vm2344, %v6815, %v6847
        %v6849 = vsel %vm2346, %v6819, %v6848
        %v6850 = vsel %vm2348, %v6823, %v6849
        %v6851 = vsel %vm2350, %v6827, %v6850
        %v6852 = vsel %vm1913, %v6833, 2147483647
        %v6853 = vand.u32 %v6852, 65535
        %v6854 = vshra.s32 %v6852, 16
        %v6855 = vcvt.s32.f32 %v6853
        %v6856 = vcvt.s32.f32 %v6854
        %6857 = vmin.xlane.f32.xlu0 %v6856
        %v6858 = vpop.xlane.xlu0 %6857
        %vm6859 = vcmp.eq.f32.partialorder %v6856, %v6858
        %v6860 = vsel %vm6859, %v6855, inf
        %6861 = vmin.xlane.f32.xlu0 %v6860
        %v6862 = vpop.xlane.xlu0 %6861
        %v6863 = vcvt.f32.s32 %v6862
        %v6864 = vcvt.f32.s32 %v6858
        %v6865 = vshll.u32 %v6864, 16
        %v6866 = vadd.s32 %v6865, %v6863
        %v6867 = vsel %vm1913, %v6839, 2147483647
        %v6868 = vand.u32 %v6867, 65535
        %v6869 = vshra.s32 %v6867, 16
        %v6870 = vcvt.s32.f32 %v6868
        %v6871 = vcvt.s32.f32 %v6869
        %6872 = vmin.xlane.f32.xlu0 %v6871
        %v6873 = vpop.xlane.xlu0 %6872
        %vm6874 = vcmp.eq.f32.partialorder %v6871, %v6873
        %v6875 = vsel %vm6874, %v6870, inf
        %6876 = vmin.xlane.f32.xlu0 %v6875
        %v6877 = vpop.xlane.xlu0 %6876
        %v6878 = vcvt.f32.s32 %v6877
        %v6879 = vcvt.f32.s32 %v6873
        %v6880 = vshll.u32 %v6879, 16
        %v6881 = vadd.s32 %v6880, %v6878
        %v6882 = vsel %vm1913, %v6845, 2147483647
        %v6883 = vand.u32 %v6882, 65535
        %v6884 = vshra.s32 %v6882, 16
        %v6885 = vcvt.s32.f32 %v6883
        %v6886 = vcvt.s32.f32 %v6884
        %6887 = vmin.xlane.f32.xlu0 %v6886
        %v6888 = vpop.xlane.xlu0 %6887
        %vm6889 = vcmp.eq.f32.partialorder %v6886, %v6888
        %v6890 = vsel %vm6889, %v6885, inf
        %6891 = vmin.xlane.f32.xlu0 %v6890
        %v6892 = vpop.xlane.xlu0 %6891
        %v6893 = vcvt.f32.s32 %v6892
        %v6894 = vcvt.f32.s32 %v6888
        %v6895 = vshll.u32 %v6894, 16
        %v6896 = vadd.s32 %v6895, %v6893
        %v6897 = vsel %vm1913, %v6851, 2147483647
        %v6898 = vand.u32 %v6897, 65535
        %v6899 = vshra.s32 %v6897, 16
        %v6900 = vcvt.s32.f32 %v6898
        %v6901 = vcvt.s32.f32 %v6899
        %6902 = vmin.xlane.f32.xlu0 %v6901
        %v6903 = vpop.xlane.xlu0 %6902
        %vm6904 = vcmp.eq.f32.partialorder %v6901, %v6903
        %v6905 = vsel %vm6904, %v6900, inf
        %6906 = vmin.xlane.f32.xlu0 %v6905
        %v6907 = vpop.xlane.xlu0 %6906
        %v6908 = vcvt.f32.s32 %v6907
        %v6909 = vcvt.f32.s32 %v6903
        %v6910 = vshll.u32 %v6909, 16
        %v6911 = vadd.s32 %v6910, %v6908
        %v6912 = vlaneseq
        %v6913 = vshrl.u32 %v6912, 7
        %v6914 = vsub.s32 4, %v6913
        %v6915 = vrot.slane %v1853, %v6914
        %6917 = vbcast.lane.b32.xlu0 %v6915, 256
        %v6918 = vpop.permute.xlu0 %6917
        %v6919 = vlaneseq
        %v6920 = vshrl.u32 %v6919, 7
        %v6921 = vsub.s32 5, %v6920
        %v6922 = vrot.slane %v1853, %v6921
        %6924 = vbcast.lane.b32.xlu0 %v6922, 256
        %v6925 = vpop.permute.xlu0 %6924
        %v6926 = vlaneseq
        %v6927 = vshrl.u32 %v6926, 7
        %v6928 = vsub.s32 6, %v6927
        %v6929 = vrot.slane %v1853, %v6928
        %6931 = vbcast.lane.b32.xlu0 %v6929, 256
        %v6932 = vpop.permute.xlu0 %6931
        %v6933 = vlaneseq
        %v6934 = vshrl.u32 %v6933, 7
        %v6935 = vsub.s32 7, %v6934
        %v6936 = vrot.slane %v1853, %v6935
        %6938 = vbcast.lane.b32.xlu0 %v6936, 256
        %v6939 = vpop.permute.xlu0 %6938
        %v6944 = vadd.f32 %v6422, %v6918
        %v6945 = vadd.f32 %v6425, %v6925
        %v6946 = vadd.f32 %v6428, %v6932
        %v6947 = vadd.f32 %v6431, %v6939
        %v6949 = vlaneseq
        %v6950 = vshrl.u32 %v6949, 7
        %v6951 = vsub.s32 0, %v6950
        %v6952 = vrot.slane %v1856, %v6951
        %6954 = vbcast.lane.b32.xlu0 %v6952, 256
        %v6955 = vpop.permute.xlu0 %6954
        %v6957 = vadd.f32 %v6944, %v6955
        %v6958 = vadd.f32 %v6945, %v6955
        %v6959 = vadd.f32 %v6946, %v6955
        %v6960 = vadd.f32 %v6947, %v6955
        %6965 = vset.pattern.permute.xlu0 0
        %6966 = vperm.xlu0 %6965, %v6957
        %v6967 = vpop.permute.xlu0 %6966
        %6968 = vset.pattern.permute.xlu0 0
        %6969 = vperm.xlu0 %6968, %v6958
        %v6970 = vpop.permute.xlu0 %6969
        %6971 = vset.pattern.permute.xlu0 0
        %6972 = vperm.xlu0 %6971, %v6959
        %v6973 = vpop.permute.xlu0 %6972
        %6974 = vset.pattern.permute.xlu0 0
        %6975 = vperm.xlu0 %6974, %v6960
        %v6976 = vpop.permute.xlu0 %6975
        %v6977 = vlaneseq
        %v6978 = vshrl.u32 %v6977, 7
        %v6979 = vsub.s32 %v437, %v6978
        %v6980 = vrot.slane %v6967, %v6979
        %v6981 = vlaneseq
        %v6982 = vshrl.u32 %v6981, 7
        %v6983 = vsub.s32 %v437, %v6982
        %v6984 = vrot.slane %v6970, %v6983
        %v6985 = vlaneseq
        %v6986 = vshrl.u32 %v6985, 7
        %v6987 = vsub.s32 %v437, %v6986
        %v6988 = vrot.slane %v6973, %v6987
        %v6989 = vlaneseq
        %v6990 = vshrl.u32 %v6989, 7
        %v6991 = vsub.s32 %v437, %v6990
        %v6992 = vrot.slane %v6976, %v6991
        %v6993 = vsel %vm2340, %v6984, %v6980
        %v6994 = vsel %vm2342, %v6988, %v6993
        %v6995 = vsel %vm2344, %v6992, %v6994
        %vm6997 = vcmask 52224
        %v6998 = vsel %vm6997, %v6995, -inf
        %6999 = vmax.xlane.f32.xlu0 %v6998
        %v7000 = vpop.xlane.xlu0 %6999
        %v7002 = vlaneseq
        %v7003 = vshrl.u32 %v7002, 7
        %v7004 = vsub.s32 0, %v7003
        %v7005 = vrot.slane %v7000, %v7004
        %v7006 = vlaneseq
        %v7007 = vshrl.u32 %v7006, 7
        %v7008 = vsub.s32 1, %v7007
        %v7009 = vrot.slane %v7000, %v7008
        %v7010 = vlaneseq
        %v7011 = vshrl.u32 %v7010, 7
        %v7012 = vsub.s32 2, %v7011
        %v7013 = vrot.slane %v7000, %v7012
        %v7014 = vlaneseq
        %v7015 = vshrl.u32 %v7014, 7
        %v7016 = vsub.s32 3, %v7015
        %v7017 = vrot.slane %v7000, %v7016
        %vm7022 = vcmp.eq.f32.partialorder %v6957, %v7005
        %vm7023 = vcmp.eq.f32.partialorder %v6958, %v7009
        %vm7024 = vcmp.eq.f32.partialorder %v6959, %v7013
        %vm7025 = vcmp.eq.f32.partialorder %v6960, %v7017
        %v7026 = vsel %vm7022, %v2560, 1073741824
        %v7027 = vsel %vm7023, %v2560, 1073741824
        %v7028 = vsel %vm7024, %v2560, 1073741824
        %v7029 = vsel %vm7025, %v2560, 1073741824
        %7030 = vset.pattern.permute.xlu0 0
        %7031 = vperm.xlu0 %7030, %v7026
        %v7032 = vpop.permute.xlu0 %7031
        %7033 = vset.pattern.permute.xlu0 0
        %7034 = vperm.xlu0 %7033, %v7027
        %v7035 = vpop.permute.xlu0 %7034
        %7036 = vset.pattern.permute.xlu0 0
        %7037 = vperm.xlu0 %7036, %v7028
        %v7038 = vpop.permute.xlu0 %7037
        %7039 = vset.pattern.permute.xlu0 0
        %7040 = vperm.xlu0 %7039, %v7029
        %v7041 = vpop.permute.xlu0 %7040
        %v7042 = vlaneseq
        %v7043 = vshrl.u32 %v7042, 7
        %v7044 = vsub.s32 %v437, %v7043
        %v7045 = vrot.slane %v7032, %v7044
        %v7046 = vlaneseq
        %v7047 = vshrl.u32 %v7046, 7
        %v7048 = vsub.s32 %v437, %v7047
        %v7049 = vrot.slane %v7035, %v7048
        %v7050 = vlaneseq
        %v7051 = vshrl.u32 %v7050, 7
        %v7052 = vsub.s32 %v437, %v7051
        %v7053 = vrot.slane %v7038, %v7052
        %v7054 = vlaneseq
        %v7055 = vshrl.u32 %v7054, 7
        %v7056 = vsub.s32 %v437, %v7055
        %v7057 = vrot.slane %v7041, %v7056
        %v7058 = vsel %vm2340, %v7049, %v7045
        %v7059 = vsel %vm2342, %v7053, %v7058
        %v7060 = vsel %vm2344, %v7057, %v7059
        %v7061 = vsel %vm6997, %v7060, 2147483647
        %v7062 = vand.u32 %v7061, 65535
        %v7063 = vshra.s32 %v7061, 16
        %v7064 = vcvt.s32.f32 %v7062
        %v7065 = vcvt.s32.f32 %v7063
        %7066 = vmin.xlane.f32.xlu0 %v7065
        %v7067 = vpop.xlane.xlu0 %7066
        %vm7068 = vcmp.eq.f32.partialorder %v7065, %v7067
        %v7069 = vsel %vm7068, %v7064, inf
        %7070 = vmin.xlane.f32.xlu0 %v7069
        %v7071 = vpop.xlane.xlu0 %7070
        %v7072 = vcvt.f32.s32 %v7071
        %v7073 = vcvt.f32.s32 %v7067
        %v7074 = vshll.u32 %v7073, 16
        %v7075 = vadd.s32 %v7074, %v7072
        %vm7076 = vcmp.eq.s32.totalorder %v437, %v7075
        %v7077 = vlaneseq
        %v7078 = vshrl.u32 %v7077, 7
        %v7079 = vsub.s32 %v437, %v7078
        %v7080 = vrot.slane %v6866, %v7079
        %v7081 = vlaneseq
        %v7082 = vshrl.u32 %v7081, 7
        %v7083 = vsub.s32 %v437, %v7082
        %v7084 = vrot.slane %v6881, %v7083
        %v7085 = vlaneseq
        %v7086 = vshrl.u32 %v7085, 7
        %v7087 = vsub.s32 %v437, %v7086
        %v7088 = vrot.slane %v6896, %v7087
        %v7089 = vlaneseq
        %v7090 = vshrl.u32 %v7089, 7
        %v7091 = vsub.s32 %v437, %v7090
        %v7092 = vrot.slane %v6911, %v7091
        %v7093 = vsel %vm2340, %v7084, %v7080
        %v7094 = vsel %vm2342, %v7088, %v7093
        %v7095 = vsel %vm2344, %v7092, %v7094
        %v7096 = vsel %vm7076, %v7095, 0
        %v7097 = vsel %vm6997, %v7096, 0
        %v7098 = vand.u32 %v7097, 65535
        %v7099 = vshrl.u32 %v7097, 16
        %v7100 = vcvt.s32.f32 %v7098
        %v7101 = vcvt.s32.f32 %v7099
        %7102 = vadd.xlane.f32.xlu0 %v7100
        %v7103 = vpop.xlane.xlu0 %7102
        %7104 = vadd.xlane.f32.xlu0 %v7101
        %v7105 = vpop.xlane.xlu0 %7104
        %v7106 = vcvt.f32.s32 %v7103
        %v7107 = vcvt.f32.s32 %v7105
        %v7108 = vshll.u32 %v7107, 16
        %v7109 = vadd.s32 %v7108, %v7106
        %vm7110 = vcmp.eq.s32.totalorder %v437, %v7109
        %v7111 = vlaneseq
        %v7112 = vshrl.u32 %v7111, 7
        %v7113 = vsub.s32 %v437, %v7112
        %v7114 = vrot.slane %v6057, %v7113
        %v7115 = vlaneseq
        %v7116 = vshrl.u32 %v7115, 7
        %v7117 = vsub.s32 %v437, %v7116
        %v7118 = vrot.slane %v6072, %v7117
        %v7119 = vlaneseq
        %v7120 = vshrl.u32 %v7119, 7
        %v7121 = vsub.s32 %v437, %v7120
        %v7122 = vrot.slane %v6087, %v7121
        %v7123 = vlaneseq
        %v7124 = vshrl.u32 %v7123, 7
        %v7125 = vsub.s32 %v437, %v7124
        %v7126 = vrot.slane %v6102, %v7125
        %v7127 = vsel %vm2340, %v7118, %v7114
        %v7128 = vsel %vm2342, %v7122, %v7127
        %v7129 = vsel %vm2344, %v7126, %v7128
        %v7130 = vsel %vm7110, %v7129, 0
        %v7131 = vsel %vm6997, %v7130, 0
        %v7132 = vand.u32 %v7131, 65535
        %v7133 = vshrl.u32 %v7131, 16
        %v7134 = vcvt.s32.f32 %v7132
        %v7135 = vcvt.s32.f32 %v7133
        %7136 = vadd.xlane.f32.xlu0 %v7134
        %v7137 = vpop.xlane.xlu0 %7136
        %7138 = vadd.xlane.f32.xlu0 %v7135
        %v7139 = vpop.xlane.xlu0 %7138
        %v7140 = vcvt.f32.s32 %v7137
        %v7141 = vcvt.f32.s32 %v7139
        %v7142 = vshll.u32 %v7141, 16
        %v7143 = vadd.s32 %v7142, %v7140
        %vm7144 = vcmp.eq.s32.totalorder %v437, %v7143
        %v7145 = vlaneseq
        %v7146 = vshrl.u32 %v7145, 7
        %v7147 = vsub.s32 %v437, %v7146
        %v7148 = vrot.slane %v5249, %v7147
        %v7149 = vlaneseq
        %v7150 = vshrl.u32 %v7149, 7
        %v7151 = vsub.s32 %v437, %v7150
        %v7152 = vrot.slane %v5264, %v7151
        %v7153 = vlaneseq
        %v7154 = vshrl.u32 %v7153, 7
        %v7155 = vsub.s32 %v437, %v7154
        %v7156 = vrot.slane %v5279, %v7155
        %v7157 = vlaneseq
        %v7158 = vshrl.u32 %v7157, 7
        %v7159 = vsub.s32 %v437, %v7158
        %v7160 = vrot.slane %v5294, %v7159
        %v7161 = vsel %vm2340, %v7152, %v7148
        %v7162 = vsel %vm2342, %v7156, %v7161
        %v7163 = vsel %vm2344, %v7160, %v7162
        %v7164 = vsel %vm7144, %v7163, 0
        %v7165 = vsel %vm6997, %v7164, 0
        %v7166 = vand.u32 %v7165, 65535
        %v7167 = vshrl.u32 %v7165, 16
        %v7168 = vcvt.s32.f32 %v7166
        %v7169 = vcvt.s32.f32 %v7167
        %7170 = vadd.xlane.f32.xlu0 %v7168
        %v7171 = vpop.xlane.xlu0 %7170
        %7172 = vadd.xlane.f32.xlu0 %v7169
        %v7173 = vpop.xlane.xlu0 %7172
        %v7174 = vcvt.f32.s32 %v7171
        %v7175 = vcvt.f32.s32 %v7173
        %v7176 = vshll.u32 %v7175, 16
        %v7177 = vadd.s32 %v7176, %v7174
        %vm7178 = vcmp.eq.s32.totalorder %v437, %v7177
        %v7179 = vlaneseq
        %v7180 = vshrl.u32 %v7179, 7
        %v7181 = vsub.s32 %v437, %v7180
        %v7182 = vrot.slane %v4440, %v7181
        %v7183 = vlaneseq
        %v7184 = vshrl.u32 %v7183, 7
        %v7185 = vsub.s32 %v437, %v7184
        %v7186 = vrot.slane %v4455, %v7185
        %v7187 = vlaneseq
        %v7188 = vshrl.u32 %v7187, 7
        %v7189 = vsub.s32 %v437, %v7188
        %v7190 = vrot.slane %v4470, %v7189
        %v7191 = vlaneseq
        %v7192 = vshrl.u32 %v7191, 7
        %v7193 = vsub.s32 %v437, %v7192
        %v7194 = vrot.slane %v4485, %v7193
        %v7195 = vsel %vm2340, %v7186, %v7182
        %v7196 = vsel %vm2342, %v7190, %v7195
        %v7197 = vsel %vm2344, %v7194, %v7196
        %v7198 = vsel %vm7178, %v7197, 0
        %v7199 = vsel %vm6997, %v7198, 0
        %v7200 = vand.u32 %v7199, 65535
        %v7201 = vshrl.u32 %v7199, 16
        %v7202 = vcvt.s32.f32 %v7200
        %v7203 = vcvt.s32.f32 %v7201
        %7204 = vadd.xlane.f32.xlu0 %v7202
        %v7205 = vpop.xlane.xlu0 %7204
        %7206 = vadd.xlane.f32.xlu0 %v7203
        %v7207 = vpop.xlane.xlu0 %7206
        %v7208 = vcvt.f32.s32 %v7205
        %v7209 = vcvt.f32.s32 %v7207
        %v7210 = vshll.u32 %v7209, 16
        %v7211 = vadd.s32 %v7210, %v7208
        %vm7212 = vcmp.eq.s32.totalorder %v437, %v7211
        %v7213 = vlaneseq
        %v7214 = vshrl.u32 %v7213, 7
        %v7215 = vsub.s32 %v437, %v7214
        %v7216 = vrot.slane %v3632, %v7215
        %v7217 = vlaneseq
        %v7218 = vshrl.u32 %v7217, 7
        %v7219 = vsub.s32 %v437, %v7218
        %v7220 = vrot.slane %v3647, %v7219
        %v7221 = vlaneseq
        %v7222 = vshrl.u32 %v7221, 7
        %v7223 = vsub.s32 %v437, %v7222
        %v7224 = vrot.slane %v3662, %v7223
        %v7225 = vlaneseq
        %v7226 = vshrl.u32 %v7225, 7
        %v7227 = vsub.s32 %v437, %v7226
        %v7228 = vrot.slane %v3677, %v7227
        %v7229 = vsel %vm2340, %v7220, %v7216
        %v7230 = vsel %vm2342, %v7224, %v7229
        %v7231 = vsel %vm2344, %v7228, %v7230
        %v7232 = vsel %vm7212, %v7231, 0
        %v7233 = vsel %vm6997, %v7232, 0
        %v7234 = vand.u32 %v7233, 65535
        %v7235 = vshrl.u32 %v7233, 16
        %v7236 = vcvt.s32.f32 %v7234
        %v7237 = vcvt.s32.f32 %v7235
        %7238 = vadd.xlane.f32.xlu0 %v7236
        %v7239 = vpop.xlane.xlu0 %7238
        %7240 = vadd.xlane.f32.xlu0 %v7237
        %v7241 = vpop.xlane.xlu0 %7240
        %v7242 = vcvt.f32.s32 %v7239
        %v7243 = vcvt.f32.s32 %v7241
        %v7244 = vshll.u32 %v7243, 16
        %v7245 = vadd.s32 %v7244, %v7242
        %vm7246 = vcmp.eq.s32.totalorder %v437, %v7245
        %v7247 = vlaneseq
        %v7248 = vshrl.u32 %v7247, 7
        %v7249 = vsub.s32 %v437, %v7248
        %v7250 = vrot.slane %v2823, %v7249
        %v7251 = vlaneseq
        %v7252 = vshrl.u32 %v7251, 7
        %v7253 = vsub.s32 %v437, %v7252
        %v7254 = vrot.slane %v2838, %v7253
        %v7255 = vlaneseq
        %v7256 = vshrl.u32 %v7255, 7
        %v7257 = vsub.s32 %v437, %v7256
        %v7258 = vrot.slane %v2853, %v7257
        %v7259 = vlaneseq
        %v7260 = vshrl.u32 %v7259, 7
        %v7261 = vsub.s32 %v437, %v7260
        %v7262 = vrot.slane %v2868, %v7261
        %v7263 = vsel %vm2340, %v7254, %v7250
        %v7264 = vsel %vm2342, %v7258, %v7263
        %v7265 = vsel %vm2344, %v7262, %v7264
        %v7266 = vsel %vm7246, %v7265, 0
        %v7267 = vsel %vm6997, %v7266, 0
        %v7268 = vand.u32 %v7267, 65535
        %v7269 = vshrl.u32 %v7267, 16
        %v7270 = vcvt.s32.f32 %v7268
        %v7271 = vcvt.s32.f32 %v7269
        %7272 = vadd.xlane.f32.xlu0 %v7270
        %v7273 = vpop.xlane.xlu0 %7272
        %7274 = vadd.xlane.f32.xlu0 %v7271
        %v7275 = vpop.xlane.xlu0 %7274
        %v7276 = vcvt.f32.s32 %v7273
        %v7277 = vcvt.f32.s32 %v7275
        %v7278 = vshll.u32 %v7277, 16
        %v7279 = vadd.s32 %v7278, %v7276
        %vm7280 = vcmp.eq.s32.totalorder %v437, %v7279
        %v7281 = vlaneseq
        %v7282 = vshrl.u32 %v7281, 7
        %v7283 = vsub.s32 %v437, %v7282
        %v7284 = vrot.slane %v1948, %v7283
        %v7285 = vlaneseq
        %v7286 = vshrl.u32 %v7285, 7
        %v7287 = vsub.s32 %v437, %v7286
        %v7288 = vrot.slane %v1963, %v7287
        %v7289 = vlaneseq
        %v7290 = vshrl.u32 %v7289, 7
        %v7291 = vsub.s32 %v437, %v7290
        %v7292 = vrot.slane %v1978, %v7291
        %v7293 = vlaneseq
        %v7294 = vshrl.u32 %v7293, 7
        %v7295 = vsub.s32 %v437, %v7294
        %v7296 = vrot.slane %v1993, %v7295
        %v7297 = vsel %vm2340, %v7288, %v7284
        %v7298 = vsel %vm2342, %v7292, %v7297
        %v7299 = vsel %vm2344, %v7296, %v7298
        %v7300 = vsel %vm7280, %v7299, 0
        %v7301 = vsel %vm6997, %v7300, 0
        %v7302 = vand.u32 %v7301, 65535
        %v7303 = vshrl.u32 %v7301, 16
        %v7304 = vcvt.s32.f32 %v7302
        %v7305 = vcvt.s32.f32 %v7303
        %7306 = vadd.xlane.f32.xlu0 %v7304
        %v7307 = vpop.xlane.xlu0 %7306
        %7308 = vadd.xlane.f32.xlu0 %v7305
        %v7309 = vpop.xlane.xlu0 %7308
        %v7310 = vcvt.f32.s32 %v7307
        %v7311 = vcvt.f32.s32 %v7309
        %v7312 = vshll.u32 %v7311, 16
        %v7313 = vadd.s32 %v7312, %v7310
        %vm7314 = vcmask 7168
        %v7315 = vsel %vm7314, %v7313, %v7279
        %vm7316 = vcmask 15360
        %v7317 = vsel %vm7316, %v7315, %v7245
        %vm7318 = vcmask 23552
        %v7319 = vsel %vm7318, %v7317, %v7211
        %vm7320 = vcmask 31744
        %v7321 = vsel %vm7320, %v7319, %v7177
        %vm7322 = vcmask 39936
        %v7323 = vsel %vm7322, %v7321, %v7143
        %vm7324 = vcmask 48128
        %v7325 = vsel %vm7324, %v7323, %v7109
        %vm7326 = vcmask 56320
        %v7327 = vsel %vm7326, %v7325, %v7075
        %vm7328 = vcmask 60416
        %7329 = vst.msk [vmem:[%s423] sm:$0xf] %vm7328, %v7327
        %s7330 = sand.u32 %s296, 1
        %s7331 = scalar_lea.sflag [#allocation3], %s7330
        %s7332 = sand.u32 %s296, 1
        %s7333 = smul.addr %s7332, 4
        %s7334 = scalar_lea.vmem [#allocation2], %s7333
        // Predicated region
        $region69: #{tpu_custom_call.1} parent=67 // pred_check
          %p7335 = pneg %p306
        $region70: #{tpu_custom_call.1} parent=67 // pred_check_branch
          %7337 = sbr.rel (%p7335) target = $region72
        $region71: #{tpu_custom_call.1} parent=67 // pred_region
          %s7339 = ssub.s32 64, 64
          %7340 = vsyncadd %s7331, %s7339
          %s7341 = smul.addr %s26, 64
          %s7342 = scalar_lea.hbm %s12, %s7341
          %s7344 = sshll.u32 %s7334, 4
          %s7345 = int_to_ptr.vmem [resolvable:$true] %s7344
          %7347 = dma.vmem_to_hbm [thread:$0]  %s7345, 64, %s7342, %s7331
        $region72: #{tpu_custom_call.1} parent=67 // pred_fallthru
          _
      $region68: #{tpu_custom_call.1} parent=5 // pred_fallthru
        _
      %p7348 = scmp.le.s32.totalorder 2, %s21
      // Predicated region
      $region73: #{tpu_custom_call.1} parent=5 // pred_check
        %p7349 = pneg %p7348
      $region74: #{tpu_custom_call.1} parent=5 // pred_check_branch
        %7351 = sbr.rel (%p7349) target = $region76
      $region75: #{tpu_custom_call.1} parent=5 // pred_region
        %s7352 = ssub.s32 %s21, 2
        // Predicated region
        $region77: #{tpu_custom_call.1} parent=75 // pred_check
          %p7353 = pneg %p312
        $region78: #{tpu_custom_call.1} parent=75 // pred_check_branch
          %7355 = sbr.rel (%p7353) target = $region80
        $region79: #{tpu_custom_call.1} parent=75 // pred_region
          %s7356 = sand.u32 %s297, 1
          %s7357 = scalar_lea.sflag [#allocation3], %s7356
          %s7358 = sand.u32 %s297, 1
          %s7359 = smul.addr %s7358, 4
          %s7360 = scalar_lea.vmem [#allocation2], %s7359
          %7361 = dma.done %s7357, 64
        $region80: #{tpu_custom_call.1} parent=75 // pred_fallthru
          _
      $region76: #{tpu_custom_call.1} parent=5 // pred_fallthru
        _
    $region6: #{tpu_custom_call.1} parent=1 // loop_footer
      %s25 = sadd.s32 1, %s21
    $region7: #{tpu_custom_call.1} parent=1 // loop_footer_branch
      %20 = sbr.rel target = $region3
    $region8: #{tpu_custom_call.1} parent=1 // loop_exit
      _
    %7362 = vsyncpa [#allocation3], 1
    %s7363 = scalar_lea.sflag [#allocation3], 1
    %7364 = vsyncpa %s7363, 1

</llo_original>
